<compile_context>
chip_gen: v6e
topology: v6e:2x2x1
jax: 0.10.0
libtpu: 0.0.40
codegen_flags: <defaults>
</compile_context>

<pallas_src>
import numpy as np

import jax
import jax.numpy as jnp
from jax.experimental import pallas as pl
from jax.experimental.pallas import tpu as pltpu


def _round_up(x, m):
    return ((x + m - 1) // m) * m


# ---------------------------------------------------------------------------
# Fused kernel: grid = (model, fc1-K-slab)
# ---------------------------------------------------------------------------
def _ddqn_fused_kernel(x_ref, wt1_ref, b1_ref, wt2_ref, b2_ref, wt3_ref, b3_ref,
                       fw1_ref, fb1_ref, fw2_ref, fb2_ref, out_ref,
                       flat_ref, hid_ref):
    j = pl.program_id(1)
    n_slabs = pl.num_programs(1)

    n_batch = out_ref.shape[0]
    h_in = x_ref.shape[0] // n_batch          # per-image row stride in the slab
    c3p = wt3_ref.shape[2]                    # padded conv3 row width (lanes)
    k_s = fw1_ref.shape[0]                    # fc1 K per slab
    rows_per_slab = k_s // c3p
    h3o = n_slabs * rows_per_slab             # conv3 valid rows per image

    def conv_relu(src, wt_ref, b_ref):
        # src: (slab_rows, K) bf16; wt_ref: (kh, K, N) band weights; b_ref: (1, N).
        kh = wt_ref.shape[0]
        h_out = src.shape[0] - kh + 1
        acc = jnp.zeros((h_out, wt_ref.shape[2]), jnp.float32)
        for dy in range(kh):                                   # static unroll (kh<=4)
            acc = acc + jnp.dot(src[dy:dy + h_out, :], wt_ref[dy],
                                preferred_element_type=jnp.float32)
        acc = acc + b_ref[...]
        return jnp.maximum(acc, 0.0).astype(jnp.bfloat16)

    # Conv stack runs once per model (first fc1 slab). The whole batch is one
    # stacked slab, so each conv layer is kh lane-dense matmuls with a big M.
    @pl.when(j == 0)
    def _():
        a = x_ref[...]                                         # (n*H, K1p) bf16
        a = conv_relu(a, wt1_ref, b1_ref)
        a = conv_relu(a, wt2_ref, b2_ref)
        a = conv_relu(a, wt3_ref, b3_ref)                      # (n*H - 7, c3p)
        # Flatten only the valid conv3 rows (b*h_in + y, y < h3o) into the fc1
        # LHS scratch, laid out per fc1-K slab so the per-slab matmul below
        # needs no in-kernel reshape.
        for b in range(n_batch):
            for y in range(h3o):
                s, r = divmod(y, rows_per_slab)
                row = b * h_in + y
                flat_ref[s, b:b + 1, r * c3p:(r + 1) * c3p] = a[row:row + 1, :]
        hid_ref[...] = jnp.zeros_like(hid_ref)

    # fc1, streamed over K slabs: overlaps the dominant fw1 weight DMA with the
    # conv compute / earlier slab matmuls.
    hid_ref[...] += jnp.dot(flat_ref[j], fw1_ref[...],
                            preferred_element_type=jnp.float32)

    @pl.when(j == n_slabs - 1)
    def _():
        hid = jnp.maximum(hid_ref[...] + fb1_ref[...], 0.0).astype(jnp.bfloat16)
        q = jnp.dot(hid, fw2_ref[...], preferred_element_type=jnp.float32)
        out_ref[...] = (q + fb2_ref[...]).astype(out_ref.dtype)   # one (n, 128) store


# ---------------------------------------------------------------------------
# Weight-side preparation (run ONCE per weight update, outside the hot path)
# ---------------------------------------------------------------------------
def _band_index(w_in, c_in, kw, c_out):
    """Static gather map for the per-dy block-Toeplitz conv matrix."""
    w_out = w_in - kw + 1
    zero_slot = kw * c_in * c_out
    idx = np.full((w_in * c_in, w_out * c_out), zero_slot, dtype=np.int32)
    cc = np.arange(c_in)[:, None]
    oo = np.arange(c_out)[None, :]
    for x in range(w_out):
        for dx in range(kw):
            rows = (x + dx) * c_in + np.arange(c_in)
            cols = x * c_out + np.arange(c_out)
            idx[np.ix_(rows, cols)] = dx * c_in * c_out + cc * c_out + oo
    return idx


def _band_weight(w_oihw, w_in, k_pad, n_pad, dtype):
    """Expand PyTorch conv weight (O, C, KH, KW) into KH band matrices
    (k_pad, n_pad) with T[dy][x_in*C+c, x_out*O+o] = w[o,c,dy,x_in-x_out];
    padded rows/cols are exactly zero."""
    o, c, kh, kw = w_oihw.shape
    idx = jnp.asarray(_band_index(w_in, c, kw, o))
    w_k = jnp.transpose(w_oihw, (2, 3, 1, 0)).reshape(kh, kw * c * o)
    w_aug = jnp.concatenate([w_k, jnp.zeros((kh, 1), w_k.dtype)], axis=1)
    band = jnp.take(w_aug, idx, axis=1)                        # (kh, w_in*C, w_out*O)
    band = jnp.pad(band, ((0, 0), (0, k_pad - band.shape[1]),
                          (0, n_pad - band.shape[2])))
    return band.astype(dtype)


def _conv_bias(b, w_out, o, n_pad):
    return jnp.pad(jnp.tile(b, (w_out,)), (0, n_pad - w_out * o)) \
              .reshape(1, n_pad).astype(jnp.float32)


def _prepare_one(p, h_in, w_in, n_slabs, dtype):
    o1, c_in, kh1, kw1 = p["c1_w"].shape
    o2, _, kh2, kw2 = p["c2_w"].shape
    o3, _, kh3, kw3 = p["c3_w"].shape
    h1o, w1o = h_in - kh1 + 1, w_in - kw1 + 1
    h2o, w2o = h1o - kh2 + 1, w1o - kw2 + 1
    h3o, w3o = h2o - kh3 + 1, w2o - kw3 + 1

    k1p = _round_up(w_in * c_in, 128)          # conv1 K   (80  -> 128)
    n1p = _round_up(w1o * o1, 128)             # conv1 out (272 -> 384)
    n2p = _round_up(w2o * o2, 128)             # conv2 out (448 -> 512)
    n3p = _round_up(w3o * o3, 128)             # conv3 out (416 -> 512)

    hid = p["fc1_w"].shape[1]
    assert p["fc1_w"].shape[0] == o3 * h3o * w3o
    assert h3o % n_slabs == 0
    out_dim = p["fc2_w"].shape[1]
    out_pad = _round_up(out_dim, 128)

    rows_per_slab = h3o // n_slabs
    k_s = rows_per_slab * n3p

    # fc1 weight reordered to match the in-kernel flatten (y, x*O+o) layout,
    # zero-padded on the lanes that are zero in the activation, and pre-split
    # into fc1-K slabs: (n_slabs, K_s, hid).
    fw1 = (p["fc1_w"].reshape(o3, h3o, w3o, hid)               # NCHW-flatten order
           .transpose(1, 2, 0, 3)                              # -> (y, x, o, f)
           .reshape(h3o, w3o * o3, hid))
    fw1 = jnp.pad(fw1, ((0, 0), (0, n3p - w3o * o3), (0, 0)))
    fw1 = fw1.reshape(n_slabs, k_s, hid).astype(dtype)

    packed = {
        "wt1": _band_weight(p["c1_w"], w_in, k1p, n1p, dtype),
        "b1": _conv_bias(p["c1_b"], w1o, o1, n1p),
        "wt2": _band_weight(p["c2_w"], w1o, n1p, n2p, dtype),
        "b2": _conv_bias(p["c2_b"], w2o, o2, n2p),
        "wt3": _band_weight(p["c3_w"], w2o, n2p, n3p, dtype),
        "b3": _conv_bias(p["c3_b"], w3o, o3, n3p),
        "fw1": fw1,
        "fb1": p["fc1_b"].reshape(1, hid).astype(jnp.float32),
        "fw2": jnp.pad(p["fc2_w"], ((0, 0), (0, out_pad - out_dim))).astype(dtype),
        "fb2": jnp.pad(p["fc2_b"], (0, out_pad - out_dim)).reshape(1, out_pad)
                  .astype(jnp.float32),
    }
    return packed, out_dim


def _pick_n_slabs(h3o):
    for s in (4, 3, 2):
        if h3o % s == 0:
            return s
    return 1


def prepare_kernel_params(params, models, h_in, w_in, dtype=jnp.bfloat16):
    p0 = params[models[0]]
    kh_total = p0["c1_w"].shape[2] + p0["c2_w"].shape[2] + p0["c3_w"].shape[2] - 3
    n_slabs = _pick_n_slabs(h_in - kh_total)
    packs, out_dim = [], None
    for m in models:
        pk, out_dim = _prepare_one(params[m], h_in, w_in, n_slabs, dtype)
        packs.append(pk)
    stacked = {k: jnp.stack([pk[k] for pk in packs], axis=0) for k in packs[0]}
    return stacked, out_dim


# ---------------------------------------------------------------------------
# pallas_call wrapper (the hot path: only x layout + the fused kernel)
# ---------------------------------------------------------------------------
_PARAM_ORDER = ("wt1", "b1", "wt2", "b2", "wt3", "b3", "fw1", "fb1", "fw2", "fb2")


def _model_block_spec(arr):
    ndim = arr.ndim
    return pl.BlockSpec((None,) + tuple(arr.shape[1:]),
                        lambda m, j: (m,) + (0,) * (ndim - 1))


def ddqn_apply_packed(packed, x_nchw, out_dim):
    n, c, h_img, w_img = x_nchw.shape
    n_models = packed["wt1"].shape[0]
    act_dtype = packed["wt1"].dtype
    k1p = packed["wt1"].shape[2]
    c3p = packed["wt3"].shape[3]
    out_pad = packed["fw2"].shape[-1]
    n_slabs, k_s, hid_dim = packed["fw1"].shape[1:]

    kh_total = (packed["wt1"].shape[1] + packed["wt2"].shape[1]
                + packed["wt3"].shape[1] - 3)
    assert (h_img - kh_total) * c3p == n_slabs * k_s
    assert k1p >= w_img * c

    # Only activation-side layout op in the hot path: NCHW -> stacked
    # channel-fastest rows (N*H, W*C), lane-padded to a multiple of 128.
    x_prep = jnp.transpose(x_nchw, (0, 2, 3, 1)).reshape(n * h_img, w_img * c)
    x_prep = jnp.pad(x_prep.astype(act_dtype), ((0, 0), (0, k1p - w_img * c)))

    in_specs = [pl.BlockSpec((n * h_img, k1p), lambda m, j: (0, 0))]
    for key in _PARAM_ORDER:
        if key == "fw1":
            in_specs.append(pl.BlockSpec((None, None, k_s, hid_dim),
                                         lambda m, j: (m, j, 0, 0)))
        else:
            in_specs.append(_model_block_spec(packed[key]))

    # Advisory cost hint.
    def _conv_cost(wt, rows_in):
        kh, kp, npad = wt.shape[1:]
        return 2 * kh * (rows_in - kh + 1) * kp * npad, rows_in - kh + 1
    f1, r1 = _conv_cost(packed["wt1"], n * h_img)
    f2, r2 = _conv_cost(packed["wt2"], r1)
    f3, _ = _conv_cost(packed["wt3"], r2)
    flops = n_models * (f1 + f2 + f3 + 2 * n * n_slabs * k_s * hid_dim
                        + 2 * n * hid_dim * out_pad)
    bytes_accessed = int(sum(v.size * v.dtype.itemsize for v in packed.values())
                         + x_prep.size * x_prep.dtype.itemsize
                         + n_models * n * out_pad * 4)

    out = pl.pallas_call(
        _ddqn_fused_kernel,
        out_shape=jax.ShapeDtypeStruct((n_models, n, out_pad), jnp.float32),
        grid=(n_models, n_slabs),
        in_specs=in_specs,
        out_specs=pl.BlockSpec((None, n, out_pad), lambda m, j: (m, 0, 0)),
        scratch_shapes=[pltpu.VMEM((n_slabs, n, k_s), act_dtype),   # flat fc1 LHS
                        pltpu.VMEM((n, hid_dim), jnp.float32)],     # fc1 accumulator
        compiler_params=pltpu.CompilerParams(
            # v7x: the size-2 model axis should shard across the two TensorCores;
            # each core still pipelines fw1 over the inner "arbitrary" slab axis.
            dimension_semantics=("parallel", "arbitrary"),
            # ~10 MB double-buffered working set: 32 MiB is safe on v5e/v6e and
            # leaves headroom under v7x's 64 MiB physical VMEM.
            vmem_limit_bytes=32 * 1024 * 1024,
        ),
        cost_estimate=pl.CostEstimate(flops=flops, transcendentals=0,
                                      bytes_accessed=bytes_accessed),
    )(x_prep, *[packed[k] for k in _PARAM_ORDER])
    return out[:, :, :out_dim]


def make_ddqn_forward(params, h_in, w_in, models=("online", "target")):
    """Pack weights ONCE (re-pack only after a weight update) and return
    (packed_weights, jitted forward).  The forward takes (packed, x_nchw) and
    returns {model_name: (N, out_dim) Q-values} from a single fused launch."""
    packed, out_dim = prepare_kernel_params(params, models, h_in, w_in)

    @jax.jit
    def fwd(packed_weights, x_nchw):
        q = ddqn_apply_packed(packed_weights, x_nchw, out_dim)
        return {m: q[i] for i, m in enumerate(models)}

    return packed, fwd


# ---------------------------------------------------------------------------
# Pure-JAX reference (same bf16 cast points as the kernel) for validation
# ---------------------------------------------------------------------------
def _ref_forward(p, x_nchw, dtype=jnp.bfloat16):
    def q(a):                                   # quantize like the kernel's MXU inputs
        return a.astype(dtype).astype(jnp.float32)

    def conv(x, w, b):
        n, c, hh, ww = x.shape
        o, _, kh, kw = w.shape
        ho, wo = hh - kh + 1, ww - kw + 1
        xn = jnp.transpose(q(x), (0, 2, 3, 1))
        cols = jnp.stack([xn[:, i:i + ho, j:j + wo, :]
                          for i in range(kh) for j in range(kw)], axis=3)
        cols = cols.reshape(n * ho * wo, kh * kw * c)
        w2 = jnp.transpose(q(w), (2, 3, 1, 0)).reshape(kh * kw * c, o)
        y = jnp.maximum(cols @ w2 + b.astype(jnp.float32), 0.0)
        return jnp.transpose(y.reshape(n, ho, wo, o), (0, 3, 1, 2))

    h = conv(x_nchw, p["c1_w"], p["c1_b"])
    h = conv(h, p["c2_w"], p["c2_b"])
    h = conv(h, p["c3_w"], p["c3_b"])
    flat = h.reshape(h.shape[0], -1)                            # NCHW flatten
    h = jnp.maximum(q(flat) @ q(p["fc1_w"]) + p["fc1_b"].astype(jnp.float32), 0.0)
    return q(h) @ q(p["fc2_w"]) + p["fc2_b"].astype(jnp.float32)


# ---------------------------------------------------------------------------
# Deterministic parameter init (PyTorch-default-like uniform scale)
# ---------------------------------------------------------------------------
def _uniform(key, shape, fan_in):
    bound = 1.0 / np.sqrt(float(fan_in))
    return jax.random.uniform(key, shape, jnp.float32, -bound, bound)


def init_params(key, input_dim, output_dim):
    c, h, w = input_dim
    flat_dim = 32 * (h - 7) * (w - 7)
    assert flat_dim == 3744, "input spatial dims must satisfy Linear(3744, 512)"
    ks = jax.random.split(key, 10)
    online = {
        "c1_w": _uniform(ks[0], (16, c, 4, 4), c * 16),
        "c1_b": _uniform(ks[1], (16,), c * 16),
        "c2_w": _uniform(ks[2], (32, 16, 4, 4), 16 * 16),
        "c2_b": _uniform(ks[3], (32,), 16 * 16),
        "c3_w": _uniform(ks[4], (32, 32, 2, 2), 32 * 4),
        "c3_b": _uniform(ks[5], (32,), 32 * 4),
        "fc1_w": _uniform(ks[6], (flat_dim, 512), flat_dim),    # stored (in, out)
        "fc1_b": _uniform(ks[7], (512,), flat_dim),
        "fc2_w": _uniform(ks[8], (512, output_dim), 512),
        "fc2_b": _uniform(ks[9], (output_dim,), 512),
    }
    # target = deepcopy(online); requires_grad=False is a training-time concern only.
    target = jax.tree_util.tree_map(jnp.copy, online)
    return {"online": online, "target": target}


if __name__ == "__main__":
    # Linear(3744, 512) implies 32*(H-7)*(W-7) == 3744 -> (H, W) = (16, 20)
    input_dim = (4, 16, 20)          # (C, H, W)
    output_dim = 5
    batch = 2

    key = jax.random.PRNGKey(0)
    pkey, xkey = jax.random.split(key)
    params = init_params(pkey, input_dim, output_dim)
    x = jax.random.normal(xkey, (batch,) + input_dim, dtype=jnp.float32)   # NCHW

    # Pack weights once (outside the per-forward hot path), then run the single
    # fused launch computing BOTH the online and target networks.
    packed, fwd = make_ddqn_forward(params, input_dim[1], input_dim[2],
                                    models=("online", "target"))
    q = jax.block_until_ready(fwd(packed, x))
    q = jax.block_until_ready(fwd(packed, x))    # steady-state call: no re-packing

    for name in ("online", "target"):
        got = q[name]
        ref = _ref_forward(params[name], x)
        assert got.shape == (batch, output_dim), got.shape
        assert bool(jnp.all(jnp.isfinite(got)))
        assert bool(jnp.allclose(got, ref, rtol=2e-2, atol=2e-3)), (
            name, float(jnp.max(jnp.abs(got - ref))))
    print("KERNEL_OK")
</pallas_src>

<mosaic_0001>
module attributes {stable_mosaic.version = 11 : i64} {
  func.func @_ddqn_fused_kernel(%arg0: i32, %arg1: i32, %arg2: memref<32x128xbf16, #tpu.memory_space<vmem>>, %arg3: memref<1x4x128x384xbf16, #tpu.memory_space<vmem>>, %arg4: memref<1x1x384xf32, #tpu.memory_space<vmem>>, %arg5: memref<1x4x384x512xbf16, #tpu.memory_space<vmem>>, %arg6: memref<1x1x512xf32, #tpu.memory_space<vmem>>, %arg7: memref<1x2x512x512xbf16, #tpu.memory_space<vmem>>, %arg8: memref<1x1x512xf32, #tpu.memory_space<vmem>>, %arg9: memref<1x1x1536x512xbf16, #tpu.memory_space<vmem>>, %arg10: memref<1x1x512xf32, #tpu.memory_space<vmem>>, %arg11: memref<1x512x128xbf16, #tpu.memory_space<vmem>>, %arg12: memref<1x1x128xf32, #tpu.memory_space<vmem>>, %arg13: memref<1x2x128xf32, #tpu.memory_space<vmem>>, %arg14: memref<3x2x1536xbf16, #tpu.memory_space<vmem>>, %arg15: memref<2x512xf32, #tpu.memory_space<vmem>>) attributes {dimension_semantics = [#tpu.dimension_semantics<parallel>, #tpu.dimension_semantics<arbitrary>], iteration_bounds = array<i64: 2, 3>, scalar_prefetch = 0 : i64, scratch_operands = 2 : i64, tpu.core_type = #tpu.core_type<tc>, window_params = [{pipeline_mode = #tpu.pipeline_mode<synchronous>, transform_indices = @transform_0, window_bounds = array<i64: 32, 128>}, {transform_indices = @transform_1, window_bounds = array<i64: 1, 4, 128, 384>}, {transform_indices = @transform_2, window_bounds = array<i64: 1, 1, 384>}, {transform_indices = @transform_3, window_bounds = array<i64: 1, 4, 384, 512>}, {transform_indices = @transform_4, window_bounds = array<i64: 1, 1, 512>}, {transform_indices = @transform_5, window_bounds = array<i64: 1, 2, 512, 512>}, {transform_indices = @transform_6, window_bounds = array<i64: 1, 1, 512>}, {transform_indices = @transform_7, window_bounds = array<i64: 1, 1, 1536, 512>}, {transform_indices = @transform_8, window_bounds = array<i64: 1, 1, 512>}, {transform_indices = @transform_9, window_bounds = array<i64: 1, 512, 128>}, {transform_indices = @transform_10, window_bounds = array<i64: 1, 1, 128>}, {transform_indices = @transform_11, window_bounds = array<i64: 1, 2, 128>}]} {
    %c0_i32 = arith.constant 0 : i32
    %0 = arith.cmpi eq, %arg1, %c0_i32 : i32
    %1 = arith.extui %0 : i1 to i32
    %c0_i32_0 = arith.constant 0 : i32
    %2 = arith.cmpi ne, %1, %c0_i32_0 : i32
    scf.if %2 {
      %c0_11 = arith.constant 0 : index
      %c0_12 = arith.constant 0 : index
      %15 = vector.load %arg2[%c0_11, %c0_12] : memref<32x128xbf16, #tpu.memory_space<vmem>>, vector<32x128xbf16>
      %cst_13 = arith.constant 0.000000e+00 : f32
      %16 = vector.broadcast %cst_13 : f32 to vector<29x384xf32>
      %17 = vector.extract_strided_slice %15 {offsets = [0, 0], sizes = [29, 128], strides = [1, 1]} : vector<32x128xbf16> to vector<29x128xbf16>
      %c0_14 = arith.constant 0 : index
      %c0_15 = arith.constant 0 : index
      %c0_16 = arith.constant 0 : index
      %c0_17 = arith.constant 0 : index
      %18 = vector.load %arg3[%c0_14, %c0_15, %c0_16, %c0_17] : memref<1x4x128x384xbf16, #tpu.memory_space<vmem>>, vector<1x1x128x384xbf16>
      %19 = vector.shape_cast %18 : vector<1x1x128x384xbf16> to vector<128x384xbf16>
      %cst_18 = arith.constant dense<0.000000e+00> : vector<29x384xf32>
      %20 = tpu.matmul %17, %19, %cst_18 {dimension_numbers = #tpu.dot_dimension_numbers<[1], [0], [0], [1], [0, 0, 1, 1], [], []>} : vector<29x128xbf16>, vector<128x384xbf16>, vector<29x384xf32> -> vector<29x384xf32>
      %21 = arith.addf %16, %20 : vector<29x384xf32>
      %22 = vector.extract_strided_slice %15 {offsets = [1, 0], sizes = [29, 128], strides = [1, 1]} : vector<32x128xbf16> to vector<29x128xbf16>
      %c0_19 = arith.constant 0 : index
      %c1 = arith.constant 1 : index
      %c0_20 = arith.constant 0 : index
      %c0_21 = arith.constant 0 : index
      %23 = vector.load %arg3[%c0_19, %c1, %c0_20, %c0_21] : memref<1x4x128x384xbf16, #tpu.memory_space<vmem>>, vector<1x1x128x384xbf16>
      %24 = vector.shape_cast %23 : vector<1x1x128x384xbf16> to vector<128x384xbf16>
      %cst_22 = arith.constant dense<0.000000e+00> : vector<29x384xf32>
      %25 = tpu.matmul %22, %24, %cst_22 {dimension_numbers = #tpu.dot_dimension_numbers<[1], [0], [0], [1], [0, 0, 1, 1], [], []>} : vector<29x128xbf16>, vector<128x384xbf16>, vector<29x384xf32> -> vector<29x384xf32>
      %26 = arith.addf %21, %25 : vector<29x384xf32>
      %27 = vector.extract_strided_slice %15 {offsets = [2, 0], sizes = [29, 128], strides = [1, 1]} : vector<32x128xbf16> to vector<29x128xbf16>
      %c0_23 = arith.constant 0 : index
      %c2 = arith.constant 2 : index
      %c0_24 = arith.constant 0 : index
      %c0_25 = arith.constant 0 : index
      %28 = vector.load %arg3[%c0_23, %c2, %c0_24, %c0_25] : memref<1x4x128x384xbf16, #tpu.memory_space<vmem>>, vector<1x1x128x384xbf16>
      %29 = vector.shape_cast %28 : vector<1x1x128x384xbf16> to vector<128x384xbf16>
      %cst_26 = arith.constant dense<0.000000e+00> : vector<29x384xf32>
      %30 = tpu.matmul %27, %29, %cst_26 {dimension_numbers = #tpu.dot_dimension_numbers<[1], [0], [0], [1], [0, 0, 1, 1], [], []>} : vector<29x128xbf16>, vector<128x384xbf16>, vector<29x384xf32> -> vector<29x384xf32>
      %31 = arith.addf %26, %30 : vector<29x384xf32>
      %32 = vector.extract_strided_slice %15 {offsets = [3, 0], sizes = [29, 128], strides = [1, 1]} : vector<32x128xbf16> to vector<29x128xbf16>
      %c0_27 = arith.constant 0 : index
      %c3 = arith.constant 3 : index
      %c0_28 = arith.constant 0 : index
      %c0_29 = arith.constant 0 : index
      %33 = vector.load %arg3[%c0_27, %c3, %c0_28, %c0_29] : memref<1x4x128x384xbf16, #tpu.memory_space<vmem>>, vector<1x1x128x384xbf16>
      %34 = vector.shape_cast %33 : vector<1x1x128x384xbf16> to vector<128x384xbf16>
      %cst_30 = arith.constant dense<0.000000e+00> : vector<29x384xf32>
      %35 = tpu.matmul %32, %34, %cst_30 {dimension_numbers = #tpu.dot_dimension_numbers<[1], [0], [0], [1], [0, 0, 1, 1], [], []>} : vector<29x128xbf16>, vector<128x384xbf16>, vector<29x384xf32> -> vector<29x384xf32>
      %36 = arith.addf %31, %35 : vector<29x384xf32>
      %c0_31 = arith.constant 0 : index
      %c0_32 = arith.constant 0 : index
      %c0_33 = arith.constant 0 : index
      %37 = vector.load %arg4[%c0_31, %c0_32, %c0_33] : memref<1x1x384xf32, #tpu.memory_space<vmem>>, vector<1x1x384xf32>
      %38 = vector.shape_cast %37 : vector<1x1x384xf32> to vector<1x384xf32>
      %39 = vector.broadcast %38 : vector<1x384xf32> to vector<29x384xf32>
      %40 = arith.addf %36, %39 : vector<29x384xf32>
      %cst_34 = arith.constant 0.000000e+00 : f32
      %41 = vector.broadcast %cst_34 : f32 to vector<29x384xf32>
      %42 = arith.maximumf %40, %41 : vector<29x384xf32>
      %43 = arith.truncf %42 : vector<29x384xf32> to vector<29x384xbf16>
      %cst_35 = arith.constant 0.000000e+00 : f32
      %44 = vector.broadcast %cst_35 : f32 to vector<26x512xf32>
      %45 = vector.extract_strided_slice %43 {offsets = [0, 0], sizes = [26, 384], strides = [1, 1]} : vector<29x384xbf16> to vector<26x384xbf16>
      %c0_36 = arith.constant 0 : index
      %c0_37 = arith.constant 0 : index
      %c0_38 = arith.constant 0 : index
      %c0_39 = arith.constant 0 : index
      %46 = vector.load %arg5[%c0_36, %c0_37, %c0_38, %c0_39] : memref<1x4x384x512xbf16, #tpu.memory_space<vmem>>, vector<1x1x384x512xbf16>
      %47 = vector.shape_cast %46 : vector<1x1x384x512xbf16> to vector<384x512xbf16>
      %cst_40 = arith.constant dense<0.000000e+00> : vector<26x512xf32>
      %48 = tpu.matmul %45, %47, %cst_40 {dimension_numbers = #tpu.dot_dimension_numbers<[1], [0], [0], [1], [0, 0, 1, 1], [], []>} : vector<26x384xbf16>, vector<384x512xbf16>, vector<26x512xf32> -> vector<26x512xf32>
      %49 = arith.addf %44, %48 : vector<26x512xf32>
      %50 = vector.extract_strided_slice %43 {offsets = [1, 0], sizes = [26, 384], strides = [1, 1]} : vector<29x384xbf16> to vector<26x384xbf16>
      %c0_41 = arith.constant 0 : index
      %c1_42 = arith.constant 1 : index
      %c0_43 = arith.constant 0 : index
      %c0_44 = arith.constant 0 : index
      %51 = vector.load %arg5[%c0_41, %c1_42, %c0_43, %c0_44] : memref<1x4x384x512xbf16, #tpu.memory_space<vmem>>, vector<1x1x384x512xbf16>
      %52 = vector.shape_cast %51 : vector<1x1x384x512xbf16> to vector<384x512xbf16>
      %cst_45 = arith.constant dense<0.000000e+00> : vector<26x512xf32>
      %53 = tpu.matmul %50, %52, %cst_45 {dimension_numbers = #tpu.dot_dimension_numbers<[1], [0], [0], [1], [0, 0, 1, 1], [], []>} : vector<26x384xbf16>, vector<384x512xbf16>, vector<26x512xf32> -> vector<26x512xf32>
      %54 = arith.addf %49, %53 : vector<26x512xf32>
      %55 = vector.extract_strided_slice %43 {offsets = [2, 0], sizes = [26, 384], strides = [1, 1]} : vector<29x384xbf16> to vector<26x384xbf16>
      %c0_46 = arith.constant 0 : index
      %c2_47 = arith.constant 2 : index
      %c0_48 = arith.constant 0 : index
      %c0_49 = arith.constant 0 : index
      %56 = vector.load %arg5[%c0_46, %c2_47, %c0_48, %c0_49] : memref<1x4x384x512xbf16, #tpu.memory_space<vmem>>, vector<1x1x384x512xbf16>
      %57 = vector.shape_cast %56 : vector<1x1x384x512xbf16> to vector<384x512xbf16>
      %cst_50 = arith.constant dense<0.000000e+00> : vector<26x512xf32>
      %58 = tpu.matmul %55, %57, %cst_50 {dimension_numbers = #tpu.dot_dimension_numbers<[1], [0], [0], [1], [0, 0, 1, 1], [], []>} : vector<26x384xbf16>, vector<384x512xbf16>, vector<26x512xf32> -> vector<26x512xf32>
      %59 = arith.addf %54, %58 : vector<26x512xf32>
      %60 = vector.extract_strided_slice %43 {offsets = [3, 0], sizes = [26, 384], strides = [1, 1]} : vector<29x384xbf16> to vector<26x384xbf16>
      %c0_51 = arith.constant 0 : index
      %c3_52 = arith.constant 3 : index
      %c0_53 = arith.constant 0 : index
      %c0_54 = arith.constant 0 : index
      %61 = vector.load %arg5[%c0_51, %c3_52, %c0_53, %c0_54] : memref<1x4x384x512xbf16, #tpu.memory_space<vmem>>, vector<1x1x384x512xbf16>
      %62 = vector.shape_cast %61 : vector<1x1x384x512xbf16> to vector<384x512xbf16>
      %cst_55 = arith.constant dense<0.000000e+00> : vector<26x512xf32>
      %63 = tpu.matmul %60, %62, %cst_55 {dimension_numbers = #tpu.dot_dimension_numbers<[1], [0], [0], [1], [0, 0, 1, 1], [], []>} : vector<26x384xbf16>, vector<384x512xbf16>, vector<26x512xf32> -> vector<26x512xf32>
      %64 = arith.addf %59, %63 : vector<26x512xf32>
      %c0_56 = arith.constant 0 : index
      %c0_57 = arith.constant 0 : index
      %c0_58 = arith.constant 0 : index
      %65 = vector.load %arg6[%c0_56, %c0_57, %c0_58] : memref<1x1x512xf32, #tpu.memory_space<vmem>>, vector<1x1x512xf32>
      %66 = vector.shape_cast %65 : vector<1x1x512xf32> to vector<1x512xf32>
      %67 = vector.broadcast %66 : vector<1x512xf32> to vector<26x512xf32>
      %68 = arith.addf %64, %67 : vector<26x512xf32>
      %cst_59 = arith.constant 0.000000e+00 : f32
      %69 = vector.broadcast %cst_59 : f32 to vector<26x512xf32>
      %70 = arith.maximumf %68, %69 : vector<26x512xf32>
      %71 = arith.truncf %70 : vector<26x512xf32> to vector<26x512xbf16>
      %cst_60 = arith.constant 0.000000e+00 : f32
      %72 = vector.broadcast %cst_60 : f32 to vector<25x512xf32>
      %73 = vector.extract_strided_slice %71 {offsets = [0, 0], sizes = [25, 512], strides = [1, 1]} : vector<26x512xbf16> to vector<25x512xbf16>
      %c0_61 = arith.constant 0 : index
      %c0_62 = arith.constant 0 : index
      %c0_63 = arith.constant 0 : index
      %c0_64 = arith.constant 0 : index
      %74 = vector.load %arg7[%c0_61, %c0_62, %c0_63, %c0_64] : memref<1x2x512x512xbf16, #tpu.memory_space<vmem>>, vector<1x1x512x512xbf16>
      %75 = vector.shape_cast %74 : vector<1x1x512x512xbf16> to vector<512x512xbf16>
      %cst_65 = arith.constant dense<0.000000e+00> : vector<25x512xf32>
      %76 = tpu.matmul %73, %75, %cst_65 {dimension_numbers = #tpu.dot_dimension_numbers<[1], [0], [0], [1], [0, 0, 1, 1], [], []>} : vector<25x512xbf16>, vector<512x512xbf16>, vector<25x512xf32> -> vector<25x512xf32>
      %77 = arith.addf %72, %76 : vector<25x512xf32>
      %78 = vector.extract_strided_slice %71 {offsets = [1, 0], sizes = [25, 512], strides = [1, 1]} : vector<26x512xbf16> to vector<25x512xbf16>
      %c0_66 = arith.constant 0 : index
      %c1_67 = arith.constant 1 : index
      %c0_68 = arith.constant 0 : index
      %c0_69 = arith.constant 0 : index
      %79 = vector.load %arg7[%c0_66, %c1_67, %c0_68, %c0_69] : memref<1x2x512x512xbf16, #tpu.memory_space<vmem>>, vector<1x1x512x512xbf16>
      %80 = vector.shape_cast %79 : vector<1x1x512x512xbf16> to vector<512x512xbf16>
      %cst_70 = arith.constant dense<0.000000e+00> : vector<25x512xf32>
      %81 = tpu.matmul %78, %80, %cst_70 {dimension_numbers = #tpu.dot_dimension_numbers<[1], [0], [0], [1], [0, 0, 1, 1], [], []>} : vector<25x512xbf16>, vector<512x512xbf16>, vector<25x512xf32> -> vector<25x512xf32>
      %82 = arith.addf %77, %81 : vector<25x512xf32>
      %c0_71 = arith.constant 0 : index
      %c0_72 = arith.constant 0 : index
      %c0_73 = arith.constant 0 : index
      %83 = vector.load %arg8[%c0_71, %c0_72, %c0_73] : memref<1x1x512xf32, #tpu.memory_space<vmem>>, vector<1x1x512xf32>
      %84 = vector.shape_cast %83 : vector<1x1x512xf32> to vector<1x512xf32>
      %85 = vector.broadcast %84 : vector<1x512xf32> to vector<25x512xf32>
      %86 = arith.addf %82, %85 : vector<25x512xf32>
      %cst_74 = arith.constant 0.000000e+00 : f32
      %87 = vector.broadcast %cst_74 : f32 to vector<25x512xf32>
      %88 = arith.maximumf %86, %87 : vector<25x512xf32>
      %89 = arith.truncf %88 : vector<25x512xf32> to vector<25x512xbf16>
      %90 = vector.extract_strided_slice %89 {offsets = [0, 0], sizes = [1, 512], strides = [1, 1]} : vector<25x512xbf16> to vector<1x512xbf16>
      %c0_75 = arith.constant 0 : index
      %c0_76 = arith.constant 0 : index
      %c0_77 = arith.constant 0 : index
      %91 = vector.load %arg14[%c0_75, %c0_76, %c0_77] : memref<3x2x1536xbf16, #tpu.memory_space<vmem>>, vector<1x1x512xbf16>
      %92 = vector.shape_cast %91 : vector<1x1x512xbf16> to vector<1x512xbf16>
      %93 = vector.shape_cast %90 : vector<1x512xbf16> to vector<1x1x512xbf16>
      tpu.vector_store %arg14[%c0_75, %c0_76, %c0_77], %93 {strides = array<i32>} : memref<3x2x1536xbf16, #tpu.memory_space<vmem>>, vector<1x1x512xbf16>,
      %94 = vector.extract_strided_slice %89 {offsets = [1, 0], sizes = [1, 512], strides = [1, 1]} : vector<25x512xbf16> to vector<1x512xbf16>
      %c0_78 = arith.constant 0 : index
      %c0_79 = arith.constant 0 : index
      %c512 = arith.constant 512 : index
      %95 = vector.load %arg14[%c0_78, %c0_79, %c512] : memref<3x2x1536xbf16, #tpu.memory_space<vmem>>, vector<1x1x512xbf16>
      %96 = vector.shape_cast %95 : vector<1x1x512xbf16> to vector<1x512xbf16>
      %97 = vector.shape_cast %94 : vector<1x512xbf16> to vector<1x1x512xbf16>
      tpu.vector_store %arg14[%c0_78, %c0_79, %c512], %97 {strides = array<i32>} : memref<3x2x1536xbf16, #tpu.memory_space<vmem>>, vector<1x1x512xbf16>,
      %98 = vector.extract_strided_slice %89 {offsets = [2, 0], sizes = [1, 512], strides = [1, 1]} : vector<25x512xbf16> to vector<1x512xbf16>
      %c0_80 = arith.constant 0 : index
      %c0_81 = arith.constant 0 : index
      %c1024 = arith.constant 1024 : index
      %99 = vector.load %arg14[%c0_80, %c0_81, %c1024] : memref<3x2x1536xbf16, #tpu.memory_space<vmem>>, vector<1x1x512xbf16>
      %100 = vector.shape_cast %99 : vector<1x1x512xbf16> to vector<1x512xbf16>
      %101 = vector.shape_cast %98 : vector<1x512xbf16> to vector<1x1x512xbf16>
      tpu.vector_store %arg14[%c0_80, %c0_81, %c1024], %101 {strides = array<i32>} : memref<3x2x1536xbf16, #tpu.memory_space<vmem>>, vector<1x1x512xbf16>,
      %102 = vector.extract_strided_slice %89 {offsets = [3, 0], sizes = [1, 512], strides = [1, 1]} : vector<25x512xbf16> to vector<1x512xbf16>
      %c1_82 = arith.constant 1 : index
      %c0_83 = arith.constant 0 : index
      %c0_84 = arith.constant 0 : index
      %103 = vector.load %arg14[%c1_82, %c0_83, %c0_84] : memref<3x2x1536xbf16, #tpu.memory_space<vmem>>, vector<1x1x512xbf16>
      %104 = vector.shape_cast %103 : vector<1x1x512xbf16> to vector<1x512xbf16>
      %105 = vector.shape_cast %102 : vector<1x512xbf16> to vector<1x1x512xbf16>
      tpu.vector_store %arg14[%c1_82, %c0_83, %c0_84], %105 {strides = array<i32>} : memref<3x2x1536xbf16, #tpu.memory_space<vmem>>, vector<1x1x512xbf16>,
      %106 = vector.extract_strided_slice %89 {offsets = [4, 0], sizes = [1, 512], strides = [1, 1]} : vector<25x512xbf16> to vector<1x512xbf16>
      %c1_85 = arith.constant 1 : index
      %c0_86 = arith.constant 0 : index
      %c512_87 = arith.constant 512 : index
      %107 = vector.load %arg14[%c1_85, %c0_86, %c512_87] : memref<3x2x1536xbf16, #tpu.memory_space<vmem>>, vector<1x1x512xbf16>
      %108 = vector.shape_cast %107 : vector<1x1x512xbf16> to vector<1x512xbf16>
      %109 = vector.shape_cast %106 : vector<1x512xbf16> to vector<1x1x512xbf16>
      tpu.vector_store %arg14[%c1_85, %c0_86, %c512_87], %109 {strides = array<i32>} : memref<3x2x1536xbf16, #tpu.memory_space<vmem>>, vector<1x1x512xbf16>,
      %110 = vector.extract_strided_slice %89 {offsets = [5, 0], sizes = [1, 512], strides = [1, 1]} : vector<25x512xbf16> to vector<1x512xbf16>
      %c1_88 = arith.constant 1 : index
      %c0_89 = arith.constant 0 : index
      %c1024_90 = arith.constant 1024 : index
      %111 = vector.load %arg14[%c1_88, %c0_89, %c1024_90] : memref<3x2x1536xbf16, #tpu.memory_space<vmem>>, vector<1x1x512xbf16>
      %112 = vector.shape_cast %111 : vector<1x1x512xbf16> to vector<1x512xbf16>
      %113 = vector.shape_cast %110 : vector<1x512xbf16> to vector<1x1x512xbf16>
      tpu.vector_store %arg14[%c1_88, %c0_89, %c1024_90], %113 {strides = array<i32>} : memref<3x2x1536xbf16, #tpu.memory_space<vmem>>, vector<1x1x512xbf16>,
      %114 = vector.extract_strided_slice %89 {offsets = [6, 0], sizes = [1, 512], strides = [1, 1]} : vector<25x512xbf16> to vector<1x512xbf16>
      %c2_91 = arith.constant 2 : index
      %c0_92 = arith.constant 0 : index
      %c0_93 = arith.constant 0 : index
      %115 = vector.load %arg14[%c2_91, %c0_92, %c0_93] : memref<3x2x1536xbf16, #tpu.memory_space<vmem>>, vector<1x1x512xbf16>
      %116 = vector.shape_cast %115 : vector<1x1x512xbf16> to vector<1x512xbf16>
      %117 = vector.shape_cast %114 : vector<1x512xbf16> to vector<1x1x512xbf16>
      tpu.vector_store %arg14[%c2_91, %c0_92, %c0_93], %117 {strides = array<i32>} : memref<3x2x1536xbf16, #tpu.memory_space<vmem>>, vector<1x1x512xbf16>,
      %118 = vector.extract_strided_slice %89 {offsets = [7, 0], sizes = [1, 512], strides = [1, 1]} : vector<25x512xbf16> to vector<1x512xbf16>
      %c2_94 = arith.constant 2 : index
      %c0_95 = arith.constant 0 : index
      %c512_96 = arith.constant 512 : index
      %119 = vector.load %arg14[%c2_94, %c0_95, %c512_96] : memref<3x2x1536xbf16, #tpu.memory_space<vmem>>, vector<1x1x512xbf16>
      %120 = vector.shape_cast %119 : vector<1x1x512xbf16> to vector<1x512xbf16>
      %121 = vector.shape_cast %118 : vector<1x512xbf16> to vector<1x1x512xbf16>
      tpu.vector_store %arg14[%c2_94, %c0_95, %c512_96], %121 {strides = array<i32>} : memref<3x2x1536xbf16, #tpu.memory_space<vmem>>, vector<1x1x512xbf16>,
      %122 = vector.extract_strided_slice %89 {offsets = [8, 0], sizes = [1, 512], strides = [1, 1]} : vector<25x512xbf16> to vector<1x512xbf16>
      %c2_97 = arith.constant 2 : index
      %c0_98 = arith.constant 0 : index
      %c1024_99 = arith.constant 1024 : index
      %123 = vector.load %arg14[%c2_97, %c0_98, %c1024_99] : memref<3x2x1536xbf16, #tpu.memory_space<vmem>>, vector<1x1x512xbf16>
      %124 = vector.shape_cast %123 : vector<1x1x512xbf16> to vector<1x512xbf16>
      %125 = vector.shape_cast %122 : vector<1x512xbf16> to vector<1x1x512xbf16>
      tpu.vector_store %arg14[%c2_97, %c0_98, %c1024_99], %125 {strides = array<i32>} : memref<3x2x1536xbf16, #tpu.memory_space<vmem>>, vector<1x1x512xbf16>,
      %126 = vector.extract_strided_slice %89 {offsets = [16, 0], sizes = [1, 512], strides = [1, 1]} : vector<25x512xbf16> to vector<1x512xbf16>
      %c0_100 = arith.constant 0 : index
      %c1_101 = arith.constant 1 : index
      %c0_102 = arith.constant 0 : index
      %127 = vector.load %arg14[%c0_100, %c1_101, %c0_102] : memref<3x2x1536xbf16, #tpu.memory_space<vmem>>, vector<1x1x512xbf16>
      %128 = vector.shape_cast %127 : vector<1x1x512xbf16> to vector<1x512xbf16>
      %129 = vector.shape_cast %126 : vector<1x512xbf16> to vector<1x1x512xbf16>
      tpu.vector_store %arg14[%c0_100, %c1_101, %c0_102], %129 {strides = array<i32>} : memref<3x2x1536xbf16, #tpu.memory_space<vmem>>, vector<1x1x512xbf16>,
      %130 = vector.extract_strided_slice %89 {offsets = [17, 0], sizes = [1, 512], strides = [1, 1]} : vector<25x512xbf16> to vector<1x512xbf16>
      %c0_103 = arith.constant 0 : index
      %c1_104 = arith.constant 1 : index
      %c512_105 = arith.constant 512 : index
      %131 = vector.load %arg14[%c0_103, %c1_104, %c512_105] : memref<3x2x1536xbf16, #tpu.memory_space<vmem>>, vector<1x1x512xbf16>
      %132 = vector.shape_cast %131 : vector<1x1x512xbf16> to vector<1x512xbf16>
      %133 = vector.shape_cast %130 : vector<1x512xbf16> to vector<1x1x512xbf16>
      tpu.vector_store %arg14[%c0_103, %c1_104, %c512_105], %133 {strides = array<i32>} : memref<3x2x1536xbf16, #tpu.memory_space<vmem>>, vector<1x1x512xbf16>,
      %134 = vector.extract_strided_slice %89 {offsets = [18, 0], sizes = [1, 512], strides = [1, 1]} : vector<25x512xbf16> to vector<1x512xbf16>
      %c0_106 = arith.constant 0 : index
      %c1_107 = arith.constant 1 : index
      %c1024_108 = arith.constant 1024 : index
      %135 = vector.load %arg14[%c0_106, %c1_107, %c1024_108] : memref<3x2x1536xbf16, #tpu.memory_space<vmem>>, vector<1x1x512xbf16>
      %136 = vector.shape_cast %135 : vector<1x1x512xbf16> to vector<1x512xbf16>
      %137 = vector.shape_cast %134 : vector<1x512xbf16> to vector<1x1x512xbf16>
      tpu.vector_store %arg14[%c0_106, %c1_107, %c1024_108], %137 {strides = array<i32>} : memref<3x2x1536xbf16, #tpu.memory_space<vmem>>, vector<1x1x512xbf16>,
      %138 = vector.extract_strided_slice %89 {offsets = [19, 0], sizes = [1, 512], strides = [1, 1]} : vector<25x512xbf16> to vector<1x512xbf16>
      %c1_109 = arith.constant 1 : index
      %c1_110 = arith.constant 1 : index
      %c0_111 = arith.constant 0 : index
      %139 = vector.load %arg14[%c1_109, %c1_110, %c0_111] : memref<3x2x1536xbf16, #tpu.memory_space<vmem>>, vector<1x1x512xbf16>
      %140 = vector.shape_cast %139 : vector<1x1x512xbf16> to vector<1x512xbf16>
      %141 = vector.shape_cast %138 : vector<1x512xbf16> to vector<1x1x512xbf16>
      tpu.vector_store %arg14[%c1_109, %c1_110, %c0_111], %141 {strides = array<i32>} : memref<3x2x1536xbf16, #tpu.memory_space<vmem>>, vector<1x1x512xbf16>,
      %142 = vector.extract_strided_slice %89 {offsets = [20, 0], sizes = [1, 512], strides = [1, 1]} : vector<25x512xbf16> to vector<1x512xbf16>
      %c1_112 = arith.constant 1 : index
      %c1_113 = arith.constant 1 : index
      %c512_114 = arith.constant 512 : index
      %143 = vector.load %arg14[%c1_112, %c1_113, %c512_114] : memref<3x2x1536xbf16, #tpu.memory_space<vmem>>, vector<1x1x512xbf16>
      %144 = vector.shape_cast %143 : vector<1x1x512xbf16> to vector<1x512xbf16>
      %145 = vector.shape_cast %142 : vector<1x512xbf16> to vector<1x1x512xbf16>
      tpu.vector_store %arg14[%c1_112, %c1_113, %c512_114], %145 {strides = array<i32>} : memref<3x2x1536xbf16, #tpu.memory_space<vmem>>, vector<1x1x512xbf16>,
      %146 = vector.extract_strided_slice %89 {offsets = [21, 0], sizes = [1, 512], strides = [1, 1]} : vector<25x512xbf16> to vector<1x512xbf16>
      %c1_115 = arith.constant 1 : index
      %c1_116 = arith.constant 1 : index
      %c1024_117 = arith.constant 1024 : index
      %147 = vector.load %arg14[%c1_115, %c1_116, %c1024_117] : memref<3x2x1536xbf16, #tpu.memory_space<vmem>>, vector<1x1x512xbf16>
      %148 = vector.shape_cast %147 : vector<1x1x512xbf16> to vector<1x512xbf16>
      %149 = vector.shape_cast %146 : vector<1x512xbf16> to vector<1x1x512xbf16>
      tpu.vector_store %arg14[%c1_115, %c1_116, %c1024_117], %149 {strides = array<i32>} : memref<3x2x1536xbf16, #tpu.memory_space<vmem>>, vector<1x1x512xbf16>,
      %150 = vector.extract_strided_slice %89 {offsets = [22, 0], sizes = [1, 512], strides = [1, 1]} : vector<25x512xbf16> to vector<1x512xbf16>
      %c2_118 = arith.constant 2 : index
      %c1_119 = arith.constant 1 : index
      %c0_120 = arith.constant 0 : index
      %151 = vector.load %arg14[%c2_118, %c1_119, %c0_120] : memref<3x2x1536xbf16, #tpu.memory_space<vmem>>, vector<1x1x512xbf16>
      %152 = vector.shape_cast %151 : vector<1x1x512xbf16> to vector<1x512xbf16>
      %153 = vector.shape_cast %150 : vector<1x512xbf16> to vector<1x1x512xbf16>
      tpu.vector_store %arg14[%c2_118, %c1_119, %c0_120], %153 {strides = array<i32>} : memref<3x2x1536xbf16, #tpu.memory_space<vmem>>, vector<1x1x512xbf16>,
      %154 = vector.extract_strided_slice %89 {offsets = [23, 0], sizes = [1, 512], strides = [1, 1]} : vector<25x512xbf16> to vector<1x512xbf16>
      %c2_121 = arith.constant 2 : index
      %c1_122 = arith.constant 1 : index
      %c512_123 = arith.constant 512 : index
      %155 = vector.load %arg14[%c2_121, %c1_122, %c512_123] : memref<3x2x1536xbf16, #tpu.memory_space<vmem>>, vector<1x1x512xbf16>
      %156 = vector.shape_cast %155 : vector<1x1x512xbf16> to vector<1x512xbf16>
      %157 = vector.shape_cast %154 : vector<1x512xbf16> to vector<1x1x512xbf16>
      tpu.vector_store %arg14[%c2_121, %c1_122, %c512_123], %157 {strides = array<i32>} : memref<3x2x1536xbf16, #tpu.memory_space<vmem>>, vector<1x1x512xbf16>,
      %158 = vector.extract_strided_slice %89 {offsets = [24, 0], sizes = [1, 512], strides = [1, 1]} : vector<25x512xbf16> to vector<1x512xbf16>
      %c2_124 = arith.constant 2 : index
      %c1_125 = arith.constant 1 : index
      %c1024_126 = arith.constant 1024 : index
      %159 = vector.load %arg14[%c2_124, %c1_125, %c1024_126] : memref<3x2x1536xbf16, #tpu.memory_space<vmem>>, vector<1x1x512xbf16>
      %160 = vector.shape_cast %159 : vector<1x1x512xbf16> to vector<1x512xbf16>
      %161 = vector.shape_cast %158 : vector<1x512xbf16> to vector<1x1x512xbf16>
      tpu.vector_store %arg14[%c2_124, %c1_125, %c1024_126], %161 {strides = array<i32>} : memref<3x2x1536xbf16, #tpu.memory_space<vmem>>, vector<1x1x512xbf16>,
      %cst_127 = arith.constant 0.000000e+00 : f32
      %162 = vector.broadcast %cst_127 : f32 to vector<2x512xf32>
      %c0_128 = arith.constant 0 : index
      %c0_129 = arith.constant 0 : index
      %163 = vector.load %arg15[%c0_128, %c0_129] : memref<2x512xf32, #tpu.memory_space<vmem>>, vector<2x512xf32>
      tpu.vector_store %arg15[%c0_128, %c0_129], %162 {strides = array<i32>} : memref<2x512xf32, #tpu.memory_space<vmem>>, vector<2x512xf32>,
    } else {
    }
    %c0 = arith.constant 0 : index
    %c0_1 = arith.constant 0 : index
    %3 = vector.load %arg15[%c0, %c0_1] : memref<2x512xf32, #tpu.memory_space<vmem>>, vector<2x512xf32>
    %4 = arith.index_cast %arg1 : i32 to index
    %c0_2 = arith.constant 0 : index
    %c0_3 = arith.constant 0 : index
    %5 = vector.load %arg14[%4, %c0_2, %c0_3] : memref<3x2x1536xbf16, #tpu.memory_space<vmem>>, vector<1x2x1536xbf16>
    %6 = vector.shape_cast %5 : vector<1x2x1536xbf16> to vector<2x1536xbf16>
    %c0_4 = arith.constant 0 : index
    %c0_5 = arith.constant 0 : index
    %c0_6 = arith.constant 0 : index
    %c0_7 = arith.constant 0 : index
    %7 = vector.load %arg9[%c0_4, %c0_5, %c0_6, %c0_7] : memref<1x1x1536x512xbf16, #tpu.memory_space<vmem>>, vector<1x1x1536x512xbf16>
    %8 = vector.shape_cast %7 : vector<1x1x1536x512xbf16> to vector<1536x512xbf16>
    %cst = arith.constant dense<0.000000e+00> : vector<2x512xf32>
    %9 = tpu.matmul %6, %8, %cst {dimension_numbers = #tpu.dot_dimension_numbers<[1], [0], [0], [1], [0, 0, 1, 1], [], []>} : vector<2x1536xbf16>, vector<1536x512xbf16>, vector<2x512xf32> -> vector<2x512xf32>
    %10 = arith.addf %3, %9 : vector<2x512xf32>
    %c0_8 = arith.constant 0 : index
    %c0_9 = arith.constant 0 : index
    %11 = vector.load %arg15[%c0_8, %c0_9] : memref<2x512xf32, #tpu.memory_space<vmem>>, vector<2x512xf32>
    tpu.vector_store %arg15[%c0_8, %c0_9], %10 {strides = array<i32>} : memref<2x512xf32, #tpu.memory_space<vmem>>, vector<2x512xf32>,
    %c2_i32 = arith.constant 2 : i32
    %12 = arith.cmpi eq, %arg1, %c2_i32 : i32
    %13 = arith.extui %12 : i1 to i32
    %c0_i32_10 = arith.constant 0 : i32
    %14 = arith.cmpi ne, %13, %c0_i32_10 : i32
    scf.if %14 {
      %c0_11 = arith.constant 0 : index
      %c0_12 = arith.constant 0 : index
      %15 = vector.load %arg15[%c0_11, %c0_12] : memref<2x512xf32, #tpu.memory_space<vmem>>, vector<2x512xf32>
      %c0_13 = arith.constant 0 : index
      %c0_14 = arith.constant 0 : index
      %c0_15 = arith.constant 0 : index
      %16 = vector.load %arg10[%c0_13, %c0_14, %c0_15] : memref<1x1x512xf32, #tpu.memory_space<vmem>>, vector<1x1x512xf32>
      %17 = vector.shape_cast %16 : vector<1x1x512xf32> to vector<1x512xf32>
      %18 = vector.broadcast %17 : vector<1x512xf32> to vector<2x512xf32>
      %19 = arith.addf %15, %18 : vector<2x512xf32>
      %cst_16 = arith.constant 0.000000e+00 : f32
      %20 = vector.broadcast %cst_16 : f32 to vector<2x512xf32>
      %21 = arith.maximumf %19, %20 : vector<2x512xf32>
      %22 = arith.truncf %21 : vector<2x512xf32> to vector<2x512xbf16>
      %c0_17 = arith.constant 0 : index
      %c0_18 = arith.constant 0 : index
      %c0_19 = arith.constant 0 : index
      %23 = vector.load %arg11[%c0_17, %c0_18, %c0_19] : memref<1x512x128xbf16, #tpu.memory_space<vmem>>, vector<1x512x128xbf16>
      %24 = vector.shape_cast %23 : vector<1x512x128xbf16> to vector<512x128xbf16>
      %cst_20 = arith.constant dense<0.000000e+00> : vector<2x128xf32>
      %25 = tpu.matmul %22, %24, %cst_20 {dimension_numbers = #tpu.dot_dimension_numbers<[1], [0], [0], [1], [0, 0, 1, 1], [], []>} : vector<2x512xbf16>, vector<512x128xbf16>, vector<2x128xf32> -> vector<2x128xf32>
      %c0_21 = arith.constant 0 : index
      %c0_22 = arith.constant 0 : index
      %c0_23 = arith.constant 0 : index
      %26 = vector.load %arg12[%c0_21, %c0_22, %c0_23] : memref<1x1x128xf32, #tpu.memory_space<vmem>>, vector<1x1x128xf32>
      %27 = vector.shape_cast %26 : vector<1x1x128xf32> to vector<1x128xf32>
      %28 = vector.broadcast %27 : vector<1x128xf32> to vector<2x128xf32>
      %29 = arith.addf %25, %28 : vector<2x128xf32>
      %c0_24 = arith.constant 0 : index
      %c0_25 = arith.constant 0 : index
      %c0_26 = arith.constant 0 : index
      %30 = vector.load %arg13[%c0_24, %c0_25, %c0_26] : memref<1x2x128xf32, #tpu.memory_space<vmem>>, vector<1x2x128xf32>
      %31 = vector.shape_cast %30 : vector<1x2x128xf32> to vector<2x128xf32>
      %32 = vector.shape_cast %29 : vector<2x128xf32> to vector<1x2x128xf32>
      tpu.vector_store %arg13[%c0_24, %c0_25, %c0_26], %32 {strides = array<i32>} : memref<1x2x128xf32, #tpu.memory_space<vmem>>, vector<1x2x128xf32>,
    } else {
    }
    return
  }
  func.func @transform_0(%arg0: i32, %arg1: i32) -> (i32, i32) {
    %c0_i32 = arith.constant 0 : i32
    %c0_i32_0 = arith.constant 0 : i32
    %c0_i32_1 = arith.constant 0 : i32
    return %c0_i32, %c0_i32_0 : i32, i32
  }
  func.func @transform_1(%arg0: i32, %arg1: i32) -> (i32, i32, i32, i32) {
    %c0_i32 = arith.constant 0 : i32
    %c0_i32_0 = arith.constant 0 : i32
    %c0_i32_1 = arith.constant 0 : i32
    %c0_i32_2 = arith.constant 0 : i32
    return %arg0, %c0_i32, %c0_i32_0, %c0_i32_1 : i32, i32, i32, i32
  }
  func.func @transform_2(%arg0: i32, %arg1: i32) -> (i32, i32, i32) {
    %c0_i32 = arith.constant 0 : i32
    %c0_i32_0 = arith.constant 0 : i32
    %c0_i32_1 = arith.constant 0 : i32
    return %arg0, %c0_i32, %c0_i32_0 : i32, i32, i32
  }
  func.func @transform_3(%arg0: i32, %arg1: i32) -> (i32, i32, i32, i32) {
    %c0_i32 = arith.constant 0 : i32
    %c0_i32_0 = arith.constant 0 : i32
    %c0_i32_1 = arith.constant 0 : i32
    %c0_i32_2 = arith.constant 0 : i32
    return %arg0, %c0_i32, %c0_i32_0, %c0_i32_1 : i32, i32, i32, i32
  }
  func.func @transform_4(%arg0: i32, %arg1: i32) -> (i32, i32, i32) {
    %c0_i32 = arith.constant 0 : i32
    %c0_i32_0 = arith.constant 0 : i32
    %c0_i32_1 = arith.constant 0 : i32
    return %arg0, %c0_i32, %c0_i32_0 : i32, i32, i32
  }
  func.func @transform_5(%arg0: i32, %arg1: i32) -> (i32, i32, i32, i32) {
    %c0_i32 = arith.constant 0 : i32
    %c0_i32_0 = arith.constant 0 : i32
    %c0_i32_1 = arith.constant 0 : i32
    %c0_i32_2 = arith.constant 0 : i32
    return %arg0, %c0_i32, %c0_i32_0, %c0_i32_1 : i32, i32, i32, i32
  }
  func.func @transform_6(%arg0: i32, %arg1: i32) -> (i32, i32, i32) {
    %c0_i32 = arith.constant 0 : i32
    %c0_i32_0 = arith.constant 0 : i32
    %c0_i32_1 = arith.constant 0 : i32
    return %arg0, %c0_i32, %c0_i32_0 : i32, i32, i32
  }
  func.func @transform_7(%arg0: i32, %arg1: i32) -> (i32, i32, i32, i32) {
    %c0_i32 = arith.constant 0 : i32
    %c0_i32_0 = arith.constant 0 : i32
    %c0_i32_1 = arith.constant 0 : i32
    return %arg0, %arg1, %c0_i32, %c0_i32_0 : i32, i32, i32, i32
  }
  func.func @transform_8(%arg0: i32, %arg1: i32) -> (i32, i32, i32) {
    %c0_i32 = arith.constant 0 : i32
    %c0_i32_0 = arith.constant 0 : i32
    %c0_i32_1 = arith.constant 0 : i32
    return %arg0, %c0_i32, %c0_i32_0 : i32, i32, i32
  }
  func.func @transform_9(%arg0: i32, %arg1: i32) -> (i32, i32, i32) {
    %c0_i32 = arith.constant 0 : i32
    %c0_i32_0 = arith.constant 0 : i32
    %c0_i32_1 = arith.constant 0 : i32
    return %arg0, %c0_i32, %c0_i32_0 : i32, i32, i32
  }
  func.func @transform_10(%arg0: i32, %arg1: i32) -> (i32, i32, i32) {
    %c0_i32 = arith.constant 0 : i32
    %c0_i32_0 = arith.constant 0 : i32
    %c0_i32_1 = arith.constant 0 : i32
    return %arg0, %c0_i32, %c0_i32_0 : i32, i32, i32
  }
  func.func @transform_11(%arg0: i32, %arg1: i32) -> (i32, i32, i32) {
    %c0_i32 = arith.constant 0 : i32
    %c0_i32_0 = arith.constant 0 : i32
    %c0_i32_1 = arith.constant 0 : i32
    return %arg0, %c0_i32, %c0_i32_0 : i32, i32, i32
  }
}

</mosaic_0001>

<llo_original>
// kernel: fwd.1
$region0: #{fwd.1}
  #allocation0 [shape = 'u32[]', space=smem, size = 0x4, offset = 0x4, fixed_abs, tag = 'smem constant byte address 0x4 - core index']
  #allocation1 [shape = 'u32[144,128]{1,0:T(1,128)}', space=vmem, size = 0x12000, scoped, tag = 'internal scratch']
  #allocation2 [shape = 'bf16[3,2,1536]{2,1,0:T(2,128)(2,1)}', space=vmem, size = 0x4800, scoped, tag = 'scratch operand']
  #allocation3 [shape = 'f32[2,512]{1,0:T(2,128)}', space=vmem, size = 0x1000, scoped, tag = 'scratch operand']
  %s0 = inlined_call_operand.vmem [shape: bf16[32,128], index: 0, kind: input, shape index: {}]
  %s1 = inlined_call_operand.hbm [shape: bf16[2,4,128,384], index: 1, kind: input, shape index: {}]
  %s2 = inlined_call_operand.hbm [shape: f32[2,1,384], index: 2, kind: input, shape index: {}]
  %s3 = inlined_call_operand.hbm [shape: bf16[2,4,384,512], index: 3, kind: input, shape index: {}]
  %s4 = inlined_call_operand.hbm [shape: f32[2,1,512], index: 4, kind: input, shape index: {}]
  %s5 = inlined_call_operand.hbm [shape: bf16[2,2,512,512], index: 5, kind: input, shape index: {}]
  %s6 = inlined_call_operand.hbm [shape: f32[2,1,512], index: 6, kind: input, shape index: {}]
  %s7 = inlined_call_operand.hbm [shape: bf16[2,3,1536,512], index: 7, kind: input, shape index: {}]
  %s8 = inlined_call_operand.hbm [shape: f32[2,1,512], index: 8, kind: input, shape index: {}]
  %s9 = inlined_call_operand.hbm [shape: bf16[2,512,128], index: 9, kind: input, shape index: {}]
  %s10 = inlined_call_operand.hbm [shape: f32[2,1,128], index: 10, kind: input, shape index: {}]
  %s11 = inlined_call_operand.vmem [shape: f32[2,2,128], index: 11, kind: output, shape index: {}]
  %s12 = sld [smem:[#allocation0]]
  $region125: #{fwd.1} parent=0
    _
  %s14 = ssub.s32 1, %s12
  %s15 = scalar_select 0, %s14, %s12
  $region1: #{fwd.1} parent=0
    #allocation4 [shape = 'u8[786432]{0}', space=vmem, size = 0xc0000, scoped, tag = 'input window, operand 1']
    #allocation5 [shape = 's32[2]{0}', space=sflag, size = 0x8, scoped, tag = 'scoped memory for fwd.1']
    #allocation6 [shape = 'u8[3072]{0}', space=vmem, size = 0xc00, scoped, tag = 'input window, operand 2']
    #allocation7 [shape = 's32[2]{0}', space=sflag, size = 0x8, scoped, tag = 'scoped memory for fwd.1']
    #allocation8 [shape = 'u8[3145728]{0}', space=vmem, size = 0x300000, scoped, tag = 'input window, operand 3']
    #allocation9 [shape = 'u8[4096]{0}', space=vmem, size = 0x1000, scoped, tag = 'input window, operand 4']
    #allocation10 [shape = 's32[2]{0}', space=sflag, size = 0x8, scoped, tag = 'scoped memory for fwd.1']
    #allocation11 [shape = 'u8[2097152]{0}', space=vmem, size = 0x200000, scoped, tag = 'input window, operand 5']
    #allocation12 [shape = 'u8[4096]{0}', space=vmem, size = 0x1000, scoped, tag = 'input window, operand 6']
    #allocation13 [shape = 's32[2]{0}', space=sflag, size = 0x8, scoped, tag = 'scoped memory for fwd.1']
    #allocation14 [shape = 'u8[3145728]{0}', space=vmem, size = 0x300000, scoped, tag = 'input window, operand 7']
    #allocation15 [shape = 'u8[4096]{0}', space=vmem, size = 0x1000, scoped, tag = 'input window, operand 8']
    #allocation16 [shape = 's32[2]{0}', space=sflag, size = 0x8, scoped, tag = 'scoped memory for fwd.1']
    #allocation17 [shape = 'u8[262144]{0}', space=vmem, size = 0x40000, scoped, tag = 'input window, operand 9']
    #allocation18 [shape = 'u8[1024]{0}', space=vmem, size = 0x400, scoped, tag = 'input window, operand 10']
    #allocation19 [shape = 's32[2]{0}', space=sflag, size = 0x8, scoped, tag = 'scoped memory for fwd.1']
    %16 = vsyncpa [#allocation5], 0
    %s17 = scalar_lea.sflag [#allocation5], 1
    %18 = vsyncpa %s17, 0
    %19 = vsyncpa [#allocation7], 0
    %s20 = scalar_lea.sflag [#allocation7], 1
    %21 = vsyncpa %s20, 0
    %22 = vsyncpa [#allocation10], 0
    %s23 = scalar_lea.sflag [#allocation10], 1
    %24 = vsyncpa %s23, 0
    %25 = vsyncpa [#allocation13], 0
    %s26 = scalar_lea.sflag [#allocation13], 1
    %27 = vsyncpa %s26, 0
    %28 = vsyncpa [#allocation16], 0
    %s29 = scalar_lea.sflag [#allocation16], 1
    %30 = vsyncpa %s29, 0
    %31 = vsyncpa [#allocation19], 0
    %s32 = scalar_lea.sflag [#allocation19], 1
    %33 = vsyncpa %s32, 0
    loop: start=0, step=1, limit=8
    $region2: #{fwd.1} parent=1 // loop_pre_header
      _
    $region3: #{fwd.1} parent=1 // loop_header
      %s35 = sphi 0, %s39
      %p36 = scmp.ge.s32.totalorder %s35, 8
      %s42 = sphi 0, %s54
      %s43 = sphi 0, %s50
      %s44 = sphi 0, %s42
      %s45 = sphi 0, %s43
      %s46 = sphi 0, %s44
      %s47 = sphi 0, %s45
      %s55 = sphi 0, %s55
      %s57 = sphi 0, %s55
      %s58 = sphi 0, %s57
      %s72 = sphi 0, %s58
      %s78 = sphi 0, %s80
      %s81 = sphi 0, %s78
      %s82 = sphi 0, %s81
      %s98 = sphi 0, %s82
      %s104 = sphi 0, %s106
      %s107 = sphi 0, %s104
      %s108 = sphi 0, %s107
      %s124 = sphi 0, %s108
      %s130 = sphi 0, %s132
      %s133 = sphi 0, %s130
      %s134 = sphi 0, %s133
      %s150 = sphi 0, %s134
      %s156 = sphi 0, %s158
      %s159 = sphi 0, %s156
      %s160 = sphi 0, %s159
      %s176 = sphi 0, %s160
      %s182 = sphi 0, %s184
      %s185 = sphi 0, %s182
      %s186 = sphi 0, %s185
      %s202 = sphi 0, %s186
      %s208 = sphi 0, %s210
      %s211 = sphi 0, %s208
      %s212 = sphi 0, %s211
      %s228 = sphi 0, %s212
      %s236 = sphi 0, %s238
      %s239 = sphi 0, %s236
      %s240 = sphi 0, %s239
      %s256 = sphi 0, %s240
      %s262 = sphi 0, %s264
      %s265 = sphi 0, %s262
      %s266 = sphi 0, %s265
      %s282 = sphi 0, %s266
      %s288 = sphi 0, %s290
      %s291 = sphi 0, %s288
      %s292 = sphi 0, %s291
      %s308 = sphi 0, %s292
      %s314 = sphi 0, %s316
      %s317 = sphi 0, %s314
      %s318 = sphi 0, %s317
      %s334 = sphi 0, %s318
      %s340 = sphi 0, %s342
      %s343 = sphi 0, %s340
      %s344 = sphi 0, %s343
      %s360 = sphi 0, %s344
    $region4: #{fwd.1} parent=1 // loop_header_branch
      %38 = sbr.rel (%p36) target = $region8
    $region5: #{fwd.1} parent=1 // loop_body
      %s40 = ssub.s32 %s35, 1
      %s41 = ssub.s32 %s35, 2
      %s48 = sadd.s32 1, %s43
      %p49 = scmp.ge.s32.totalorder %s48, 3
      %s50 = scalar_select %p49, 0, %s48
      %s51 = sadd.s32 1, %s42
      %s52 = scalar_select %p49, %s51, %s42
      %p53 = scmp.ge.s32.totalorder %s52, 2
      %s54 = scalar_select %p53, 0, %s52
      %s56 = sadd.s32 %s55, 1
      %p59 = scmp.eq.s32.totalorder %s35, 5
      %p60 = scmp.ne.s32.totalorder %s55, %s57
      %p61 = scmp.eq.s32.totalorder %s35, 0
      %p62 = por %p60, %p61
      %p63 = scmp.ne.s32.totalorder %s55, %s57
      %p64 = scmp.eq.s32.totalorder %s40, 5
      %p65 = por %p63, %p64
      %p66 = scmp.ne.s32.totalorder %s57, %s58
      %p67 = scmp.eq.s32.totalorder %s40, 0
      %p68 = por %p66, %p67
      %p69 = scmp.ne.s32.totalorder %s57, %s58
      %p70 = scmp.eq.s32.totalorder %s41, 5
      %p71 = por %p69, %p70
      %p73 = scmp.ne.s32.totalorder %s58, %s72
      %p74 = scmp.eq.s32.totalorder %s41, 0
      %p75 = por %p73, %p74
      %s76 = ssub.s32 %s42, %s54
      %p77 = scmp.eq.s32.totalorder %s76, 0
      %s79 = sadd.s32 %s78, 1
      %s80 = scalar_select %p77, %s78, %s79
      %p83 = pneg %p77
      %p84 = scmp.eq.s32.totalorder %s35, 5
      %p85 = por %p83, %p84
      %p86 = scmp.ne.s32.totalorder %s78, %s81
      %p87 = scmp.eq.s32.totalorder %s35, 0
      %p88 = por %p86, %p87
      %p89 = scmp.ne.s32.totalorder %s78, %s81
      %p90 = scmp.eq.s32.totalorder %s40, 5
      %p91 = por %p89, %p90
      %p92 = scmp.ne.s32.totalorder %s81, %s82
      %p93 = scmp.eq.s32.totalorder %s40, 0
      %p94 = por %p92, %p93
      %p95 = scmp.ne.s32.totalorder %s81, %s82
      %p96 = scmp.eq.s32.totalorder %s41, 5
      %p97 = por %p95, %p96
      %p99 = scmp.ne.s32.totalorder %s82, %s98
      %p100 = scmp.eq.s32.totalorder %s41, 0
      %p101 = por %p99, %p100
      %s102 = ssub.s32 %s42, %s54
      %p103 = scmp.eq.s32.totalorder %s102, 0
      %s105 = sadd.s32 %s104, 1
      %s106 = scalar_select %p103, %s104, %s105
      %p109 = pneg %p103
      %p110 = scmp.eq.s32.totalorder %s35, 5
      %p111 = por %p109, %p110
      %p112 = scmp.ne.s32.totalorder %s104, %s107
      %p113 = scmp.eq.s32.totalorder %s35, 0
      %p114 = por %p112, %p113
      %p115 = scmp.ne.s32.totalorder %s104, %s107
      %p116 = scmp.eq.s32.totalorder %s40, 5
      %p117 = por %p115, %p116
      %p118 = scmp.ne.s32.totalorder %s107, %s108
      %p119 = scmp.eq.s32.totalorder %s40, 0
      %p120 = por %p118, %p119
      %p121 = scmp.ne.s32.totalorder %s107, %s108
      %p122 = scmp.eq.s32.totalorder %s41, 5
      %p123 = por %p121, %p122
      %p125 = scmp.ne.s32.totalorder %s108, %s124
      %p126 = scmp.eq.s32.totalorder %s41, 0
      %p127 = por %p125, %p126
      %s128 = ssub.s32 %s42, %s54
      %p129 = scmp.eq.s32.totalorder %s128, 0
      %s131 = sadd.s32 %s130, 1
      %s132 = scalar_select %p129, %s130, %s131
      %p135 = pneg %p129
      %p136 = scmp.eq.s32.totalorder %s35, 5
      %p137 = por %p135, %p136
      %p138 = scmp.ne.s32.totalorder %s130, %s133
      %p139 = scmp.eq.s32.totalorder %s35, 0
      %p140 = por %p138, %p139
      %p141 = scmp.ne.s32.totalorder %s130, %s133
      %p142 = scmp.eq.s32.totalorder %s40, 5
      %p143 = por %p141, %p142
      %p144 = scmp.ne.s32.totalorder %s133, %s134
      %p145 = scmp.eq.s32.totalorder %s40, 0
      %p146 = por %p144, %p145
      %p147 = scmp.ne.s32.totalorder %s133, %s134
      %p148 = scmp.eq.s32.totalorder %s41, 5
      %p149 = por %p147, %p148
      %p151 = scmp.ne.s32.totalorder %s134, %s150
      %p152 = scmp.eq.s32.totalorder %s41, 0
      %p153 = por %p151, %p152
      %s154 = ssub.s32 %s42, %s54
      %p155 = scmp.eq.s32.totalorder %s154, 0
      %s157 = sadd.s32 %s156, 1
      %s158 = scalar_select %p155, %s156, %s157
      %p161 = pneg %p155
      %p162 = scmp.eq.s32.totalorder %s35, 5
      %p163 = por %p161, %p162
      %p164 = scmp.ne.s32.totalorder %s156, %s159
      %p165 = scmp.eq.s32.totalorder %s35, 0
      %p166 = por %p164, %p165
      %p167 = scmp.ne.s32.totalorder %s156, %s159
      %p168 = scmp.eq.s32.totalorder %s40, 5
      %p169 = por %p167, %p168
      %p170 = scmp.ne.s32.totalorder %s159, %s160
      %p171 = scmp.eq.s32.totalorder %s40, 0
      %p172 = por %p170, %p171
      %p173 = scmp.ne.s32.totalorder %s159, %s160
      %p174 = scmp.eq.s32.totalorder %s41, 5
      %p175 = por %p173, %p174
      %p177 = scmp.ne.s32.totalorder %s160, %s176
      %p178 = scmp.eq.s32.totalorder %s41, 0
      %p179 = por %p177, %p178
      %s180 = ssub.s32 %s42, %s54
      %p181 = scmp.eq.s32.totalorder %s180, 0
      %s183 = sadd.s32 %s182, 1
      %s184 = scalar_select %p181, %s182, %s183
      %p187 = pneg %p181
      %p188 = scmp.eq.s32.totalorder %s35, 5
      %p189 = por %p187, %p188
      %p190 = scmp.ne.s32.totalorder %s182, %s185
      %p191 = scmp.eq.s32.totalorder %s35, 0
      %p192 = por %p190, %p191
      %p193 = scmp.ne.s32.totalorder %s182, %s185
      %p194 = scmp.eq.s32.totalorder %s40, 5
      %p195 = por %p193, %p194
      %p196 = scmp.ne.s32.totalorder %s185, %s186
      %p197 = scmp.eq.s32.totalorder %s40, 0
      %p198 = por %p196, %p197
      %p199 = scmp.ne.s32.totalorder %s185, %s186
      %p200 = scmp.eq.s32.totalorder %s41, 5
      %p201 = por %p199, %p200
      %p203 = scmp.ne.s32.totalorder %s186, %s202
      %p204 = scmp.eq.s32.totalorder %s41, 0
      %p205 = por %p203, %p204
      %s206 = ssub.s32 %s42, %s54
      %p207 = scmp.eq.s32.totalorder %s206, 0
      %s209 = sadd.s32 %s208, 1
      %s210 = scalar_select %p207, %s208, %s209
      %p213 = pneg %p207
      %p214 = scmp.eq.s32.totalorder %s35, 5
      %p215 = por %p213, %p214
      %p216 = scmp.ne.s32.totalorder %s208, %s211
      %p217 = scmp.eq.s32.totalorder %s35, 0
      %p218 = por %p216, %p217
      %p219 = scmp.ne.s32.totalorder %s208, %s211
      %p220 = scmp.eq.s32.totalorder %s40, 5
      %p221 = por %p219, %p220
      %p222 = scmp.ne.s32.totalorder %s211, %s212
      %p223 = scmp.eq.s32.totalorder %s40, 0
      %p224 = por %p222, %p223
      %p225 = scmp.ne.s32.totalorder %s211, %s212
      %p226 = scmp.eq.s32.totalorder %s41, 5
      %p227 = por %p225, %p226
      %p229 = scmp.ne.s32.totalorder %s212, %s228
      %p230 = scmp.eq.s32.totalorder %s41, 0
      %p231 = por %p229, %p230
      %s232 = ssub.s32 %s42, %s54
      %s233 = ssub.s32 %s43, %s50
      %s234 = sor.u32 %s232, %s233
      %p235 = scmp.eq.s32.totalorder %s234, 0
      %s237 = sadd.s32 %s236, 1
      %s238 = scalar_select %p235, %s236, %s237
      %p241 = pneg %p235
      %p242 = scmp.eq.s32.totalorder %s35, 5
      %p243 = por %p241, %p242
      %p244 = scmp.ne.s32.totalorder %s236, %s239
      %p245 = scmp.eq.s32.totalorder %s35, 0
      %p246 = por %p244, %p245
      %p247 = scmp.ne.s32.totalorder %s236, %s239
      %p248 = scmp.eq.s32.totalorder %s40, 5
      %p249 = por %p247, %p248
      %p250 = scmp.ne.s32.totalorder %s239, %s240
      %p251 = scmp.eq.s32.totalorder %s40, 0
      %p252 = por %p250, %p251
      %p253 = scmp.ne.s32.totalorder %s239, %s240
      %p254 = scmp.eq.s32.totalorder %s41, 5
      %p255 = por %p253, %p254
      %p257 = scmp.ne.s32.totalorder %s240, %s256
      %p258 = scmp.eq.s32.totalorder %s41, 0
      %p259 = por %p257, %p258
      %s260 = ssub.s32 %s42, %s54
      %p261 = scmp.eq.s32.totalorder %s260, 0
      %s263 = sadd.s32 %s262, 1
      %s264 = scalar_select %p261, %s262, %s263
      %p267 = pneg %p261
      %p268 = scmp.eq.s32.totalorder %s35, 5
      %p269 = por %p267, %p268
      %p270 = scmp.ne.s32.totalorder %s262, %s265
      %p271 = scmp.eq.s32.totalorder %s35, 0
      %p272 = por %p270, %p271
      %p273 = scmp.ne.s32.totalorder %s262, %s265
      %p274 = scmp.eq.s32.totalorder %s40, 5
      %p275 = por %p273, %p274
      %p276 = scmp.ne.s32.totalorder %s265, %s266
      %p277 = scmp.eq.s32.totalorder %s40, 0
      %p278 = por %p276, %p277
      %p279 = scmp.ne.s32.totalorder %s265, %s266
      %p280 = scmp.eq.s32.totalorder %s41, 5
      %p281 = por %p279, %p280
      %p283 = scmp.ne.s32.totalorder %s266, %s282
      %p284 = scmp.eq.s32.totalorder %s41, 0
      %p285 = por %p283, %p284
      %s286 = ssub.s32 %s42, %s54
      %p287 = scmp.eq.s32.totalorder %s286, 0
      %s289 = sadd.s32 %s288, 1
      %s290 = scalar_select %p287, %s288, %s289
      %p293 = pneg %p287
      %p294 = scmp.eq.s32.totalorder %s35, 5
      %p295 = por %p293, %p294
      %p296 = scmp.ne.s32.totalorder %s288, %s291
      %p297 = scmp.eq.s32.totalorder %s35, 0
      %p298 = por %p296, %p297
      %p299 = scmp.ne.s32.totalorder %s288, %s291
      %p300 = scmp.eq.s32.totalorder %s40, 5
      %p301 = por %p299, %p300
      %p302 = scmp.ne.s32.totalorder %s291, %s292
      %p303 = scmp.eq.s32.totalorder %s40, 0
      %p304 = por %p302, %p303
      %p305 = scmp.ne.s32.totalorder %s291, %s292
      %p306 = scmp.eq.s32.totalorder %s41, 5
      %p307 = por %p305, %p306
      %p309 = scmp.ne.s32.totalorder %s292, %s308
      %p310 = scmp.eq.s32.totalorder %s41, 0
      %p311 = por %p309, %p310
      %s312 = ssub.s32 %s42, %s54
      %p313 = scmp.eq.s32.totalorder %s312, 0
      %s315 = sadd.s32 %s314, 1
      %s316 = scalar_select %p313, %s314, %s315
      %p319 = pneg %p313
      %p320 = scmp.eq.s32.totalorder %s35, 5
      %p321 = por %p319, %p320
      %p322 = scmp.ne.s32.totalorder %s314, %s317
      %p323 = scmp.eq.s32.totalorder %s35, 0
      %p324 = por %p322, %p323
      %p325 = scmp.ne.s32.totalorder %s314, %s317
      %p326 = scmp.eq.s32.totalorder %s40, 5
      %p327 = por %p325, %p326
      %p328 = scmp.ne.s32.totalorder %s317, %s318
      %p329 = scmp.eq.s32.totalorder %s40, 0
      %p330 = por %p328, %p329
      %p331 = scmp.ne.s32.totalorder %s317, %s318
      %p332 = scmp.eq.s32.totalorder %s41, 5
      %p333 = por %p331, %p332
      %p335 = scmp.ne.s32.totalorder %s318, %s334
      %p336 = scmp.eq.s32.totalorder %s41, 0
      %p337 = por %p335, %p336
      %s338 = ssub.s32 %s42, %s54
      %p339 = scmp.eq.s32.totalorder %s338, 0
      %s341 = sadd.s32 %s340, 1
      %s342 = scalar_select %p339, %s340, %s341
      %p345 = pneg %p339
      %p346 = scmp.eq.s32.totalorder %s35, 5
      %p347 = por %p345, %p346
      %p348 = scmp.ne.s32.totalorder %s340, %s343
      %p349 = scmp.eq.s32.totalorder %s35, 0
      %p350 = por %p348, %p349
      %p351 = scmp.ne.s32.totalorder %s340, %s343
      %p352 = scmp.eq.s32.totalorder %s40, 5
      %p353 = por %p351, %p352
      %p354 = scmp.ne.s32.totalorder %s343, %s344
      %p355 = scmp.eq.s32.totalorder %s40, 0
      %p356 = por %p354, %p355
      %p357 = scmp.ne.s32.totalorder %s343, %s344
      %p358 = scmp.eq.s32.totalorder %s41, 5
      %p359 = por %p357, %p358
      %p361 = scmp.ne.s32.totalorder %s344, %s360
      %p362 = scmp.eq.s32.totalorder %s41, 0
      %p363 = por %p361, %p362
      %p364 = scmp.le.s32.totalorder 1, %s35
      %p365 = scmp.lt.s32.totalorder %s35, 7
      %p366 = pnand %p364, %p365
      %p367 = pneg %p366
      // Predicated region
      $region9: #{fwd.1} parent=5 // pred_check
        _
      $region10: #{fwd.1} parent=5 // pred_check_branch
        %369 = sbr.rel (%p366) target = $region12
      $region11: #{fwd.1} parent=5 // pred_region
        %s370 = ssub.s32 %s35, 1
        // Predicated region
        $region13: #{fwd.1} parent=11 // pred_check
          %p371 = pneg %p68
        $region14: #{fwd.1} parent=11 // pred_check_branch
          %373 = sbr.rel (%p371) target = $region16
        $region15: #{fwd.1} parent=11 // pred_region
          _
        $region16: #{fwd.1} parent=11 // pred_fallthru
          _
      $region12: #{fwd.1} parent=5 // pred_fallthru
        _
      %p374 = scmp.lt.s32.totalorder %s35, 6
      // Predicated region
      $region17: #{fwd.1} parent=5 // pred_check
        %p375 = pneg %p374
      $region18: #{fwd.1} parent=5 // pred_check_branch
        %377 = sbr.rel (%p375) target = $region20
      $region19: #{fwd.1} parent=5 // pred_region
        // Predicated region
        $region21: #{fwd.1} parent=19 // pred_check
          %p378 = pneg %p88
        $region22: #{fwd.1} parent=19 // pred_check_branch
          %380 = sbr.rel (%p378) target = $region24
        $region23: #{fwd.1} parent=19 // pred_region
          %s381 = sand.u32 %s78, 1
          %s382 = scalar_lea.sflag [#allocation5], %s381
          %s383 = sand.u32 %s78, 1
          %s384 = smul.addr %s383, 768
          %s385 = scalar_lea.vmem [#allocation4], %s384
          %s387 = ssub.s32 12288, 12288
          %388 = vsyncadd %s382, %s387
          %s389 = smul.addr %s42, 192
          %s390 = smul.addr %s389, 64
          %s391 = scalar_lea.hbm %s1, %s390
          %s392 = sshll.u32 %s385, 4
          %s393 = int_to_ptr.vmem [resolvable:$true] %s392
          %398 = dma.hbm_to_vmem [thread:$0]  %s391, 12288, %s393, %s382, 192, 192, 12
        $region24: #{fwd.1} parent=19 // pred_fallthru
          _
        // Predicated region
        $region25: #{fwd.1} parent=19 // pred_check
          %p399 = pneg %p114
        $region26: #{fwd.1} parent=19 // pred_check_branch
          %401 = sbr.rel (%p399) target = $region28
        $region27: #{fwd.1} parent=19 // pred_region
          %s402 = sand.u32 %s35, 1
          %s403 = scalar_lea.sflag [#allocation7], %s402
          %s404 = sand.u32 %s104, 1
          %s405 = smul.addr %s404, 3
          %s406 = scalar_lea.vmem [#allocation6], %s405
          %s408 = ssub.s32 48, 48
          %409 = vsyncadd %s403, %s408
          %s410 = smul.addr %s42, 3
          %s411 = smul.addr %s410, 16
          %s412 = scalar_lea.hbm %s2, %s411
          %s414 = sshll.u32 %s406, 4
          %s415 = int_to_ptr.vmem [resolvable:$true] %s414
          %417 = dma.hbm_to_vmem [thread:$0]  %s412, 48, %s415, %s403
        $region28: #{fwd.1} parent=19 // pred_fallthru
          _
        // Predicated region
        $region29: #{fwd.1} parent=19 // pred_check
          %p418 = pneg %p140
        $region30: #{fwd.1} parent=19 // pred_check_branch
          %420 = sbr.rel (%p418) target = $region32
        $region31: #{fwd.1} parent=19 // pred_region
          %s421 = sand.u32 %s35, 1
          %s422 = scalar_lea.sflag [#allocation7], %s421
          %s423 = sand.u32 %s130, 1
          %s424 = smul.addr %s423, 3072
          %s425 = scalar_lea.vmem [#allocation8], %s424
          %s427 = ssub.s32 49152, 49152
          %428 = vsyncadd %s422, %s427
          %s429 = smul.addr %s42, 768
          %s430 = smul.addr %s429, 64
          %s431 = scalar_lea.hbm %s3, %s430
          %s432 = sshll.u32 %s425, 4
          %s433 = int_to_ptr.vmem [resolvable:$true] %s432
          %438 = dma.hbm_to_vmem [thread:$0]  %s431, 49152, %s433, %s422, 256, 256, 16
        $region32: #{fwd.1} parent=19 // pred_fallthru
          _
        // Predicated region
        $region33: #{fwd.1} parent=19 // pred_check
          %p439 = pneg %p166
        $region34: #{fwd.1} parent=19 // pred_check_branch
          %441 = sbr.rel (%p439) target = $region36
        $region35: #{fwd.1} parent=19 // pred_region
          %s442 = sand.u32 %s35, 1
          %s443 = scalar_lea.sflag [#allocation10], %s442
          %s444 = sand.u32 %s156, 1
          %s445 = smul.addr %s444, 4
          %s446 = scalar_lea.vmem [#allocation9], %s445
          %s448 = ssub.s32 64, 64
          %449 = vsyncadd %s443, %s448
          %s450 = smul.addr %s42, 4
          %s451 = smul.addr %s450, 16
          %s452 = scalar_lea.hbm %s4, %s451
          %s454 = sshll.u32 %s446, 4
          %s455 = int_to_ptr.vmem [resolvable:$true] %s454
          %457 = dma.hbm_to_vmem [thread:$0]  %s452, 64, %s455, %s443
        $region36: #{fwd.1} parent=19 // pred_fallthru
          _
        // Predicated region
        $region37: #{fwd.1} parent=19 // pred_check
          %p458 = pneg %p192
        $region38: #{fwd.1} parent=19 // pred_check_branch
          %460 = sbr.rel (%p458) target = $region40
        $region39: #{fwd.1} parent=19 // pred_region
          %s461 = sand.u32 %s35, 1
          %s462 = scalar_lea.sflag [#allocation10], %s461
          %s463 = sand.u32 %s182, 1
          %s464 = smul.addr %s463, 2048
          %s465 = scalar_lea.vmem [#allocation11], %s464
          %s467 = ssub.s32 32768, 32768
          %468 = vsyncadd %s462, %s467
          %s469 = smul.addr %s42, 512
          %s470 = smul.addr %s469, 64
          %s471 = scalar_lea.hbm %s5, %s470
          %s472 = sshll.u32 %s465, 4
          %s473 = int_to_ptr.vmem [resolvable:$true] %s472
          %478 = dma.hbm_to_vmem [thread:$0]  %s471, 32768, %s473, %s462, 256, 256, 16
        $region40: #{fwd.1} parent=19 // pred_fallthru
          _
        // Predicated region
        $region41: #{fwd.1} parent=19 // pred_check
          %p479 = pneg %p218
        $region42: #{fwd.1} parent=19 // pred_check_branch
          %481 = sbr.rel (%p479) target = $region44
        $region43: #{fwd.1} parent=19 // pred_region
          %s482 = sand.u32 %s35, 1
          %s483 = scalar_lea.sflag [#allocation13], %s482
          %s484 = sand.u32 %s208, 1
          %s485 = smul.addr %s484, 4
          %s486 = scalar_lea.vmem [#allocation12], %s485
          %s488 = ssub.s32 64, 64
          %489 = vsyncadd %s483, %s488
          %s490 = smul.addr %s42, 4
          %s491 = smul.addr %s490, 16
          %s492 = scalar_lea.hbm %s6, %s491
          %s494 = sshll.u32 %s486, 4
          %s495 = int_to_ptr.vmem [resolvable:$true] %s494
          %497 = dma.hbm_to_vmem [thread:$0]  %s492, 64, %s495, %s483
        $region44: #{fwd.1} parent=19 // pred_fallthru
          _
        // Predicated region
        $region45: #{fwd.1} parent=19 // pred_check
          %p498 = pneg %p246
        $region46: #{fwd.1} parent=19 // pred_check_branch
          %500 = sbr.rel (%p498) target = $region48
        $region47: #{fwd.1} parent=19 // pred_region
          %s501 = sand.u32 %s35, 1
          %s502 = scalar_lea.sflag [#allocation13], %s501
          %s503 = sand.u32 %s236, 1
          %s504 = smul.addr %s503, 3072
          %s505 = scalar_lea.vmem [#allocation14], %s504
          %s507 = ssub.s32 49152, 49152
          %508 = vsyncadd %s502, %s507
          %s509 = smul.addr %s43, 768
          %s510 = smul.addr %s42, 2304
          %s511 = sadd.s32 %s509, %s510
          %s512 = smul.addr %s511, 64
          %s513 = scalar_lea.hbm %s7, %s512
          %s514 = sshll.u32 %s505, 4
          %s515 = int_to_ptr.vmem [resolvable:$true] %s514
          %520 = dma.hbm_to_vmem [thread:$0]  %s513, 49152, %s515, %s502, 256, 256, 16
        $region48: #{fwd.1} parent=19 // pred_fallthru
          _
        // Predicated region
        $region49: #{fwd.1} parent=19 // pred_check
          %p521 = pneg %p272
        $region50: #{fwd.1} parent=19 // pred_check_branch
          %523 = sbr.rel (%p521) target = $region52
        $region51: #{fwd.1} parent=19 // pred_region
          %s524 = sand.u32 %s35, 1
          %s525 = scalar_lea.sflag [#allocation16], %s524
          %s526 = sand.u32 %s262, 1
          %s527 = smul.addr %s526, 4
          %s528 = scalar_lea.vmem [#allocation15], %s527
          %s530 = ssub.s32 64, 64
          %531 = vsyncadd %s525, %s530
          %s532 = smul.addr %s42, 4
          %s533 = smul.addr %s532, 16
          %s534 = scalar_lea.hbm %s8, %s533
          %s536 = sshll.u32 %s528, 4
          %s537 = int_to_ptr.vmem [resolvable:$true] %s536
          %539 = dma.hbm_to_vmem [thread:$0]  %s534, 64, %s537, %s525
        $region52: #{fwd.1} parent=19 // pred_fallthru
          _
        // Predicated region
        $region53: #{fwd.1} parent=19 // pred_check
          %p540 = pneg %p298
        $region54: #{fwd.1} parent=19 // pred_check_branch
          %542 = sbr.rel (%p540) target = $region56
        $region55: #{fwd.1} parent=19 // pred_region
          %s543 = sand.u32 %s35, 1
          %s544 = scalar_lea.sflag [#allocation16], %s543
          %s545 = sand.u32 %s288, 1
          %s546 = smul.addr %s545, 256
          %s547 = scalar_lea.vmem [#allocation17], %s546
          %s549 = ssub.s32 4096, 4096
          %550 = vsyncadd %s544, %s549
          %s551 = smul.addr %s42, 64
          %s552 = smul.addr %s551, 64
          %s553 = scalar_lea.hbm %s9, %s552
          %s554 = sshll.u32 %s547, 4
          %s555 = int_to_ptr.vmem [resolvable:$true] %s554
          %560 = dma.hbm_to_vmem [thread:$0]  %s553, 4096, %s555, %s544, 64, 64, 4
        $region56: #{fwd.1} parent=19 // pred_fallthru
          _
        // Predicated region
        $region57: #{fwd.1} parent=19 // pred_check
          %p561 = pneg %p324
        $region58: #{fwd.1} parent=19 // pred_check_branch
          %563 = sbr.rel (%p561) target = $region60
        $region59: #{fwd.1} parent=19 // pred_region
          %s564 = sand.u32 %s314, 1
          %s565 = scalar_lea.sflag [#allocation19], %s564
          %s566 = sand.u32 %s314, 1
          %s567 = scalar_lea.vmem [#allocation18], %s566
          %s569 = ssub.s32 16, 16
          %570 = vsyncadd %s565, %s569
          %s571 = smul.addr %s42, 16
          %s572 = scalar_lea.hbm %s10, %s571
          %s574 = sshll.u32 %s567, 4
          %s575 = int_to_ptr.vmem [resolvable:$true] %s574
          %577 = dma.hbm_to_vmem [thread:$0]  %s572, 16, %s575, %s565
        $region60: #{fwd.1} parent=19 // pred_fallthru
          _
      $region20: #{fwd.1} parent=5 // pred_fallthru
        _
      %p578 = scmp.le.s32.totalorder 1, %s35
      %p579 = scmp.lt.s32.totalorder %s35, 7
      %p580 = pnand %p578, %p579
      %p581 = pneg %p580
      // Predicated region
      $region61: #{fwd.1} parent=5 // pred_check
        _
      $region62: #{fwd.1} parent=5 // pred_check_branch
        %583 = sbr.rel (%p580) target = $region64
      $region63: #{fwd.1} parent=5 // pred_region
        %s584 = ssub.s32 %s35, 1
        %s585 = sand.u32 %s81, 1
        %s586 = scalar_lea.sflag [#allocation5], %s585
        %s587 = sand.u32 %s81, 1
        %s588 = smul.addr %s587, 768
        %s589 = scalar_lea.vmem [#allocation4], %s588
        // Predicated region
        $region65: #{fwd.1} parent=63 // pred_check
          %p590 = pneg %p94
        $region66: #{fwd.1} parent=63 // pred_check_branch
          %592 = sbr.rel (%p590) target = $region68
        $region67: #{fwd.1} parent=63 // pred_region
          %593 = dma.done %s586, 12288
        $region68: #{fwd.1} parent=63 // pred_fallthru
          _
        %s594 = sand.u32 %s40, 1
        %s595 = scalar_lea.sflag [#allocation7], %s594
        %s596 = sand.u32 %s107, 1
        %s597 = smul.addr %s596, 3
        %s598 = scalar_lea.vmem [#allocation6], %s597
        // Predicated region
        $region69: #{fwd.1} parent=63 // pred_check
          %p599 = pneg %p120
        $region70: #{fwd.1} parent=63 // pred_check_branch
          %601 = sbr.rel (%p599) target = $region72
        $region71: #{fwd.1} parent=63 // pred_region
          %602 = dma.done %s595, 48
        $region72: #{fwd.1} parent=63 // pred_fallthru
          _
        %s603 = sand.u32 %s40, 1
        %s604 = scalar_lea.sflag [#allocation7], %s603
        %s605 = sand.u32 %s133, 1
        %s606 = smul.addr %s605, 3072
        %s607 = scalar_lea.vmem [#allocation8], %s606
        // Predicated region
        $region73: #{fwd.1} parent=63 // pred_check
          %p608 = pneg %p146
        $region74: #{fwd.1} parent=63 // pred_check_branch
          %610 = sbr.rel (%p608) target = $region76
        $region75: #{fwd.1} parent=63 // pred_region
          %611 = dma.done %s604, 49152
        $region76: #{fwd.1} parent=63 // pred_fallthru
          _
        %s612 = sand.u32 %s40, 1
        %s613 = scalar_lea.sflag [#allocation10], %s612
        %s614 = sand.u32 %s159, 1
        %s615 = smul.addr %s614, 4
        %s616 = scalar_lea.vmem [#allocation9], %s615
        // Predicated region
        $region77: #{fwd.1} parent=63 // pred_check
          %p617 = pneg %p172
        $region78: #{fwd.1} parent=63 // pred_check_branch
          %619 = sbr.rel (%p617) target = $region80
        $region79: #{fwd.1} parent=63 // pred_region
          %620 = dma.done %s613, 64
        $region80: #{fwd.1} parent=63 // pred_fallthru
          _
        %s621 = sand.u32 %s40, 1
        %s622 = scalar_lea.sflag [#allocation10], %s621
        %s623 = sand.u32 %s185, 1
        %s624 = smul.addr %s623, 2048
        %s625 = scalar_lea.vmem [#allocation11], %s624
        // Predicated region
        $region81: #{fwd.1} parent=63 // pred_check
          %p626 = pneg %p198
        $region82: #{fwd.1} parent=63 // pred_check_branch
          %628 = sbr.rel (%p626) target = $region84
        $region83: #{fwd.1} parent=63 // pred_region
          %629 = dma.done %s622, 32768
        $region84: #{fwd.1} parent=63 // pred_fallthru
          _
        %s630 = sand.u32 %s40, 1
        %s631 = scalar_lea.sflag [#allocation13], %s630
        %s632 = sand.u32 %s211, 1
        %s633 = smul.addr %s632, 4
        %s634 = scalar_lea.vmem [#allocation12], %s633
        // Predicated region
        $region85: #{fwd.1} parent=63 // pred_check
          %p635 = pneg %p224
        $region86: #{fwd.1} parent=63 // pred_check_branch
          %637 = sbr.rel (%p635) target = $region88
        $region87: #{fwd.1} parent=63 // pred_region
          %638 = dma.done %s631, 64
        $region88: #{fwd.1} parent=63 // pred_fallthru
          _
        %s639 = sand.u32 %s40, 1
        %s640 = scalar_lea.sflag [#allocation13], %s639
        %s641 = sand.u32 %s239, 1
        %s642 = smul.addr %s641, 3072
        %s643 = scalar_lea.vmem [#allocation14], %s642
        // Predicated region
        $region89: #{fwd.1} parent=63 // pred_check
          %p644 = pneg %p252
        $region90: #{fwd.1} parent=63 // pred_check_branch
          %646 = sbr.rel (%p644) target = $region92
        $region91: #{fwd.1} parent=63 // pred_region
          %647 = dma.done %s640, 49152
        $region92: #{fwd.1} parent=63 // pred_fallthru
          _
        %s648 = sand.u32 %s40, 1
        %s649 = scalar_lea.sflag [#allocation16], %s648
        %s650 = sand.u32 %s265, 1
        %s651 = smul.addr %s650, 4
        %s652 = scalar_lea.vmem [#allocation15], %s651
        // Predicated region
        $region93: #{fwd.1} parent=63 // pred_check
          %p653 = pneg %p278
        $region94: #{fwd.1} parent=63 // pred_check_branch
          %655 = sbr.rel (%p653) target = $region96
        $region95: #{fwd.1} parent=63 // pred_region
          %656 = dma.done %s649, 64
        $region96: #{fwd.1} parent=63 // pred_fallthru
          _
        %s657 = sand.u32 %s40, 1
        %s658 = scalar_lea.sflag [#allocation16], %s657
        %s659 = sand.u32 %s291, 1
        %s660 = smul.addr %s659, 256
        %s661 = scalar_lea.vmem [#allocation17], %s660
        // Predicated region
        $region97: #{fwd.1} parent=63 // pred_check
          %p662 = pneg %p304
        $region98: #{fwd.1} parent=63 // pred_check_branch
          %664 = sbr.rel (%p662) target = $region100
        $region99: #{fwd.1} parent=63 // pred_region
          %665 = dma.done %s658, 4096
        $region100: #{fwd.1} parent=63 // pred_fallthru
          _
        %s666 = sand.u32 %s317, 1
        %s667 = scalar_lea.sflag [#allocation19], %s666
        %s668 = sand.u32 %s317, 1
        %s669 = scalar_lea.vmem [#allocation18], %s668
        // Predicated region
        $region101: #{fwd.1} parent=63 // pred_check
          %p670 = pneg %p330
        $region102: #{fwd.1} parent=63 // pred_check_branch
          %672 = sbr.rel (%p670) target = $region104
        $region103: #{fwd.1} parent=63 // pred_region
          %673 = dma.done %s667, 16
        $region104: #{fwd.1} parent=63 // pred_fallthru
          _
        %p674 = pneg %p68
        %p675 = pneg %p65
        %s676 = sand.u32 %s81, 1
        %s677 = scalar_lea.sflag [#allocation5], %s676
        %s678 = sand.u32 %s81, 1
        %s679 = smul.addr %s678, 768
        %s680 = scalar_lea.vmem [#allocation4], %s679
        %p681 = pneg %p94
        %p682 = pneg %p91
        %s683 = sand.u32 %s40, 1
        %s684 = scalar_lea.sflag [#allocation7], %s683
        %s685 = sand.u32 %s107, 1
        %s686 = smul.addr %s685, 3
        %s687 = scalar_lea.vmem [#allocation6], %s686
        %p688 = pneg %p120
        %p689 = pneg %p117
        %s690 = sand.u32 %s40, 1
        %s691 = scalar_lea.sflag [#allocation7], %s690
        %s692 = sand.u32 %s133, 1
        %s693 = smul.addr %s692, 3072
        %s694 = scalar_lea.vmem [#allocation8], %s693
        %p695 = pneg %p146
        %p696 = pneg %p143
        %s697 = sand.u32 %s40, 1
        %s698 = scalar_lea.sflag [#allocation10], %s697
        %s699 = sand.u32 %s159, 1
        %s700 = smul.addr %s699, 4
        %s701 = scalar_lea.vmem [#allocation9], %s700
        %p702 = pneg %p172
        %p703 = pneg %p169
        %s704 = sand.u32 %s40, 1
        %s705 = scalar_lea.sflag [#allocation10], %s704
        %s706 = sand.u32 %s185, 1
        %s707 = smul.addr %s706, 2048
        %s708 = scalar_lea.vmem [#allocation11], %s707
        %p709 = pneg %p198
        %p710 = pneg %p195
        %s711 = sand.u32 %s40, 1
        %s712 = scalar_lea.sflag [#allocation13], %s711
        %s713 = sand.u32 %s211, 1
        %s714 = smul.addr %s713, 4
        %s715 = scalar_lea.vmem [#allocation12], %s714
        %p716 = pneg %p224
        %p717 = pneg %p221
        %s718 = sand.u32 %s40, 1
        %s719 = scalar_lea.sflag [#allocation13], %s718
        %s720 = sand.u32 %s239, 1
        %s721 = smul.addr %s720, 3072
        %s722 = scalar_lea.vmem [#allocation14], %s721
        %p723 = pneg %p252
        %p724 = pneg %p249
        %s725 = sand.u32 %s40, 1
        %s726 = scalar_lea.sflag [#allocation16], %s725
        %s727 = sand.u32 %s265, 1
        %s728 = smul.addr %s727, 4
        %s729 = scalar_lea.vmem [#allocation15], %s728
        %p730 = pneg %p278
        %p731 = pneg %p275
        %s732 = sand.u32 %s40, 1
        %s733 = scalar_lea.sflag [#allocation16], %s732
        %s734 = sand.u32 %s291, 1
        %s735 = smul.addr %s734, 256
        %s736 = scalar_lea.vmem [#allocation17], %s735
        %p737 = pneg %p304
        %p738 = pneg %p301
        %s739 = sand.u32 %s317, 1
        %s740 = scalar_lea.sflag [#allocation19], %s739
        %s741 = sand.u32 %s317, 1
        %s742 = scalar_lea.vmem [#allocation18], %s741
        %p743 = pneg %p330
        %p744 = pneg %p327
        %p745 = pneg %p356
        %p746 = pneg %p353
        %p747 = scmp.lt.s32.totalorder %s44, 1
        %s748 = scalar_select %p747, %s44, 1
        %s749 = smul.addr %s748, 2
        %s750 = scalar_lea.vmem %s11, %s749
        %p751 = scmp.lt.s32.totalorder %s44, 1
        %s752 = scalar_select %p751, %s44, 1
        %s753 = smul.addr %s752, 2
        %s754 = scalar_lea.vmem %s11, %s753
        %p756 = scmp.eq.s32.totalorder %s45, 0
        // Predicated region
        $region105: #{fwd.1} parent=63 // pred_check
          %p757 = pneg %p756
        $region106: #{fwd.1} parent=63 // pred_check_branch
          %759 = sbr.rel (%p757) target = $region108
        $region107: #{fwd.1} parent=63 // pred_region
          %v760 = vld [vmem:[%s0] sm:$0xf]
          %v761 = vld [vmem:[%s0 + $0x4] sm:$0xf]
          %v762 = vld [vmem:[%s0 + $0x8] sm:$0xf]
          %v763 = vld [vmem:[%s0 + $0xc] sm:$0xf]
          %v764 = vld [vmem:[%s589] sm:$0xff]
          %v765 = vld [vmem:[%s589 + $0x8] sm:$0xf]
          %v766 = vld [vmem:[%s589 + $0xc] sm:$0xff]
          %v767 = vld [vmem:[%s589 + $0x14] sm:$0xf]
          %v768 = vld [vmem:[%s589 + $0x18] sm:$0xff]
          %v769 = vld [vmem:[%s589 + $0x20] sm:$0xf]
          %v770 = vld [vmem:[%s589 + $0x24] sm:$0xff]
          %v771 = vld [vmem:[%s589 + $0x2c] sm:$0xf]
          %v772 = vld [vmem:[%s589 + $0x30] sm:$0xff]
          %v773 = vld [vmem:[%s589 + $0x38] sm:$0xf]
          %v774 = vld [vmem:[%s589 + $0x3c] sm:$0xff]
          %v775 = vld [vmem:[%s589 + $0x44] sm:$0xf]
          %v776 = vld [vmem:[%s589 + $0x48] sm:$0xff]
          %v777 = vld [vmem:[%s589 + $0x50] sm:$0xf]
          %v778 = vld [vmem:[%s589 + $0x54] sm:$0xff]
          %v779 = vld [vmem:[%s589 + $0x5c] sm:$0xf]
          %v780 = vld [vmem:[%s589 + $0x60] sm:$0xff]
          %v781 = vld [vmem:[%s589 + $0x68] sm:$0xf]
          %v782 = vld [vmem:[%s589 + $0x6c] sm:$0xff]
          %v783 = vld [vmem:[%s589 + $0x74] sm:$0xf]
          %v784 = vld [vmem:[%s589 + $0x78] sm:$0xff]
          %v785 = vld [vmem:[%s589 + $0x80] sm:$0xf]
          %v786 = vld [vmem:[%s589 + $0x84] sm:$0xff]
          %v787 = vld [vmem:[%s589 + $0x8c] sm:$0xf]
          %v788 = vld [vmem:[%s589 + $0x90] sm:$0xff]
          %v789 = vld [vmem:[%s589 + $0x98] sm:$0xf]
          %v790 = vld [vmem:[%s589 + $0x9c] sm:$0xff]
          %v791 = vld [vmem:[%s589 + $0xa4] sm:$0xf]
          %v792 = vld [vmem:[%s589 + $0xa8] sm:$0xff]
          %v793 = vld [vmem:[%s589 + $0xb0] sm:$0xf]
          %v794 = vld [vmem:[%s589 + $0xb4] sm:$0xff]
          %v795 = vld [vmem:[%s589 + $0xbc] sm:$0xf]
          %s796 = scalar_lea.vmem %s589, 192 [#allocation4]
          %v797 = vld [vmem:[%s796] sm:$0xff]
          %v798 = vld [vmem:[%s796 + $0x8] sm:$0xf]
          %v799 = vld [vmem:[%s796 + $0xc] sm:$0xff]
          %v800 = vld [vmem:[%s796 + $0x14] sm:$0xf]
          %v801 = vld [vmem:[%s796 + $0x18] sm:$0xff]
          %v802 = vld [vmem:[%s796 + $0x20] sm:$0xf]
          %v803 = vld [vmem:[%s796 + $0x24] sm:$0xff]
          %v804 = vld [vmem:[%s796 + $0x2c] sm:$0xf]
          %v805 = vld [vmem:[%s796 + $0x30] sm:$0xff]
          %v806 = vld [vmem:[%s796 + $0x38] sm:$0xf]
          %v807 = vld [vmem:[%s796 + $0x3c] sm:$0xff]
          %v808 = vld [vmem:[%s796 + $0x44] sm:$0xf]
          %v809 = vld [vmem:[%s796 + $0x48] sm:$0xff]
          %v810 = vld [vmem:[%s796 + $0x50] sm:$0xf]
          %v811 = vld [vmem:[%s796 + $0x54] sm:$0xff]
          %v812 = vld [vmem:[%s796 + $0x5c] sm:$0xf]
          %v813 = vld [vmem:[%s796 + $0x60] sm:$0xff]
          %v814 = vld [vmem:[%s796 + $0x68] sm:$0xf]
          %v815 = vld [vmem:[%s796 + $0x6c] sm:$0xff]
          %v816 = vld [vmem:[%s796 + $0x74] sm:$0xf]
          %v817 = vld [vmem:[%s796 + $0x78] sm:$0xff]
          %v818 = vld [vmem:[%s796 + $0x80] sm:$0xf]
          %v819 = vld [vmem:[%s796 + $0x84] sm:$0xff]
          %v820 = vld [vmem:[%s796 + $0x8c] sm:$0xf]
          %v821 = vld [vmem:[%s796 + $0x90] sm:$0xff]
          %v822 = vld [vmem:[%s796 + $0x98] sm:$0xf]
          %v823 = vld [vmem:[%s796 + $0x9c] sm:$0xff]
          %v824 = vld [vmem:[%s796 + $0xa4] sm:$0xf]
          %v825 = vld [vmem:[%s796 + $0xa8] sm:$0xff]
          %v826 = vld [vmem:[%s796 + $0xb0] sm:$0xf]
          %v827 = vld [vmem:[%s796 + $0xb4] sm:$0xff]
          %v828 = vld [vmem:[%s796 + $0xbc] sm:$0xf]
          %v833 = vunpack.c.l.b16 %v760
          %v834 = vunpack.c.l.b16 %v761
          %v835 = vunpack.c.l.b16 %v762
          %v836 = vunpack.c.l.b16 %v763
          %v837 = vpack.c.b16 %v834, %v833
          %v838 = vpack.c.b16 %v836, %v835
          %vm839 = vsmask.f32 7424
          %v841 = vshrl.u32 %v837, 16
          %v843 = vshll.u32 %v837, 16
          %v845 = vrot.slane %v843, 1
          %v846 = vor.u32 %v841, %v845
          %v848 = vshll.u32 %v838, 16
          %v850 = vrot.slane %v848, 1
          %v851 = vsel %vm839, %v846, %v850
          %v852 = vshrl.u32 %v838, 16
          %v854 = vor.u32 %v852, %v850
          %v889 = vunpack.c.l.b16 %v797
          %v890 = vunpack.c.h.b16 %v797
          %v891 = vunpack.c.l.b16 %v798
          %v892 = vunpack.c.l.b16 %v799
          %v893 = vunpack.c.h.b16 %v799
          %v894 = vunpack.c.l.b16 %v800
          %v895 = vunpack.c.l.b16 %v801
          %v896 = vunpack.c.h.b16 %v801
          %v897 = vunpack.c.l.b16 %v802
          %v898 = vunpack.c.l.b16 %v803
          %v899 = vunpack.c.h.b16 %v803
          %v900 = vunpack.c.l.b16 %v804
          %v901 = vunpack.c.l.b16 %v805
          %v902 = vunpack.c.h.b16 %v805
          %v903 = vunpack.c.l.b16 %v806
          %v904 = vunpack.c.l.b16 %v807
          %v905 = vunpack.c.h.b16 %v807
          %v906 = vunpack.c.l.b16 %v808
          %v907 = vunpack.c.l.b16 %v809
          %v908 = vunpack.c.h.b16 %v809
          %v909 = vunpack.c.l.b16 %v810
          %v910 = vunpack.c.l.b16 %v811
          %v911 = vunpack.c.h.b16 %v811
          %v912 = vunpack.c.l.b16 %v812
          %v913 = vunpack.c.l.b16 %v813
          %v914 = vunpack.c.h.b16 %v813
          %v915 = vunpack.c.l.b16 %v814
          %v916 = vunpack.c.l.b16 %v815
          %v917 = vunpack.c.h.b16 %v815
          %v918 = vunpack.c.l.b16 %v816
          %v919 = vunpack.c.l.b16 %v817
          %v920 = vunpack.c.h.b16 %v817
          %v921 = vunpack.c.l.b16 %v818
          %v922 = vunpack.c.l.b16 %v819
          %v923 = vunpack.c.h.b16 %v819
          %v924 = vunpack.c.l.b16 %v820
          %v925 = vunpack.c.l.b16 %v821
          %v926 = vunpack.c.h.b16 %v821
          %v927 = vunpack.c.l.b16 %v822
          %v928 = vunpack.c.l.b16 %v823
          %v929 = vunpack.c.h.b16 %v823
          %v930 = vunpack.c.l.b16 %v824
          %v931 = vunpack.c.l.b16 %v825
          %v932 = vunpack.c.h.b16 %v825
          %v933 = vunpack.c.l.b16 %v826
          %v934 = vunpack.c.l.b16 %v827
          %v935 = vunpack.c.h.b16 %v827
          %v936 = vunpack.c.l.b16 %v828
          %v937 = vpack.c.b16 %v892, %v889
          %v938 = vpack.c.b16 %v893, %v890
          %v939 = vpack.c.b16 %v894, %v891
          %v940 = vpack.c.b16 %v898, %v895
          %v941 = vpack.c.b16 %v899, %v896
          %v942 = vpack.c.b16 %v900, %v897
          %v943 = vpack.c.b16 %v904, %v901
          %v944 = vpack.c.b16 %v905, %v902
          %v945 = vpack.c.b16 %v906, %v903
          %v946 = vpack.c.b16 %v910, %v907
          %v947 = vpack.c.b16 %v911, %v908
          %v948 = vpack.c.b16 %v912, %v909
          %v949 = vpack.c.b16 %v916, %v913
          %v950 = vpack.c.b16 %v917, %v914
          %v951 = vpack.c.b16 %v918, %v915
          %v952 = vpack.c.b16 %v922, %v919
          %v953 = vpack.c.b16 %v923, %v920
          %v954 = vpack.c.b16 %v924, %v921
          %v955 = vpack.c.b16 %v928, %v925
          %v956 = vpack.c.b16 %v929, %v926
          %v957 = vpack.c.b16 %v930, %v927
          %v958 = vpack.c.b16 %v934, %v931
          %v959 = vpack.c.b16 %v935, %v932
          %v960 = vpack.c.b16 %v936, %v933
          %985 = vmatprep.subr.bf16.mxu0 %v959
          %986 = vmatpush1.bf16.msra.mxu0 %v958
          %987 = vmatprep.subr.bf16.mxu0 %v956
          %988 = vmatpush1.bf16.msra.mxu0 %v955
          %989 = vmatprep.subr.bf16.mxu0 %v953
          %990 = vmatpush1.bf16.msra.mxu0 %v952
          %991 = vmatprep.subr.bf16.mxu0 %v950
          %992 = vmatpush1.bf16.msra.mxu0 %v949
          %993 = vmatprep.subr.bf16.mxu0 %v947
          %994 = vmatpush1.bf16.msra.mxu0 %v946
          %995 = vmatprep.subr.bf16.mxu0 %v944
          %996 = vmatpush1.bf16.msra.mxu0 %v943
          %997 = vmatprep.subr.bf16.mxu0 %v941
          %998 = vmatpush1.bf16.msra.mxu0 %v940
          %999 = vmatprep.subr.bf16.mxu0 %v938
          %1000 = vmatpush1.bf16.msra.mxu0 %v937
          %1001 = vmatprep.subr.bf16.mxu0 0
          %1002 = vmatpush2.bf16.msra.mxu0 0
          %1003 = vmatprep.subr.bf16.mxu0 0
          %1004 = vmatpush2.bf16.msra.mxu0 0
          %1005 = vmatprep.subr.bf16.mxu0 0
          %1006 = vmatpush2.bf16.msra.mxu0 0
          %1007 = vmatprep.subr.bf16.mxu0 0
          %1008 = vmatpush2.bf16.msra.mxu0 0
          %1009 = vmatprep.subr.bf16.mxu0 0
          %1010 = vmatpush2.bf16.msra.mxu0 0
          %1011 = vmatprep.subr.bf16.mxu0 0
          %1012 = vmatpush2.bf16.msra.mxu0 0
          %1013 = vmatprep.subr.bf16.mxu0 0
          %1014 = vmatpush2.bf16.msra.mxu0 0
          %1015 = vmatprep.subr.bf16.mxu0 0
          %1016 = vmatpush2.bf16.msra.mxu0 0
          %1017 = vmatprep.mubr.bf16.mxu0 0
          %1018 = vmatmul.mubr.bf16.gmra.mxu0 %v851
          %v1019 = vpop.f32.mrf.mxu0
          %v1020 = vadd.f32 0.0, %v1019
          %v1021 = vpop.f32.mrf.mxu0
          %v1022 = vadd.f32 0.0, %v1021
          %v1023 = vpop.f32.mrf.mxu0
          %v1024 = vadd.f32 0.0, %v1023
          %v1025 = vpop.f32.mrf.mxu0
          %v1026 = vadd.f32 0.0, %v1025
          %1027 = vmatprep.mubr.bf16.mxu0 0
          %1028 = vmatmul.mubr.bf16.gmra.mxu0 %v854
          %v1029 = vpop.f32.mrf.mxu0
          %v1030 = vadd.f32 0.0, %v1029
          %v1031 = vpop.f32.mrf.mxu0
          %v1032 = vadd.f32 0.0, %v1031
          %v1033 = vpop.f32.mrf.mxu0
          %v1034 = vadd.f32 0.0, %v1033
          %v1035 = vpop.f32.mrf.mxu0
          %v1036 = vadd.f32 0.0, %v1035
          %1037 = vdwg.mxu0
          %1038 = vmatprep.subr.bf16.mxu0 0
          %1039 = vmatpush1.bf16.msra.mxu0 %v960
          %1040 = vmatprep.subr.bf16.mxu0 0
          %1041 = vmatpush1.bf16.msra.mxu0 %v957
          %1042 = vmatprep.subr.bf16.mxu0 0
          %1043 = vmatpush1.bf16.msra.mxu0 %v954
          %1044 = vmatprep.subr.bf16.mxu0 0
          %1045 = vmatpush1.bf16.msra.mxu0 %v951
          %1046 = vmatprep.subr.bf16.mxu0 0
          %1047 = vmatpush1.bf16.msra.mxu0 %v948
          %1048 = vmatprep.subr.bf16.mxu0 0
          %1049 = vmatpush1.bf16.msra.mxu0 %v945
          %1050 = vmatprep.subr.bf16.mxu0 0
          %1051 = vmatpush1.bf16.msra.mxu0 %v942
          %1052 = vmatprep.subr.bf16.mxu0 0
          %1053 = vmatpush1.bf16.msra.mxu0 %v939
          %1054 = vmatprep.subr.bf16.mxu0 0
          %1055 = vmatpush2.bf16.msra.mxu0 0
          %1056 = vmatprep.subr.bf16.mxu0 0
          %1057 = vmatpush2.bf16.msra.mxu0 0
          %1058 = vmatprep.subr.bf16.mxu0 0
          %1059 = vmatpush2.bf16.msra.mxu0 0
          %1060 = vmatprep.subr.bf16.mxu0 0
          %1061 = vmatpush2.bf16.msra.mxu0 0
          %1062 = vmatprep.subr.bf16.mxu0 0
          %1063 = vmatpush2.bf16.msra.mxu0 0
          %1064 = vmatprep.subr.bf16.mxu0 0
          %1065 = vmatpush2.bf16.msra.mxu0 0
          %1066 = vmatprep.subr.bf16.mxu0 0
          %1067 = vmatpush2.bf16.msra.mxu0 0
          %1068 = vmatprep.subr.bf16.mxu0 0
          %1069 = vmatpush2.bf16.msra.mxu0 0
          %1070 = vmatprep.mubr.bf16.mxu0 0
          %1071 = vmatmul.mubr.bf16.gmra.mxu0 %v851
          %v1072 = vpop.f32.mrf.mxu0
          %v1073 = vadd.f32 0.0, %v1072
          %v1074 = vpop.f32.mrf.mxu0
          %v1075 = vpop.f32.mrf.mxu0
          %v1076 = vadd.f32 0.0, %v1075
          %v1077 = vpop.f32.mrf.mxu0
          %1078 = vmatprep.mubr.bf16.mxu0 0
          %1079 = vmatmul.mubr.bf16.gmra.mxu0 %v854
          %v1080 = vpop.f32.mrf.mxu0
          %v1081 = vadd.f32 0.0, %v1080
          %v1082 = vpop.f32.mrf.mxu0
          %v1083 = vpop.f32.mrf.mxu0
          %v1084 = vadd.f32 0.0, %v1083
          %v1085 = vpop.f32.mrf.mxu0
          %1086 = vdwg.mxu0
          %v1121 = vunpack.c.l.b16 %v764
          %v1122 = vunpack.c.h.b16 %v764
          %v1123 = vunpack.c.l.b16 %v765
          %v1124 = vunpack.c.l.b16 %v766
          %v1125 = vunpack.c.h.b16 %v766
          %v1126 = vunpack.c.l.b16 %v767
          %v1127 = vunpack.c.l.b16 %v768
          %v1128 = vunpack.c.h.b16 %v768
          %v1129 = vunpack.c.l.b16 %v769
          %v1130 = vunpack.c.l.b16 %v770
          %v1131 = vunpack.c.h.b16 %v770
          %v1132 = vunpack.c.l.b16 %v771
          %v1133 = vunpack.c.l.b16 %v772
          %v1134 = vunpack.c.h.b16 %v772
          %v1135 = vunpack.c.l.b16 %v773
          %v1136 = vunpack.c.l.b16 %v774
          %v1137 = vunpack.c.h.b16 %v774
          %v1138 = vunpack.c.l.b16 %v775
          %v1139 = vunpack.c.l.b16 %v776
          %v1140 = vunpack.c.h.b16 %v776
          %v1141 = vunpack.c.l.b16 %v777
          %v1142 = vunpack.c.l.b16 %v778
          %v1143 = vunpack.c.h.b16 %v778
          %v1144 = vunpack.c.l.b16 %v779
          %v1145 = vunpack.c.l.b16 %v780
          %v1146 = vunpack.c.h.b16 %v780
          %v1147 = vunpack.c.l.b16 %v781
          %v1148 = vunpack.c.l.b16 %v782
          %v1149 = vunpack.c.h.b16 %v782
          %v1150 = vunpack.c.l.b16 %v783
          %v1151 = vunpack.c.l.b16 %v784
          %v1152 = vunpack.c.h.b16 %v784
          %v1153 = vunpack.c.l.b16 %v785
          %v1154 = vunpack.c.l.b16 %v786
          %v1155 = vunpack.c.h.b16 %v786
          %v1156 = vunpack.c.l.b16 %v787
          %v1157 = vunpack.c.l.b16 %v788
          %v1158 = vunpack.c.h.b16 %v788
          %v1159 = vunpack.c.l.b16 %v789
          %v1160 = vunpack.c.l.b16 %v790
          %v1161 = vunpack.c.h.b16 %v790
          %v1162 = vunpack.c.l.b16 %v791
          %v1163 = vunpack.c.l.b16 %v792
          %v1164 = vunpack.c.h.b16 %v792
          %v1165 = vunpack.c.l.b16 %v793
          %v1166 = vunpack.c.l.b16 %v794
          %v1167 = vunpack.c.h.b16 %v794
          %v1168 = vunpack.c.l.b16 %v795
          %v1169 = vpack.c.b16 %v1124, %v1121
          %v1170 = vpack.c.b16 %v1125, %v1122
          %v1171 = vpack.c.b16 %v1126, %v1123
          %v1172 = vpack.c.b16 %v1130, %v1127
          %v1173 = vpack.c.b16 %v1131, %v1128
          %v1174 = vpack.c.b16 %v1132, %v1129
          %v1175 = vpack.c.b16 %v1136, %v1133
          %v1176 = vpack.c.b16 %v1137, %v1134
          %v1177 = vpack.c.b16 %v1138, %v1135
          %v1178 = vpack.c.b16 %v1142, %v1139
          %v1179 = vpack.c.b16 %v1143, %v1140
          %v1180 = vpack.c.b16 %v1144, %v1141
          %v1181 = vpack.c.b16 %v1148, %v1145
          %v1182 = vpack.c.b16 %v1149, %v1146
          %v1183 = vpack.c.b16 %v1150, %v1147
          %v1184 = vpack.c.b16 %v1154, %v1151
          %v1185 = vpack.c.b16 %v1155, %v1152
          %v1186 = vpack.c.b16 %v1156, %v1153
          %v1187 = vpack.c.b16 %v1160, %v1157
          %v1188 = vpack.c.b16 %v1161, %v1158
          %v1189 = vpack.c.b16 %v1162, %v1159
          %v1190 = vpack.c.b16 %v1166, %v1163
          %v1191 = vpack.c.b16 %v1167, %v1164
          %v1192 = vpack.c.b16 %v1168, %v1165
          %1217 = vmatprep.subr.bf16.mxu0 %v1191
          %1218 = vmatpush1.bf16.msra.mxu0 %v1190
          %1219 = vmatprep.subr.bf16.mxu0 %v1188
          %1220 = vmatpush1.bf16.msra.mxu0 %v1187
          %1221 = vmatprep.subr.bf16.mxu0 %v1185
          %1222 = vmatpush1.bf16.msra.mxu0 %v1184
          %1223 = vmatprep.subr.bf16.mxu0 %v1182
          %1224 = vmatpush1.bf16.msra.mxu0 %v1181
          %1225 = vmatprep.subr.bf16.mxu0 %v1179
          %1226 = vmatpush1.bf16.msra.mxu0 %v1178
          %1227 = vmatprep.subr.bf16.mxu0 %v1176
          %1228 = vmatpush1.bf16.msra.mxu0 %v1175
          %1229 = vmatprep.subr.bf16.mxu0 %v1173
          %1230 = vmatpush1.bf16.msra.mxu0 %v1172
          %1231 = vmatprep.subr.bf16.mxu0 %v1170
          %1232 = vmatpush1.bf16.msra.mxu0 %v1169
          %1233 = vmatprep.subr.bf16.mxu0 0
          %1234 = vmatpush2.bf16.msra.mxu0 0
          %1235 = vmatprep.subr.bf16.mxu0 0
          %1236 = vmatpush2.bf16.msra.mxu0 0
          %1237 = vmatprep.subr.bf16.mxu0 0
          %1238 = vmatpush2.bf16.msra.mxu0 0
          %1239 = vmatprep.subr.bf16.mxu0 0
          %1240 = vmatpush2.bf16.msra.mxu0 0
          %1241 = vmatprep.subr.bf16.mxu0 0
          %1242 = vmatpush2.bf16.msra.mxu0 0
          %1243 = vmatprep.subr.bf16.mxu0 0
          %1244 = vmatpush2.bf16.msra.mxu0 0
          %1245 = vmatprep.subr.bf16.mxu0 0
          %1246 = vmatpush2.bf16.msra.mxu0 0
          %1247 = vmatprep.subr.bf16.mxu0 0
          %1248 = vmatpush2.bf16.msra.mxu0 0
          %1249 = vmatprep.mubr.bf16.mxu0 0
          %1250 = vmatmul.mubr.bf16.gmra.mxu0 %v837
          %v1251 = vpop.f32.mrf.mxu0
          %v1252 = vadd.f32 %v1020, %v1251
          %v1253 = vpop.f32.mrf.mxu0
          %v1254 = vadd.f32 %v1022, %v1253
          %v1255 = vpop.f32.mrf.mxu0
          %v1256 = vadd.f32 %v1024, %v1255
          %v1257 = vpop.f32.mrf.mxu0
          %v1258 = vadd.f32 %v1026, %v1257
          %1259 = vmatprep.mubr.bf16.mxu0 0
          %1260 = vmatmul.mubr.bf16.gmra.mxu0 %v838
          %v1261 = vpop.f32.mrf.mxu0
          %v1262 = vadd.f32 %v1030, %v1261
          %v1263 = vpop.f32.mrf.mxu0
          %v1264 = vadd.f32 %v1032, %v1263
          %v1265 = vpop.f32.mrf.mxu0
          %v1266 = vadd.f32 %v1034, %v1265
          %v1267 = vpop.f32.mrf.mxu0
          %v1268 = vadd.f32 %v1036, %v1267
          %1269 = vdwg.mxu0
          %1270 = vmatprep.subr.bf16.mxu0 0
          %1271 = vmatpush1.bf16.msra.mxu0 %v1192
          %1272 = vmatprep.subr.bf16.mxu0 0
          %1273 = vmatpush1.bf16.msra.mxu0 %v1189
          %1274 = vmatprep.subr.bf16.mxu0 0
          %1275 = vmatpush1.bf16.msra.mxu0 %v1186
          %1276 = vmatprep.subr.bf16.mxu0 0
          %1277 = vmatpush1.bf16.msra.mxu0 %v1183
          %1278 = vmatprep.subr.bf16.mxu0 0
          %1279 = vmatpush1.bf16.msra.mxu0 %v1180
          %1280 = vmatprep.subr.bf16.mxu0 0
          %1281 = vmatpush1.bf16.msra.mxu0 %v1177
          %1282 = vmatprep.subr.bf16.mxu0 0
          %1283 = vmatpush1.bf16.msra.mxu0 %v1174
          %1284 = vmatprep.subr.bf16.mxu0 0
          %1285 = vmatpush1.bf16.msra.mxu0 %v1171
          %1286 = vmatprep.subr.bf16.mxu0 0
          %1287 = vmatpush2.bf16.msra.mxu0 0
          %1288 = vmatprep.subr.bf16.mxu0 0
          %1289 = vmatpush2.bf16.msra.mxu0 0
          %1290 = vmatprep.subr.bf16.mxu0 0
          %1291 = vmatpush2.bf16.msra.mxu0 0
          %1292 = vmatprep.subr.bf16.mxu0 0
          %1293 = vmatpush2.bf16.msra.mxu0 0
          %1294 = vmatprep.subr.bf16.mxu0 0
          %1295 = vmatpush2.bf16.msra.mxu0 0
          %1296 = vmatprep.subr.bf16.mxu0 0
          %1297 = vmatpush2.bf16.msra.mxu0 0
          %1298 = vmatprep.subr.bf16.mxu0 0
          %1299 = vmatpush2.bf16.msra.mxu0 0
          %1300 = vmatprep.subr.bf16.mxu0 0
          %1301 = vmatpush2.bf16.msra.mxu0 0
          %1302 = vmatprep.mubr.bf16.mxu0 0
          %1303 = vmatmul.mubr.bf16.gmra.mxu0 %v837
          %v1304 = vpop.f32.mrf.mxu0
          %v1305 = vadd.f32 %v1073, %v1304
          %v1306 = vpop.f32.mrf.mxu0
          %v1307 = vpop.f32.mrf.mxu0
          %v1308 = vadd.f32 %v1076, %v1307
          %v1309 = vpop.f32.mrf.mxu0
          %1310 = vmatprep.mubr.bf16.mxu0 0
          %1311 = vmatmul.mubr.bf16.gmra.mxu0 %v838
          %v1312 = vpop.f32.mrf.mxu0
          %v1313 = vadd.f32 %v1081, %v1312
          %v1314 = vpop.f32.mrf.mxu0
          %v1315 = vpop.f32.mrf.mxu0
          %v1316 = vadd.f32 %v1084, %v1315
          %v1317 = vpop.f32.mrf.mxu0
          %1318 = vdwg.mxu0
          %s1319 = scalar_lea.vmem %s589, 384 [#allocation4]
          %v1320 = vld [vmem:[%s1319] sm:$0xff]
          %v1321 = vld [vmem:[%s1319 + $0x8] sm:$0xf]
          %v1322 = vld [vmem:[%s1319 + $0xc] sm:$0xff]
          %v1323 = vld [vmem:[%s1319 + $0x14] sm:$0xf]
          %v1324 = vld [vmem:[%s1319 + $0x18] sm:$0xff]
          %v1325 = vld [vmem:[%s1319 + $0x20] sm:$0xf]
          %v1326 = vld [vmem:[%s1319 + $0x24] sm:$0xff]
          %v1327 = vld [vmem:[%s1319 + $0x2c] sm:$0xf]
          %v1328 = vld [vmem:[%s1319 + $0x30] sm:$0xff]
          %v1329 = vld [vmem:[%s1319 + $0x38] sm:$0xf]
          %v1330 = vld [vmem:[%s1319 + $0x3c] sm:$0xff]
          %v1331 = vld [vmem:[%s1319 + $0x44] sm:$0xf]
          %v1332 = vld [vmem:[%s1319 + $0x48] sm:$0xff]
          %v1333 = vld [vmem:[%s1319 + $0x50] sm:$0xf]
          %v1334 = vld [vmem:[%s1319 + $0x54] sm:$0xff]
          %v1335 = vld [vmem:[%s1319 + $0x5c] sm:$0xf]
          %v1336 = vld [vmem:[%s1319 + $0x60] sm:$0xff]
          %v1337 = vld [vmem:[%s1319 + $0x68] sm:$0xf]
          %v1338 = vld [vmem:[%s1319 + $0x6c] sm:$0xff]
          %v1339 = vld [vmem:[%s1319 + $0x74] sm:$0xf]
          %v1340 = vld [vmem:[%s1319 + $0x78] sm:$0xff]
          %v1341 = vld [vmem:[%s1319 + $0x80] sm:$0xf]
          %v1342 = vld [vmem:[%s1319 + $0x84] sm:$0xff]
          %v1343 = vld [vmem:[%s1319 + $0x8c] sm:$0xf]
          %v1344 = vld [vmem:[%s1319 + $0x90] sm:$0xff]
          %v1345 = vld [vmem:[%s1319 + $0x98] sm:$0xf]
          %v1346 = vld [vmem:[%s1319 + $0x9c] sm:$0xff]
          %v1347 = vld [vmem:[%s1319 + $0xa4] sm:$0xf]
          %v1348 = vld [vmem:[%s1319 + $0xa8] sm:$0xff]
          %v1349 = vld [vmem:[%s1319 + $0xb0] sm:$0xf]
          %v1350 = vld [vmem:[%s1319 + $0xb4] sm:$0xff]
          %v1351 = vld [vmem:[%s1319 + $0xbc] sm:$0xf]
          %vm1352 = vcmask 1046528
          %v1353 = vrot.slane %v837, 1
          %v1354 = vrot.slane %v838, 1
          %v1355 = vsel %vm1352, %v1353, %v1354
          %v1390 = vunpack.c.l.b16 %v1320
          %v1391 = vunpack.c.h.b16 %v1320
          %v1392 = vunpack.c.l.b16 %v1321
          %v1393 = vunpack.c.l.b16 %v1322
          %v1394 = vunpack.c.h.b16 %v1322
          %v1395 = vunpack.c.l.b16 %v1323
          %v1396 = vunpack.c.l.b16 %v1324
          %v1397 = vunpack.c.h.b16 %v1324
          %v1398 = vunpack.c.l.b16 %v1325
          %v1399 = vunpack.c.l.b16 %v1326
          %v1400 = vunpack.c.h.b16 %v1326
          %v1401 = vunpack.c.l.b16 %v1327
          %v1402 = vunpack.c.l.b16 %v1328
          %v1403 = vunpack.c.h.b16 %v1328
          %v1404 = vunpack.c.l.b16 %v1329
          %v1405 = vunpack.c.l.b16 %v1330
          %v1406 = vunpack.c.h.b16 %v1330
          %v1407 = vunpack.c.l.b16 %v1331
          %v1408 = vunpack.c.l.b16 %v1332
          %v1409 = vunpack.c.h.b16 %v1332
          %v1410 = vunpack.c.l.b16 %v1333
          %v1411 = vunpack.c.l.b16 %v1334
          %v1412 = vunpack.c.h.b16 %v1334
          %v1413 = vunpack.c.l.b16 %v1335
          %v1414 = vunpack.c.l.b16 %v1336
          %v1415 = vunpack.c.h.b16 %v1336
          %v1416 = vunpack.c.l.b16 %v1337
          %v1417 = vunpack.c.l.b16 %v1338
          %v1418 = vunpack.c.h.b16 %v1338
          %v1419 = vunpack.c.l.b16 %v1339
          %v1420 = vunpack.c.l.b16 %v1340
          %v1421 = vunpack.c.h.b16 %v1340
          %v1422 = vunpack.c.l.b16 %v1341
          %v1423 = vunpack.c.l.b16 %v1342
          %v1424 = vunpack.c.h.b16 %v1342
          %v1425 = vunpack.c.l.b16 %v1343
          %v1426 = vunpack.c.l.b16 %v1344
          %v1427 = vunpack.c.h.b16 %v1344
          %v1428 = vunpack.c.l.b16 %v1345
          %v1429 = vunpack.c.l.b16 %v1346
          %v1430 = vunpack.c.h.b16 %v1346
          %v1431 = vunpack.c.l.b16 %v1347
          %v1432 = vunpack.c.l.b16 %v1348
          %v1433 = vunpack.c.h.b16 %v1348
          %v1434 = vunpack.c.l.b16 %v1349
          %v1435 = vunpack.c.l.b16 %v1350
          %v1436 = vunpack.c.h.b16 %v1350
          %v1437 = vunpack.c.l.b16 %v1351
          %v1438 = vpack.c.b16 %v1393, %v1390
          %v1439 = vpack.c.b16 %v1394, %v1391
          %v1440 = vpack.c.b16 %v1395, %v1392
          %v1441 = vpack.c.b16 %v1399, %v1396
          %v1442 = vpack.c.b16 %v1400, %v1397
          %v1443 = vpack.c.b16 %v1401, %v1398
          %v1444 = vpack.c.b16 %v1405, %v1402
          %v1445 = vpack.c.b16 %v1406, %v1403
          %v1446 = vpack.c.b16 %v1407, %v1404
          %v1447 = vpack.c.b16 %v1411, %v1408
          %v1448 = vpack.c.b16 %v1412, %v1409
          %v1449 = vpack.c.b16 %v1413, %v1410
          %v1450 = vpack.c.b16 %v1417, %v1414
          %v1451 = vpack.c.b16 %v1418, %v1415
          %v1452 = vpack.c.b16 %v1419, %v1416
          %v1453 = vpack.c.b16 %v1423, %v1420
          %v1454 = vpack.c.b16 %v1424, %v1421
          %v1455 = vpack.c.b16 %v1425, %v1422
          %v1456 = vpack.c.b16 %v1429, %v1426
          %v1457 = vpack.c.b16 %v1430, %v1427
          %v1458 = vpack.c.b16 %v1431, %v1428
          %v1459 = vpack.c.b16 %v1435, %v1432
          %v1460 = vpack.c.b16 %v1436, %v1433
          %v1461 = vpack.c.b16 %v1437, %v1434
          %1486 = vmatprep.subr.bf16.mxu0 %v1460
          %1487 = vmatpush1.bf16.msra.mxu0 %v1459
          %1488 = vmatprep.subr.bf16.mxu0 %v1457
          %1489 = vmatpush1.bf16.msra.mxu0 %v1456
          %1490 = vmatprep.subr.bf16.mxu0 %v1454
          %1491 = vmatpush1.bf16.msra.mxu0 %v1453
          %1492 = vmatprep.subr.bf16.mxu0 %v1451
          %1493 = vmatpush1.bf16.msra.mxu0 %v1450
          %1494 = vmatprep.subr.bf16.mxu0 %v1448
          %1495 = vmatpush1.bf16.msra.mxu0 %v1447
          %1496 = vmatprep.subr.bf16.mxu0 %v1445
          %1497 = vmatpush1.bf16.msra.mxu0 %v1444
          %1498 = vmatprep.subr.bf16.mxu0 %v1442
          %1499 = vmatpush1.bf16.msra.mxu0 %v1441
          %1500 = vmatprep.subr.bf16.mxu0 %v1439
          %1501 = vmatpush1.bf16.msra.mxu0 %v1438
          %1502 = vmatprep.subr.bf16.mxu0 0
          %1503 = vmatpush2.bf16.msra.mxu0 0
          %1504 = vmatprep.subr.bf16.mxu0 0
          %1505 = vmatpush2.bf16.msra.mxu0 0
          %1506 = vmatprep.subr.bf16.mxu0 0
          %1507 = vmatpush2.bf16.msra.mxu0 0
          %1508 = vmatprep.subr.bf16.mxu0 0
          %1509 = vmatpush2.bf16.msra.mxu0 0
          %1510 = vmatprep.subr.bf16.mxu0 0
          %1511 = vmatpush2.bf16.msra.mxu0 0
          %1512 = vmatprep.subr.bf16.mxu0 0
          %1513 = vmatpush2.bf16.msra.mxu0 0
          %1514 = vmatprep.subr.bf16.mxu0 0
          %1515 = vmatpush2.bf16.msra.mxu0 0
          %1516 = vmatprep.subr.bf16.mxu0 0
          %1517 = vmatpush2.bf16.msra.mxu0 0
          %1518 = vmatprep.mubr.bf16.mxu0 0
          %1519 = vmatmul.mubr.bf16.gmra.mxu0 %v1355
          %v1520 = vpop.f32.mrf.mxu0
          %v1521 = vadd.f32 0.0, %v1520
          %v1522 = vpop.f32.mrf.mxu0
          %v1523 = vadd.f32 0.0, %v1522
          %v1524 = vpop.f32.mrf.mxu0
          %v1525 = vadd.f32 0.0, %v1524
          %v1526 = vpop.f32.mrf.mxu0
          %v1527 = vadd.f32 0.0, %v1526
          %1528 = vmatprep.mubr.bf16.mxu0 0
          %1529 = vmatmul.mubr.bf16.gmra.mxu0 %v1354
          %v1530 = vpop.f32.mrf.mxu0
          %v1531 = vadd.f32 0.0, %v1530
          %v1532 = vpop.f32.mrf.mxu0
          %v1533 = vadd.f32 0.0, %v1532
          %v1534 = vpop.f32.mrf.mxu0
          %v1535 = vadd.f32 0.0, %v1534
          %v1536 = vpop.f32.mrf.mxu0
          %v1537 = vadd.f32 0.0, %v1536
          %1538 = vdwg.mxu0
          %1539 = vmatprep.subr.bf16.mxu0 0
          %1540 = vmatpush1.bf16.msra.mxu0 %v1461
          %1541 = vmatprep.subr.bf16.mxu0 0
          %1542 = vmatpush1.bf16.msra.mxu0 %v1458
          %1543 = vmatprep.subr.bf16.mxu0 0
          %1544 = vmatpush1.bf16.msra.mxu0 %v1455
          %1545 = vmatprep.subr.bf16.mxu0 0
          %1546 = vmatpush1.bf16.msra.mxu0 %v1452
          %1547 = vmatprep.subr.bf16.mxu0 0
          %1548 = vmatpush1.bf16.msra.mxu0 %v1449
          %1549 = vmatprep.subr.bf16.mxu0 0
          %1550 = vmatpush1.bf16.msra.mxu0 %v1446
          %1551 = vmatprep.subr.bf16.mxu0 0
          %1552 = vmatpush1.bf16.msra.mxu0 %v1443
          %1553 = vmatprep.subr.bf16.mxu0 0
          %1554 = vmatpush1.bf16.msra.mxu0 %v1440
          %1555 = vmatprep.subr.bf16.mxu0 0
          %1556 = vmatpush2.bf16.msra.mxu0 0
          %1557 = vmatprep.subr.bf16.mxu0 0
          %1558 = vmatpush2.bf16.msra.mxu0 0
          %1559 = vmatprep.subr.bf16.mxu0 0
          %1560 = vmatpush2.bf16.msra.mxu0 0
          %1561 = vmatprep.subr.bf16.mxu0 0
          %1562 = vmatpush2.bf16.msra.mxu0 0
          %1563 = vmatprep.subr.bf16.mxu0 0
          %1564 = vmatpush2.bf16.msra.mxu0 0
          %1565 = vmatprep.subr.bf16.mxu0 0
          %1566 = vmatpush2.bf16.msra.mxu0 0
          %1567 = vmatprep.subr.bf16.mxu0 0
          %1568 = vmatpush2.bf16.msra.mxu0 0
          %1569 = vmatprep.subr.bf16.mxu0 0
          %1570 = vmatpush2.bf16.msra.mxu0 0
          %1571 = vmatprep.mubr.bf16.mxu0 0
          %1572 = vmatmul.mubr.bf16.gmra.mxu0 %v1355
          %v1573 = vpop.f32.mrf.mxu0
          %v1574 = vadd.f32 0.0, %v1573
          %v1575 = vpop.f32.mrf.mxu0
          %v1576 = vpop.f32.mrf.mxu0
          %v1577 = vadd.f32 0.0, %v1576
          %v1578 = vpop.f32.mrf.mxu0
          %1579 = vmatprep.mubr.bf16.mxu0 0
          %1580 = vmatmul.mubr.bf16.gmra.mxu0 %v1354
          %v1581 = vpop.f32.mrf.mxu0
          %v1582 = vadd.f32 0.0, %v1581
          %v1583 = vpop.f32.mrf.mxu0
          %v1584 = vpop.f32.mrf.mxu0
          %v1585 = vadd.f32 0.0, %v1584
          %v1586 = vpop.f32.mrf.mxu0
          %1587 = vdwg.mxu0
          %v1588 = vadd.f32 %v1252, %v1521
          %v1589 = vadd.f32 %v1254, %v1523
          %v1590 = vadd.f32 %v1305, %v1574
          %v1591 = vadd.f32 %v1256, %v1525
          %v1592 = vadd.f32 %v1258, %v1527
          %v1593 = vadd.f32 %v1308, %v1577
          %v1594 = vadd.f32 %v1262, %v1531
          %v1595 = vadd.f32 %v1264, %v1533
          %v1596 = vadd.f32 %v1313, %v1582
          %v1597 = vadd.f32 %v1266, %v1535
          %v1598 = vadd.f32 %v1268, %v1537
          %v1599 = vadd.f32 %v1316, %v1585
          %s1600 = scalar_lea.vmem %s589, 576 [#allocation4]
          %v1601 = vld [vmem:[%s1600] sm:$0xff]
          %v1602 = vld [vmem:[%s1600 + $0x8] sm:$0xf]
          %v1603 = vld [vmem:[%s1600 + $0xc] sm:$0xff]
          %v1604 = vld [vmem:[%s1600 + $0x14] sm:$0xf]
          %v1605 = vld [vmem:[%s1600 + $0x18] sm:$0xff]
          %v1606 = vld [vmem:[%s1600 + $0x20] sm:$0xf]
          %v1607 = vld [vmem:[%s1600 + $0x24] sm:$0xff]
          %v1608 = vld [vmem:[%s1600 + $0x2c] sm:$0xf]
          %v1609 = vld [vmem:[%s1600 + $0x30] sm:$0xff]
          %v1610 = vld [vmem:[%s1600 + $0x38] sm:$0xf]
          %v1611 = vld [vmem:[%s1600 + $0x3c] sm:$0xff]
          %v1612 = vld [vmem:[%s1600 + $0x44] sm:$0xf]
          %v1613 = vld [vmem:[%s1600 + $0x48] sm:$0xff]
          %v1614 = vld [vmem:[%s1600 + $0x50] sm:$0xf]
          %v1615 = vld [vmem:[%s1600 + $0x54] sm:$0xff]
          %v1616 = vld [vmem:[%s1600 + $0x5c] sm:$0xf]
          %v1617 = vld [vmem:[%s1600 + $0x60] sm:$0xff]
          %v1618 = vld [vmem:[%s1600 + $0x68] sm:$0xf]
          %v1619 = vld [vmem:[%s1600 + $0x6c] sm:$0xff]
          %v1620 = vld [vmem:[%s1600 + $0x74] sm:$0xf]
          %v1621 = vld [vmem:[%s1600 + $0x78] sm:$0xff]
          %v1622 = vld [vmem:[%s1600 + $0x80] sm:$0xf]
          %v1623 = vld [vmem:[%s1600 + $0x84] sm:$0xff]
          %v1624 = vld [vmem:[%s1600 + $0x8c] sm:$0xf]
          %v1625 = vld [vmem:[%s1600 + $0x90] sm:$0xff]
          %v1626 = vld [vmem:[%s1600 + $0x98] sm:$0xf]
          %v1627 = vld [vmem:[%s1600 + $0x9c] sm:$0xff]
          %v1628 = vld [vmem:[%s1600 + $0xa4] sm:$0xf]
          %v1629 = vld [vmem:[%s1600 + $0xa8] sm:$0xff]
          %v1630 = vld [vmem:[%s1600 + $0xb0] sm:$0xf]
          %v1631 = vld [vmem:[%s1600 + $0xb4] sm:$0xff]
          %v1632 = vld [vmem:[%s1600 + $0xbc] sm:$0xf]
          %vm1633 = vsmask.f32 6400
          %v1634 = vrot.slane %v841, 1
          %v1635 = vrot.slane %v843, 2
          %v1636 = vor.u32 %v1634, %v1635
          %v1637 = vrot.slane %v852, 1
          %v1638 = vrot.slane %v848, 2
          %v1639 = vor.u32 %v1637, %v1638
          %v1640 = vsel %vm1633, %v1636, %v1639
          %v1675 = vunpack.c.l.b16 %v1601
          %v1676 = vunpack.c.h.b16 %v1601
          %v1677 = vunpack.c.l.b16 %v1602
          %v1678 = vunpack.c.l.b16 %v1603
          %v1679 = vunpack.c.h.b16 %v1603
          %v1680 = vunpack.c.l.b16 %v1604
          %v1681 = vunpack.c.l.b16 %v1605
          %v1682 = vunpack.c.h.b16 %v1605
          %v1683 = vunpack.c.l.b16 %v1606
          %v1684 = vunpack.c.l.b16 %v1607
          %v1685 = vunpack.c.h.b16 %v1607
          %v1686 = vunpack.c.l.b16 %v1608
          %v1687 = vunpack.c.l.b16 %v1609
          %v1688 = vunpack.c.h.b16 %v1609
          %v1689 = vunpack.c.l.b16 %v1610
          %v1690 = vunpack.c.l.b16 %v1611
          %v1691 = vunpack.c.h.b16 %v1611
          %v1692 = vunpack.c.l.b16 %v1612
          %v1693 = vunpack.c.l.b16 %v1613
          %v1694 = vunpack.c.h.b16 %v1613
          %v1695 = vunpack.c.l.b16 %v1614
          %v1696 = vunpack.c.l.b16 %v1615
          %v1697 = vunpack.c.h.b16 %v1615
          %v1698 = vunpack.c.l.b16 %v1616
          %v1699 = vunpack.c.l.b16 %v1617
          %v1700 = vunpack.c.h.b16 %v1617
          %v1701 = vunpack.c.l.b16 %v1618
          %v1702 = vunpack.c.l.b16 %v1619
          %v1703 = vunpack.c.h.b16 %v1619
          %v1704 = vunpack.c.l.b16 %v1620
          %v1705 = vunpack.c.l.b16 %v1621
          %v1706 = vunpack.c.h.b16 %v1621
          %v1707 = vunpack.c.l.b16 %v1622
          %v1708 = vunpack.c.l.b16 %v1623
          %v1709 = vunpack.c.h.b16 %v1623
          %v1710 = vunpack.c.l.b16 %v1624
          %v1711 = vunpack.c.l.b16 %v1625
          %v1712 = vunpack.c.h.b16 %v1625
          %v1713 = vunpack.c.l.b16 %v1626
          %v1714 = vunpack.c.l.b16 %v1627
          %v1715 = vunpack.c.h.b16 %v1627
          %v1716 = vunpack.c.l.b16 %v1628
          %v1717 = vunpack.c.l.b16 %v1629
          %v1718 = vunpack.c.h.b16 %v1629
          %v1719 = vunpack.c.l.b16 %v1630
          %v1720 = vunpack.c.l.b16 %v1631
          %v1721 = vunpack.c.h.b16 %v1631
          %v1722 = vunpack.c.l.b16 %v1632
          %v1723 = vpack.c.b16 %v1678, %v1675
          %v1724 = vpack.c.b16 %v1679, %v1676
          %v1725 = vpack.c.b16 %v1680, %v1677
          %v1726 = vpack.c.b16 %v1684, %v1681
          %v1727 = vpack.c.b16 %v1685, %v1682
          %v1728 = vpack.c.b16 %v1686, %v1683
          %v1729 = vpack.c.b16 %v1690, %v1687
          %v1730 = vpack.c.b16 %v1691, %v1688
          %v1731 = vpack.c.b16 %v1692, %v1689
          %v1732 = vpack.c.b16 %v1696, %v1693
          %v1733 = vpack.c.b16 %v1697, %v1694
          %v1734 = vpack.c.b16 %v1698, %v1695
          %v1735 = vpack.c.b16 %v1702, %v1699
          %v1736 = vpack.c.b16 %v1703, %v1700
          %v1737 = vpack.c.b16 %v1704, %v1701
          %v1738 = vpack.c.b16 %v1708, %v1705
          %v1739 = vpack.c.b16 %v1709, %v1706
          %v1740 = vpack.c.b16 %v1710, %v1707
          %v1741 = vpack.c.b16 %v1714, %v1711
          %v1742 = vpack.c.b16 %v1715, %v1712
          %v1743 = vpack.c.b16 %v1716, %v1713
          %v1744 = vpack.c.b16 %v1720, %v1717
          %v1745 = vpack.c.b16 %v1721, %v1718
          %v1746 = vpack.c.b16 %v1722, %v1719
          %1771 = vmatprep.subr.bf16.mxu0 %v1745
          %1772 = vmatpush1.bf16.msra.mxu0 %v1744
          %1773 = vmatprep.subr.bf16.mxu0 %v1742
          %1774 = vmatpush1.bf16.msra.mxu0 %v1741
          %1775 = vmatprep.subr.bf16.mxu0 %v1739
          %1776 = vmatpush1.bf16.msra.mxu0 %v1738
          %1777 = vmatprep.subr.bf16.mxu0 %v1736
          %1778 = vmatpush1.bf16.msra.mxu0 %v1735
          %1779 = vmatprep.subr.bf16.mxu0 %v1733
          %1780 = vmatpush1.bf16.msra.mxu0 %v1732
          %1781 = vmatprep.subr.bf16.mxu0 %v1730
          %1782 = vmatpush1.bf16.msra.mxu0 %v1729
          %1783 = vmatprep.subr.bf16.mxu0 %v1727
          %1784 = vmatpush1.bf16.msra.mxu0 %v1726
          %1785 = vmatprep.subr.bf16.mxu0 %v1724
          %1786 = vmatpush1.bf16.msra.mxu0 %v1723
          %1787 = vmatprep.subr.bf16.mxu0 0
          %1788 = vmatpush2.bf16.msra.mxu0 0
          %1789 = vmatprep.subr.bf16.mxu0 0
          %1790 = vmatpush2.bf16.msra.mxu0 0
          %1791 = vmatprep.subr.bf16.mxu0 0
          %1792 = vmatpush2.bf16.msra.mxu0 0
          %1793 = vmatprep.subr.bf16.mxu0 0
          %1794 = vmatpush2.bf16.msra.mxu0 0
          %1795 = vmatprep.subr.bf16.mxu0 0
          %1796 = vmatpush2.bf16.msra.mxu0 0
          %1797 = vmatprep.subr.bf16.mxu0 0
          %1798 = vmatpush2.bf16.msra.mxu0 0
          %1799 = vmatprep.subr.bf16.mxu0 0
          %1800 = vmatpush2.bf16.msra.mxu0 0
          %1801 = vmatprep.subr.bf16.mxu0 0
          %1802 = vmatpush2.bf16.msra.mxu0 0
          %1803 = vmatprep.mubr.bf16.mxu0 0
          %1804 = vmatmul.mubr.bf16.gmra.mxu0 %v1640
          %v1805 = vpop.f32.mrf.mxu0
          %v1806 = vadd.f32 0.0, %v1805
          %v1807 = vpop.f32.mrf.mxu0
          %v1808 = vadd.f32 0.0, %v1807
          %v1809 = vpop.f32.mrf.mxu0
          %v1810 = vadd.f32 0.0, %v1809
          %v1811 = vpop.f32.mrf.mxu0
          %v1812 = vadd.f32 0.0, %v1811
          %1813 = vmatprep.mubr.bf16.mxu0 0
          %1814 = vmatmul.mubr.bf16.gmra.mxu0 %v1639
          %v1815 = vpop.f32.mrf.mxu0
          %v1816 = vadd.f32 0.0, %v1815
          %v1817 = vpop.f32.mrf.mxu0
          %v1818 = vadd.f32 0.0, %v1817
          %v1819 = vpop.f32.mrf.mxu0
          %v1820 = vadd.f32 0.0, %v1819
          %v1821 = vpop.f32.mrf.mxu0
          %v1822 = vadd.f32 0.0, %v1821
          %1823 = vdwg.mxu0
          %1824 = vmatprep.subr.bf16.mxu0 0
          %1825 = vmatpush1.bf16.msra.mxu0 %v1746
          %1826 = vmatprep.subr.bf16.mxu0 0
          %1827 = vmatpush1.bf16.msra.mxu0 %v1743
          %1828 = vmatprep.subr.bf16.mxu0 0
          %1829 = vmatpush1.bf16.msra.mxu0 %v1740
          %1830 = vmatprep.subr.bf16.mxu0 0
          %1831 = vmatpush1.bf16.msra.mxu0 %v1737
          %1832 = vmatprep.subr.bf16.mxu0 0
          %1833 = vmatpush1.bf16.msra.mxu0 %v1734
          %1834 = vmatprep.subr.bf16.mxu0 0
          %1835 = vmatpush1.bf16.msra.mxu0 %v1731
          %1836 = vmatprep.subr.bf16.mxu0 0
          %1837 = vmatpush1.bf16.msra.mxu0 %v1728
          %1838 = vmatprep.subr.bf16.mxu0 0
          %1839 = vmatpush1.bf16.msra.mxu0 %v1725
          %1840 = vmatprep.subr.bf16.mxu0 0
          %1841 = vmatpush2.bf16.msra.mxu0 0
          %1842 = vmatprep.subr.bf16.mxu0 0
          %1843 = vmatpush2.bf16.msra.mxu0 0
          %1844 = vmatprep.subr.bf16.mxu0 0
          %1845 = vmatpush2.bf16.msra.mxu0 0
          %1846 = vmatprep.subr.bf16.mxu0 0
          %1847 = vmatpush2.bf16.msra.mxu0 0
          %1848 = vmatprep.subr.bf16.mxu0 0
          %1849 = vmatpush2.bf16.msra.mxu0 0
          %1850 = vmatprep.subr.bf16.mxu0 0
          %1851 = vmatpush2.bf16.msra.mxu0 0
          %1852 = vmatprep.subr.bf16.mxu0 0
          %1853 = vmatpush2.bf16.msra.mxu0 0
          %1854 = vmatprep.subr.bf16.mxu0 0
          %1855 = vmatpush2.bf16.msra.mxu0 0
          %1856 = vmatprep.mubr.bf16.mxu0 0
          %1857 = vmatmul.mubr.bf16.gmra.mxu0 %v1640
          %v1858 = vpop.f32.mrf.mxu0
          %v1859 = vadd.f32 0.0, %v1858
          %v1860 = vpop.f32.mrf.mxu0
          %v1861 = vpop.f32.mrf.mxu0
          %v1862 = vadd.f32 0.0, %v1861
          %v1863 = vpop.f32.mrf.mxu0
          %1864 = vmatprep.mubr.bf16.mxu0 0
          %1865 = vmatmul.mubr.bf16.gmra.mxu0 %v1639
          %v1866 = vpop.f32.mrf.mxu0
          %v1867 = vadd.f32 0.0, %v1866
          %v1868 = vpop.f32.mrf.mxu0
          %v1869 = vpop.f32.mrf.mxu0
          %v1870 = vadd.f32 0.0, %v1869
          %v1871 = vpop.f32.mrf.mxu0
          %1872 = vdwg.mxu0
          %v1873 = vadd.f32 %v1588, %v1806
          %v1874 = vadd.f32 %v1589, %v1808
          %v1875 = vadd.f32 %v1590, %v1859
          %v1876 = vadd.f32 %v1591, %v1810
          %v1877 = vadd.f32 %v1592, %v1812
          %v1878 = vadd.f32 %v1593, %v1862
          %v1879 = vadd.f32 %v1594, %v1816
          %v1880 = vadd.f32 %v1595, %v1818
          %v1881 = vadd.f32 %v1596, %v1867
          %v1882 = vadd.f32 %v1597, %v1820
          %v1883 = vadd.f32 %v1598, %v1822
          %v1884 = vadd.f32 %v1599, %v1870
          %v1885 = vld [vmem:[%s598] sm:$0x7]
          %v1887 = vlaneseq
          %v1888 = vshrl.u32 %v1887, 7
          %v1889 = vsub.s32 0, %v1888
          %v1890 = vrot.slane %v1885, %v1889
          %v1891 = vlaneseq
          %v1892 = vshrl.u32 %v1891, 7
          %v1893 = vsub.s32 1, %v1892
          %v1894 = vrot.slane %v1885, %v1893
          %v1895 = vlaneseq
          %v1896 = vshrl.u32 %v1895, 7
          %v1897 = vsub.s32 2, %v1896
          %v1898 = vrot.slane %v1885, %v1897
          %v1902 = vadd.f32 %v1873, %v1890
          %v1903 = vadd.f32 %v1874, %v1894
          %v1904 = vadd.f32 %v1875, %v1898
          %v1905 = vadd.f32 %v1876, %v1890
          %v1906 = vadd.f32 %v1877, %v1894
          %v1907 = vadd.f32 %v1878, %v1898
          %v1908 = vadd.f32 %v1879, %v1890
          %v1909 = vadd.f32 %v1880, %v1894
          %v1910 = vadd.f32 %v1881, %v1898
          %v1911 = vadd.f32 %v1882, %v1890
          %v1912 = vadd.f32 %v1883, %v1894
          %v1913 = vadd.f32 %v1884, %v1898
          %v1914 = vmax.f32 %v1902, 0.0
          %v1915 = vmax.f32 %v1903, 0.0
          %v1916 = vmax.f32 %v1904, 0.0
          %v1917 = vmax.f32 %v1905, 0.0
          %v1918 = vmax.f32 %v1906, 0.0
          %v1919 = vmax.f32 %v1907, 0.0
          %v1920 = vmax.f32 %v1908, 0.0
          %v1921 = vmax.f32 %v1909, 0.0
          %v1922 = vmax.f32 %v1910, 0.0
          %v1923 = vmax.f32 %v1911, 0.0
          %v1924 = vmax.f32 %v1912, 0.0
          %v1925 = vmax.f32 %v1913, 0.0
          %v1926 = vpack.c.bf16 %v1917, %v1914
          %v1927 = vpack.c.bf16 %v1918, %v1915
          %v1928 = vpack.c.bf16 %v1919, %v1916
          %v1929 = vpack.c.bf16 %v1923, %v1920
          %v1930 = vpack.c.bf16 %v1924, %v1921
          %v1931 = vpack.c.bf16 %v1925, %v1922
          %v1932 = vld [vmem:[%s607] sm:$0xff]
          %v1933 = vld [vmem:[%s607 + $0x8] sm:$0xff]
          %v1934 = vld [vmem:[%s607 + $0x10] sm:$0xff]
          %v1935 = vld [vmem:[%s607 + $0x18] sm:$0xff]
          %v1936 = vld [vmem:[%s607 + $0x20] sm:$0xff]
          %v1937 = vld [vmem:[%s607 + $0x28] sm:$0xff]
          %v1938 = vld [vmem:[%s607 + $0x30] sm:$0xff]
          %v1939 = vld [vmem:[%s607 + $0x38] sm:$0xff]
          %v1940 = vld [vmem:[%s607 + $0x40] sm:$0xff]
          %v1941 = vld [vmem:[%s607 + $0x48] sm:$0xff]
          %v1942 = vld [vmem:[%s607 + $0x50] sm:$0xff]
          %v1943 = vld [vmem:[%s607 + $0x58] sm:$0xff]
          %v1944 = vld [vmem:[%s607 + $0x60] sm:$0xff]
          %v1945 = vld [vmem:[%s607 + $0x68] sm:$0xff]
          %v1946 = vld [vmem:[%s607 + $0x70] sm:$0xff]
          %v1947 = vld [vmem:[%s607 + $0x78] sm:$0xff]
          %v1948 = vld [vmem:[%s607 + $0x80] sm:$0xff]
          %v1949 = vld [vmem:[%s607 + $0x88] sm:$0xff]
          %v1950 = vld [vmem:[%s607 + $0x90] sm:$0xff]
          %v1951 = vld [vmem:[%s607 + $0x98] sm:$0xff]
          %v1952 = vld [vmem:[%s607 + $0xa0] sm:$0xff]
          %v1953 = vld [vmem:[%s607 + $0xa8] sm:$0xff]
          %v1954 = vld [vmem:[%s607 + $0xb0] sm:$0xff]
          %v1955 = vld [vmem:[%s607 + $0xb8] sm:$0xff]
          %v1956 = vld [vmem:[%s607 + $0xc0] sm:$0xff]
          %v1957 = vld [vmem:[%s607 + $0xc8] sm:$0xff]
          %v1958 = vld [vmem:[%s607 + $0xd0] sm:$0xff]
          %v1959 = vld [vmem:[%s607 + $0xd8] sm:$0xff]
          %v1960 = vld [vmem:[%s607 + $0xe0] sm:$0xff]
          %v1961 = vld [vmem:[%s607 + $0xe8] sm:$0xff]
          %v1962 = vld [vmem:[%s607 + $0xf0] sm:$0xff]
          %v1963 = vld [vmem:[%s607 + $0xf8] sm:$0xff]
          %v1964 = vld [vmem:[%s607 + $0x100] sm:$0xff]
          %v1965 = vld [vmem:[%s607 + $0x108] sm:$0xff]
          %v1966 = vld [vmem:[%s607 + $0x110] sm:$0xff]
          %v1967 = vld [vmem:[%s607 + $0x118] sm:$0xff]
          %v1968 = vld [vmem:[%s607 + $0x120] sm:$0xff]
          %v1969 = vld [vmem:[%s607 + $0x128] sm:$0xff]
          %v1970 = vld [vmem:[%s607 + $0x130] sm:$0xff]
          %v1971 = vld [vmem:[%s607 + $0x138] sm:$0xff]
          %v1972 = vld [vmem:[%s607 + $0x140] sm:$0xff]
          %v1973 = vld [vmem:[%s607 + $0x148] sm:$0xff]
          %v1974 = vld [vmem:[%s607 + $0x150] sm:$0xff]
          %v1975 = vld [vmem:[%s607 + $0x158] sm:$0xff]
          %v1976 = vld [vmem:[%s607 + $0x160] sm:$0xff]
          %v1977 = vld [vmem:[%s607 + $0x168] sm:$0xff]
          %v1978 = vld [vmem:[%s607 + $0x170] sm:$0xff]
          %v1979 = vld [vmem:[%s607 + $0x178] sm:$0xff]
          %v1980 = vld [vmem:[%s607 + $0x180] sm:$0xff]
          %v1981 = vld [vmem:[%s607 + $0x188] sm:$0xff]
          %v1982 = vld [vmem:[%s607 + $0x190] sm:$0xff]
          %v1983 = vld [vmem:[%s607 + $0x198] sm:$0xff]
          %v1984 = vld [vmem:[%s607 + $0x1a0] sm:$0xff]
          %v1985 = vld [vmem:[%s607 + $0x1a8] sm:$0xff]
          %v1986 = vld [vmem:[%s607 + $0x1b0] sm:$0xff]
          %v1987 = vld [vmem:[%s607 + $0x1b8] sm:$0xff]
          %v1988 = vld [vmem:[%s607 + $0x1c0] sm:$0xff]
          %v1989 = vld [vmem:[%s607 + $0x1c8] sm:$0xff]
          %v1990 = vld [vmem:[%s607 + $0x1d0] sm:$0xff]
          %v1991 = vld [vmem:[%s607 + $0x1d8] sm:$0xff]
          %v1992 = vld [vmem:[%s607 + $0x1e0] sm:$0xff]
          %v1993 = vld [vmem:[%s607 + $0x1e8] sm:$0xff]
          %v1994 = vld [vmem:[%s607 + $0x1f0] sm:$0xff]
          %v1995 = vld [vmem:[%s607 + $0x1f8] sm:$0xff]
          %v1996 = vld [vmem:[%s607 + $0x200] sm:$0xff]
          %v1997 = vld [vmem:[%s607 + $0x208] sm:$0xff]
          %v1998 = vld [vmem:[%s607 + $0x210] sm:$0xff]
          %v1999 = vld [vmem:[%s607 + $0x218] sm:$0xff]
          %v2000 = vld [vmem:[%s607 + $0x220] sm:$0xff]
          %v2001 = vld [vmem:[%s607 + $0x228] sm:$0xff]
          %v2002 = vld [vmem:[%s607 + $0x230] sm:$0xff]
          %v2003 = vld [vmem:[%s607 + $0x238] sm:$0xff]
          %v2004 = vld [vmem:[%s607 + $0x240] sm:$0xff]
          %v2005 = vld [vmem:[%s607 + $0x248] sm:$0xff]
          %v2006 = vld [vmem:[%s607 + $0x250] sm:$0xff]
          %v2007 = vld [vmem:[%s607 + $0x258] sm:$0xff]
          %v2008 = vld [vmem:[%s607 + $0x260] sm:$0xff]
          %v2009 = vld [vmem:[%s607 + $0x268] sm:$0xff]
          %v2010 = vld [vmem:[%s607 + $0x270] sm:$0xff]
          %v2011 = vld [vmem:[%s607 + $0x278] sm:$0xff]
          %v2012 = vld [vmem:[%s607 + $0x280] sm:$0xff]
          %v2013 = vld [vmem:[%s607 + $0x288] sm:$0xff]
          %v2014 = vld [vmem:[%s607 + $0x290] sm:$0xff]
          %v2015 = vld [vmem:[%s607 + $0x298] sm:$0xff]
          %v2016 = vld [vmem:[%s607 + $0x2a0] sm:$0xff]
          %v2017 = vld [vmem:[%s607 + $0x2a8] sm:$0xff]
          %v2018 = vld [vmem:[%s607 + $0x2b0] sm:$0xff]
          %v2019 = vld [vmem:[%s607 + $0x2b8] sm:$0xff]
          %v2020 = vld [vmem:[%s607 + $0x2c0] sm:$0xff]
          %v2021 = vld [vmem:[%s607 + $0x2c8] sm:$0xff]
          %v2022 = vld [vmem:[%s607 + $0x2d0] sm:$0xff]
          %v2023 = vld [vmem:[%s607 + $0x2d8] sm:$0xff]
          %v2024 = vld [vmem:[%s607 + $0x2e0] sm:$0xff]
          %v2025 = vld [vmem:[%s607 + $0x2e8] sm:$0xff]
          %v2026 = vld [vmem:[%s607 + $0x2f0] sm:$0xff]
          %v2027 = vld [vmem:[%s607 + $0x2f8] sm:$0xff]
          %s2028 = scalar_lea.vmem %s607, 768 [#allocation8]
          %v2029 = vld [vmem:[%s2028] sm:$0xff]
          %v2030 = vld [vmem:[%s2028 + $0x8] sm:$0xff]
          %v2031 = vld [vmem:[%s2028 + $0x10] sm:$0xff]
          %v2032 = vld [vmem:[%s2028 + $0x18] sm:$0xff]
          %v2033 = vld [vmem:[%s2028 + $0x20] sm:$0xff]
          %v2034 = vld [vmem:[%s2028 + $0x28] sm:$0xff]
          %v2035 = vld [vmem:[%s2028 + $0x30] sm:$0xff]
          %v2036 = vld [vmem:[%s2028 + $0x38] sm:$0xff]
          %v2037 = vld [vmem:[%s2028 + $0x40] sm:$0xff]
          %v2038 = vld [vmem:[%s2028 + $0x48] sm:$0xff]
          %v2039 = vld [vmem:[%s2028 + $0x50] sm:$0xff]
          %v2040 = vld [vmem:[%s2028 + $0x58] sm:$0xff]
          %v2041 = vld [vmem:[%s2028 + $0x60] sm:$0xff]
          %v2042 = vld [vmem:[%s2028 + $0x68] sm:$0xff]
          %v2043 = vld [vmem:[%s2028 + $0x70] sm:$0xff]
          %v2044 = vld [vmem:[%s2028 + $0x78] sm:$0xff]
          %v2045 = vld [vmem:[%s2028 + $0x80] sm:$0xff]
          %v2046 = vld [vmem:[%s2028 + $0x88] sm:$0xff]
          %v2047 = vld [vmem:[%s2028 + $0x90] sm:$0xff]
          %v2048 = vld [vmem:[%s2028 + $0x98] sm:$0xff]
          %v2049 = vld [vmem:[%s2028 + $0xa0] sm:$0xff]
          %v2050 = vld [vmem:[%s2028 + $0xa8] sm:$0xff]
          %v2051 = vld [vmem:[%s2028 + $0xb0] sm:$0xff]
          %v2052 = vld [vmem:[%s2028 + $0xb8] sm:$0xff]
          %v2053 = vld [vmem:[%s2028 + $0xc0] sm:$0xff]
          %v2054 = vld [vmem:[%s2028 + $0xc8] sm:$0xff]
          %v2055 = vld [vmem:[%s2028 + $0xd0] sm:$0xff]
          %v2056 = vld [vmem:[%s2028 + $0xd8] sm:$0xff]
          %v2057 = vld [vmem:[%s2028 + $0xe0] sm:$0xff]
          %v2058 = vld [vmem:[%s2028 + $0xe8] sm:$0xff]
          %v2059 = vld [vmem:[%s2028 + $0xf0] sm:$0xff]
          %v2060 = vld [vmem:[%s2028 + $0xf8] sm:$0xff]
          %v2061 = vld [vmem:[%s2028 + $0x100] sm:$0xff]
          %v2062 = vld [vmem:[%s2028 + $0x108] sm:$0xff]
          %v2063 = vld [vmem:[%s2028 + $0x110] sm:$0xff]
          %v2064 = vld [vmem:[%s2028 + $0x118] sm:$0xff]
          %v2065 = vld [vmem:[%s2028 + $0x120] sm:$0xff]
          %v2066 = vld [vmem:[%s2028 + $0x128] sm:$0xff]
          %v2067 = vld [vmem:[%s2028 + $0x130] sm:$0xff]
          %v2068 = vld [vmem:[%s2028 + $0x138] sm:$0xff]
          %v2069 = vld [vmem:[%s2028 + $0x140] sm:$0xff]
          %v2070 = vld [vmem:[%s2028 + $0x148] sm:$0xff]
          %v2071 = vld [vmem:[%s2028 + $0x150] sm:$0xff]
          %v2072 = vld [vmem:[%s2028 + $0x158] sm:$0xff]
          %v2073 = vld [vmem:[%s2028 + $0x160] sm:$0xff]
          %v2074 = vld [vmem:[%s2028 + $0x168] sm:$0xff]
          %v2075 = vld [vmem:[%s2028 + $0x170] sm:$0xff]
          %v2076 = vld [vmem:[%s2028 + $0x178] sm:$0xff]
          %v2077 = vld [vmem:[%s2028 + $0x180] sm:$0xff]
          %v2078 = vld [vmem:[%s2028 + $0x188] sm:$0xff]
          %v2079 = vld [vmem:[%s2028 + $0x190] sm:$0xff]
          %v2080 = vld [vmem:[%s2028 + $0x198] sm:$0xff]
          %v2081 = vld [vmem:[%s2028 + $0x1a0] sm:$0xff]
          %v2082 = vld [vmem:[%s2028 + $0x1a8] sm:$0xff]
          %v2083 = vld [vmem:[%s2028 + $0x1b0] sm:$0xff]
          %v2084 = vld [vmem:[%s2028 + $0x1b8] sm:$0xff]
          %v2085 = vld [vmem:[%s2028 + $0x1c0] sm:$0xff]
          %v2086 = vld [vmem:[%s2028 + $0x1c8] sm:$0xff]
          %v2087 = vld [vmem:[%s2028 + $0x1d0] sm:$0xff]
          %v2088 = vld [vmem:[%s2028 + $0x1d8] sm:$0xff]
          %v2089 = vld [vmem:[%s2028 + $0x1e0] sm:$0xff]
          %v2090 = vld [vmem:[%s2028 + $0x1e8] sm:$0xff]
          %v2091 = vld [vmem:[%s2028 + $0x1f0] sm:$0xff]
          %v2092 = vld [vmem:[%s2028 + $0x1f8] sm:$0xff]
          %v2093 = vld [vmem:[%s2028 + $0x200] sm:$0xff]
          %v2094 = vld [vmem:[%s2028 + $0x208] sm:$0xff]
          %v2095 = vld [vmem:[%s2028 + $0x210] sm:$0xff]
          %v2096 = vld [vmem:[%s2028 + $0x218] sm:$0xff]
          %v2097 = vld [vmem:[%s2028 + $0x220] sm:$0xff]
          %v2098 = vld [vmem:[%s2028 + $0x228] sm:$0xff]
          %v2099 = vld [vmem:[%s2028 + $0x230] sm:$0xff]
          %v2100 = vld [vmem:[%s2028 + $0x238] sm:$0xff]
          %v2101 = vld [vmem:[%s2028 + $0x240] sm:$0xff]
          %v2102 = vld [vmem:[%s2028 + $0x248] sm:$0xff]
          %v2103 = vld [vmem:[%s2028 + $0x250] sm:$0xff]
          %v2104 = vld [vmem:[%s2028 + $0x258] sm:$0xff]
          %v2105 = vld [vmem:[%s2028 + $0x260] sm:$0xff]
          %v2106 = vld [vmem:[%s2028 + $0x268] sm:$0xff]
          %v2107 = vld [vmem:[%s2028 + $0x270] sm:$0xff]
          %v2108 = vld [vmem:[%s2028 + $0x278] sm:$0xff]
          %v2109 = vld [vmem:[%s2028 + $0x280] sm:$0xff]
          %v2110 = vld [vmem:[%s2028 + $0x288] sm:$0xff]
          %v2111 = vld [vmem:[%s2028 + $0x290] sm:$0xff]
          %v2112 = vld [vmem:[%s2028 + $0x298] sm:$0xff]
          %v2113 = vld [vmem:[%s2028 + $0x2a0] sm:$0xff]
          %v2114 = vld [vmem:[%s2028 + $0x2a8] sm:$0xff]
          %v2115 = vld [vmem:[%s2028 + $0x2b0] sm:$0xff]
          %v2116 = vld [vmem:[%s2028 + $0x2b8] sm:$0xff]
          %v2117 = vld [vmem:[%s2028 + $0x2c0] sm:$0xff]
          %v2118 = vld [vmem:[%s2028 + $0x2c8] sm:$0xff]
          %v2119 = vld [vmem:[%s2028 + $0x2d0] sm:$0xff]
          %v2120 = vld [vmem:[%s2028 + $0x2d8] sm:$0xff]
          %v2121 = vld [vmem:[%s2028 + $0x2e0] sm:$0xff]
          %v2122 = vld [vmem:[%s2028 + $0x2e8] sm:$0xff]
          %v2123 = vld [vmem:[%s2028 + $0x2f0] sm:$0xff]
          %v2124 = vld [vmem:[%s2028 + $0x2f8] sm:$0xff]
          %v2126 = vshrl.u32 %v1926, 16
          %v2128 = vshll.u32 %v1926, 16
          %v2130 = vrot.slane %v2128, 1
          %v2131 = vor.u32 %v2126, %v2130
          %v2133 = vshll.u32 %v1929, 16
          %v2135 = vrot.slane %v2133, 1
          %v2136 = vsel %vm839, %v2131, %v2135
          %v2138 = vshrl.u32 %v1927, 16
          %v2140 = vshll.u32 %v1927, 16
          %v2142 = vrot.slane %v2140, 1
          %v2143 = vor.u32 %v2138, %v2142
          %v2145 = vshll.u32 %v1930, 16
          %v2147 = vrot.slane %v2145, 1
          %v2148 = vsel %vm839, %v2143, %v2147
          %v2150 = vshrl.u32 %v1928, 16
          %v2152 = vshll.u32 %v1928, 16
          %v2154 = vrot.slane %v2152, 1
          %v2155 = vor.u32 %v2150, %v2154
          %v2157 = vshll.u32 %v1931, 16
          %v2159 = vrot.slane %v2157, 1
          %v2160 = vsel %vm839, %v2155, %v2159
          %v2161 = vshrl.u32 %v1929, 16
          %v2163 = vor.u32 %v2161, %v2135
          %v2164 = vshrl.u32 %v1930, 16
          %v2166 = vor.u32 %v2164, %v2147
          %v2167 = vshrl.u32 %v1931, 16
          %v2169 = vor.u32 %v2167, %v2159
          %v2272 = vunpack.c.l.b16 %v2029
          %v2273 = vunpack.c.h.b16 %v2029
          %v2274 = vunpack.c.l.b16 %v2030
          %v2275 = vunpack.c.h.b16 %v2030
          %v2276 = vunpack.c.l.b16 %v2031
          %v2277 = vunpack.c.h.b16 %v2031
          %v2278 = vunpack.c.l.b16 %v2032
          %v2279 = vunpack.c.h.b16 %v2032
          %v2280 = vunpack.c.l.b16 %v2033
          %v2281 = vunpack.c.h.b16 %v2033
          %v2282 = vunpack.c.l.b16 %v2034
          %v2283 = vunpack.c.h.b16 %v2034
          %v2284 = vunpack.c.l.b16 %v2035
          %v2285 = vunpack.c.h.b16 %v2035
          %v2286 = vunpack.c.l.b16 %v2036
          %v2287 = vunpack.c.h.b16 %v2036
          %v2288 = vunpack.c.l.b16 %v2037
          %v2289 = vunpack.c.h.b16 %v2037
          %v2290 = vunpack.c.l.b16 %v2038
          %v2291 = vunpack.c.h.b16 %v2038
          %v2292 = vunpack.c.l.b16 %v2039
          %v2293 = vunpack.c.h.b16 %v2039
          %v2294 = vunpack.c.l.b16 %v2040
          %v2295 = vunpack.c.h.b16 %v2040
          %v2296 = vunpack.c.l.b16 %v2041
          %v2297 = vunpack.c.h.b16 %v2041
          %v2298 = vunpack.c.l.b16 %v2042
          %v2299 = vunpack.c.h.b16 %v2042
          %v2300 = vunpack.c.l.b16 %v2043
          %v2301 = vunpack.c.h.b16 %v2043
          %v2302 = vunpack.c.l.b16 %v2044
          %v2303 = vunpack.c.h.b16 %v2044
          %v2304 = vunpack.c.l.b16 %v2045
          %v2305 = vunpack.c.h.b16 %v2045
          %v2306 = vunpack.c.l.b16 %v2046
          %v2307 = vunpack.c.h.b16 %v2046
          %v2308 = vunpack.c.l.b16 %v2047
          %v2309 = vunpack.c.h.b16 %v2047
          %v2310 = vunpack.c.l.b16 %v2048
          %v2311 = vunpack.c.h.b16 %v2048
          %v2312 = vunpack.c.l.b16 %v2049
          %v2313 = vunpack.c.h.b16 %v2049
          %v2314 = vunpack.c.l.b16 %v2050
          %v2315 = vunpack.c.h.b16 %v2050
          %v2316 = vunpack.c.l.b16 %v2051
          %v2317 = vunpack.c.h.b16 %v2051
          %v2318 = vunpack.c.l.b16 %v2052
          %v2319 = vunpack.c.h.b16 %v2052
          %v2320 = vunpack.c.l.b16 %v2053
          %v2321 = vunpack.c.h.b16 %v2053
          %v2322 = vunpack.c.l.b16 %v2054
          %v2323 = vunpack.c.h.b16 %v2054
          %v2324 = vunpack.c.l.b16 %v2055
          %v2325 = vunpack.c.h.b16 %v2055
          %v2326 = vunpack.c.l.b16 %v2056
          %v2327 = vunpack.c.h.b16 %v2056
          %v2328 = vunpack.c.l.b16 %v2057
          %v2329 = vunpack.c.h.b16 %v2057
          %v2330 = vunpack.c.l.b16 %v2058
          %v2331 = vunpack.c.h.b16 %v2058
          %v2332 = vunpack.c.l.b16 %v2059
          %v2333 = vunpack.c.h.b16 %v2059
          %v2334 = vunpack.c.l.b16 %v2060
          %v2335 = vunpack.c.h.b16 %v2060
          %v2336 = vunpack.c.l.b16 %v2061
          %v2337 = vunpack.c.h.b16 %v2061
          %v2338 = vunpack.c.l.b16 %v2062
          %v2339 = vunpack.c.h.b16 %v2062
          %v2340 = vunpack.c.l.b16 %v2063
          %v2341 = vunpack.c.h.b16 %v2063
          %v2342 = vunpack.c.l.b16 %v2064
          %v2343 = vunpack.c.h.b16 %v2064
          %v2344 = vunpack.c.l.b16 %v2065
          %v2345 = vunpack.c.h.b16 %v2065
          %v2346 = vunpack.c.l.b16 %v2066
          %v2347 = vunpack.c.h.b16 %v2066
          %v2348 = vunpack.c.l.b16 %v2067
          %v2349 = vunpack.c.h.b16 %v2067
          %v2350 = vunpack.c.l.b16 %v2068
          %v2351 = vunpack.c.h.b16 %v2068
          %v2352 = vunpack.c.l.b16 %v2069
          %v2353 = vunpack.c.h.b16 %v2069
          %v2354 = vunpack.c.l.b16 %v2070
          %v2355 = vunpack.c.h.b16 %v2070
          %v2356 = vunpack.c.l.b16 %v2071
          %v2357 = vunpack.c.h.b16 %v2071
          %v2358 = vunpack.c.l.b16 %v2072
          %v2359 = vunpack.c.h.b16 %v2072
          %v2360 = vunpack.c.l.b16 %v2073
          %v2361 = vunpack.c.h.b16 %v2073
          %v2362 = vunpack.c.l.b16 %v2074
          %v2363 = vunpack.c.h.b16 %v2074
          %v2364 = vunpack.c.l.b16 %v2075
          %v2365 = vunpack.c.h.b16 %v2075
          %v2366 = vunpack.c.l.b16 %v2076
          %v2367 = vunpack.c.h.b16 %v2076
          %v2368 = vunpack.c.l.b16 %v2077
          %v2369 = vunpack.c.h.b16 %v2077
          %v2370 = vunpack.c.l.b16 %v2078
          %v2371 = vunpack.c.h.b16 %v2078
          %v2372 = vunpack.c.l.b16 %v2079
          %v2373 = vunpack.c.h.b16 %v2079
          %v2374 = vunpack.c.l.b16 %v2080
          %v2375 = vunpack.c.h.b16 %v2080
          %v2376 = vunpack.c.l.b16 %v2081
          %v2377 = vunpack.c.h.b16 %v2081
          %v2378 = vunpack.c.l.b16 %v2082
          %v2379 = vunpack.c.h.b16 %v2082
          %v2380 = vunpack.c.l.b16 %v2083
          %v2381 = vunpack.c.h.b16 %v2083
          %v2382 = vunpack.c.l.b16 %v2084
          %v2383 = vunpack.c.h.b16 %v2084
          %v2384 = vunpack.c.l.b16 %v2085
          %v2385 = vunpack.c.h.b16 %v2085
          %v2386 = vunpack.c.l.b16 %v2086
          %v2387 = vunpack.c.h.b16 %v2086
          %v2388 = vunpack.c.l.b16 %v2087
          %v2389 = vunpack.c.h.b16 %v2087
          %v2390 = vunpack.c.l.b16 %v2088
          %v2391 = vunpack.c.h.b16 %v2088
          %v2392 = vunpack.c.l.b16 %v2089
          %v2393 = vunpack.c.h.b16 %v2089
          %v2394 = vunpack.c.l.b16 %v2090
          %v2395 = vunpack.c.h.b16 %v2090
          %v2396 = vunpack.c.l.b16 %v2091
          %v2397 = vunpack.c.h.b16 %v2091
          %v2398 = vunpack.c.l.b16 %v2092
          %v2399 = vunpack.c.h.b16 %v2092
          %v2400 = vunpack.c.l.b16 %v2093
          %v2401 = vunpack.c.h.b16 %v2093
          %v2402 = vunpack.c.l.b16 %v2094
          %v2403 = vunpack.c.h.b16 %v2094
          %v2404 = vunpack.c.l.b16 %v2095
          %v2405 = vunpack.c.h.b16 %v2095
          %v2406 = vunpack.c.l.b16 %v2096
          %v2407 = vunpack.c.h.b16 %v2096
          %v2408 = vunpack.c.l.b16 %v2097
          %v2409 = vunpack.c.h.b16 %v2097
          %v2410 = vunpack.c.l.b16 %v2098
          %v2411 = vunpack.c.h.b16 %v2098
          %v2412 = vunpack.c.l.b16 %v2099
          %v2413 = vunpack.c.h.b16 %v2099
          %v2414 = vunpack.c.l.b16 %v2100
          %v2415 = vunpack.c.h.b16 %v2100
          %v2416 = vunpack.c.l.b16 %v2101
          %v2417 = vunpack.c.h.b16 %v2101
          %v2418 = vunpack.c.l.b16 %v2102
          %v2419 = vunpack.c.h.b16 %v2102
          %v2420 = vunpack.c.l.b16 %v2103
          %v2421 = vunpack.c.h.b16 %v2103
          %v2422 = vunpack.c.l.b16 %v2104
          %v2423 = vunpack.c.h.b16 %v2104
          %v2424 = vunpack.c.l.b16 %v2105
          %v2425 = vunpack.c.h.b16 %v2105
          %v2426 = vunpack.c.l.b16 %v2106
          %v2427 = vunpack.c.h.b16 %v2106
          %v2428 = vunpack.c.l.b16 %v2107
          %v2429 = vunpack.c.h.b16 %v2107
          %v2430 = vunpack.c.l.b16 %v2108
          %v2431 = vunpack.c.h.b16 %v2108
          %v2432 = vunpack.c.l.b16 %v2109
          %v2433 = vunpack.c.h.b16 %v2109
          %v2434 = vunpack.c.l.b16 %v2110
          %v2435 = vunpack.c.h.b16 %v2110
          %v2436 = vunpack.c.l.b16 %v2111
          %v2437 = vunpack.c.h.b16 %v2111
          %v2438 = vunpack.c.l.b16 %v2112
          %v2439 = vunpack.c.h.b16 %v2112
          %v2440 = vunpack.c.l.b16 %v2113
          %v2441 = vunpack.c.h.b16 %v2113
          %v2442 = vunpack.c.l.b16 %v2114
          %v2443 = vunpack.c.h.b16 %v2114
          %v2444 = vunpack.c.l.b16 %v2115
          %v2445 = vunpack.c.h.b16 %v2115
          %v2446 = vunpack.c.l.b16 %v2116
          %v2447 = vunpack.c.h.b16 %v2116
          %v2448 = vunpack.c.l.b16 %v2117
          %v2449 = vunpack.c.h.b16 %v2117
          %v2450 = vunpack.c.l.b16 %v2118
          %v2451 = vunpack.c.h.b16 %v2118
          %v2452 = vunpack.c.l.b16 %v2119
          %v2453 = vunpack.c.h.b16 %v2119
          %v2454 = vunpack.c.l.b16 %v2120
          %v2455 = vunpack.c.h.b16 %v2120
          %v2456 = vunpack.c.l.b16 %v2121
          %v2457 = vunpack.c.h.b16 %v2121
          %v2458 = vunpack.c.l.b16 %v2122
          %v2459 = vunpack.c.h.b16 %v2122
          %v2460 = vunpack.c.l.b16 %v2123
          %v2461 = vunpack.c.h.b16 %v2123
          %v2462 = vunpack.c.l.b16 %v2124
          %v2463 = vunpack.c.h.b16 %v2124
          %v2464 = vpack.c.b16 %v2276, %v2272
          %v2465 = vpack.c.b16 %v2277, %v2273
          %v2466 = vpack.c.b16 %v2278, %v2274
          %v2467 = vpack.c.b16 %v2279, %v2275
          %v2468 = vpack.c.b16 %v2284, %v2280
          %v2469 = vpack.c.b16 %v2285, %v2281
          %v2470 = vpack.c.b16 %v2286, %v2282
          %v2471 = vpack.c.b16 %v2287, %v2283
          %v2472 = vpack.c.b16 %v2292, %v2288
          %v2473 = vpack.c.b16 %v2293, %v2289
          %v2474 = vpack.c.b16 %v2294, %v2290
          %v2475 = vpack.c.b16 %v2295, %v2291
          %v2476 = vpack.c.b16 %v2300, %v2296
          %v2477 = vpack.c.b16 %v2301, %v2297
          %v2478 = vpack.c.b16 %v2302, %v2298
          %v2479 = vpack.c.b16 %v2303, %v2299
          %v2480 = vpack.c.b16 %v2308, %v2304
          %v2481 = vpack.c.b16 %v2309, %v2305
          %v2482 = vpack.c.b16 %v2310, %v2306
          %v2483 = vpack.c.b16 %v2311, %v2307
          %v2484 = vpack.c.b16 %v2316, %v2312
          %v2485 = vpack.c.b16 %v2317, %v2313
          %v2486 = vpack.c.b16 %v2318, %v2314
          %v2487 = vpack.c.b16 %v2319, %v2315
          %v2488 = vpack.c.b16 %v2324, %v2320
          %v2489 = vpack.c.b16 %v2325, %v2321
          %v2490 = vpack.c.b16 %v2326, %v2322
          %v2491 = vpack.c.b16 %v2327, %v2323
          %v2492 = vpack.c.b16 %v2332, %v2328
          %v2493 = vpack.c.b16 %v2333, %v2329
          %v2494 = vpack.c.b16 %v2334, %v2330
          %v2495 = vpack.c.b16 %v2335, %v2331
          %v2496 = vpack.c.b16 %v2340, %v2336
          %v2497 = vpack.c.b16 %v2341, %v2337
          %v2498 = vpack.c.b16 %v2342, %v2338
          %v2499 = vpack.c.b16 %v2343, %v2339
          %v2500 = vpack.c.b16 %v2348, %v2344
          %v2501 = vpack.c.b16 %v2349, %v2345
          %v2502 = vpack.c.b16 %v2350, %v2346
          %v2503 = vpack.c.b16 %v2351, %v2347
          %v2504 = vpack.c.b16 %v2356, %v2352
          %v2505 = vpack.c.b16 %v2357, %v2353
          %v2506 = vpack.c.b16 %v2358, %v2354
          %v2507 = vpack.c.b16 %v2359, %v2355
          %v2508 = vpack.c.b16 %v2364, %v2360
          %v2509 = vpack.c.b16 %v2365, %v2361
          %v2510 = vpack.c.b16 %v2366, %v2362
          %v2511 = vpack.c.b16 %v2367, %v2363
          %v2512 = vpack.c.b16 %v2372, %v2368
          %v2513 = vpack.c.b16 %v2373, %v2369
          %v2514 = vpack.c.b16 %v2374, %v2370
          %v2515 = vpack.c.b16 %v2375, %v2371
          %v2516 = vpack.c.b16 %v2380, %v2376
          %v2517 = vpack.c.b16 %v2381, %v2377
          %v2518 = vpack.c.b16 %v2382, %v2378
          %v2519 = vpack.c.b16 %v2383, %v2379
          %v2520 = vpack.c.b16 %v2388, %v2384
          %v2521 = vpack.c.b16 %v2389, %v2385
          %v2522 = vpack.c.b16 %v2390, %v2386
          %v2523 = vpack.c.b16 %v2391, %v2387
          %v2524 = vpack.c.b16 %v2396, %v2392
          %v2525 = vpack.c.b16 %v2397, %v2393
          %v2526 = vpack.c.b16 %v2398, %v2394
          %v2527 = vpack.c.b16 %v2399, %v2395
          %v2528 = vpack.c.b16 %v2404, %v2400
          %v2529 = vpack.c.b16 %v2405, %v2401
          %v2530 = vpack.c.b16 %v2406, %v2402
          %v2531 = vpack.c.b16 %v2407, %v2403
          %v2532 = vpack.c.b16 %v2412, %v2408
          %v2533 = vpack.c.b16 %v2413, %v2409
          %v2534 = vpack.c.b16 %v2414, %v2410
          %v2535 = vpack.c.b16 %v2415, %v2411
          %v2536 = vpack.c.b16 %v2420, %v2416
          %v2537 = vpack.c.b16 %v2421, %v2417
          %v2538 = vpack.c.b16 %v2422, %v2418
          %v2539 = vpack.c.b16 %v2423, %v2419
          %v2540 = vpack.c.b16 %v2428, %v2424
          %v2541 = vpack.c.b16 %v2429, %v2425
          %v2542 = vpack.c.b16 %v2430, %v2426
          %v2543 = vpack.c.b16 %v2431, %v2427
          %v2544 = vpack.c.b16 %v2436, %v2432
          %v2545 = vpack.c.b16 %v2437, %v2433
          %v2546 = vpack.c.b16 %v2438, %v2434
          %v2547 = vpack.c.b16 %v2439, %v2435
          %v2548 = vpack.c.b16 %v2444, %v2440
          %v2549 = vpack.c.b16 %v2445, %v2441
          %v2550 = vpack.c.b16 %v2446, %v2442
          %v2551 = vpack.c.b16 %v2447, %v2443
          %v2552 = vpack.c.b16 %v2452, %v2448
          %v2553 = vpack.c.b16 %v2453, %v2449
          %v2554 = vpack.c.b16 %v2454, %v2450
          %v2555 = vpack.c.b16 %v2455, %v2451
          %v2556 = vpack.c.b16 %v2460, %v2456
          %v2557 = vpack.c.b16 %v2461, %v2457
          %v2558 = vpack.c.b16 %v2462, %v2458
          %v2559 = vpack.c.b16 %v2463, %v2459
          %2656 = vmatprep.subr.bf16.mxu0 %v2493
          %2657 = vmatpush1.bf16.msra.mxu0 %v2492
          %2658 = vmatprep.subr.bf16.mxu0 %v2489
          %2659 = vmatpush1.bf16.msra.mxu0 %v2488
          %2660 = vmatprep.subr.bf16.mxu0 %v2485
          %2661 = vmatpush1.bf16.msra.mxu0 %v2484
          %2662 = vmatprep.subr.bf16.mxu0 %v2481
          %2663 = vmatpush1.bf16.msra.mxu0 %v2480
          %2664 = vmatprep.subr.bf16.mxu0 %v2477
          %2665 = vmatpush1.bf16.msra.mxu0 %v2476
          %2666 = vmatprep.subr.bf16.mxu0 %v2473
          %2667 = vmatpush1.bf16.msra.mxu0 %v2472
          %2668 = vmatprep.subr.bf16.mxu0 %v2469
          %2669 = vmatpush1.bf16.msra.mxu0 %v2468
          %2670 = vmatprep.subr.bf16.mxu0 %v2465
          %2671 = vmatpush1.bf16.msra.mxu0 %v2464
          %2672 = vmatprep.subr.bf16.mxu0 %v2525
          %2673 = vmatpush2.bf16.msra.mxu0 %v2524
          %2674 = vmatprep.subr.bf16.mxu0 %v2521
          %2675 = vmatpush2.bf16.msra.mxu0 %v2520
          %2676 = vmatprep.subr.bf16.mxu0 %v2517
          %2677 = vmatpush2.bf16.msra.mxu0 %v2516
          %2678 = vmatprep.subr.bf16.mxu0 %v2513
          %2679 = vmatpush2.bf16.msra.mxu0 %v2512
          %2680 = vmatprep.subr.bf16.mxu0 %v2509
          %2681 = vmatpush2.bf16.msra.mxu0 %v2508
          %2682 = vmatprep.subr.bf16.mxu0 %v2505
          %2683 = vmatpush2.bf16.msra.mxu0 %v2504
          %2684 = vmatprep.subr.bf16.mxu0 %v2501
          %2685 = vmatpush2.bf16.msra.mxu0 %v2500
          %2686 = vmatprep.subr.bf16.mxu0 %v2497
          %2687 = vmatpush2.bf16.msra.mxu0 %v2496
          %2688 = vmatprep.mubr.bf16.mxu0 %v2148
          %2689 = vmatmul.mubr.bf16.gmra.mxu0 %v2136
          %v2690 = vpop.f32.mrf.mxu0
          %v2691 = vadd.f32 0.0, %v2690
          %v2692 = vpop.f32.mrf.mxu0
          %v2693 = vadd.f32 0.0, %v2692
          %v2694 = vpop.f32.mrf.mxu0
          %v2695 = vadd.f32 0.0, %v2694
          %v2696 = vpop.f32.mrf.mxu0
          %v2697 = vadd.f32 0.0, %v2696
          %2698 = vmatprep.mubr.bf16.mxu0 %v2166
          %2699 = vmatmul.mubr.bf16.gmra.mxu0 %v2163
          %v2700 = vpop.f32.mrf.mxu0
          %v2701 = vadd.f32 0.0, %v2700
          %v2702 = vpop.f32.mrf.mxu0
          %v2703 = vadd.f32 0.0, %v2702
          %v2704 = vpop.f32.mrf.mxu0
          %v2705 = vadd.f32 0.0, %v2704
          %v2706 = vpop.f32.mrf.mxu0
          %v2707 = vadd.f32 0.0, %v2706
          %2708 = vdwg.mxu0
          %2709 = vmatprep.subr.bf16.mxu0 %v2557
          %2710 = vmatpush1.bf16.msra.mxu0 %v2556
          %2711 = vmatprep.subr.bf16.mxu0 %v2553
          %2712 = vmatpush1.bf16.msra.mxu0 %v2552
          %2713 = vmatprep.subr.bf16.mxu0 %v2549
          %2714 = vmatpush1.bf16.msra.mxu0 %v2548
          %2715 = vmatprep.subr.bf16.mxu0 %v2545
          %2716 = vmatpush1.bf16.msra.mxu0 %v2544
          %2717 = vmatprep.subr.bf16.mxu0 %v2541
          %2718 = vmatpush1.bf16.msra.mxu0 %v2540
          %2719 = vmatprep.subr.bf16.mxu0 %v2537
          %2720 = vmatpush1.bf16.msra.mxu0 %v2536
          %2721 = vmatprep.subr.bf16.mxu0 %v2533
          %2722 = vmatpush1.bf16.msra.mxu0 %v2532
          %2723 = vmatprep.subr.bf16.mxu0 %v2529
          %2724 = vmatpush1.bf16.msra.mxu0 %v2528
          %2725 = vmatprep.subr.bf16.mxu0 0
          %2726 = vmatpush2.bf16.msra.mxu0 0
          %2727 = vmatprep.subr.bf16.mxu0 0
          %2728 = vmatpush2.bf16.msra.mxu0 0
          %2729 = vmatprep.subr.bf16.mxu0 0
          %2730 = vmatpush2.bf16.msra.mxu0 0
          %2731 = vmatprep.subr.bf16.mxu0 0
          %2732 = vmatpush2.bf16.msra.mxu0 0
          %2733 = vmatprep.subr.bf16.mxu0 0
          %2734 = vmatpush2.bf16.msra.mxu0 0
          %2735 = vmatprep.subr.bf16.mxu0 0
          %2736 = vmatpush2.bf16.msra.mxu0 0
          %2737 = vmatprep.subr.bf16.mxu0 0
          %2738 = vmatpush2.bf16.msra.mxu0 0
          %2739 = vmatprep.subr.bf16.mxu0 0
          %2740 = vmatpush2.bf16.msra.mxu0 0
          %2741 = vmatprep.mubr.bf16.mxu0 0
          %2742 = vmatmul.mubr.bf16.gmra.mxu0 %v2160
          %v2743 = vpop.f32.mrf.mxu0
          %v2744 = vadd.f32 %v2691, %v2743
          %v2745 = vpop.f32.mrf.mxu0
          %v2746 = vadd.f32 %v2693, %v2745
          %v2747 = vpop.f32.mrf.mxu0
          %v2748 = vadd.f32 %v2695, %v2747
          %v2749 = vpop.f32.mrf.mxu0
          %v2750 = vadd.f32 %v2697, %v2749
          %2751 = vmatprep.mubr.bf16.mxu0 0
          %2752 = vmatmul.mubr.bf16.gmra.mxu0 %v2169
          %v2753 = vpop.f32.mrf.mxu0
          %v2754 = vadd.f32 %v2701, %v2753
          %v2755 = vpop.f32.mrf.mxu0
          %v2756 = vadd.f32 %v2703, %v2755
          %v2757 = vpop.f32.mrf.mxu0
          %v2758 = vadd.f32 %v2705, %v2757
          %v2759 = vpop.f32.mrf.mxu0
          %v2760 = vadd.f32 %v2707, %v2759
          %2761 = vdwg.mxu0
          %2762 = vmatprep.subr.bf16.mxu0 %v2495
          %2763 = vmatpush1.bf16.msra.mxu0 %v2494
          %2764 = vmatprep.subr.bf16.mxu0 %v2491
          %2765 = vmatpush1.bf16.msra.mxu0 %v2490
          %2766 = vmatprep.subr.bf16.mxu0 %v2487
          %2767 = vmatpush1.bf16.msra.mxu0 %v2486
          %2768 = vmatprep.subr.bf16.mxu0 %v2483
          %2769 = vmatpush1.bf16.msra.mxu0 %v2482
          %2770 = vmatprep.subr.bf16.mxu0 %v2479
          %2771 = vmatpush1.bf16.msra.mxu0 %v2478
          %2772 = vmatprep.subr.bf16.mxu0 %v2475
          %2773 = vmatpush1.bf16.msra.mxu0 %v2474
          %2774 = vmatprep.subr.bf16.mxu0 %v2471
          %2775 = vmatpush1.bf16.msra.mxu0 %v2470
          %2776 = vmatprep.subr.bf16.mxu0 %v2467
          %2777 = vmatpush1.bf16.msra.mxu0 %v2466
          %2778 = vmatprep.subr.bf16.mxu0 %v2527
          %2779 = vmatpush2.bf16.msra.mxu0 %v2526
          %2780 = vmatprep.subr.bf16.mxu0 %v2523
          %2781 = vmatpush2.bf16.msra.mxu0 %v2522
          %2782 = vmatprep.subr.bf16.mxu0 %v2519
          %2783 = vmatpush2.bf16.msra.mxu0 %v2518
          %2784 = vmatprep.subr.bf16.mxu0 %v2515
          %2785 = vmatpush2.bf16.msra.mxu0 %v2514
          %2786 = vmatprep.subr.bf16.mxu0 %v2511
          %2787 = vmatpush2.bf16.msra.mxu0 %v2510
          %2788 = vmatprep.subr.bf16.mxu0 %v2507
          %2789 = vmatpush2.bf16.msra.mxu0 %v2506
          %2790 = vmatprep.subr.bf16.mxu0 %v2503
          %2791 = vmatpush2.bf16.msra.mxu0 %v2502
          %2792 = vmatprep.subr.bf16.mxu0 %v2499
          %2793 = vmatpush2.bf16.msra.mxu0 %v2498
          %2794 = vmatprep.mubr.bf16.mxu0 %v2148
          %2795 = vmatmul.mubr.bf16.gmra.mxu0 %v2136
          %v2796 = vpop.f32.mrf.mxu0
          %v2797 = vadd.f32 0.0, %v2796
          %v2798 = vpop.f32.mrf.mxu0
          %v2799 = vadd.f32 0.0, %v2798
          %v2800 = vpop.f32.mrf.mxu0
          %v2801 = vadd.f32 0.0, %v2800
          %v2802 = vpop.f32.mrf.mxu0
          %v2803 = vadd.f32 0.0, %v2802
          %2804 = vmatprep.mubr.bf16.mxu0 %v2166
          %2805 = vmatmul.mubr.bf16.gmra.mxu0 %v2163
          %v2806 = vpop.f32.mrf.mxu0
          %v2807 = vadd.f32 0.0, %v2806
          %v2808 = vpop.f32.mrf.mxu0
          %v2809 = vadd.f32 0.0, %v2808
          %v2810 = vpop.f32.mrf.mxu0
          %v2811 = vadd.f32 0.0, %v2810
          %v2812 = vpop.f32.mrf.mxu0
          %v2813 = vadd.f32 0.0, %v2812
          %2814 = vdwg.mxu0
          %2815 = vmatprep.subr.bf16.mxu0 %v2559
          %2816 = vmatpush1.bf16.msra.mxu0 %v2558
          %2817 = vmatprep.subr.bf16.mxu0 %v2555
          %2818 = vmatpush1.bf16.msra.mxu0 %v2554
          %2819 = vmatprep.subr.bf16.mxu0 %v2551
          %2820 = vmatpush1.bf16.msra.mxu0 %v2550
          %2821 = vmatprep.subr.bf16.mxu0 %v2547
          %2822 = vmatpush1.bf16.msra.mxu0 %v2546
          %2823 = vmatprep.subr.bf16.mxu0 %v2543
          %2824 = vmatpush1.bf16.msra.mxu0 %v2542
          %2825 = vmatprep.subr.bf16.mxu0 %v2539
          %2826 = vmatpush1.bf16.msra.mxu0 %v2538
          %2827 = vmatprep.subr.bf16.mxu0 %v2535
          %2828 = vmatpush1.bf16.msra.mxu0 %v2534
          %2829 = vmatprep.subr.bf16.mxu0 %v2531
          %2830 = vmatpush1.bf16.msra.mxu0 %v2530
          %2831 = vmatprep.subr.bf16.mxu0 0
          %2832 = vmatpush2.bf16.msra.mxu0 0
          %2833 = vmatprep.subr.bf16.mxu0 0
          %2834 = vmatpush2.bf16.msra.mxu0 0
          %2835 = vmatprep.subr.bf16.mxu0 0
          %2836 = vmatpush2.bf16.msra.mxu0 0
          %2837 = vmatprep.subr.bf16.mxu0 0
          %2838 = vmatpush2.bf16.msra.mxu0 0
          %2839 = vmatprep.subr.bf16.mxu0 0
          %2840 = vmatpush2.bf16.msra.mxu0 0
          %2841 = vmatprep.subr.bf16.mxu0 0
          %2842 = vmatpush2.bf16.msra.mxu0 0
          %2843 = vmatprep.subr.bf16.mxu0 0
          %2844 = vmatpush2.bf16.msra.mxu0 0
          %2845 = vmatprep.subr.bf16.mxu0 0
          %2846 = vmatpush2.bf16.msra.mxu0 0
          %2847 = vmatprep.mubr.bf16.mxu0 0
          %2848 = vmatmul.mubr.bf16.gmra.mxu0 %v2160
          %v2849 = vpop.f32.mrf.mxu0
          %v2850 = vadd.f32 %v2797, %v2849
          %v2851 = vpop.f32.mrf.mxu0
          %v2852 = vadd.f32 %v2799, %v2851
          %v2853 = vpop.f32.mrf.mxu0
          %v2854 = vadd.f32 %v2801, %v2853
          %v2855 = vpop.f32.mrf.mxu0
          %v2856 = vadd.f32 %v2803, %v2855
          %2857 = vmatprep.mubr.bf16.mxu0 0
          %2858 = vmatmul.mubr.bf16.gmra.mxu0 %v2169
          %v2859 = vpop.f32.mrf.mxu0
          %v2860 = vadd.f32 %v2807, %v2859
          %v2861 = vpop.f32.mrf.mxu0
          %v2862 = vadd.f32 %v2809, %v2861
          %v2863 = vpop.f32.mrf.mxu0
          %v2864 = vadd.f32 %v2811, %v2863
          %v2865 = vpop.f32.mrf.mxu0
          %v2866 = vadd.f32 %v2813, %v2865
          %2867 = vdwg.mxu0
          %v2964 = vunpack.c.l.b16 %v1932
          %v2965 = vunpack.c.h.b16 %v1932
          %v2966 = vunpack.c.l.b16 %v1933
          %v2967 = vunpack.c.h.b16 %v1933
          %v2968 = vunpack.c.l.b16 %v1934
          %v2969 = vunpack.c.h.b16 %v1934
          %v2970 = vunpack.c.l.b16 %v1935
          %v2971 = vunpack.c.h.b16 %v1935
          %v2972 = vunpack.c.l.b16 %v1936
          %v2973 = vunpack.c.h.b16 %v1936
          %v2974 = vunpack.c.l.b16 %v1937
          %v2975 = vunpack.c.h.b16 %v1937
          %v2976 = vunpack.c.l.b16 %v1938
          %v2977 = vunpack.c.h.b16 %v1938
          %v2978 = vunpack.c.l.b16 %v1939
          %v2979 = vunpack.c.h.b16 %v1939
          %v2980 = vunpack.c.l.b16 %v1940
          %v2981 = vunpack.c.h.b16 %v1940
          %v2982 = vunpack.c.l.b16 %v1941
          %v2983 = vunpack.c.h.b16 %v1941
          %v2984 = vunpack.c.l.b16 %v1942
          %v2985 = vunpack.c.h.b16 %v1942
          %v2986 = vunpack.c.l.b16 %v1943
          %v2987 = vunpack.c.h.b16 %v1943
          %v2988 = vunpack.c.l.b16 %v1944
          %v2989 = vunpack.c.h.b16 %v1944
          %v2990 = vunpack.c.l.b16 %v1945
          %v2991 = vunpack.c.h.b16 %v1945
          %v2992 = vunpack.c.l.b16 %v1946
          %v2993 = vunpack.c.h.b16 %v1946
          %v2994 = vunpack.c.l.b16 %v1947
          %v2995 = vunpack.c.h.b16 %v1947
          %v2996 = vunpack.c.l.b16 %v1948
          %v2997 = vunpack.c.h.b16 %v1948
          %v2998 = vunpack.c.l.b16 %v1949
          %v2999 = vunpack.c.h.b16 %v1949
          %v3000 = vunpack.c.l.b16 %v1950
          %v3001 = vunpack.c.h.b16 %v1950
          %v3002 = vunpack.c.l.b16 %v1951
          %v3003 = vunpack.c.h.b16 %v1951
          %v3004 = vunpack.c.l.b16 %v1952
          %v3005 = vunpack.c.h.b16 %v1952
          %v3006 = vunpack.c.l.b16 %v1953
          %v3007 = vunpack.c.h.b16 %v1953
          %v3008 = vunpack.c.l.b16 %v1954
          %v3009 = vunpack.c.h.b16 %v1954
          %v3010 = vunpack.c.l.b16 %v1955
          %v3011 = vunpack.c.h.b16 %v1955
          %v3012 = vunpack.c.l.b16 %v1956
          %v3013 = vunpack.c.h.b16 %v1956
          %v3014 = vunpack.c.l.b16 %v1957
          %v3015 = vunpack.c.h.b16 %v1957
          %v3016 = vunpack.c.l.b16 %v1958
          %v3017 = vunpack.c.h.b16 %v1958
          %v3018 = vunpack.c.l.b16 %v1959
          %v3019 = vunpack.c.h.b16 %v1959
          %v3020 = vunpack.c.l.b16 %v1960
          %v3021 = vunpack.c.h.b16 %v1960
          %v3022 = vunpack.c.l.b16 %v1961
          %v3023 = vunpack.c.h.b16 %v1961
          %v3024 = vunpack.c.l.b16 %v1962
          %v3025 = vunpack.c.h.b16 %v1962
          %v3026 = vunpack.c.l.b16 %v1963
          %v3027 = vunpack.c.h.b16 %v1963
          %v3028 = vunpack.c.l.b16 %v1964
          %v3029 = vunpack.c.h.b16 %v1964
          %v3030 = vunpack.c.l.b16 %v1965
          %v3031 = vunpack.c.h.b16 %v1965
          %v3032 = vunpack.c.l.b16 %v1966
          %v3033 = vunpack.c.h.b16 %v1966
          %v3034 = vunpack.c.l.b16 %v1967
          %v3035 = vunpack.c.h.b16 %v1967
          %v3036 = vunpack.c.l.b16 %v1968
          %v3037 = vunpack.c.h.b16 %v1968
          %v3038 = vunpack.c.l.b16 %v1969
          %v3039 = vunpack.c.h.b16 %v1969
          %v3040 = vunpack.c.l.b16 %v1970
          %v3041 = vunpack.c.h.b16 %v1970
          %v3042 = vunpack.c.l.b16 %v1971
          %v3043 = vunpack.c.h.b16 %v1971
          %v3044 = vunpack.c.l.b16 %v1972
          %v3045 = vunpack.c.h.b16 %v1972
          %v3046 = vunpack.c.l.b16 %v1973
          %v3047 = vunpack.c.h.b16 %v1973
          %v3048 = vunpack.c.l.b16 %v1974
          %v3049 = vunpack.c.h.b16 %v1974
          %v3050 = vunpack.c.l.b16 %v1975
          %v3051 = vunpack.c.h.b16 %v1975
          %v3052 = vunpack.c.l.b16 %v1976
          %v3053 = vunpack.c.h.b16 %v1976
          %v3054 = vunpack.c.l.b16 %v1977
          %v3055 = vunpack.c.h.b16 %v1977
          %v3056 = vunpack.c.l.b16 %v1978
          %v3057 = vunpack.c.h.b16 %v1978
          %v3058 = vunpack.c.l.b16 %v1979
          %v3059 = vunpack.c.h.b16 %v1979
          %v3060 = vunpack.c.l.b16 %v1980
          %v3061 = vunpack.c.h.b16 %v1980
          %v3062 = vunpack.c.l.b16 %v1981
          %v3063 = vunpack.c.h.b16 %v1981
          %v3064 = vunpack.c.l.b16 %v1982
          %v3065 = vunpack.c.h.b16 %v1982
          %v3066 = vunpack.c.l.b16 %v1983
          %v3067 = vunpack.c.h.b16 %v1983
          %v3068 = vunpack.c.l.b16 %v1984
          %v3069 = vunpack.c.h.b16 %v1984
          %v3070 = vunpack.c.l.b16 %v1985
          %v3071 = vunpack.c.h.b16 %v1985
          %v3072 = vunpack.c.l.b16 %v1986
          %v3073 = vunpack.c.h.b16 %v1986
          %v3074 = vunpack.c.l.b16 %v1987
          %v3075 = vunpack.c.h.b16 %v1987
          %v3076 = vunpack.c.l.b16 %v1988
          %v3077 = vunpack.c.h.b16 %v1988
          %v3078 = vunpack.c.l.b16 %v1989
          %v3079 = vunpack.c.h.b16 %v1989
          %v3080 = vunpack.c.l.b16 %v1990
          %v3081 = vunpack.c.h.b16 %v1990
          %v3082 = vunpack.c.l.b16 %v1991
          %v3083 = vunpack.c.h.b16 %v1991
          %v3084 = vunpack.c.l.b16 %v1992
          %v3085 = vunpack.c.h.b16 %v1992
          %v3086 = vunpack.c.l.b16 %v1993
          %v3087 = vunpack.c.h.b16 %v1993
          %v3088 = vunpack.c.l.b16 %v1994
          %v3089 = vunpack.c.h.b16 %v1994
          %v3090 = vunpack.c.l.b16 %v1995
          %v3091 = vunpack.c.h.b16 %v1995
          %v3092 = vunpack.c.l.b16 %v1996
          %v3093 = vunpack.c.h.b16 %v1996
          %v3094 = vunpack.c.l.b16 %v1997
          %v3095 = vunpack.c.h.b16 %v1997
          %v3096 = vunpack.c.l.b16 %v1998
          %v3097 = vunpack.c.h.b16 %v1998
          %v3098 = vunpack.c.l.b16 %v1999
          %v3099 = vunpack.c.h.b16 %v1999
          %v3100 = vunpack.c.l.b16 %v2000
          %v3101 = vunpack.c.h.b16 %v2000
          %v3102 = vunpack.c.l.b16 %v2001
          %v3103 = vunpack.c.h.b16 %v2001
          %v3104 = vunpack.c.l.b16 %v2002
          %v3105 = vunpack.c.h.b16 %v2002
          %v3106 = vunpack.c.l.b16 %v2003
          %v3107 = vunpack.c.h.b16 %v2003
          %v3108 = vunpack.c.l.b16 %v2004
          %v3109 = vunpack.c.h.b16 %v2004
          %v3110 = vunpack.c.l.b16 %v2005
          %v3111 = vunpack.c.h.b16 %v2005
          %v3112 = vunpack.c.l.b16 %v2006
          %v3113 = vunpack.c.h.b16 %v2006
          %v3114 = vunpack.c.l.b16 %v2007
          %v3115 = vunpack.c.h.b16 %v2007
          %v3116 = vunpack.c.l.b16 %v2008
          %v3117 = vunpack.c.h.b16 %v2008
          %v3118 = vunpack.c.l.b16 %v2009
          %v3119 = vunpack.c.h.b16 %v2009
          %v3120 = vunpack.c.l.b16 %v2010
          %v3121 = vunpack.c.h.b16 %v2010
          %v3122 = vunpack.c.l.b16 %v2011
          %v3123 = vunpack.c.h.b16 %v2011
          %v3124 = vunpack.c.l.b16 %v2012
          %v3125 = vunpack.c.h.b16 %v2012
          %v3126 = vunpack.c.l.b16 %v2013
          %v3127 = vunpack.c.h.b16 %v2013
          %v3128 = vunpack.c.l.b16 %v2014
          %v3129 = vunpack.c.h.b16 %v2014
          %v3130 = vunpack.c.l.b16 %v2015
          %v3131 = vunpack.c.h.b16 %v2015
          %v3132 = vunpack.c.l.b16 %v2016
          %v3133 = vunpack.c.h.b16 %v2016
          %v3134 = vunpack.c.l.b16 %v2017
          %v3135 = vunpack.c.h.b16 %v2017
          %v3136 = vunpack.c.l.b16 %v2018
          %v3137 = vunpack.c.h.b16 %v2018
          %v3138 = vunpack.c.l.b16 %v2019
          %v3139 = vunpack.c.h.b16 %v2019
          %v3140 = vunpack.c.l.b16 %v2020
          %v3141 = vunpack.c.h.b16 %v2020
          %v3142 = vunpack.c.l.b16 %v2021
          %v3143 = vunpack.c.h.b16 %v2021
          %v3144 = vunpack.c.l.b16 %v2022
          %v3145 = vunpack.c.h.b16 %v2022
          %v3146 = vunpack.c.l.b16 %v2023
          %v3147 = vunpack.c.h.b16 %v2023
          %v3148 = vunpack.c.l.b16 %v2024
          %v3149 = vunpack.c.h.b16 %v2024
          %v3150 = vunpack.c.l.b16 %v2025
          %v3151 = vunpack.c.h.b16 %v2025
          %v3152 = vunpack.c.l.b16 %v2026
          %v3153 = vunpack.c.h.b16 %v2026
          %v3154 = vunpack.c.l.b16 %v2027
          %v3155 = vunpack.c.h.b16 %v2027
          %v3156 = vpack.c.b16 %v2968, %v2964
          %v3157 = vpack.c.b16 %v2969, %v2965
          %v3158 = vpack.c.b16 %v2970, %v2966
          %v3159 = vpack.c.b16 %v2971, %v2967
          %v3160 = vpack.c.b16 %v2976, %v2972
          %v3161 = vpack.c.b16 %v2977, %v2973
          %v3162 = vpack.c.b16 %v2978, %v2974
          %v3163 = vpack.c.b16 %v2979, %v2975
          %v3164 = vpack.c.b16 %v2984, %v2980
          %v3165 = vpack.c.b16 %v2985, %v2981
          %v3166 = vpack.c.b16 %v2986, %v2982
          %v3167 = vpack.c.b16 %v2987, %v2983
          %v3168 = vpack.c.b16 %v2992, %v2988
          %v3169 = vpack.c.b16 %v2993, %v2989
          %v3170 = vpack.c.b16 %v2994, %v2990
          %v3171 = vpack.c.b16 %v2995, %v2991
          %v3172 = vpack.c.b16 %v3000, %v2996
          %v3173 = vpack.c.b16 %v3001, %v2997
          %v3174 = vpack.c.b16 %v3002, %v2998
          %v3175 = vpack.c.b16 %v3003, %v2999
          %v3176 = vpack.c.b16 %v3008, %v3004
          %v3177 = vpack.c.b16 %v3009, %v3005
          %v3178 = vpack.c.b16 %v3010, %v3006
          %v3179 = vpack.c.b16 %v3011, %v3007
          %v3180 = vpack.c.b16 %v3016, %v3012
          %v3181 = vpack.c.b16 %v3017, %v3013
          %v3182 = vpack.c.b16 %v3018, %v3014
          %v3183 = vpack.c.b16 %v3019, %v3015
          %v3184 = vpack.c.b16 %v3024, %v3020
          %v3185 = vpack.c.b16 %v3025, %v3021
          %v3186 = vpack.c.b16 %v3026, %v3022
          %v3187 = vpack.c.b16 %v3027, %v3023
          %v3188 = vpack.c.b16 %v3032, %v3028
          %v3189 = vpack.c.b16 %v3033, %v3029
          %v3190 = vpack.c.b16 %v3034, %v3030
          %v3191 = vpack.c.b16 %v3035, %v3031
          %v3192 = vpack.c.b16 %v3040, %v3036
          %v3193 = vpack.c.b16 %v3041, %v3037
          %v3194 = vpack.c.b16 %v3042, %v3038
          %v3195 = vpack.c.b16 %v3043, %v3039
          %v3196 = vpack.c.b16 %v3048, %v3044
          %v3197 = vpack.c.b16 %v3049, %v3045
          %v3198 = vpack.c.b16 %v3050, %v3046
          %v3199 = vpack.c.b16 %v3051, %v3047
          %v3200 = vpack.c.b16 %v3056, %v3052
          %v3201 = vpack.c.b16 %v3057, %v3053
          %v3202 = vpack.c.b16 %v3058, %v3054
          %v3203 = vpack.c.b16 %v3059, %v3055
          %v3204 = vpack.c.b16 %v3064, %v3060
          %v3205 = vpack.c.b16 %v3065, %v3061
          %v3206 = vpack.c.b16 %v3066, %v3062
          %v3207 = vpack.c.b16 %v3067, %v3063
          %v3208 = vpack.c.b16 %v3072, %v3068
          %v3209 = vpack.c.b16 %v3073, %v3069
          %v3210 = vpack.c.b16 %v3074, %v3070
          %v3211 = vpack.c.b16 %v3075, %v3071
          %v3212 = vpack.c.b16 %v3080, %v3076
          %v3213 = vpack.c.b16 %v3081, %v3077
          %v3214 = vpack.c.b16 %v3082, %v3078
          %v3215 = vpack.c.b16 %v3083, %v3079
          %v3216 = vpack.c.b16 %v3088, %v3084
          %v3217 = vpack.c.b16 %v3089, %v3085
          %v3218 = vpack.c.b16 %v3090, %v3086
          %v3219 = vpack.c.b16 %v3091, %v3087
          %v3220 = vpack.c.b16 %v3096, %v3092
          %v3221 = vpack.c.b16 %v3097, %v3093
          %v3222 = vpack.c.b16 %v3098, %v3094
          %v3223 = vpack.c.b16 %v3099, %v3095
          %v3224 = vpack.c.b16 %v3104, %v3100
          %v3225 = vpack.c.b16 %v3105, %v3101
          %v3226 = vpack.c.b16 %v3106, %v3102
          %v3227 = vpack.c.b16 %v3107, %v3103
          %v3228 = vpack.c.b16 %v3112, %v3108
          %v3229 = vpack.c.b16 %v3113, %v3109
          %v3230 = vpack.c.b16 %v3114, %v3110
          %v3231 = vpack.c.b16 %v3115, %v3111
          %v3232 = vpack.c.b16 %v3120, %v3116
          %v3233 = vpack.c.b16 %v3121, %v3117
          %v3234 = vpack.c.b16 %v3122, %v3118
          %v3235 = vpack.c.b16 %v3123, %v3119
          %v3236 = vpack.c.b16 %v3128, %v3124
          %v3237 = vpack.c.b16 %v3129, %v3125
          %v3238 = vpack.c.b16 %v3130, %v3126
          %v3239 = vpack.c.b16 %v3131, %v3127
          %v3240 = vpack.c.b16 %v3136, %v3132
          %v3241 = vpack.c.b16 %v3137, %v3133
          %v3242 = vpack.c.b16 %v3138, %v3134
          %v3243 = vpack.c.b16 %v3139, %v3135
          %v3244 = vpack.c.b16 %v3144, %v3140
          %v3245 = vpack.c.b16 %v3145, %v3141
          %v3246 = vpack.c.b16 %v3146, %v3142
          %v3247 = vpack.c.b16 %v3147, %v3143
          %v3248 = vpack.c.b16 %v3152, %v3148
          %v3249 = vpack.c.b16 %v3153, %v3149
          %v3250 = vpack.c.b16 %v3154, %v3150
          %v3251 = vpack.c.b16 %v3155, %v3151
          %3348 = vmatprep.subr.bf16.mxu0 %v3185
          %3349 = vmatpush1.bf16.msra.mxu0 %v3184
          %3350 = vmatprep.subr.bf16.mxu0 %v3181
          %3351 = vmatpush1.bf16.msra.mxu0 %v3180
          %3352 = vmatprep.subr.bf16.mxu0 %v3177
          %3353 = vmatpush1.bf16.msra.mxu0 %v3176
          %3354 = vmatprep.subr.bf16.mxu0 %v3173
          %3355 = vmatpush1.bf16.msra.mxu0 %v3172
          %3356 = vmatprep.subr.bf16.mxu0 %v3169
          %3357 = vmatpush1.bf16.msra.mxu0 %v3168
          %3358 = vmatprep.subr.bf16.mxu0 %v3165
          %3359 = vmatpush1.bf16.msra.mxu0 %v3164
          %3360 = vmatprep.subr.bf16.mxu0 %v3161
          %3361 = vmatpush1.bf16.msra.mxu0 %v3160
          %3362 = vmatprep.subr.bf16.mxu0 %v3157
          %3363 = vmatpush1.bf16.msra.mxu0 %v3156
          %3364 = vmatprep.subr.bf16.mxu0 %v3217
          %3365 = vmatpush2.bf16.msra.mxu0 %v3216
          %3366 = vmatprep.subr.bf16.mxu0 %v3213
          %3367 = vmatpush2.bf16.msra.mxu0 %v3212
          %3368 = vmatprep.subr.bf16.mxu0 %v3209
          %3369 = vmatpush2.bf16.msra.mxu0 %v3208
          %3370 = vmatprep.subr.bf16.mxu0 %v3205
          %3371 = vmatpush2.bf16.msra.mxu0 %v3204
          %3372 = vmatprep.subr.bf16.mxu0 %v3201
          %3373 = vmatpush2.bf16.msra.mxu0 %v3200
          %3374 = vmatprep.subr.bf16.mxu0 %v3197
          %3375 = vmatpush2.bf16.msra.mxu0 %v3196
          %3376 = vmatprep.subr.bf16.mxu0 %v3193
          %3377 = vmatpush2.bf16.msra.mxu0 %v3192
          %3378 = vmatprep.subr.bf16.mxu0 %v3189
          %3379 = vmatpush2.bf16.msra.mxu0 %v3188
          %3380 = vmatprep.mubr.bf16.mxu0 %v1927
          %3381 = vmatmul.mubr.bf16.gmra.mxu0 %v1926
          %v3382 = vpop.f32.mrf.mxu0
          %v3383 = vadd.f32 %v2744, %v3382
          %v3384 = vpop.f32.mrf.mxu0
          %v3385 = vadd.f32 %v2746, %v3384
          %v3386 = vpop.f32.mrf.mxu0
          %v3387 = vadd.f32 %v2748, %v3386
          %v3388 = vpop.f32.mrf.mxu0
          %v3389 = vadd.f32 %v2750, %v3388
          %3390 = vmatprep.mubr.bf16.mxu0 %v1930
          %3391 = vmatmul.mubr.bf16.gmra.mxu0 %v1929
          %v3392 = vpop.f32.mrf.mxu0
          %v3393 = vadd.f32 %v2754, %v3392
          %v3394 = vpop.f32.mrf.mxu0
          %v3395 = vadd.f32 %v2756, %v3394
          %v3396 = vpop.f32.mrf.mxu0
          %v3397 = vadd.f32 %v2758, %v3396
          %v3398 = vpop.f32.mrf.mxu0
          %v3399 = vadd.f32 %v2760, %v3398
          %3400 = vdwg.mxu0
          %3401 = vmatprep.subr.bf16.mxu0 %v3249
          %3402 = vmatpush1.bf16.msra.mxu0 %v3248
          %3403 = vmatprep.subr.bf16.mxu0 %v3245
          %3404 = vmatpush1.bf16.msra.mxu0 %v3244
          %3405 = vmatprep.subr.bf16.mxu0 %v3241
          %3406 = vmatpush1.bf16.msra.mxu0 %v3240
          %3407 = vmatprep.subr.bf16.mxu0 %v3237
          %3408 = vmatpush1.bf16.msra.mxu0 %v3236
          %3409 = vmatprep.subr.bf16.mxu0 %v3233
          %3410 = vmatpush1.bf16.msra.mxu0 %v3232
          %3411 = vmatprep.subr.bf16.mxu0 %v3229
          %3412 = vmatpush1.bf16.msra.mxu0 %v3228
          %3413 = vmatprep.subr.bf16.mxu0 %v3225
          %3414 = vmatpush1.bf16.msra.mxu0 %v3224
          %3415 = vmatprep.subr.bf16.mxu0 %v3221
          %3416 = vmatpush1.bf16.msra.mxu0 %v3220
          %3417 = vmatprep.subr.bf16.mxu0 0
          %3418 = vmatpush2.bf16.msra.mxu0 0
          %3419 = vmatprep.subr.bf16.mxu0 0
          %3420 = vmatpush2.bf16.msra.mxu0 0
          %3421 = vmatprep.subr.bf16.mxu0 0
          %3422 = vmatpush2.bf16.msra.mxu0 0
          %3423 = vmatprep.subr.bf16.mxu0 0
          %3424 = vmatpush2.bf16.msra.mxu0 0
          %3425 = vmatprep.subr.bf16.mxu0 0
          %3426 = vmatpush2.bf16.msra.mxu0 0
          %3427 = vmatprep.subr.bf16.mxu0 0
          %3428 = vmatpush2.bf16.msra.mxu0 0
          %3429 = vmatprep.subr.bf16.mxu0 0
          %3430 = vmatpush2.bf16.msra.mxu0 0
          %3431 = vmatprep.subr.bf16.mxu0 0
          %3432 = vmatpush2.bf16.msra.mxu0 0
          %3433 = vmatprep.mubr.bf16.mxu0 0
          %3434 = vmatmul.mubr.bf16.gmra.mxu0 %v1928
          %v3435 = vpop.f32.mrf.mxu0
          %v3436 = vadd.f32 %v3383, %v3435
          %v3437 = vpop.f32.mrf.mxu0
          %v3438 = vadd.f32 %v3385, %v3437
          %v3439 = vpop.f32.mrf.mxu0
          %v3440 = vadd.f32 %v3387, %v3439
          %v3441 = vpop.f32.mrf.mxu0
          %v3442 = vadd.f32 %v3389, %v3441
          %3443 = vmatprep.mubr.bf16.mxu0 0
          %3444 = vmatmul.mubr.bf16.gmra.mxu0 %v1931
          %v3445 = vpop.f32.mrf.mxu0
          %v3446 = vadd.f32 %v3393, %v3445
          %v3447 = vpop.f32.mrf.mxu0
          %v3448 = vadd.f32 %v3395, %v3447
          %v3449 = vpop.f32.mrf.mxu0
          %v3450 = vadd.f32 %v3397, %v3449
          %v3451 = vpop.f32.mrf.mxu0
          %v3452 = vadd.f32 %v3399, %v3451
          %3453 = vdwg.mxu0
          %3454 = vmatprep.subr.bf16.mxu0 %v3187
          %3455 = vmatpush1.bf16.msra.mxu0 %v3186
          %3456 = vmatprep.subr.bf16.mxu0 %v3183
          %3457 = vmatpush1.bf16.msra.mxu0 %v3182
          %3458 = vmatprep.subr.bf16.mxu0 %v3179
          %3459 = vmatpush1.bf16.msra.mxu0 %v3178
          %3460 = vmatprep.subr.bf16.mxu0 %v3175
          %3461 = vmatpush1.bf16.msra.mxu0 %v3174
          %3462 = vmatprep.subr.bf16.mxu0 %v3171
          %3463 = vmatpush1.bf16.msra.mxu0 %v3170
          %3464 = vmatprep.subr.bf16.mxu0 %v3167
          %3465 = vmatpush1.bf16.msra.mxu0 %v3166
          %3466 = vmatprep.subr.bf16.mxu0 %v3163
          %3467 = vmatpush1.bf16.msra.mxu0 %v3162
          %3468 = vmatprep.subr.bf16.mxu0 %v3159
          %3469 = vmatpush1.bf16.msra.mxu0 %v3158
          %3470 = vmatprep.subr.bf16.mxu0 %v3219
          %3471 = vmatpush2.bf16.msra.mxu0 %v3218
          %3472 = vmatprep.subr.bf16.mxu0 %v3215
          %3473 = vmatpush2.bf16.msra.mxu0 %v3214
          %3474 = vmatprep.subr.bf16.mxu0 %v3211
          %3475 = vmatpush2.bf16.msra.mxu0 %v3210
          %3476 = vmatprep.subr.bf16.mxu0 %v3207
          %3477 = vmatpush2.bf16.msra.mxu0 %v3206
          %3478 = vmatprep.subr.bf16.mxu0 %v3203
          %3479 = vmatpush2.bf16.msra.mxu0 %v3202
          %3480 = vmatprep.subr.bf16.mxu0 %v3199
          %3481 = vmatpush2.bf16.msra.mxu0 %v3198
          %3482 = vmatprep.subr.bf16.mxu0 %v3195
          %3483 = vmatpush2.bf16.msra.mxu0 %v3194
          %3484 = vmatprep.subr.bf16.mxu0 %v3191
          %3485 = vmatpush2.bf16.msra.mxu0 %v3190
          %3486 = vmatprep.mubr.bf16.mxu0 %v1927
          %3487 = vmatmul.mubr.bf16.gmra.mxu0 %v1926
          %v3488 = vpop.f32.mrf.mxu0
          %v3489 = vadd.f32 %v2850, %v3488
          %v3490 = vpop.f32.mrf.mxu0
          %v3491 = vadd.f32 %v2852, %v3490
          %v3492 = vpop.f32.mrf.mxu0
          %v3493 = vadd.f32 %v2854, %v3492
          %v3494 = vpop.f32.mrf.mxu0
          %v3495 = vadd.f32 %v2856, %v3494
          %3496 = vmatprep.mubr.bf16.mxu0 %v1930
          %3497 = vmatmul.mubr.bf16.gmra.mxu0 %v1929
          %v3498 = vpop.f32.mrf.mxu0
          %v3499 = vadd.f32 %v2860, %v3498
          %v3500 = vpop.f32.mrf.mxu0
          %v3501 = vadd.f32 %v2862, %v3500
          %v3502 = vpop.f32.mrf.mxu0
          %v3503 = vadd.f32 %v2864, %v3502
          %v3504 = vpop.f32.mrf.mxu0
          %v3505 = vadd.f32 %v2866, %v3504
          %3506 = vdwg.mxu0
          %3507 = vmatprep.subr.bf16.mxu0 %v3251
          %3508 = vmatpush1.bf16.msra.mxu0 %v3250
          %3509 = vmatprep.subr.bf16.mxu0 %v3247
          %3510 = vmatpush1.bf16.msra.mxu0 %v3246
          %3511 = vmatprep.subr.bf16.mxu0 %v3243
          %3512 = vmatpush1.bf16.msra.mxu0 %v3242
          %3513 = vmatprep.subr.bf16.mxu0 %v3239
          %3514 = vmatpush1.bf16.msra.mxu0 %v3238
          %3515 = vmatprep.subr.bf16.mxu0 %v3235
          %3516 = vmatpush1.bf16.msra.mxu0 %v3234
          %3517 = vmatprep.subr.bf16.mxu0 %v3231
          %3518 = vmatpush1.bf16.msra.mxu0 %v3230
          %3519 = vmatprep.subr.bf16.mxu0 %v3227
          %3520 = vmatpush1.bf16.msra.mxu0 %v3226
          %3521 = vmatprep.subr.bf16.mxu0 %v3223
          %3522 = vmatpush1.bf16.msra.mxu0 %v3222
          %3523 = vmatprep.subr.bf16.mxu0 0
          %3524 = vmatpush2.bf16.msra.mxu0 0
          %3525 = vmatprep.subr.bf16.mxu0 0
          %3526 = vmatpush2.bf16.msra.mxu0 0
          %3527 = vmatprep.subr.bf16.mxu0 0
          %3528 = vmatpush2.bf16.msra.mxu0 0
          %3529 = vmatprep.subr.bf16.mxu0 0
          %3530 = vmatpush2.bf16.msra.mxu0 0
          %3531 = vmatprep.subr.bf16.mxu0 0
          %3532 = vmatpush2.bf16.msra.mxu0 0
          %3533 = vmatprep.subr.bf16.mxu0 0
          %3534 = vmatpush2.bf16.msra.mxu0 0
          %3535 = vmatprep.subr.bf16.mxu0 0
          %3536 = vmatpush2.bf16.msra.mxu0 0
          %3537 = vmatprep.subr.bf16.mxu0 0
          %3538 = vmatpush2.bf16.msra.mxu0 0
          %3539 = vmatprep.mubr.bf16.mxu0 0
          %3540 = vmatmul.mubr.bf16.gmra.mxu0 %v1928
          %v3541 = vpop.f32.mrf.mxu0
          %v3542 = vadd.f32 %v3489, %v3541
          %v3543 = vpop.f32.mrf.mxu0
          %v3544 = vadd.f32 %v3491, %v3543
          %v3545 = vpop.f32.mrf.mxu0
          %v3546 = vadd.f32 %v3493, %v3545
          %v3547 = vpop.f32.mrf.mxu0
          %v3548 = vadd.f32 %v3495, %v3547
          %3549 = vmatprep.mubr.bf16.mxu0 0
          %3550 = vmatmul.mubr.bf16.gmra.mxu0 %v1931
          %v3551 = vpop.f32.mrf.mxu0
          %v3552 = vadd.f32 %v3499, %v3551
          %v3553 = vpop.f32.mrf.mxu0
          %v3554 = vadd.f32 %v3501, %v3553
          %v3555 = vpop.f32.mrf.mxu0
          %v3556 = vadd.f32 %v3503, %v3555
          %v3557 = vpop.f32.mrf.mxu0
          %v3558 = vadd.f32 %v3505, %v3557
          %3559 = vdwg.mxu0
          %s3560 = scalar_lea.vmem %s607, 1536 [#allocation8]
          %v3561 = vld [vmem:[%s3560] sm:$0xff]
          %v3562 = vld [vmem:[%s3560 + $0x8] sm:$0xff]
          %v3563 = vld [vmem:[%s3560 + $0x10] sm:$0xff]
          %v3564 = vld [vmem:[%s3560 + $0x18] sm:$0xff]
          %v3565 = vld [vmem:[%s3560 + $0x20] sm:$0xff]
          %v3566 = vld [vmem:[%s3560 + $0x28] sm:$0xff]
          %v3567 = vld [vmem:[%s3560 + $0x30] sm:$0xff]
          %v3568 = vld [vmem:[%s3560 + $0x38] sm:$0xff]
          %v3569 = vld [vmem:[%s3560 + $0x40] sm:$0xff]
          %v3570 = vld [vmem:[%s3560 + $0x48] sm:$0xff]
          %v3571 = vld [vmem:[%s3560 + $0x50] sm:$0xff]
          %v3572 = vld [vmem:[%s3560 + $0x58] sm:$0xff]
          %v3573 = vld [vmem:[%s3560 + $0x60] sm:$0xff]
          %v3574 = vld [vmem:[%s3560 + $0x68] sm:$0xff]
          %v3575 = vld [vmem:[%s3560 + $0x70] sm:$0xff]
          %v3576 = vld [vmem:[%s3560 + $0x78] sm:$0xff]
          %v3577 = vld [vmem:[%s3560 + $0x80] sm:$0xff]
          %v3578 = vld [vmem:[%s3560 + $0x88] sm:$0xff]
          %v3579 = vld [vmem:[%s3560 + $0x90] sm:$0xff]
          %v3580 = vld [vmem:[%s3560 + $0x98] sm:$0xff]
          %v3581 = vld [vmem:[%s3560 + $0xa0] sm:$0xff]
          %v3582 = vld [vmem:[%s3560 + $0xa8] sm:$0xff]
          %v3583 = vld [vmem:[%s3560 + $0xb0] sm:$0xff]
          %v3584 = vld [vmem:[%s3560 + $0xb8] sm:$0xff]
          %v3585 = vld [vmem:[%s3560 + $0xc0] sm:$0xff]
          %v3586 = vld [vmem:[%s3560 + $0xc8] sm:$0xff]
          %v3587 = vld [vmem:[%s3560 + $0xd0] sm:$0xff]
          %v3588 = vld [vmem:[%s3560 + $0xd8] sm:$0xff]
          %v3589 = vld [vmem:[%s3560 + $0xe0] sm:$0xff]
          %v3590 = vld [vmem:[%s3560 + $0xe8] sm:$0xff]
          %v3591 = vld [vmem:[%s3560 + $0xf0] sm:$0xff]
          %v3592 = vld [vmem:[%s3560 + $0xf8] sm:$0xff]
          %v3593 = vld [vmem:[%s3560 + $0x100] sm:$0xff]
          %v3594 = vld [vmem:[%s3560 + $0x108] sm:$0xff]
          %v3595 = vld [vmem:[%s3560 + $0x110] sm:$0xff]
          %v3596 = vld [vmem:[%s3560 + $0x118] sm:$0xff]
          %v3597 = vld [vmem:[%s3560 + $0x120] sm:$0xff]
          %v3598 = vld [vmem:[%s3560 + $0x128] sm:$0xff]
          %v3599 = vld [vmem:[%s3560 + $0x130] sm:$0xff]
          %v3600 = vld [vmem:[%s3560 + $0x138] sm:$0xff]
          %v3601 = vld [vmem:[%s3560 + $0x140] sm:$0xff]
          %v3602 = vld [vmem:[%s3560 + $0x148] sm:$0xff]
          %v3603 = vld [vmem:[%s3560 + $0x150] sm:$0xff]
          %v3604 = vld [vmem:[%s3560 + $0x158] sm:$0xff]
          %v3605 = vld [vmem:[%s3560 + $0x160] sm:$0xff]
          %v3606 = vld [vmem:[%s3560 + $0x168] sm:$0xff]
          %v3607 = vld [vmem:[%s3560 + $0x170] sm:$0xff]
          %v3608 = vld [vmem:[%s3560 + $0x178] sm:$0xff]
          %v3609 = vld [vmem:[%s3560 + $0x180] sm:$0xff]
          %v3610 = vld [vmem:[%s3560 + $0x188] sm:$0xff]
          %v3611 = vld [vmem:[%s3560 + $0x190] sm:$0xff]
          %v3612 = vld [vmem:[%s3560 + $0x198] sm:$0xff]
          %v3613 = vld [vmem:[%s3560 + $0x1a0] sm:$0xff]
          %v3614 = vld [vmem:[%s3560 + $0x1a8] sm:$0xff]
          %v3615 = vld [vmem:[%s3560 + $0x1b0] sm:$0xff]
          %v3616 = vld [vmem:[%s3560 + $0x1b8] sm:$0xff]
          %v3617 = vld [vmem:[%s3560 + $0x1c0] sm:$0xff]
          %v3618 = vld [vmem:[%s3560 + $0x1c8] sm:$0xff]
          %v3619 = vld [vmem:[%s3560 + $0x1d0] sm:$0xff]
          %v3620 = vld [vmem:[%s3560 + $0x1d8] sm:$0xff]
          %v3621 = vld [vmem:[%s3560 + $0x1e0] sm:$0xff]
          %v3622 = vld [vmem:[%s3560 + $0x1e8] sm:$0xff]
          %v3623 = vld [vmem:[%s3560 + $0x1f0] sm:$0xff]
          %v3624 = vld [vmem:[%s3560 + $0x1f8] sm:$0xff]
          %v3625 = vld [vmem:[%s3560 + $0x200] sm:$0xff]
          %v3626 = vld [vmem:[%s3560 + $0x208] sm:$0xff]
          %v3627 = vld [vmem:[%s3560 + $0x210] sm:$0xff]
          %v3628 = vld [vmem:[%s3560 + $0x218] sm:$0xff]
          %v3629 = vld [vmem:[%s3560 + $0x220] sm:$0xff]
          %v3630 = vld [vmem:[%s3560 + $0x228] sm:$0xff]
          %v3631 = vld [vmem:[%s3560 + $0x230] sm:$0xff]
          %v3632 = vld [vmem:[%s3560 + $0x238] sm:$0xff]
          %v3633 = vld [vmem:[%s3560 + $0x240] sm:$0xff]
          %v3634 = vld [vmem:[%s3560 + $0x248] sm:$0xff]
          %v3635 = vld [vmem:[%s3560 + $0x250] sm:$0xff]
          %v3636 = vld [vmem:[%s3560 + $0x258] sm:$0xff]
          %v3637 = vld [vmem:[%s3560 + $0x260] sm:$0xff]
          %v3638 = vld [vmem:[%s3560 + $0x268] sm:$0xff]
          %v3639 = vld [vmem:[%s3560 + $0x270] sm:$0xff]
          %v3640 = vld [vmem:[%s3560 + $0x278] sm:$0xff]
          %v3641 = vld [vmem:[%s3560 + $0x280] sm:$0xff]
          %v3642 = vld [vmem:[%s3560 + $0x288] sm:$0xff]
          %v3643 = vld [vmem:[%s3560 + $0x290] sm:$0xff]
          %v3644 = vld [vmem:[%s3560 + $0x298] sm:$0xff]
          %v3645 = vld [vmem:[%s3560 + $0x2a0] sm:$0xff]
          %v3646 = vld [vmem:[%s3560 + $0x2a8] sm:$0xff]
          %v3647 = vld [vmem:[%s3560 + $0x2b0] sm:$0xff]
          %v3648 = vld [vmem:[%s3560 + $0x2b8] sm:$0xff]
          %v3649 = vld [vmem:[%s3560 + $0x2c0] sm:$0xff]
          %v3650 = vld [vmem:[%s3560 + $0x2c8] sm:$0xff]
          %v3651 = vld [vmem:[%s3560 + $0x2d0] sm:$0xff]
          %v3652 = vld [vmem:[%s3560 + $0x2d8] sm:$0xff]
          %v3653 = vld [vmem:[%s3560 + $0x2e0] sm:$0xff]
          %v3654 = vld [vmem:[%s3560 + $0x2e8] sm:$0xff]
          %v3655 = vld [vmem:[%s3560 + $0x2f0] sm:$0xff]
          %v3656 = vld [vmem:[%s3560 + $0x2f8] sm:$0xff]
          %v3663 = vrot.slane %v1926, 1
          %v3664 = vrot.slane %v1929, 1
          %v3665 = vsel %vm1352, %v3663, %v3664
          %v3666 = vrot.slane %v1927, 1
          %v3667 = vrot.slane %v1930, 1
          %v3668 = vsel %vm1352, %v3666, %v3667
          %v3669 = vrot.slane %v1928, 1
          %v3670 = vrot.slane %v1931, 1
          %v3671 = vsel %vm1352, %v3669, %v3670
          %v3774 = vunpack.c.l.b16 %v3561
          %v3775 = vunpack.c.h.b16 %v3561
          %v3776 = vunpack.c.l.b16 %v3562
          %v3777 = vunpack.c.h.b16 %v3562
          %v3778 = vunpack.c.l.b16 %v3563
          %v3779 = vunpack.c.h.b16 %v3563
          %v3780 = vunpack.c.l.b16 %v3564
          %v3781 = vunpack.c.h.b16 %v3564
          %v3782 = vunpack.c.l.b16 %v3565
          %v3783 = vunpack.c.h.b16 %v3565
          %v3784 = vunpack.c.l.b16 %v3566
          %v3785 = vunpack.c.h.b16 %v3566
          %v3786 = vunpack.c.l.b16 %v3567
          %v3787 = vunpack.c.h.b16 %v3567
          %v3788 = vunpack.c.l.b16 %v3568
          %v3789 = vunpack.c.h.b16 %v3568
          %v3790 = vunpack.c.l.b16 %v3569
          %v3791 = vunpack.c.h.b16 %v3569
          %v3792 = vunpack.c.l.b16 %v3570
          %v3793 = vunpack.c.h.b16 %v3570
          %v3794 = vunpack.c.l.b16 %v3571
          %v3795 = vunpack.c.h.b16 %v3571
          %v3796 = vunpack.c.l.b16 %v3572
          %v3797 = vunpack.c.h.b16 %v3572
          %v3798 = vunpack.c.l.b16 %v3573
          %v3799 = vunpack.c.h.b16 %v3573
          %v3800 = vunpack.c.l.b16 %v3574
          %v3801 = vunpack.c.h.b16 %v3574
          %v3802 = vunpack.c.l.b16 %v3575
          %v3803 = vunpack.c.h.b16 %v3575
          %v3804 = vunpack.c.l.b16 %v3576
          %v3805 = vunpack.c.h.b16 %v3576
          %v3806 = vunpack.c.l.b16 %v3577
          %v3807 = vunpack.c.h.b16 %v3577
          %v3808 = vunpack.c.l.b16 %v3578
          %v3809 = vunpack.c.h.b16 %v3578
          %v3810 = vunpack.c.l.b16 %v3579
          %v3811 = vunpack.c.h.b16 %v3579
          %v3812 = vunpack.c.l.b16 %v3580
          %v3813 = vunpack.c.h.b16 %v3580
          %v3814 = vunpack.c.l.b16 %v3581
          %v3815 = vunpack.c.h.b16 %v3581
          %v3816 = vunpack.c.l.b16 %v3582
          %v3817 = vunpack.c.h.b16 %v3582
          %v3818 = vunpack.c.l.b16 %v3583
          %v3819 = vunpack.c.h.b16 %v3583
          %v3820 = vunpack.c.l.b16 %v3584
          %v3821 = vunpack.c.h.b16 %v3584
          %v3822 = vunpack.c.l.b16 %v3585
          %v3823 = vunpack.c.h.b16 %v3585
          %v3824 = vunpack.c.l.b16 %v3586
          %v3825 = vunpack.c.h.b16 %v3586
          %v3826 = vunpack.c.l.b16 %v3587
          %v3827 = vunpack.c.h.b16 %v3587
          %v3828 = vunpack.c.l.b16 %v3588
          %v3829 = vunpack.c.h.b16 %v3588
          %v3830 = vunpack.c.l.b16 %v3589
          %v3831 = vunpack.c.h.b16 %v3589
          %v3832 = vunpack.c.l.b16 %v3590
          %v3833 = vunpack.c.h.b16 %v3590
          %v3834 = vunpack.c.l.b16 %v3591
          %v3835 = vunpack.c.h.b16 %v3591
          %v3836 = vunpack.c.l.b16 %v3592
          %v3837 = vunpack.c.h.b16 %v3592
          %v3838 = vunpack.c.l.b16 %v3593
          %v3839 = vunpack.c.h.b16 %v3593
          %v3840 = vunpack.c.l.b16 %v3594
          %v3841 = vunpack.c.h.b16 %v3594
          %v3842 = vunpack.c.l.b16 %v3595
          %v3843 = vunpack.c.h.b16 %v3595
          %v3844 = vunpack.c.l.b16 %v3596
          %v3845 = vunpack.c.h.b16 %v3596
          %v3846 = vunpack.c.l.b16 %v3597
          %v3847 = vunpack.c.h.b16 %v3597
          %v3848 = vunpack.c.l.b16 %v3598
          %v3849 = vunpack.c.h.b16 %v3598
          %v3850 = vunpack.c.l.b16 %v3599
          %v3851 = vunpack.c.h.b16 %v3599
          %v3852 = vunpack.c.l.b16 %v3600
          %v3853 = vunpack.c.h.b16 %v3600
          %v3854 = vunpack.c.l.b16 %v3601
          %v3855 = vunpack.c.h.b16 %v3601
          %v3856 = vunpack.c.l.b16 %v3602
          %v3857 = vunpack.c.h.b16 %v3602
          %v3858 = vunpack.c.l.b16 %v3603
          %v3859 = vunpack.c.h.b16 %v3603
          %v3860 = vunpack.c.l.b16 %v3604
          %v3861 = vunpack.c.h.b16 %v3604
          %v3862 = vunpack.c.l.b16 %v3605
          %v3863 = vunpack.c.h.b16 %v3605
          %v3864 = vunpack.c.l.b16 %v3606
          %v3865 = vunpack.c.h.b16 %v3606
          %v3866 = vunpack.c.l.b16 %v3607
          %v3867 = vunpack.c.h.b16 %v3607
          %v3868 = vunpack.c.l.b16 %v3608
          %v3869 = vunpack.c.h.b16 %v3608
          %v3870 = vunpack.c.l.b16 %v3609
          %v3871 = vunpack.c.h.b16 %v3609
          %v3872 = vunpack.c.l.b16 %v3610
          %v3873 = vunpack.c.h.b16 %v3610
          %v3874 = vunpack.c.l.b16 %v3611
          %v3875 = vunpack.c.h.b16 %v3611
          %v3876 = vunpack.c.l.b16 %v3612
          %v3877 = vunpack.c.h.b16 %v3612
          %v3878 = vunpack.c.l.b16 %v3613
          %v3879 = vunpack.c.h.b16 %v3613
          %v3880 = vunpack.c.l.b16 %v3614
          %v3881 = vunpack.c.h.b16 %v3614
          %v3882 = vunpack.c.l.b16 %v3615
          %v3883 = vunpack.c.h.b16 %v3615
          %v3884 = vunpack.c.l.b16 %v3616
          %v3885 = vunpack.c.h.b16 %v3616
          %v3886 = vunpack.c.l.b16 %v3617
          %v3887 = vunpack.c.h.b16 %v3617
          %v3888 = vunpack.c.l.b16 %v3618
          %v3889 = vunpack.c.h.b16 %v3618
          %v3890 = vunpack.c.l.b16 %v3619
          %v3891 = vunpack.c.h.b16 %v3619
          %v3892 = vunpack.c.l.b16 %v3620
          %v3893 = vunpack.c.h.b16 %v3620
          %v3894 = vunpack.c.l.b16 %v3621
          %v3895 = vunpack.c.h.b16 %v3621
          %v3896 = vunpack.c.l.b16 %v3622
          %v3897 = vunpack.c.h.b16 %v3622
          %v3898 = vunpack.c.l.b16 %v3623
          %v3899 = vunpack.c.h.b16 %v3623
          %v3900 = vunpack.c.l.b16 %v3624
          %v3901 = vunpack.c.h.b16 %v3624
          %v3902 = vunpack.c.l.b16 %v3625
          %v3903 = vunpack.c.h.b16 %v3625
          %v3904 = vunpack.c.l.b16 %v3626
          %v3905 = vunpack.c.h.b16 %v3626
          %v3906 = vunpack.c.l.b16 %v3627
          %v3907 = vunpack.c.h.b16 %v3627
          %v3908 = vunpack.c.l.b16 %v3628
          %v3909 = vunpack.c.h.b16 %v3628
          %v3910 = vunpack.c.l.b16 %v3629
          %v3911 = vunpack.c.h.b16 %v3629
          %v3912 = vunpack.c.l.b16 %v3630
          %v3913 = vunpack.c.h.b16 %v3630
          %v3914 = vunpack.c.l.b16 %v3631
          %v3915 = vunpack.c.h.b16 %v3631
          %v3916 = vunpack.c.l.b16 %v3632
          %v3917 = vunpack.c.h.b16 %v3632
          %v3918 = vunpack.c.l.b16 %v3633
          %v3919 = vunpack.c.h.b16 %v3633
          %v3920 = vunpack.c.l.b16 %v3634
          %v3921 = vunpack.c.h.b16 %v3634
          %v3922 = vunpack.c.l.b16 %v3635
          %v3923 = vunpack.c.h.b16 %v3635
          %v3924 = vunpack.c.l.b16 %v3636
          %v3925 = vunpack.c.h.b16 %v3636
          %v3926 = vunpack.c.l.b16 %v3637
          %v3927 = vunpack.c.h.b16 %v3637
          %v3928 = vunpack.c.l.b16 %v3638
          %v3929 = vunpack.c.h.b16 %v3638
          %v3930 = vunpack.c.l.b16 %v3639
          %v3931 = vunpack.c.h.b16 %v3639
          %v3932 = vunpack.c.l.b16 %v3640
          %v3933 = vunpack.c.h.b16 %v3640
          %v3934 = vunpack.c.l.b16 %v3641
          %v3935 = vunpack.c.h.b16 %v3641
          %v3936 = vunpack.c.l.b16 %v3642
          %v3937 = vunpack.c.h.b16 %v3642
          %v3938 = vunpack.c.l.b16 %v3643
          %v3939 = vunpack.c.h.b16 %v3643
          %v3940 = vunpack.c.l.b16 %v3644
          %v3941 = vunpack.c.h.b16 %v3644
          %v3942 = vunpack.c.l.b16 %v3645
          %v3943 = vunpack.c.h.b16 %v3645
          %v3944 = vunpack.c.l.b16 %v3646
          %v3945 = vunpack.c.h.b16 %v3646
          %v3946 = vunpack.c.l.b16 %v3647
          %v3947 = vunpack.c.h.b16 %v3647
          %v3948 = vunpack.c.l.b16 %v3648
          %v3949 = vunpack.c.h.b16 %v3648
          %v3950 = vunpack.c.l.b16 %v3649
          %v3951 = vunpack.c.h.b16 %v3649
          %v3952 = vunpack.c.l.b16 %v3650
          %v3953 = vunpack.c.h.b16 %v3650
          %v3954 = vunpack.c.l.b16 %v3651
          %v3955 = vunpack.c.h.b16 %v3651
          %v3956 = vunpack.c.l.b16 %v3652
          %v3957 = vunpack.c.h.b16 %v3652
          %v3958 = vunpack.c.l.b16 %v3653
          %v3959 = vunpack.c.h.b16 %v3653
          %v3960 = vunpack.c.l.b16 %v3654
          %v3961 = vunpack.c.h.b16 %v3654
          %v3962 = vunpack.c.l.b16 %v3655
          %v3963 = vunpack.c.h.b16 %v3655
          %v3964 = vunpack.c.l.b16 %v3656
          %v3965 = vunpack.c.h.b16 %v3656
          %v3966 = vpack.c.b16 %v3778, %v3774
          %v3967 = vpack.c.b16 %v3779, %v3775
          %v3968 = vpack.c.b16 %v3780, %v3776
          %v3969 = vpack.c.b16 %v3781, %v3777
          %v3970 = vpack.c.b16 %v3786, %v3782
          %v3971 = vpack.c.b16 %v3787, %v3783
          %v3972 = vpack.c.b16 %v3788, %v3784
          %v3973 = vpack.c.b16 %v3789, %v3785
          %v3974 = vpack.c.b16 %v3794, %v3790
          %v3975 = vpack.c.b16 %v3795, %v3791
          %v3976 = vpack.c.b16 %v3796, %v3792
          %v3977 = vpack.c.b16 %v3797, %v3793
          %v3978 = vpack.c.b16 %v3802, %v3798
          %v3979 = vpack.c.b16 %v3803, %v3799
          %v3980 = vpack.c.b16 %v3804, %v3800
          %v3981 = vpack.c.b16 %v3805, %v3801
          %v3982 = vpack.c.b16 %v3810, %v3806
          %v3983 = vpack.c.b16 %v3811, %v3807
          %v3984 = vpack.c.b16 %v3812, %v3808
          %v3985 = vpack.c.b16 %v3813, %v3809
          %v3986 = vpack.c.b16 %v3818, %v3814
          %v3987 = vpack.c.b16 %v3819, %v3815
          %v3988 = vpack.c.b16 %v3820, %v3816
          %v3989 = vpack.c.b16 %v3821, %v3817
          %v3990 = vpack.c.b16 %v3826, %v3822
          %v3991 = vpack.c.b16 %v3827, %v3823
          %v3992 = vpack.c.b16 %v3828, %v3824
          %v3993 = vpack.c.b16 %v3829, %v3825
          %v3994 = vpack.c.b16 %v3834, %v3830
          %v3995 = vpack.c.b16 %v3835, %v3831
          %v3996 = vpack.c.b16 %v3836, %v3832
          %v3997 = vpack.c.b16 %v3837, %v3833
          %v3998 = vpack.c.b16 %v3842, %v3838
          %v3999 = vpack.c.b16 %v3843, %v3839
          %v4000 = vpack.c.b16 %v3844, %v3840
          %v4001 = vpack.c.b16 %v3845, %v3841
          %v4002 = vpack.c.b16 %v3850, %v3846
          %v4003 = vpack.c.b16 %v3851, %v3847
          %v4004 = vpack.c.b16 %v3852, %v3848
          %v4005 = vpack.c.b16 %v3853, %v3849
          %v4006 = vpack.c.b16 %v3858, %v3854
          %v4007 = vpack.c.b16 %v3859, %v3855
          %v4008 = vpack.c.b16 %v3860, %v3856
          %v4009 = vpack.c.b16 %v3861, %v3857
          %v4010 = vpack.c.b16 %v3866, %v3862
          %v4011 = vpack.c.b16 %v3867, %v3863
          %v4012 = vpack.c.b16 %v3868, %v3864
          %v4013 = vpack.c.b16 %v3869, %v3865
          %v4014 = vpack.c.b16 %v3874, %v3870
          %v4015 = vpack.c.b16 %v3875, %v3871
          %v4016 = vpack.c.b16 %v3876, %v3872
          %v4017 = vpack.c.b16 %v3877, %v3873
          %v4018 = vpack.c.b16 %v3882, %v3878
          %v4019 = vpack.c.b16 %v3883, %v3879
          %v4020 = vpack.c.b16 %v3884, %v3880
          %v4021 = vpack.c.b16 %v3885, %v3881
          %v4022 = vpack.c.b16 %v3890, %v3886
          %v4023 = vpack.c.b16 %v3891, %v3887
          %v4024 = vpack.c.b16 %v3892, %v3888
          %v4025 = vpack.c.b16 %v3893, %v3889
          %v4026 = vpack.c.b16 %v3898, %v3894
          %v4027 = vpack.c.b16 %v3899, %v3895
          %v4028 = vpack.c.b16 %v3900, %v3896
          %v4029 = vpack.c.b16 %v3901, %v3897
          %v4030 = vpack.c.b16 %v3906, %v3902
          %v4031 = vpack.c.b16 %v3907, %v3903
          %v4032 = vpack.c.b16 %v3908, %v3904
          %v4033 = vpack.c.b16 %v3909, %v3905
          %v4034 = vpack.c.b16 %v3914, %v3910
          %v4035 = vpack.c.b16 %v3915, %v3911
          %v4036 = vpack.c.b16 %v3916, %v3912
          %v4037 = vpack.c.b16 %v3917, %v3913
          %v4038 = vpack.c.b16 %v3922, %v3918
          %v4039 = vpack.c.b16 %v3923, %v3919
          %v4040 = vpack.c.b16 %v3924, %v3920
          %v4041 = vpack.c.b16 %v3925, %v3921
          %v4042 = vpack.c.b16 %v3930, %v3926
          %v4043 = vpack.c.b16 %v3931, %v3927
          %v4044 = vpack.c.b16 %v3932, %v3928
          %v4045 = vpack.c.b16 %v3933, %v3929
          %v4046 = vpack.c.b16 %v3938, %v3934
          %v4047 = vpack.c.b16 %v3939, %v3935
          %v4048 = vpack.c.b16 %v3940, %v3936
          %v4049 = vpack.c.b16 %v3941, %v3937
          %v4050 = vpack.c.b16 %v3946, %v3942
          %v4051 = vpack.c.b16 %v3947, %v3943
          %v4052 = vpack.c.b16 %v3948, %v3944
          %v4053 = vpack.c.b16 %v3949, %v3945
          %v4054 = vpack.c.b16 %v3954, %v3950
          %v4055 = vpack.c.b16 %v3955, %v3951
          %v4056 = vpack.c.b16 %v3956, %v3952
          %v4057 = vpack.c.b16 %v3957, %v3953
          %v4058 = vpack.c.b16 %v3962, %v3958
          %v4059 = vpack.c.b16 %v3963, %v3959
          %v4060 = vpack.c.b16 %v3964, %v3960
          %v4061 = vpack.c.b16 %v3965, %v3961
          %4158 = vmatprep.subr.bf16.mxu0 %v3995
          %4159 = vmatpush1.bf16.msra.mxu0 %v3994
          %4160 = vmatprep.subr.bf16.mxu0 %v3991
          %4161 = vmatpush1.bf16.msra.mxu0 %v3990
          %4162 = vmatprep.subr.bf16.mxu0 %v3987
          %4163 = vmatpush1.bf16.msra.mxu0 %v3986
          %4164 = vmatprep.subr.bf16.mxu0 %v3983
          %4165 = vmatpush1.bf16.msra.mxu0 %v3982
          %4166 = vmatprep.subr.bf16.mxu0 %v3979
          %4167 = vmatpush1.bf16.msra.mxu0 %v3978
          %4168 = vmatprep.subr.bf16.mxu0 %v3975
          %4169 = vmatpush1.bf16.msra.mxu0 %v3974
          %4170 = vmatprep.subr.bf16.mxu0 %v3971
          %4171 = vmatpush1.bf16.msra.mxu0 %v3970
          %4172 = vmatprep.subr.bf16.mxu0 %v3967
          %4173 = vmatpush1.bf16.msra.mxu0 %v3966
          %4174 = vmatprep.subr.bf16.mxu0 %v4027
          %4175 = vmatpush2.bf16.msra.mxu0 %v4026
          %4176 = vmatprep.subr.bf16.mxu0 %v4023
          %4177 = vmatpush2.bf16.msra.mxu0 %v4022
          %4178 = vmatprep.subr.bf16.mxu0 %v4019
          %4179 = vmatpush2.bf16.msra.mxu0 %v4018
          %4180 = vmatprep.subr.bf16.mxu0 %v4015
          %4181 = vmatpush2.bf16.msra.mxu0 %v4014
          %4182 = vmatprep.subr.bf16.mxu0 %v4011
          %4183 = vmatpush2.bf16.msra.mxu0 %v4010
          %4184 = vmatprep.subr.bf16.mxu0 %v4007
          %4185 = vmatpush2.bf16.msra.mxu0 %v4006
          %4186 = vmatprep.subr.bf16.mxu0 %v4003
          %4187 = vmatpush2.bf16.msra.mxu0 %v4002
          %4188 = vmatprep.subr.bf16.mxu0 %v3999
          %4189 = vmatpush2.bf16.msra.mxu0 %v3998
          %4190 = vmatprep.mubr.bf16.mxu0 %v3668
          %4191 = vmatmul.mubr.bf16.gmra.mxu0 %v3665
          %v4192 = vpop.f32.mrf.mxu0
          %v4193 = vadd.f32 0.0, %v4192
          %v4194 = vpop.f32.mrf.mxu0
          %v4195 = vadd.f32 0.0, %v4194
          %v4196 = vpop.f32.mrf.mxu0
          %v4197 = vadd.f32 0.0, %v4196
          %v4198 = vpop.f32.mrf.mxu0
          %v4199 = vadd.f32 0.0, %v4198
          %4200 = vmatprep.mubr.bf16.mxu0 %v3667
          %4201 = vmatmul.mubr.bf16.gmra.mxu0 %v3664
          %v4202 = vpop.f32.mrf.mxu0
          %v4203 = vadd.f32 0.0, %v4202
          %v4204 = vpop.f32.mrf.mxu0
          %v4205 = vadd.f32 0.0, %v4204
          %v4206 = vpop.f32.mrf.mxu0
          %v4207 = vadd.f32 0.0, %v4206
          %v4208 = vpop.f32.mrf.mxu0
          %v4209 = vadd.f32 0.0, %v4208
          %4210 = vdwg.mxu0
          %4211 = vmatprep.subr.bf16.mxu0 %v4059
          %4212 = vmatpush1.bf16.msra.mxu0 %v4058
          %4213 = vmatprep.subr.bf16.mxu0 %v4055
          %4214 = vmatpush1.bf16.msra.mxu0 %v4054
          %4215 = vmatprep.subr.bf16.mxu0 %v4051
          %4216 = vmatpush1.bf16.msra.mxu0 %v4050
          %4217 = vmatprep.subr.bf16.mxu0 %v4047
          %4218 = vmatpush1.bf16.msra.mxu0 %v4046
          %4219 = vmatprep.subr.bf16.mxu0 %v4043
          %4220 = vmatpush1.bf16.msra.mxu0 %v4042
          %4221 = vmatprep.subr.bf16.mxu0 %v4039
          %4222 = vmatpush1.bf16.msra.mxu0 %v4038
          %4223 = vmatprep.subr.bf16.mxu0 %v4035
          %4224 = vmatpush1.bf16.msra.mxu0 %v4034
          %4225 = vmatprep.subr.bf16.mxu0 %v4031
          %4226 = vmatpush1.bf16.msra.mxu0 %v4030
          %4227 = vmatprep.subr.bf16.mxu0 0
          %4228 = vmatpush2.bf16.msra.mxu0 0
          %4229 = vmatprep.subr.bf16.mxu0 0
          %4230 = vmatpush2.bf16.msra.mxu0 0
          %4231 = vmatprep.subr.bf16.mxu0 0
          %4232 = vmatpush2.bf16.msra.mxu0 0
          %4233 = vmatprep.subr.bf16.mxu0 0
          %4234 = vmatpush2.bf16.msra.mxu0 0
          %4235 = vmatprep.subr.bf16.mxu0 0
          %4236 = vmatpush2.bf16.msra.mxu0 0
          %4237 = vmatprep.subr.bf16.mxu0 0
          %4238 = vmatpush2.bf16.msra.mxu0 0
          %4239 = vmatprep.subr.bf16.mxu0 0
          %4240 = vmatpush2.bf16.msra.mxu0 0
          %4241 = vmatprep.subr.bf16.mxu0 0
          %4242 = vmatpush2.bf16.msra.mxu0 0
          %4243 = vmatprep.mubr.bf16.mxu0 0
          %4244 = vmatmul.mubr.bf16.gmra.mxu0 %v3671
          %v4245 = vpop.f32.mrf.mxu0
          %v4246 = vadd.f32 %v4193, %v4245
          %v4247 = vpop.f32.mrf.mxu0
          %v4248 = vadd.f32 %v4195, %v4247
          %v4249 = vpop.f32.mrf.mxu0
          %v4250 = vadd.f32 %v4197, %v4249
          %v4251 = vpop.f32.mrf.mxu0
          %v4252 = vadd.f32 %v4199, %v4251
          %4253 = vmatprep.mubr.bf16.mxu0 0
          %4254 = vmatmul.mubr.bf16.gmra.mxu0 %v3670
          %v4255 = vpop.f32.mrf.mxu0
          %v4256 = vadd.f32 %v4203, %v4255
          %v4257 = vpop.f32.mrf.mxu0
          %v4258 = vadd.f32 %v4205, %v4257
          %v4259 = vpop.f32.mrf.mxu0
          %v4260 = vadd.f32 %v4207, %v4259
          %v4261 = vpop.f32.mrf.mxu0
          %v4262 = vadd.f32 %v4209, %v4261
          %4263 = vdwg.mxu0
          %4264 = vmatprep.subr.bf16.mxu0 %v3997
          %4265 = vmatpush1.bf16.msra.mxu0 %v3996
          %4266 = vmatprep.subr.bf16.mxu0 %v3993
          %4267 = vmatpush1.bf16.msra.mxu0 %v3992
          %4268 = vmatprep.subr.bf16.mxu0 %v3989
          %4269 = vmatpush1.bf16.msra.mxu0 %v3988
          %4270 = vmatprep.subr.bf16.mxu0 %v3985
          %4271 = vmatpush1.bf16.msra.mxu0 %v3984
          %4272 = vmatprep.subr.bf16.mxu0 %v3981
          %4273 = vmatpush1.bf16.msra.mxu0 %v3980
          %4274 = vmatprep.subr.bf16.mxu0 %v3977
          %4275 = vmatpush1.bf16.msra.mxu0 %v3976
          %4276 = vmatprep.subr.bf16.mxu0 %v3973
          %4277 = vmatpush1.bf16.msra.mxu0 %v3972
          %4278 = vmatprep.subr.bf16.mxu0 %v3969
          %4279 = vmatpush1.bf16.msra.mxu0 %v3968
          %4280 = vmatprep.subr.bf16.mxu0 %v4029
          %4281 = vmatpush2.bf16.msra.mxu0 %v4028
          %4282 = vmatprep.subr.bf16.mxu0 %v4025
          %4283 = vmatpush2.bf16.msra.mxu0 %v4024
          %4284 = vmatprep.subr.bf16.mxu0 %v4021
          %4285 = vmatpush2.bf16.msra.mxu0 %v4020
          %4286 = vmatprep.subr.bf16.mxu0 %v4017
          %4287 = vmatpush2.bf16.msra.mxu0 %v4016
          %4288 = vmatprep.subr.bf16.mxu0 %v4013
          %4289 = vmatpush2.bf16.msra.mxu0 %v4012
          %4290 = vmatprep.subr.bf16.mxu0 %v4009
          %4291 = vmatpush2.bf16.msra.mxu0 %v4008
          %4292 = vmatprep.subr.bf16.mxu0 %v4005
          %4293 = vmatpush2.bf16.msra.mxu0 %v4004
          %4294 = vmatprep.subr.bf16.mxu0 %v4001
          %4295 = vmatpush2.bf16.msra.mxu0 %v4000
          %4296 = vmatprep.mubr.bf16.mxu0 %v3668
          %4297 = vmatmul.mubr.bf16.gmra.mxu0 %v3665
          %v4298 = vpop.f32.mrf.mxu0
          %v4299 = vadd.f32 0.0, %v4298
          %v4300 = vpop.f32.mrf.mxu0
          %v4301 = vadd.f32 0.0, %v4300
          %v4302 = vpop.f32.mrf.mxu0
          %v4303 = vadd.f32 0.0, %v4302
          %v4304 = vpop.f32.mrf.mxu0
          %v4305 = vadd.f32 0.0, %v4304
          %4306 = vmatprep.mubr.bf16.mxu0 %v3667
          %4307 = vmatmul.mubr.bf16.gmra.mxu0 %v3664
          %v4308 = vpop.f32.mrf.mxu0
          %v4309 = vadd.f32 0.0, %v4308
          %v4310 = vpop.f32.mrf.mxu0
          %v4311 = vadd.f32 0.0, %v4310
          %v4312 = vpop.f32.mrf.mxu0
          %v4313 = vadd.f32 0.0, %v4312
          %v4314 = vpop.f32.mrf.mxu0
          %v4315 = vadd.f32 0.0, %v4314
          %4316 = vdwg.mxu0
          %4317 = vmatprep.subr.bf16.mxu0 %v4061
          %4318 = vmatpush1.bf16.msra.mxu0 %v4060
          %4319 = vmatprep.subr.bf16.mxu0 %v4057
          %4320 = vmatpush1.bf16.msra.mxu0 %v4056
          %4321 = vmatprep.subr.bf16.mxu0 %v4053
          %4322 = vmatpush1.bf16.msra.mxu0 %v4052
          %4323 = vmatprep.subr.bf16.mxu0 %v4049
          %4324 = vmatpush1.bf16.msra.mxu0 %v4048
          %4325 = vmatprep.subr.bf16.mxu0 %v4045
          %4326 = vmatpush1.bf16.msra.mxu0 %v4044
          %4327 = vmatprep.subr.bf16.mxu0 %v4041
          %4328 = vmatpush1.bf16.msra.mxu0 %v4040
          %4329 = vmatprep.subr.bf16.mxu0 %v4037
          %4330 = vmatpush1.bf16.msra.mxu0 %v4036
          %4331 = vmatprep.subr.bf16.mxu0 %v4033
          %4332 = vmatpush1.bf16.msra.mxu0 %v4032
          %4333 = vmatprep.subr.bf16.mxu0 0
          %4334 = vmatpush2.bf16.msra.mxu0 0
          %4335 = vmatprep.subr.bf16.mxu0 0
          %4336 = vmatpush2.bf16.msra.mxu0 0
          %4337 = vmatprep.subr.bf16.mxu0 0
          %4338 = vmatpush2.bf16.msra.mxu0 0
          %4339 = vmatprep.subr.bf16.mxu0 0
          %4340 = vmatpush2.bf16.msra.mxu0 0
          %4341 = vmatprep.subr.bf16.mxu0 0
          %4342 = vmatpush2.bf16.msra.mxu0 0
          %4343 = vmatprep.subr.bf16.mxu0 0
          %4344 = vmatpush2.bf16.msra.mxu0 0
          %4345 = vmatprep.subr.bf16.mxu0 0
          %4346 = vmatpush2.bf16.msra.mxu0 0
          %4347 = vmatprep.subr.bf16.mxu0 0
          %4348 = vmatpush2.bf16.msra.mxu0 0
          %4349 = vmatprep.mubr.bf16.mxu0 0
          %4350 = vmatmul.mubr.bf16.gmra.mxu0 %v3671
          %v4351 = vpop.f32.mrf.mxu0
          %v4352 = vadd.f32 %v4299, %v4351
          %v4353 = vpop.f32.mrf.mxu0
          %v4354 = vadd.f32 %v4301, %v4353
          %v4355 = vpop.f32.mrf.mxu0
          %v4356 = vadd.f32 %v4303, %v4355
          %v4357 = vpop.f32.mrf.mxu0
          %v4358 = vadd.f32 %v4305, %v4357
          %4359 = vmatprep.mubr.bf16.mxu0 0
          %4360 = vmatmul.mubr.bf16.gmra.mxu0 %v3670
          %v4361 = vpop.f32.mrf.mxu0
          %v4362 = vadd.f32 %v4309, %v4361
          %v4363 = vpop.f32.mrf.mxu0
          %v4364 = vadd.f32 %v4311, %v4363
          %v4365 = vpop.f32.mrf.mxu0
          %v4366 = vadd.f32 %v4313, %v4365
          %v4367 = vpop.f32.mrf.mxu0
          %v4368 = vadd.f32 %v4315, %v4367
          %4369 = vdwg.mxu0
          %v4370 = vadd.f32 %v3436, %v4246
          %v4371 = vadd.f32 %v3438, %v4248
          %v4372 = vadd.f32 %v3542, %v4352
          %v4373 = vadd.f32 %v3544, %v4354
          %v4374 = vadd.f32 %v3440, %v4250
          %v4375 = vadd.f32 %v3442, %v4252
          %v4376 = vadd.f32 %v3546, %v4356
          %v4377 = vadd.f32 %v3548, %v4358
          %v4378 = vadd.f32 %v3446, %v4256
          %v4379 = vadd.f32 %v3448, %v4258
          %v4380 = vadd.f32 %v3552, %v4362
          %v4381 = vadd.f32 %v3554, %v4364
          %v4382 = vadd.f32 %v3450, %v4260
          %v4383 = vadd.f32 %v3452, %v4262
          %v4384 = vadd.f32 %v3556, %v4366
          %v4385 = vadd.f32 %v3558, %v4368
          %s4386 = scalar_lea.vmem %s607, 2304 [#allocation8]
          %v4387 = vld [vmem:[%s4386] sm:$0xff]
          %v4388 = vld [vmem:[%s4386 + $0x8] sm:$0xff]
          %v4389 = vld [vmem:[%s4386 + $0x10] sm:$0xff]
          %v4390 = vld [vmem:[%s4386 + $0x18] sm:$0xff]
          %v4391 = vld [vmem:[%s4386 + $0x20] sm:$0xff]
          %v4392 = vld [vmem:[%s4386 + $0x28] sm:$0xff]
          %v4393 = vld [vmem:[%s4386 + $0x30] sm:$0xff]
          %v4394 = vld [vmem:[%s4386 + $0x38] sm:$0xff]
          %v4395 = vld [vmem:[%s4386 + $0x40] sm:$0xff]
          %v4396 = vld [vmem:[%s4386 + $0x48] sm:$0xff]
          %v4397 = vld [vmem:[%s4386 + $0x50] sm:$0xff]
          %v4398 = vld [vmem:[%s4386 + $0x58] sm:$0xff]
          %v4399 = vld [vmem:[%s4386 + $0x60] sm:$0xff]
          %v4400 = vld [vmem:[%s4386 + $0x68] sm:$0xff]
          %v4401 = vld [vmem:[%s4386 + $0x70] sm:$0xff]
          %v4402 = vld [vmem:[%s4386 + $0x78] sm:$0xff]
          %v4403 = vld [vmem:[%s4386 + $0x80] sm:$0xff]
          %v4404 = vld [vmem:[%s4386 + $0x88] sm:$0xff]
          %v4405 = vld [vmem:[%s4386 + $0x90] sm:$0xff]
          %v4406 = vld [vmem:[%s4386 + $0x98] sm:$0xff]
          %v4407 = vld [vmem:[%s4386 + $0xa0] sm:$0xff]
          %v4408 = vld [vmem:[%s4386 + $0xa8] sm:$0xff]
          %v4409 = vld [vmem:[%s4386 + $0xb0] sm:$0xff]
          %v4410 = vld [vmem:[%s4386 + $0xb8] sm:$0xff]
          %v4411 = vld [vmem:[%s4386 + $0xc0] sm:$0xff]
          %v4412 = vld [vmem:[%s4386 + $0xc8] sm:$0xff]
          %v4413 = vld [vmem:[%s4386 + $0xd0] sm:$0xff]
          %v4414 = vld [vmem:[%s4386 + $0xd8] sm:$0xff]
          %v4415 = vld [vmem:[%s4386 + $0xe0] sm:$0xff]
          %v4416 = vld [vmem:[%s4386 + $0xe8] sm:$0xff]
          %v4417 = vld [vmem:[%s4386 + $0xf0] sm:$0xff]
          %v4418 = vld [vmem:[%s4386 + $0xf8] sm:$0xff]
          %v4419 = vld [vmem:[%s4386 + $0x100] sm:$0xff]
          %v4420 = vld [vmem:[%s4386 + $0x108] sm:$0xff]
          %v4421 = vld [vmem:[%s4386 + $0x110] sm:$0xff]
          %v4422 = vld [vmem:[%s4386 + $0x118] sm:$0xff]
          %v4423 = vld [vmem:[%s4386 + $0x120] sm:$0xff]
          %v4424 = vld [vmem:[%s4386 + $0x128] sm:$0xff]
          %v4425 = vld [vmem:[%s4386 + $0x130] sm:$0xff]
          %v4426 = vld [vmem:[%s4386 + $0x138] sm:$0xff]
          %v4427 = vld [vmem:[%s4386 + $0x140] sm:$0xff]
          %v4428 = vld [vmem:[%s4386 + $0x148] sm:$0xff]
          %v4429 = vld [vmem:[%s4386 + $0x150] sm:$0xff]
          %v4430 = vld [vmem:[%s4386 + $0x158] sm:$0xff]
          %v4431 = vld [vmem:[%s4386 + $0x160] sm:$0xff]
          %v4432 = vld [vmem:[%s4386 + $0x168] sm:$0xff]
          %v4433 = vld [vmem:[%s4386 + $0x170] sm:$0xff]
          %v4434 = vld [vmem:[%s4386 + $0x178] sm:$0xff]
          %v4435 = vld [vmem:[%s4386 + $0x180] sm:$0xff]
          %v4436 = vld [vmem:[%s4386 + $0x188] sm:$0xff]
          %v4437 = vld [vmem:[%s4386 + $0x190] sm:$0xff]
          %v4438 = vld [vmem:[%s4386 + $0x198] sm:$0xff]
          %v4439 = vld [vmem:[%s4386 + $0x1a0] sm:$0xff]
          %v4440 = vld [vmem:[%s4386 + $0x1a8] sm:$0xff]
          %v4441 = vld [vmem:[%s4386 + $0x1b0] sm:$0xff]
          %v4442 = vld [vmem:[%s4386 + $0x1b8] sm:$0xff]
          %v4443 = vld [vmem:[%s4386 + $0x1c0] sm:$0xff]
          %v4444 = vld [vmem:[%s4386 + $0x1c8] sm:$0xff]
          %v4445 = vld [vmem:[%s4386 + $0x1d0] sm:$0xff]
          %v4446 = vld [vmem:[%s4386 + $0x1d8] sm:$0xff]
          %v4447 = vld [vmem:[%s4386 + $0x1e0] sm:$0xff]
          %v4448 = vld [vmem:[%s4386 + $0x1e8] sm:$0xff]
          %v4449 = vld [vmem:[%s4386 + $0x1f0] sm:$0xff]
          %v4450 = vld [vmem:[%s4386 + $0x1f8] sm:$0xff]
          %v4451 = vld [vmem:[%s4386 + $0x200] sm:$0xff]
          %v4452 = vld [vmem:[%s4386 + $0x208] sm:$0xff]
          %v4453 = vld [vmem:[%s4386 + $0x210] sm:$0xff]
          %v4454 = vld [vmem:[%s4386 + $0x218] sm:$0xff]
          %v4455 = vld [vmem:[%s4386 + $0x220] sm:$0xff]
          %v4456 = vld [vmem:[%s4386 + $0x228] sm:$0xff]
          %v4457 = vld [vmem:[%s4386 + $0x230] sm:$0xff]
          %v4458 = vld [vmem:[%s4386 + $0x238] sm:$0xff]
          %v4459 = vld [vmem:[%s4386 + $0x240] sm:$0xff]
          %v4460 = vld [vmem:[%s4386 + $0x248] sm:$0xff]
          %v4461 = vld [vmem:[%s4386 + $0x250] sm:$0xff]
          %v4462 = vld [vmem:[%s4386 + $0x258] sm:$0xff]
          %v4463 = vld [vmem:[%s4386 + $0x260] sm:$0xff]
          %v4464 = vld [vmem:[%s4386 + $0x268] sm:$0xff]
          %v4465 = vld [vmem:[%s4386 + $0x270] sm:$0xff]
          %v4466 = vld [vmem:[%s4386 + $0x278] sm:$0xff]
          %v4467 = vld [vmem:[%s4386 + $0x280] sm:$0xff]
          %v4468 = vld [vmem:[%s4386 + $0x288] sm:$0xff]
          %v4469 = vld [vmem:[%s4386 + $0x290] sm:$0xff]
          %v4470 = vld [vmem:[%s4386 + $0x298] sm:$0xff]
          %v4471 = vld [vmem:[%s4386 + $0x2a0] sm:$0xff]
          %v4472 = vld [vmem:[%s4386 + $0x2a8] sm:$0xff]
          %v4473 = vld [vmem:[%s4386 + $0x2b0] sm:$0xff]
          %v4474 = vld [vmem:[%s4386 + $0x2b8] sm:$0xff]
          %v4475 = vld [vmem:[%s4386 + $0x2c0] sm:$0xff]
          %v4476 = vld [vmem:[%s4386 + $0x2c8] sm:$0xff]
          %v4477 = vld [vmem:[%s4386 + $0x2d0] sm:$0xff]
          %v4478 = vld [vmem:[%s4386 + $0x2d8] sm:$0xff]
          %v4479 = vld [vmem:[%s4386 + $0x2e0] sm:$0xff]
          %v4480 = vld [vmem:[%s4386 + $0x2e8] sm:$0xff]
          %v4481 = vld [vmem:[%s4386 + $0x2f0] sm:$0xff]
          %v4482 = vld [vmem:[%s4386 + $0x2f8] sm:$0xff]
          %v4483 = vrot.slane %v2126, 1
          %v4484 = vrot.slane %v2128, 2
          %v4485 = vor.u32 %v4483, %v4484
          %v4486 = vrot.slane %v2161, 1
          %v4487 = vrot.slane %v2133, 2
          %v4488 = vor.u32 %v4486, %v4487
          %v4489 = vsel %vm1633, %v4485, %v4488
          %v4490 = vrot.slane %v2138, 1
          %v4491 = vrot.slane %v2140, 2
          %v4492 = vor.u32 %v4490, %v4491
          %v4493 = vrot.slane %v2164, 1
          %v4494 = vrot.slane %v2145, 2
          %v4495 = vor.u32 %v4493, %v4494
          %v4496 = vsel %vm1633, %v4492, %v4495
          %v4497 = vrot.slane %v2150, 1
          %v4498 = vrot.slane %v2152, 2
          %v4499 = vor.u32 %v4497, %v4498
          %v4500 = vrot.slane %v2167, 1
          %v4501 = vrot.slane %v2157, 2
          %v4502 = vor.u32 %v4500, %v4501
          %v4503 = vsel %vm1633, %v4499, %v4502
          %v4606 = vunpack.c.l.b16 %v4387
          %v4607 = vunpack.c.h.b16 %v4387
          %v4608 = vunpack.c.l.b16 %v4388
          %v4609 = vunpack.c.h.b16 %v4388
          %v4610 = vunpack.c.l.b16 %v4389
          %v4611 = vunpack.c.h.b16 %v4389
          %v4612 = vunpack.c.l.b16 %v4390
          %v4613 = vunpack.c.h.b16 %v4390
          %v4614 = vunpack.c.l.b16 %v4391
          %v4615 = vunpack.c.h.b16 %v4391
          %v4616 = vunpack.c.l.b16 %v4392
          %v4617 = vunpack.c.h.b16 %v4392
          %v4618 = vunpack.c.l.b16 %v4393
          %v4619 = vunpack.c.h.b16 %v4393
          %v4620 = vunpack.c.l.b16 %v4394
          %v4621 = vunpack.c.h.b16 %v4394
          %v4622 = vunpack.c.l.b16 %v4395
          %v4623 = vunpack.c.h.b16 %v4395
          %v4624 = vunpack.c.l.b16 %v4396
          %v4625 = vunpack.c.h.b16 %v4396
          %v4626 = vunpack.c.l.b16 %v4397
          %v4627 = vunpack.c.h.b16 %v4397
          %v4628 = vunpack.c.l.b16 %v4398
          %v4629 = vunpack.c.h.b16 %v4398
          %v4630 = vunpack.c.l.b16 %v4399
          %v4631 = vunpack.c.h.b16 %v4399
          %v4632 = vunpack.c.l.b16 %v4400
          %v4633 = vunpack.c.h.b16 %v4400
          %v4634 = vunpack.c.l.b16 %v4401
          %v4635 = vunpack.c.h.b16 %v4401
          %v4636 = vunpack.c.l.b16 %v4402
          %v4637 = vunpack.c.h.b16 %v4402
          %v4638 = vunpack.c.l.b16 %v4403
          %v4639 = vunpack.c.h.b16 %v4403
          %v4640 = vunpack.c.l.b16 %v4404
          %v4641 = vunpack.c.h.b16 %v4404
          %v4642 = vunpack.c.l.b16 %v4405
          %v4643 = vunpack.c.h.b16 %v4405
          %v4644 = vunpack.c.l.b16 %v4406
          %v4645 = vunpack.c.h.b16 %v4406
          %v4646 = vunpack.c.l.b16 %v4407
          %v4647 = vunpack.c.h.b16 %v4407
          %v4648 = vunpack.c.l.b16 %v4408
          %v4649 = vunpack.c.h.b16 %v4408
          %v4650 = vunpack.c.l.b16 %v4409
          %v4651 = vunpack.c.h.b16 %v4409
          %v4652 = vunpack.c.l.b16 %v4410
          %v4653 = vunpack.c.h.b16 %v4410
          %v4654 = vunpack.c.l.b16 %v4411
          %v4655 = vunpack.c.h.b16 %v4411
          %v4656 = vunpack.c.l.b16 %v4412
          %v4657 = vunpack.c.h.b16 %v4412
          %v4658 = vunpack.c.l.b16 %v4413
          %v4659 = vunpack.c.h.b16 %v4413
          %v4660 = vunpack.c.l.b16 %v4414
          %v4661 = vunpack.c.h.b16 %v4414
          %v4662 = vunpack.c.l.b16 %v4415
          %v4663 = vunpack.c.h.b16 %v4415
          %v4664 = vunpack.c.l.b16 %v4416
          %v4665 = vunpack.c.h.b16 %v4416
          %v4666 = vunpack.c.l.b16 %v4417
          %v4667 = vunpack.c.h.b16 %v4417
          %v4668 = vunpack.c.l.b16 %v4418
          %v4669 = vunpack.c.h.b16 %v4418
          %v4670 = vunpack.c.l.b16 %v4419
          %v4671 = vunpack.c.h.b16 %v4419
          %v4672 = vunpack.c.l.b16 %v4420
          %v4673 = vunpack.c.h.b16 %v4420
          %v4674 = vunpack.c.l.b16 %v4421
          %v4675 = vunpack.c.h.b16 %v4421
          %v4676 = vunpack.c.l.b16 %v4422
          %v4677 = vunpack.c.h.b16 %v4422
          %v4678 = vunpack.c.l.b16 %v4423
          %v4679 = vunpack.c.h.b16 %v4423
          %v4680 = vunpack.c.l.b16 %v4424
          %v4681 = vunpack.c.h.b16 %v4424
          %v4682 = vunpack.c.l.b16 %v4425
          %v4683 = vunpack.c.h.b16 %v4425
          %v4684 = vunpack.c.l.b16 %v4426
          %v4685 = vunpack.c.h.b16 %v4426
          %v4686 = vunpack.c.l.b16 %v4427
          %v4687 = vunpack.c.h.b16 %v4427
          %v4688 = vunpack.c.l.b16 %v4428
          %v4689 = vunpack.c.h.b16 %v4428
          %v4690 = vunpack.c.l.b16 %v4429
          %v4691 = vunpack.c.h.b16 %v4429
          %v4692 = vunpack.c.l.b16 %v4430
          %v4693 = vunpack.c.h.b16 %v4430
          %v4694 = vunpack.c.l.b16 %v4431
          %v4695 = vunpack.c.h.b16 %v4431
          %v4696 = vunpack.c.l.b16 %v4432
          %v4697 = vunpack.c.h.b16 %v4432
          %v4698 = vunpack.c.l.b16 %v4433
          %v4699 = vunpack.c.h.b16 %v4433
          %v4700 = vunpack.c.l.b16 %v4434
          %v4701 = vunpack.c.h.b16 %v4434
          %v4702 = vunpack.c.l.b16 %v4435
          %v4703 = vunpack.c.h.b16 %v4435
          %v4704 = vunpack.c.l.b16 %v4436
          %v4705 = vunpack.c.h.b16 %v4436
          %v4706 = vunpack.c.l.b16 %v4437
          %v4707 = vunpack.c.h.b16 %v4437
          %v4708 = vunpack.c.l.b16 %v4438
          %v4709 = vunpack.c.h.b16 %v4438
          %v4710 = vunpack.c.l.b16 %v4439
          %v4711 = vunpack.c.h.b16 %v4439
          %v4712 = vunpack.c.l.b16 %v4440
          %v4713 = vunpack.c.h.b16 %v4440
          %v4714 = vunpack.c.l.b16 %v4441
          %v4715 = vunpack.c.h.b16 %v4441
          %v4716 = vunpack.c.l.b16 %v4442
          %v4717 = vunpack.c.h.b16 %v4442
          %v4718 = vunpack.c.l.b16 %v4443
          %v4719 = vunpack.c.h.b16 %v4443
          %v4720 = vunpack.c.l.b16 %v4444
          %v4721 = vunpack.c.h.b16 %v4444
          %v4722 = vunpack.c.l.b16 %v4445
          %v4723 = vunpack.c.h.b16 %v4445
          %v4724 = vunpack.c.l.b16 %v4446
          %v4725 = vunpack.c.h.b16 %v4446
          %v4726 = vunpack.c.l.b16 %v4447
          %v4727 = vunpack.c.h.b16 %v4447
          %v4728 = vunpack.c.l.b16 %v4448
          %v4729 = vunpack.c.h.b16 %v4448
          %v4730 = vunpack.c.l.b16 %v4449
          %v4731 = vunpack.c.h.b16 %v4449
          %v4732 = vunpack.c.l.b16 %v4450
          %v4733 = vunpack.c.h.b16 %v4450
          %v4734 = vunpack.c.l.b16 %v4451
          %v4735 = vunpack.c.h.b16 %v4451
          %v4736 = vunpack.c.l.b16 %v4452
          %v4737 = vunpack.c.h.b16 %v4452
          %v4738 = vunpack.c.l.b16 %v4453
          %v4739 = vunpack.c.h.b16 %v4453
          %v4740 = vunpack.c.l.b16 %v4454
          %v4741 = vunpack.c.h.b16 %v4454
          %v4742 = vunpack.c.l.b16 %v4455
          %v4743 = vunpack.c.h.b16 %v4455
          %v4744 = vunpack.c.l.b16 %v4456
          %v4745 = vunpack.c.h.b16 %v4456
          %v4746 = vunpack.c.l.b16 %v4457
          %v4747 = vunpack.c.h.b16 %v4457
          %v4748 = vunpack.c.l.b16 %v4458
          %v4749 = vunpack.c.h.b16 %v4458
          %v4750 = vunpack.c.l.b16 %v4459
          %v4751 = vunpack.c.h.b16 %v4459
          %v4752 = vunpack.c.l.b16 %v4460
          %v4753 = vunpack.c.h.b16 %v4460
          %v4754 = vunpack.c.l.b16 %v4461
          %v4755 = vunpack.c.h.b16 %v4461
          %v4756 = vunpack.c.l.b16 %v4462
          %v4757 = vunpack.c.h.b16 %v4462
          %v4758 = vunpack.c.l.b16 %v4463
          %v4759 = vunpack.c.h.b16 %v4463
          %v4760 = vunpack.c.l.b16 %v4464
          %v4761 = vunpack.c.h.b16 %v4464
          %v4762 = vunpack.c.l.b16 %v4465
          %v4763 = vunpack.c.h.b16 %v4465
          %v4764 = vunpack.c.l.b16 %v4466
          %v4765 = vunpack.c.h.b16 %v4466
          %v4766 = vunpack.c.l.b16 %v4467
          %v4767 = vunpack.c.h.b16 %v4467
          %v4768 = vunpack.c.l.b16 %v4468
          %v4769 = vunpack.c.h.b16 %v4468
          %v4770 = vunpack.c.l.b16 %v4469
          %v4771 = vunpack.c.h.b16 %v4469
          %v4772 = vunpack.c.l.b16 %v4470
          %v4773 = vunpack.c.h.b16 %v4470
          %v4774 = vunpack.c.l.b16 %v4471
          %v4775 = vunpack.c.h.b16 %v4471
          %v4776 = vunpack.c.l.b16 %v4472
          %v4777 = vunpack.c.h.b16 %v4472
          %v4778 = vunpack.c.l.b16 %v4473
          %v4779 = vunpack.c.h.b16 %v4473
          %v4780 = vunpack.c.l.b16 %v4474
          %v4781 = vunpack.c.h.b16 %v4474
          %v4782 = vunpack.c.l.b16 %v4475
          %v4783 = vunpack.c.h.b16 %v4475
          %v4784 = vunpack.c.l.b16 %v4476
          %v4785 = vunpack.c.h.b16 %v4476
          %v4786 = vunpack.c.l.b16 %v4477
          %v4787 = vunpack.c.h.b16 %v4477
          %v4788 = vunpack.c.l.b16 %v4478
          %v4789 = vunpack.c.h.b16 %v4478
          %v4790 = vunpack.c.l.b16 %v4479
          %v4791 = vunpack.c.h.b16 %v4479
          %v4792 = vunpack.c.l.b16 %v4480
          %v4793 = vunpack.c.h.b16 %v4480
          %v4794 = vunpack.c.l.b16 %v4481
          %v4795 = vunpack.c.h.b16 %v4481
          %v4796 = vunpack.c.l.b16 %v4482
          %v4797 = vunpack.c.h.b16 %v4482
          %v4798 = vpack.c.b16 %v4610, %v4606
          %v4799 = vpack.c.b16 %v4611, %v4607
          %v4800 = vpack.c.b16 %v4612, %v4608
          %v4801 = vpack.c.b16 %v4613, %v4609
          %v4802 = vpack.c.b16 %v4618, %v4614
          %v4803 = vpack.c.b16 %v4619, %v4615
          %v4804 = vpack.c.b16 %v4620, %v4616
          %v4805 = vpack.c.b16 %v4621, %v4617
          %v4806 = vpack.c.b16 %v4626, %v4622
          %v4807 = vpack.c.b16 %v4627, %v4623
          %v4808 = vpack.c.b16 %v4628, %v4624
          %v4809 = vpack.c.b16 %v4629, %v4625
          %v4810 = vpack.c.b16 %v4634, %v4630
          %v4811 = vpack.c.b16 %v4635, %v4631
          %v4812 = vpack.c.b16 %v4636, %v4632
          %v4813 = vpack.c.b16 %v4637, %v4633
          %v4814 = vpack.c.b16 %v4642, %v4638
          %v4815 = vpack.c.b16 %v4643, %v4639
          %v4816 = vpack.c.b16 %v4644, %v4640
          %v4817 = vpack.c.b16 %v4645, %v4641
          %v4818 = vpack.c.b16 %v4650, %v4646
          %v4819 = vpack.c.b16 %v4651, %v4647
          %v4820 = vpack.c.b16 %v4652, %v4648
          %v4821 = vpack.c.b16 %v4653, %v4649
          %v4822 = vpack.c.b16 %v4658, %v4654
          %v4823 = vpack.c.b16 %v4659, %v4655
          %v4824 = vpack.c.b16 %v4660, %v4656
          %v4825 = vpack.c.b16 %v4661, %v4657
          %v4826 = vpack.c.b16 %v4666, %v4662
          %v4827 = vpack.c.b16 %v4667, %v4663
          %v4828 = vpack.c.b16 %v4668, %v4664
          %v4829 = vpack.c.b16 %v4669, %v4665
          %v4830 = vpack.c.b16 %v4674, %v4670
          %v4831 = vpack.c.b16 %v4675, %v4671
          %v4832 = vpack.c.b16 %v4676, %v4672
          %v4833 = vpack.c.b16 %v4677, %v4673
          %v4834 = vpack.c.b16 %v4682, %v4678
          %v4835 = vpack.c.b16 %v4683, %v4679
          %v4836 = vpack.c.b16 %v4684, %v4680
          %v4837 = vpack.c.b16 %v4685, %v4681
          %v4838 = vpack.c.b16 %v4690, %v4686
          %v4839 = vpack.c.b16 %v4691, %v4687
          %v4840 = vpack.c.b16 %v4692, %v4688
          %v4841 = vpack.c.b16 %v4693, %v4689
          %v4842 = vpack.c.b16 %v4698, %v4694
          %v4843 = vpack.c.b16 %v4699, %v4695
          %v4844 = vpack.c.b16 %v4700, %v4696
          %v4845 = vpack.c.b16 %v4701, %v4697
          %v4846 = vpack.c.b16 %v4706, %v4702
          %v4847 = vpack.c.b16 %v4707, %v4703
          %v4848 = vpack.c.b16 %v4708, %v4704
          %v4849 = vpack.c.b16 %v4709, %v4705
          %v4850 = vpack.c.b16 %v4714, %v4710
          %v4851 = vpack.c.b16 %v4715, %v4711
          %v4852 = vpack.c.b16 %v4716, %v4712
          %v4853 = vpack.c.b16 %v4717, %v4713
          %v4854 = vpack.c.b16 %v4722, %v4718
          %v4855 = vpack.c.b16 %v4723, %v4719
          %v4856 = vpack.c.b16 %v4724, %v4720
          %v4857 = vpack.c.b16 %v4725, %v4721
          %v4858 = vpack.c.b16 %v4730, %v4726
          %v4859 = vpack.c.b16 %v4731, %v4727
          %v4860 = vpack.c.b16 %v4732, %v4728
          %v4861 = vpack.c.b16 %v4733, %v4729
          %v4862 = vpack.c.b16 %v4738, %v4734
          %v4863 = vpack.c.b16 %v4739, %v4735
          %v4864 = vpack.c.b16 %v4740, %v4736
          %v4865 = vpack.c.b16 %v4741, %v4737
          %v4866 = vpack.c.b16 %v4746, %v4742
          %v4867 = vpack.c.b16 %v4747, %v4743
          %v4868 = vpack.c.b16 %v4748, %v4744
          %v4869 = vpack.c.b16 %v4749, %v4745
          %v4870 = vpack.c.b16 %v4754, %v4750
          %v4871 = vpack.c.b16 %v4755, %v4751
          %v4872 = vpack.c.b16 %v4756, %v4752
          %v4873 = vpack.c.b16 %v4757, %v4753
          %v4874 = vpack.c.b16 %v4762, %v4758
          %v4875 = vpack.c.b16 %v4763, %v4759
          %v4876 = vpack.c.b16 %v4764, %v4760
          %v4877 = vpack.c.b16 %v4765, %v4761
          %v4878 = vpack.c.b16 %v4770, %v4766
          %v4879 = vpack.c.b16 %v4771, %v4767
          %v4880 = vpack.c.b16 %v4772, %v4768
          %v4881 = vpack.c.b16 %v4773, %v4769
          %v4882 = vpack.c.b16 %v4778, %v4774
          %v4883 = vpack.c.b16 %v4779, %v4775
          %v4884 = vpack.c.b16 %v4780, %v4776
          %v4885 = vpack.c.b16 %v4781, %v4777
          %v4886 = vpack.c.b16 %v4786, %v4782
          %v4887 = vpack.c.b16 %v4787, %v4783
          %v4888 = vpack.c.b16 %v4788, %v4784
          %v4889 = vpack.c.b16 %v4789, %v4785
          %v4890 = vpack.c.b16 %v4794, %v4790
          %v4891 = vpack.c.b16 %v4795, %v4791
          %v4892 = vpack.c.b16 %v4796, %v4792
          %v4893 = vpack.c.b16 %v4797, %v4793
          %4990 = vmatprep.subr.bf16.mxu0 %v4827
          %4991 = vmatpush1.bf16.msra.mxu0 %v4826
          %4992 = vmatprep.subr.bf16.mxu0 %v4823
          %4993 = vmatpush1.bf16.msra.mxu0 %v4822
          %4994 = vmatprep.subr.bf16.mxu0 %v4819
          %4995 = vmatpush1.bf16.msra.mxu0 %v4818
          %4996 = vmatprep.subr.bf16.mxu0 %v4815
          %4997 = vmatpush1.bf16.msra.mxu0 %v4814
          %4998 = vmatprep.subr.bf16.mxu0 %v4811
          %4999 = vmatpush1.bf16.msra.mxu0 %v4810
          %5000 = vmatprep.subr.bf16.mxu0 %v4807
          %5001 = vmatpush1.bf16.msra.mxu0 %v4806
          %5002 = vmatprep.subr.bf16.mxu0 %v4803
          %5003 = vmatpush1.bf16.msra.mxu0 %v4802
          %5004 = vmatprep.subr.bf16.mxu0 %v4799
          %5005 = vmatpush1.bf16.msra.mxu0 %v4798
          %5006 = vmatprep.subr.bf16.mxu0 %v4859
          %5007 = vmatpush2.bf16.msra.mxu0 %v4858
          %5008 = vmatprep.subr.bf16.mxu0 %v4855
          %5009 = vmatpush2.bf16.msra.mxu0 %v4854
          %5010 = vmatprep.subr.bf16.mxu0 %v4851
          %5011 = vmatpush2.bf16.msra.mxu0 %v4850
          %5012 = vmatprep.subr.bf16.mxu0 %v4847
          %5013 = vmatpush2.bf16.msra.mxu0 %v4846
          %5014 = vmatprep.subr.bf16.mxu0 %v4843
          %5015 = vmatpush2.bf16.msra.mxu0 %v4842
          %5016 = vmatprep.subr.bf16.mxu0 %v4839
          %5017 = vmatpush2.bf16.msra.mxu0 %v4838
          %5018 = vmatprep.subr.bf16.mxu0 %v4835
          %5019 = vmatpush2.bf16.msra.mxu0 %v4834
          %5020 = vmatprep.subr.bf16.mxu0 %v4831
          %5021 = vmatpush2.bf16.msra.mxu0 %v4830
          %5022 = vmatprep.mubr.bf16.mxu0 %v4496
          %5023 = vmatmul.mubr.bf16.gmra.mxu0 %v4489
          %v5024 = vpop.f32.mrf.mxu0
          %v5025 = vadd.f32 0.0, %v5024
          %v5026 = vpop.f32.mrf.mxu0
          %v5027 = vadd.f32 0.0, %v5026
          %v5028 = vpop.f32.mrf.mxu0
          %v5029 = vadd.f32 0.0, %v5028
          %v5030 = vpop.f32.mrf.mxu0
          %v5031 = vadd.f32 0.0, %v5030
          %5032 = vmatprep.mubr.bf16.mxu0 %v4495
          %5033 = vmatmul.mubr.bf16.gmra.mxu0 %v4488
          %v5034 = vpop.f32.mrf.mxu0
          %v5035 = vadd.f32 0.0, %v5034
          %v5036 = vpop.f32.mrf.mxu0
          %v5037 = vadd.f32 0.0, %v5036
          %v5038 = vpop.f32.mrf.mxu0
          %v5039 = vadd.f32 0.0, %v5038
          %v5040 = vpop.f32.mrf.mxu0
          %v5041 = vadd.f32 0.0, %v5040
          %5042 = vdwg.mxu0
          %5043 = vmatprep.subr.bf16.mxu0 %v4891
          %5044 = vmatpush1.bf16.msra.mxu0 %v4890
          %5045 = vmatprep.subr.bf16.mxu0 %v4887
          %5046 = vmatpush1.bf16.msra.mxu0 %v4886
          %5047 = vmatprep.subr.bf16.mxu0 %v4883
          %5048 = vmatpush1.bf16.msra.mxu0 %v4882
          %5049 = vmatprep.subr.bf16.mxu0 %v4879
          %5050 = vmatpush1.bf16.msra.mxu0 %v4878
          %5051 = vmatprep.subr.bf16.mxu0 %v4875
          %5052 = vmatpush1.bf16.msra.mxu0 %v4874
          %5053 = vmatprep.subr.bf16.mxu0 %v4871
          %5054 = vmatpush1.bf16.msra.mxu0 %v4870
          %5055 = vmatprep.subr.bf16.mxu0 %v4867
          %5056 = vmatpush1.bf16.msra.mxu0 %v4866
          %5057 = vmatprep.subr.bf16.mxu0 %v4863
          %5058 = vmatpush1.bf16.msra.mxu0 %v4862
          %5059 = vmatprep.subr.bf16.mxu0 0
          %5060 = vmatpush2.bf16.msra.mxu0 0
          %5061 = vmatprep.subr.bf16.mxu0 0
          %5062 = vmatpush2.bf16.msra.mxu0 0
          %5063 = vmatprep.subr.bf16.mxu0 0
          %5064 = vmatpush2.bf16.msra.mxu0 0
          %5065 = vmatprep.subr.bf16.mxu0 0
          %5066 = vmatpush2.bf16.msra.mxu0 0
          %5067 = vmatprep.subr.bf16.mxu0 0
          %5068 = vmatpush2.bf16.msra.mxu0 0
          %5069 = vmatprep.subr.bf16.mxu0 0
          %5070 = vmatpush2.bf16.msra.mxu0 0
          %5071 = vmatprep.subr.bf16.mxu0 0
          %5072 = vmatpush2.bf16.msra.mxu0 0
          %5073 = vmatprep.subr.bf16.mxu0 0
          %5074 = vmatpush2.bf16.msra.mxu0 0
          %5075 = vmatprep.mubr.bf16.mxu0 0
          %5076 = vmatmul.mubr.bf16.gmra.mxu0 %v4503
          %v5077 = vpop.f32.mrf.mxu0
          %v5078 = vadd.f32 %v5025, %v5077
          %v5079 = vpop.f32.mrf.mxu0
          %v5080 = vadd.f32 %v5027, %v5079
          %v5081 = vpop.f32.mrf.mxu0
          %v5082 = vadd.f32 %v5029, %v5081
          %v5083 = vpop.f32.mrf.mxu0
          %v5084 = vadd.f32 %v5031, %v5083
          %5085 = vmatprep.mubr.bf16.mxu0 0
          %5086 = vmatmul.mubr.bf16.gmra.mxu0 %v4502
          %v5087 = vpop.f32.mrf.mxu0
          %v5088 = vadd.f32 %v5035, %v5087
          %v5089 = vpop.f32.mrf.mxu0
          %v5090 = vadd.f32 %v5037, %v5089
          %v5091 = vpop.f32.mrf.mxu0
          %v5092 = vadd.f32 %v5039, %v5091
          %v5093 = vpop.f32.mrf.mxu0
          %v5094 = vadd.f32 %v5041, %v5093
          %5095 = vdwg.mxu0
          %5096 = vmatprep.subr.bf16.mxu0 %v4829
          %5097 = vmatpush1.bf16.msra.mxu0 %v4828
          %5098 = vmatprep.subr.bf16.mxu0 %v4825
          %5099 = vmatpush1.bf16.msra.mxu0 %v4824
          %5100 = vmatprep.subr.bf16.mxu0 %v4821
          %5101 = vmatpush1.bf16.msra.mxu0 %v4820
          %5102 = vmatprep.subr.bf16.mxu0 %v4817
          %5103 = vmatpush1.bf16.msra.mxu0 %v4816
          %5104 = vmatprep.subr.bf16.mxu0 %v4813
          %5105 = vmatpush1.bf16.msra.mxu0 %v4812
          %5106 = vmatprep.subr.bf16.mxu0 %v4809
          %5107 = vmatpush1.bf16.msra.mxu0 %v4808
          %5108 = vmatprep.subr.bf16.mxu0 %v4805
          %5109 = vmatpush1.bf16.msra.mxu0 %v4804
          %5110 = vmatprep.subr.bf16.mxu0 %v4801
          %5111 = vmatpush1.bf16.msra.mxu0 %v4800
          %5112 = vmatprep.subr.bf16.mxu0 %v4861
          %5113 = vmatpush2.bf16.msra.mxu0 %v4860
          %5114 = vmatprep.subr.bf16.mxu0 %v4857
          %5115 = vmatpush2.bf16.msra.mxu0 %v4856
          %5116 = vmatprep.subr.bf16.mxu0 %v4853
          %5117 = vmatpush2.bf16.msra.mxu0 %v4852
          %5118 = vmatprep.subr.bf16.mxu0 %v4849
          %5119 = vmatpush2.bf16.msra.mxu0 %v4848
          %5120 = vmatprep.subr.bf16.mxu0 %v4845
          %5121 = vmatpush2.bf16.msra.mxu0 %v4844
          %5122 = vmatprep.subr.bf16.mxu0 %v4841
          %5123 = vmatpush2.bf16.msra.mxu0 %v4840
          %5124 = vmatprep.subr.bf16.mxu0 %v4837
          %5125 = vmatpush2.bf16.msra.mxu0 %v4836
          %5126 = vmatprep.subr.bf16.mxu0 %v4833
          %5127 = vmatpush2.bf16.msra.mxu0 %v4832
          %5128 = vmatprep.mubr.bf16.mxu0 %v4496
          %5129 = vmatmul.mubr.bf16.gmra.mxu0 %v4489
          %v5130 = vpop.f32.mrf.mxu0
          %v5131 = vadd.f32 0.0, %v5130
          %v5132 = vpop.f32.mrf.mxu0
          %v5133 = vadd.f32 0.0, %v5132
          %v5134 = vpop.f32.mrf.mxu0
          %v5135 = vadd.f32 0.0, %v5134
          %v5136 = vpop.f32.mrf.mxu0
          %v5137 = vadd.f32 0.0, %v5136
          %5138 = vmatprep.mubr.bf16.mxu0 %v4495
          %5139 = vmatmul.mubr.bf16.gmra.mxu0 %v4488
          %v5140 = vpop.f32.mrf.mxu0
          %v5141 = vadd.f32 0.0, %v5140
          %v5142 = vpop.f32.mrf.mxu0
          %v5143 = vadd.f32 0.0, %v5142
          %v5144 = vpop.f32.mrf.mxu0
          %v5145 = vadd.f32 0.0, %v5144
          %v5146 = vpop.f32.mrf.mxu0
          %v5147 = vadd.f32 0.0, %v5146
          %5148 = vdwg.mxu0
          %5149 = vmatprep.subr.bf16.mxu0 %v4893
          %5150 = vmatpush1.bf16.msra.mxu0 %v4892
          %5151 = vmatprep.subr.bf16.mxu0 %v4889
          %5152 = vmatpush1.bf16.msra.mxu0 %v4888
          %5153 = vmatprep.subr.bf16.mxu0 %v4885
          %5154 = vmatpush1.bf16.msra.mxu0 %v4884
          %5155 = vmatprep.subr.bf16.mxu0 %v4881
          %5156 = vmatpush1.bf16.msra.mxu0 %v4880
          %5157 = vmatprep.subr.bf16.mxu0 %v4877
          %5158 = vmatpush1.bf16.msra.mxu0 %v4876
          %5159 = vmatprep.subr.bf16.mxu0 %v4873
          %5160 = vmatpush1.bf16.msra.mxu0 %v4872
          %5161 = vmatprep.subr.bf16.mxu0 %v4869
          %5162 = vmatpush1.bf16.msra.mxu0 %v4868
          %5163 = vmatprep.subr.bf16.mxu0 %v4865
          %5164 = vmatpush1.bf16.msra.mxu0 %v4864
          %5165 = vmatprep.subr.bf16.mxu0 0
          %5166 = vmatpush2.bf16.msra.mxu0 0
          %5167 = vmatprep.subr.bf16.mxu0 0
          %5168 = vmatpush2.bf16.msra.mxu0 0
          %5169 = vmatprep.subr.bf16.mxu0 0
          %5170 = vmatpush2.bf16.msra.mxu0 0
          %5171 = vmatprep.subr.bf16.mxu0 0
          %5172 = vmatpush2.bf16.msra.mxu0 0
          %5173 = vmatprep.subr.bf16.mxu0 0
          %5174 = vmatpush2.bf16.msra.mxu0 0
          %5175 = vmatprep.subr.bf16.mxu0 0
          %5176 = vmatpush2.bf16.msra.mxu0 0
          %5177 = vmatprep.subr.bf16.mxu0 0
          %5178 = vmatpush2.bf16.msra.mxu0 0
          %5179 = vmatprep.subr.bf16.mxu0 0
          %5180 = vmatpush2.bf16.msra.mxu0 0
          %5181 = vmatprep.mubr.bf16.mxu0 0
          %5182 = vmatmul.mubr.bf16.gmra.mxu0 %v4503
          %v5183 = vpop.f32.mrf.mxu0
          %v5184 = vadd.f32 %v5131, %v5183
          %v5185 = vpop.f32.mrf.mxu0
          %v5186 = vadd.f32 %v5133, %v5185
          %v5187 = vpop.f32.mrf.mxu0
          %v5188 = vadd.f32 %v5135, %v5187
          %v5189 = vpop.f32.mrf.mxu0
          %v5190 = vadd.f32 %v5137, %v5189
          %5191 = vmatprep.mubr.bf16.mxu0 0
          %5192 = vmatmul.mubr.bf16.gmra.mxu0 %v4502
          %v5193 = vpop.f32.mrf.mxu0
          %v5194 = vadd.f32 %v5141, %v5193
          %v5195 = vpop.f32.mrf.mxu0
          %v5196 = vadd.f32 %v5143, %v5195
          %v5197 = vpop.f32.mrf.mxu0
          %v5198 = vadd.f32 %v5145, %v5197
          %v5199 = vpop.f32.mrf.mxu0
          %v5200 = vadd.f32 %v5147, %v5199
          %5201 = vdwg.mxu0
          %v5202 = vadd.f32 %v4370, %v5078
          %v5203 = vadd.f32 %v4371, %v5080
          %v5204 = vadd.f32 %v4372, %v5184
          %v5205 = vadd.f32 %v4373, %v5186
          %v5206 = vadd.f32 %v4374, %v5082
          %v5207 = vadd.f32 %v4375, %v5084
          %v5208 = vadd.f32 %v4376, %v5188
          %v5209 = vadd.f32 %v4377, %v5190
          %v5210 = vadd.f32 %v4378, %v5088
          %v5211 = vadd.f32 %v4379, %v5090
          %v5212 = vadd.f32 %v4380, %v5194
          %v5213 = vadd.f32 %v4381, %v5196
          %v5214 = vadd.f32 %v4382, %v5092
          %v5215 = vadd.f32 %v4383, %v5094
          %v5216 = vadd.f32 %v4384, %v5198
          %v5217 = vadd.f32 %v4385, %v5200
          %v5218 = vld [vmem:[%s616] sm:$0xf]
          %v5220 = vlaneseq
          %v5221 = vshrl.u32 %v5220, 7
          %v5222 = vsub.s32 0, %v5221
          %v5223 = vrot.slane %v5218, %v5222
          %v5224 = vlaneseq
          %v5225 = vshrl.u32 %v5224, 7
          %v5226 = vsub.s32 1, %v5225
          %v5227 = vrot.slane %v5218, %v5226
          %v5228 = vlaneseq
          %v5229 = vshrl.u32 %v5228, 7
          %v5230 = vsub.s32 2, %v5229
          %v5231 = vrot.slane %v5218, %v5230
          %v5232 = vlaneseq
          %v5233 = vshrl.u32 %v5232, 7
          %v5234 = vsub.s32 3, %v5233
          %v5235 = vrot.slane %v5218, %v5234
          %v5240 = vadd.f32 %v5202, %v5223
          %v5241 = vadd.f32 %v5203, %v5227
          %v5242 = vadd.f32 %v5204, %v5231
          %v5243 = vadd.f32 %v5205, %v5235
          %v5244 = vadd.f32 %v5206, %v5223
          %v5245 = vadd.f32 %v5207, %v5227
          %v5246 = vadd.f32 %v5208, %v5231
          %v5247 = vadd.f32 %v5209, %v5235
          %v5248 = vadd.f32 %v5210, %v5223
          %v5249 = vadd.f32 %v5211, %v5227
          %v5250 = vadd.f32 %v5212, %v5231
          %v5251 = vadd.f32 %v5213, %v5235
          %v5252 = vadd.f32 %v5214, %v5223
          %v5253 = vadd.f32 %v5215, %v5227
          %v5254 = vadd.f32 %v5216, %v5231
          %v5255 = vadd.f32 %v5217, %v5235
          %v5256 = vmax.f32 %v5240, 0.0
          %v5257 = vmax.f32 %v5241, 0.0
          %v5258 = vmax.f32 %v5242, 0.0
          %v5259 = vmax.f32 %v5243, 0.0
          %v5260 = vmax.f32 %v5244, 0.0
          %v5261 = vmax.f32 %v5245, 0.0
          %v5262 = vmax.f32 %v5246, 0.0
          %v5263 = vmax.f32 %v5247, 0.0
          %v5264 = vmax.f32 %v5248, 0.0
          %v5265 = vmax.f32 %v5249, 0.0
          %v5266 = vmax.f32 %v5250, 0.0
          %v5267 = vmax.f32 %v5251, 0.0
          %v5268 = vmax.f32 %v5252, 0.0
          %v5269 = vmax.f32 %v5253, 0.0
          %v5270 = vmax.f32 %v5254, 0.0
          %v5271 = vmax.f32 %v5255, 0.0
          %v5272 = vpack.c.bf16 %v5260, %v5256
          %v5273 = vpack.c.bf16 %v5261, %v5257
          %v5274 = vpack.c.bf16 %v5262, %v5258
          %v5275 = vpack.c.bf16 %v5263, %v5259
          %v5276 = vpack.c.bf16 %v5268, %v5264
          %v5277 = vpack.c.bf16 %v5269, %v5265
          %v5278 = vpack.c.bf16 %v5270, %v5266
          %v5279 = vpack.c.bf16 %v5271, %v5267
          %v5280 = vld [vmem:[%s625] sm:$0xff]
          %v5281 = vld [vmem:[%s625 + $0x8] sm:$0xff]
          %v5282 = vld [vmem:[%s625 + $0x10] sm:$0xff]
          %v5283 = vld [vmem:[%s625 + $0x18] sm:$0xff]
          %v5284 = vld [vmem:[%s625 + $0x20] sm:$0xff]
          %v5285 = vld [vmem:[%s625 + $0x28] sm:$0xff]
          %v5286 = vld [vmem:[%s625 + $0x30] sm:$0xff]
          %v5287 = vld [vmem:[%s625 + $0x38] sm:$0xff]
          %v5288 = vld [vmem:[%s625 + $0x40] sm:$0xff]
          %v5289 = vld [vmem:[%s625 + $0x48] sm:$0xff]
          %v5290 = vld [vmem:[%s625 + $0x50] sm:$0xff]
          %v5291 = vld [vmem:[%s625 + $0x58] sm:$0xff]
          %v5292 = vld [vmem:[%s625 + $0x60] sm:$0xff]
          %v5293 = vld [vmem:[%s625 + $0x68] sm:$0xff]
          %v5294 = vld [vmem:[%s625 + $0x70] sm:$0xff]
          %v5295 = vld [vmem:[%s625 + $0x78] sm:$0xff]
          %v5296 = vld [vmem:[%s625 + $0x80] sm:$0xff]
          %v5297 = vld [vmem:[%s625 + $0x88] sm:$0xff]
          %v5298 = vld [vmem:[%s625 + $0x90] sm:$0xff]
          %v5299 = vld [vmem:[%s625 + $0x98] sm:$0xff]
          %v5300 = vld [vmem:[%s625 + $0xa0] sm:$0xff]
          %v5301 = vld [vmem:[%s625 + $0xa8] sm:$0xff]
          %v5302 = vld [vmem:[%s625 + $0xb0] sm:$0xff]
          %v5303 = vld [vmem:[%s625 + $0xb8] sm:$0xff]
          %v5304 = vld [vmem:[%s625 + $0xc0] sm:$0xff]
          %v5305 = vld [vmem:[%s625 + $0xc8] sm:$0xff]
          %v5306 = vld [vmem:[%s625 + $0xd0] sm:$0xff]
          %v5307 = vld [vmem:[%s625 + $0xd8] sm:$0xff]
          %v5308 = vld [vmem:[%s625 + $0xe0] sm:$0xff]
          %v5309 = vld [vmem:[%s625 + $0xe8] sm:$0xff]
          %v5310 = vld [vmem:[%s625 + $0xf0] sm:$0xff]
          %v5311 = vld [vmem:[%s625 + $0xf8] sm:$0xff]
          %v5312 = vld [vmem:[%s625 + $0x100] sm:$0xff]
          %v5313 = vld [vmem:[%s625 + $0x108] sm:$0xff]
          %v5314 = vld [vmem:[%s625 + $0x110] sm:$0xff]
          %v5315 = vld [vmem:[%s625 + $0x118] sm:$0xff]
          %v5316 = vld [vmem:[%s625 + $0x120] sm:$0xff]
          %v5317 = vld [vmem:[%s625 + $0x128] sm:$0xff]
          %v5318 = vld [vmem:[%s625 + $0x130] sm:$0xff]
          %v5319 = vld [vmem:[%s625 + $0x138] sm:$0xff]
          %v5320 = vld [vmem:[%s625 + $0x140] sm:$0xff]
          %v5321 = vld [vmem:[%s625 + $0x148] sm:$0xff]
          %v5322 = vld [vmem:[%s625 + $0x150] sm:$0xff]
          %v5323 = vld [vmem:[%s625 + $0x158] sm:$0xff]
          %v5324 = vld [vmem:[%s625 + $0x160] sm:$0xff]
          %v5325 = vld [vmem:[%s625 + $0x168] sm:$0xff]
          %v5326 = vld [vmem:[%s625 + $0x170] sm:$0xff]
          %v5327 = vld [vmem:[%s625 + $0x178] sm:$0xff]
          %v5328 = vld [vmem:[%s625 + $0x180] sm:$0xff]
          %v5329 = vld [vmem:[%s625 + $0x188] sm:$0xff]
          %v5330 = vld [vmem:[%s625 + $0x190] sm:$0xff]
          %v5331 = vld [vmem:[%s625 + $0x198] sm:$0xff]
          %v5332 = vld [vmem:[%s625 + $0x1a0] sm:$0xff]
          %v5333 = vld [vmem:[%s625 + $0x1a8] sm:$0xff]
          %v5334 = vld [vmem:[%s625 + $0x1b0] sm:$0xff]
          %v5335 = vld [vmem:[%s625 + $0x1b8] sm:$0xff]
          %v5336 = vld [vmem:[%s625 + $0x1c0] sm:$0xff]
          %v5337 = vld [vmem:[%s625 + $0x1c8] sm:$0xff]
          %v5338 = vld [vmem:[%s625 + $0x1d0] sm:$0xff]
          %v5339 = vld [vmem:[%s625 + $0x1d8] sm:$0xff]
          %v5340 = vld [vmem:[%s625 + $0x1e0] sm:$0xff]
          %v5341 = vld [vmem:[%s625 + $0x1e8] sm:$0xff]
          %v5342 = vld [vmem:[%s625 + $0x1f0] sm:$0xff]
          %v5343 = vld [vmem:[%s625 + $0x1f8] sm:$0xff]
          %v5344 = vld [vmem:[%s625 + $0x200] sm:$0xff]
          %v5345 = vld [vmem:[%s625 + $0x208] sm:$0xff]
          %v5346 = vld [vmem:[%s625 + $0x210] sm:$0xff]
          %v5347 = vld [vmem:[%s625 + $0x218] sm:$0xff]
          %v5348 = vld [vmem:[%s625 + $0x220] sm:$0xff]
          %v5349 = vld [vmem:[%s625 + $0x228] sm:$0xff]
          %v5350 = vld [vmem:[%s625 + $0x230] sm:$0xff]
          %v5351 = vld [vmem:[%s625 + $0x238] sm:$0xff]
          %v5352 = vld [vmem:[%s625 + $0x240] sm:$0xff]
          %v5353 = vld [vmem:[%s625 + $0x248] sm:$0xff]
          %v5354 = vld [vmem:[%s625 + $0x250] sm:$0xff]
          %v5355 = vld [vmem:[%s625 + $0x258] sm:$0xff]
          %v5356 = vld [vmem:[%s625 + $0x260] sm:$0xff]
          %v5357 = vld [vmem:[%s625 + $0x268] sm:$0xff]
          %v5358 = vld [vmem:[%s625 + $0x270] sm:$0xff]
          %v5359 = vld [vmem:[%s625 + $0x278] sm:$0xff]
          %v5360 = vld [vmem:[%s625 + $0x280] sm:$0xff]
          %v5361 = vld [vmem:[%s625 + $0x288] sm:$0xff]
          %v5362 = vld [vmem:[%s625 + $0x290] sm:$0xff]
          %v5363 = vld [vmem:[%s625 + $0x298] sm:$0xff]
          %v5364 = vld [vmem:[%s625 + $0x2a0] sm:$0xff]
          %v5365 = vld [vmem:[%s625 + $0x2a8] sm:$0xff]
          %v5366 = vld [vmem:[%s625 + $0x2b0] sm:$0xff]
          %v5367 = vld [vmem:[%s625 + $0x2b8] sm:$0xff]
          %v5368 = vld [vmem:[%s625 + $0x2c0] sm:$0xff]
          %v5369 = vld [vmem:[%s625 + $0x2c8] sm:$0xff]
          %v5370 = vld [vmem:[%s625 + $0x2d0] sm:$0xff]
          %v5371 = vld [vmem:[%s625 + $0x2d8] sm:$0xff]
          %v5372 = vld [vmem:[%s625 + $0x2e0] sm:$0xff]
          %v5373 = vld [vmem:[%s625 + $0x2e8] sm:$0xff]
          %v5374 = vld [vmem:[%s625 + $0x2f0] sm:$0xff]
          %v5375 = vld [vmem:[%s625 + $0x2f8] sm:$0xff]
          %v5376 = vld [vmem:[%s625 + $0x300] sm:$0xff]
          %v5377 = vld [vmem:[%s625 + $0x308] sm:$0xff]
          %v5378 = vld [vmem:[%s625 + $0x310] sm:$0xff]
          %v5379 = vld [vmem:[%s625 + $0x318] sm:$0xff]
          %v5380 = vld [vmem:[%s625 + $0x320] sm:$0xff]
          %v5381 = vld [vmem:[%s625 + $0x328] sm:$0xff]
          %v5382 = vld [vmem:[%s625 + $0x330] sm:$0xff]
          %v5383 = vld [vmem:[%s625 + $0x338] sm:$0xff]
          %v5384 = vld [vmem:[%s625 + $0x340] sm:$0xff]
          %v5385 = vld [vmem:[%s625 + $0x348] sm:$0xff]
          %v5386 = vld [vmem:[%s625 + $0x350] sm:$0xff]
          %v5387 = vld [vmem:[%s625 + $0x358] sm:$0xff]
          %v5388 = vld [vmem:[%s625 + $0x360] sm:$0xff]
          %v5389 = vld [vmem:[%s625 + $0x368] sm:$0xff]
          %v5390 = vld [vmem:[%s625 + $0x370] sm:$0xff]
          %v5391 = vld [vmem:[%s625 + $0x378] sm:$0xff]
          %v5392 = vld [vmem:[%s625 + $0x380] sm:$0xff]
          %v5393 = vld [vmem:[%s625 + $0x388] sm:$0xff]
          %v5394 = vld [vmem:[%s625 + $0x390] sm:$0xff]
          %v5395 = vld [vmem:[%s625 + $0x398] sm:$0xff]
          %v5396 = vld [vmem:[%s625 + $0x3a0] sm:$0xff]
          %v5397 = vld [vmem:[%s625 + $0x3a8] sm:$0xff]
          %v5398 = vld [vmem:[%s625 + $0x3b0] sm:$0xff]
          %v5399 = vld [vmem:[%s625 + $0x3b8] sm:$0xff]
          %v5400 = vld [vmem:[%s625 + $0x3c0] sm:$0xff]
          %v5401 = vld [vmem:[%s625 + $0x3c8] sm:$0xff]
          %v5402 = vld [vmem:[%s625 + $0x3d0] sm:$0xff]
          %v5403 = vld [vmem:[%s625 + $0x3d8] sm:$0xff]
          %v5404 = vld [vmem:[%s625 + $0x3e0] sm:$0xff]
          %v5405 = vld [vmem:[%s625 + $0x3e8] sm:$0xff]
          %v5406 = vld [vmem:[%s625 + $0x3f0] sm:$0xff]
          %v5407 = vld [vmem:[%s625 + $0x3f8] sm:$0xff]
          %s5408 = scalar_lea.vmem %s625, 1024 [#allocation11]
          %v5409 = vld [vmem:[%s5408] sm:$0xff]
          %v5410 = vld [vmem:[%s5408 + $0x8] sm:$0xff]
          %v5411 = vld [vmem:[%s5408 + $0x10] sm:$0xff]
          %v5412 = vld [vmem:[%s5408 + $0x18] sm:$0xff]
          %v5413 = vld [vmem:[%s5408 + $0x20] sm:$0xff]
          %v5414 = vld [vmem:[%s5408 + $0x28] sm:$0xff]
          %v5415 = vld [vmem:[%s5408 + $0x30] sm:$0xff]
          %v5416 = vld [vmem:[%s5408 + $0x38] sm:$0xff]
          %v5417 = vld [vmem:[%s5408 + $0x40] sm:$0xff]
          %v5418 = vld [vmem:[%s5408 + $0x48] sm:$0xff]
          %v5419 = vld [vmem:[%s5408 + $0x50] sm:$0xff]
          %v5420 = vld [vmem:[%s5408 + $0x58] sm:$0xff]
          %v5421 = vld [vmem:[%s5408 + $0x60] sm:$0xff]
          %v5422 = vld [vmem:[%s5408 + $0x68] sm:$0xff]
          %v5423 = vld [vmem:[%s5408 + $0x70] sm:$0xff]
          %v5424 = vld [vmem:[%s5408 + $0x78] sm:$0xff]
          %v5425 = vld [vmem:[%s5408 + $0x80] sm:$0xff]
          %v5426 = vld [vmem:[%s5408 + $0x88] sm:$0xff]
          %v5427 = vld [vmem:[%s5408 + $0x90] sm:$0xff]
          %v5428 = vld [vmem:[%s5408 + $0x98] sm:$0xff]
          %v5429 = vld [vmem:[%s5408 + $0xa0] sm:$0xff]
          %v5430 = vld [vmem:[%s5408 + $0xa8] sm:$0xff]
          %v5431 = vld [vmem:[%s5408 + $0xb0] sm:$0xff]
          %v5432 = vld [vmem:[%s5408 + $0xb8] sm:$0xff]
          %v5433 = vld [vmem:[%s5408 + $0xc0] sm:$0xff]
          %v5434 = vld [vmem:[%s5408 + $0xc8] sm:$0xff]
          %v5435 = vld [vmem:[%s5408 + $0xd0] sm:$0xff]
          %v5436 = vld [vmem:[%s5408 + $0xd8] sm:$0xff]
          %v5437 = vld [vmem:[%s5408 + $0xe0] sm:$0xff]
          %v5438 = vld [vmem:[%s5408 + $0xe8] sm:$0xff]
          %v5439 = vld [vmem:[%s5408 + $0xf0] sm:$0xff]
          %v5440 = vld [vmem:[%s5408 + $0xf8] sm:$0xff]
          %v5441 = vld [vmem:[%s5408 + $0x100] sm:$0xff]
          %v5442 = vld [vmem:[%s5408 + $0x108] sm:$0xff]
          %v5443 = vld [vmem:[%s5408 + $0x110] sm:$0xff]
          %v5444 = vld [vmem:[%s5408 + $0x118] sm:$0xff]
          %v5445 = vld [vmem:[%s5408 + $0x120] sm:$0xff]
          %v5446 = vld [vmem:[%s5408 + $0x128] sm:$0xff]
          %v5447 = vld [vmem:[%s5408 + $0x130] sm:$0xff]
          %v5448 = vld [vmem:[%s5408 + $0x138] sm:$0xff]
          %v5449 = vld [vmem:[%s5408 + $0x140] sm:$0xff]
          %v5450 = vld [vmem:[%s5408 + $0x148] sm:$0xff]
          %v5451 = vld [vmem:[%s5408 + $0x150] sm:$0xff]
          %v5452 = vld [vmem:[%s5408 + $0x158] sm:$0xff]
          %v5453 = vld [vmem:[%s5408 + $0x160] sm:$0xff]
          %v5454 = vld [vmem:[%s5408 + $0x168] sm:$0xff]
          %v5455 = vld [vmem:[%s5408 + $0x170] sm:$0xff]
          %v5456 = vld [vmem:[%s5408 + $0x178] sm:$0xff]
          %v5457 = vld [vmem:[%s5408 + $0x180] sm:$0xff]
          %v5458 = vld [vmem:[%s5408 + $0x188] sm:$0xff]
          %v5459 = vld [vmem:[%s5408 + $0x190] sm:$0xff]
          %v5460 = vld [vmem:[%s5408 + $0x198] sm:$0xff]
          %v5461 = vld [vmem:[%s5408 + $0x1a0] sm:$0xff]
          %v5462 = vld [vmem:[%s5408 + $0x1a8] sm:$0xff]
          %v5463 = vld [vmem:[%s5408 + $0x1b0] sm:$0xff]
          %v5464 = vld [vmem:[%s5408 + $0x1b8] sm:$0xff]
          %v5465 = vld [vmem:[%s5408 + $0x1c0] sm:$0xff]
          %v5466 = vld [vmem:[%s5408 + $0x1c8] sm:$0xff]
          %v5467 = vld [vmem:[%s5408 + $0x1d0] sm:$0xff]
          %v5468 = vld [vmem:[%s5408 + $0x1d8] sm:$0xff]
          %v5469 = vld [vmem:[%s5408 + $0x1e0] sm:$0xff]
          %v5470 = vld [vmem:[%s5408 + $0x1e8] sm:$0xff]
          %v5471 = vld [vmem:[%s5408 + $0x1f0] sm:$0xff]
          %v5472 = vld [vmem:[%s5408 + $0x1f8] sm:$0xff]
          %v5473 = vld [vmem:[%s5408 + $0x200] sm:$0xff]
          %v5474 = vld [vmem:[%s5408 + $0x208] sm:$0xff]
          %v5475 = vld [vmem:[%s5408 + $0x210] sm:$0xff]
          %v5476 = vld [vmem:[%s5408 + $0x218] sm:$0xff]
          %v5477 = vld [vmem:[%s5408 + $0x220] sm:$0xff]
          %v5478 = vld [vmem:[%s5408 + $0x228] sm:$0xff]
          %v5479 = vld [vmem:[%s5408 + $0x230] sm:$0xff]
          %v5480 = vld [vmem:[%s5408 + $0x238] sm:$0xff]
          %v5481 = vld [vmem:[%s5408 + $0x240] sm:$0xff]
          %v5482 = vld [vmem:[%s5408 + $0x248] sm:$0xff]
          %v5483 = vld [vmem:[%s5408 + $0x250] sm:$0xff]
          %v5484 = vld [vmem:[%s5408 + $0x258] sm:$0xff]
          %v5485 = vld [vmem:[%s5408 + $0x260] sm:$0xff]
          %v5486 = vld [vmem:[%s5408 + $0x268] sm:$0xff]
          %v5487 = vld [vmem:[%s5408 + $0x270] sm:$0xff]
          %v5488 = vld [vmem:[%s5408 + $0x278] sm:$0xff]
          %v5489 = vld [vmem:[%s5408 + $0x280] sm:$0xff]
          %v5490 = vld [vmem:[%s5408 + $0x288] sm:$0xff]
          %v5491 = vld [vmem:[%s5408 + $0x290] sm:$0xff]
          %v5492 = vld [vmem:[%s5408 + $0x298] sm:$0xff]
          %v5493 = vld [vmem:[%s5408 + $0x2a0] sm:$0xff]
          %v5494 = vld [vmem:[%s5408 + $0x2a8] sm:$0xff]
          %v5495 = vld [vmem:[%s5408 + $0x2b0] sm:$0xff]
          %v5496 = vld [vmem:[%s5408 + $0x2b8] sm:$0xff]
          %v5497 = vld [vmem:[%s5408 + $0x2c0] sm:$0xff]
          %v5498 = vld [vmem:[%s5408 + $0x2c8] sm:$0xff]
          %v5499 = vld [vmem:[%s5408 + $0x2d0] sm:$0xff]
          %v5500 = vld [vmem:[%s5408 + $0x2d8] sm:$0xff]
          %v5501 = vld [vmem:[%s5408 + $0x2e0] sm:$0xff]
          %v5502 = vld [vmem:[%s5408 + $0x2e8] sm:$0xff]
          %v5503 = vld [vmem:[%s5408 + $0x2f0] sm:$0xff]
          %v5504 = vld [vmem:[%s5408 + $0x2f8] sm:$0xff]
          %v5505 = vld [vmem:[%s5408 + $0x300] sm:$0xff]
          %v5506 = vld [vmem:[%s5408 + $0x308] sm:$0xff]
          %v5507 = vld [vmem:[%s5408 + $0x310] sm:$0xff]
          %v5508 = vld [vmem:[%s5408 + $0x318] sm:$0xff]
          %v5509 = vld [vmem:[%s5408 + $0x320] sm:$0xff]
          %v5510 = vld [vmem:[%s5408 + $0x328] sm:$0xff]
          %v5511 = vld [vmem:[%s5408 + $0x330] sm:$0xff]
          %v5512 = vld [vmem:[%s5408 + $0x338] sm:$0xff]
          %v5513 = vld [vmem:[%s5408 + $0x340] sm:$0xff]
          %v5514 = vld [vmem:[%s5408 + $0x348] sm:$0xff]
          %v5515 = vld [vmem:[%s5408 + $0x350] sm:$0xff]
          %v5516 = vld [vmem:[%s5408 + $0x358] sm:$0xff]
          %v5517 = vld [vmem:[%s5408 + $0x360] sm:$0xff]
          %v5518 = vld [vmem:[%s5408 + $0x368] sm:$0xff]
          %v5519 = vld [vmem:[%s5408 + $0x370] sm:$0xff]
          %v5520 = vld [vmem:[%s5408 + $0x378] sm:$0xff]
          %v5521 = vld [vmem:[%s5408 + $0x380] sm:$0xff]
          %v5522 = vld [vmem:[%s5408 + $0x388] sm:$0xff]
          %v5523 = vld [vmem:[%s5408 + $0x390] sm:$0xff]
          %v5524 = vld [vmem:[%s5408 + $0x398] sm:$0xff]
          %v5525 = vld [vmem:[%s5408 + $0x3a0] sm:$0xff]
          %v5526 = vld [vmem:[%s5408 + $0x3a8] sm:$0xff]
          %v5527 = vld [vmem:[%s5408 + $0x3b0] sm:$0xff]
          %v5528 = vld [vmem:[%s5408 + $0x3b8] sm:$0xff]
          %v5529 = vld [vmem:[%s5408 + $0x3c0] sm:$0xff]
          %v5530 = vld [vmem:[%s5408 + $0x3c8] sm:$0xff]
          %v5531 = vld [vmem:[%s5408 + $0x3d0] sm:$0xff]
          %v5532 = vld [vmem:[%s5408 + $0x3d8] sm:$0xff]
          %v5533 = vld [vmem:[%s5408 + $0x3e0] sm:$0xff]
          %v5534 = vld [vmem:[%s5408 + $0x3e8] sm:$0xff]
          %v5535 = vld [vmem:[%s5408 + $0x3f0] sm:$0xff]
          %v5536 = vld [vmem:[%s5408 + $0x3f8] sm:$0xff]
          %v5538 = vshrl.u32 %v5272, 16
          %v5540 = vshll.u32 %v5272, 16
          %v5542 = vrot.slane %v5540, 1
          %v5543 = vor.u32 %v5538, %v5542
          %v5545 = vshll.u32 %v5276, 16
          %v5547 = vrot.slane %v5545, 1
          %v5548 = vsel %vm839, %v5543, %v5547
          %v5550 = vshrl.u32 %v5273, 16
          %v5552 = vshll.u32 %v5273, 16
          %v5554 = vrot.slane %v5552, 1
          %v5555 = vor.u32 %v5550, %v5554
          %v5557 = vshll.u32 %v5277, 16
          %v5559 = vrot.slane %v5557, 1
          %v5560 = vsel %vm839, %v5555, %v5559
          %v5562 = vshrl.u32 %v5274, 16
          %v5564 = vshll.u32 %v5274, 16
          %v5566 = vrot.slane %v5564, 1
          %v5567 = vor.u32 %v5562, %v5566
          %v5569 = vshll.u32 %v5278, 16
          %v5571 = vrot.slane %v5569, 1
          %v5572 = vsel %vm839, %v5567, %v5571
          %v5574 = vshrl.u32 %v5275, 16
          %v5576 = vshll.u32 %v5275, 16
          %v5578 = vrot.slane %v5576, 1
          %v5579 = vor.u32 %v5574, %v5578
          %v5581 = vshll.u32 %v5279, 16
          %v5583 = vrot.slane %v5581, 1
          %v5584 = vsel %vm839, %v5579, %v5583
          %v5585 = vshrl.u32 %v5276, 16
          %v5587 = vor.u32 %v5585, %v5547
          %v5588 = vshrl.u32 %v5277, 16
          %v5590 = vor.u32 %v5588, %v5559
          %v5591 = vshrl.u32 %v5278, 16
          %v5593 = vor.u32 %v5591, %v5571
          %v5594 = vshrl.u32 %v5279, 16
          %v5596 = vor.u32 %v5594, %v5583
          %v5733 = vunpack.c.l.b16 %v5409
          %v5734 = vunpack.c.h.b16 %v5409
          %v5735 = vunpack.c.l.b16 %v5410
          %v5736 = vunpack.c.h.b16 %v5410
          %v5737 = vunpack.c.l.b16 %v5411
          %v5738 = vunpack.c.h.b16 %v5411
          %v5739 = vunpack.c.l.b16 %v5412
          %v5740 = vunpack.c.h.b16 %v5412
          %v5741 = vunpack.c.l.b16 %v5413
          %v5742 = vunpack.c.h.b16 %v5413
          %v5743 = vunpack.c.l.b16 %v5414
          %v5744 = vunpack.c.h.b16 %v5414
          %v5745 = vunpack.c.l.b16 %v5415
          %v5746 = vunpack.c.h.b16 %v5415
          %v5747 = vunpack.c.l.b16 %v5416
          %v5748 = vunpack.c.h.b16 %v5416
          %v5749 = vunpack.c.l.b16 %v5417
          %v5750 = vunpack.c.h.b16 %v5417
          %v5751 = vunpack.c.l.b16 %v5418
          %v5752 = vunpack.c.h.b16 %v5418
          %v5753 = vunpack.c.l.b16 %v5419
          %v5754 = vunpack.c.h.b16 %v5419
          %v5755 = vunpack.c.l.b16 %v5420
          %v5756 = vunpack.c.h.b16 %v5420
          %v5757 = vunpack.c.l.b16 %v5421
          %v5758 = vunpack.c.h.b16 %v5421
          %v5759 = vunpack.c.l.b16 %v5422
          %v5760 = vunpack.c.h.b16 %v5422
          %v5761 = vunpack.c.l.b16 %v5423
          %v5762 = vunpack.c.h.b16 %v5423
          %v5763 = vunpack.c.l.b16 %v5424
          %v5764 = vunpack.c.h.b16 %v5424
          %v5765 = vunpack.c.l.b16 %v5425
          %v5766 = vunpack.c.h.b16 %v5425
          %v5767 = vunpack.c.l.b16 %v5426
          %v5768 = vunpack.c.h.b16 %v5426
          %v5769 = vunpack.c.l.b16 %v5427
          %v5770 = vunpack.c.h.b16 %v5427
          %v5771 = vunpack.c.l.b16 %v5428
          %v5772 = vunpack.c.h.b16 %v5428
          %v5773 = vunpack.c.l.b16 %v5429
          %v5774 = vunpack.c.h.b16 %v5429
          %v5775 = vunpack.c.l.b16 %v5430
          %v5776 = vunpack.c.h.b16 %v5430
          %v5777 = vunpack.c.l.b16 %v5431
          %v5778 = vunpack.c.h.b16 %v5431
          %v5779 = vunpack.c.l.b16 %v5432
          %v5780 = vunpack.c.h.b16 %v5432
          %v5781 = vunpack.c.l.b16 %v5433
          %v5782 = vunpack.c.h.b16 %v5433
          %v5783 = vunpack.c.l.b16 %v5434
          %v5784 = vunpack.c.h.b16 %v5434
          %v5785 = vunpack.c.l.b16 %v5435
          %v5786 = vunpack.c.h.b16 %v5435
          %v5787 = vunpack.c.l.b16 %v5436
          %v5788 = vunpack.c.h.b16 %v5436
          %v5789 = vunpack.c.l.b16 %v5437
          %v5790 = vunpack.c.h.b16 %v5437
          %v5791 = vunpack.c.l.b16 %v5438
          %v5792 = vunpack.c.h.b16 %v5438
          %v5793 = vunpack.c.l.b16 %v5439
          %v5794 = vunpack.c.h.b16 %v5439
          %v5795 = vunpack.c.l.b16 %v5440
          %v5796 = vunpack.c.h.b16 %v5440
          %v5797 = vunpack.c.l.b16 %v5441
          %v5798 = vunpack.c.h.b16 %v5441
          %v5799 = vunpack.c.l.b16 %v5442
          %v5800 = vunpack.c.h.b16 %v5442
          %v5801 = vunpack.c.l.b16 %v5443
          %v5802 = vunpack.c.h.b16 %v5443
          %v5803 = vunpack.c.l.b16 %v5444
          %v5804 = vunpack.c.h.b16 %v5444
          %v5805 = vunpack.c.l.b16 %v5445
          %v5806 = vunpack.c.h.b16 %v5445
          %v5807 = vunpack.c.l.b16 %v5446
          %v5808 = vunpack.c.h.b16 %v5446
          %v5809 = vunpack.c.l.b16 %v5447
          %v5810 = vunpack.c.h.b16 %v5447
          %v5811 = vunpack.c.l.b16 %v5448
          %v5812 = vunpack.c.h.b16 %v5448
          %v5813 = vunpack.c.l.b16 %v5449
          %v5814 = vunpack.c.h.b16 %v5449
          %v5815 = vunpack.c.l.b16 %v5450
          %v5816 = vunpack.c.h.b16 %v5450
          %v5817 = vunpack.c.l.b16 %v5451
          %v5818 = vunpack.c.h.b16 %v5451
          %v5819 = vunpack.c.l.b16 %v5452
          %v5820 = vunpack.c.h.b16 %v5452
          %v5821 = vunpack.c.l.b16 %v5453
          %v5822 = vunpack.c.h.b16 %v5453
          %v5823 = vunpack.c.l.b16 %v5454
          %v5824 = vunpack.c.h.b16 %v5454
          %v5825 = vunpack.c.l.b16 %v5455
          %v5826 = vunpack.c.h.b16 %v5455
          %v5827 = vunpack.c.l.b16 %v5456
          %v5828 = vunpack.c.h.b16 %v5456
          %v5829 = vunpack.c.l.b16 %v5457
          %v5830 = vunpack.c.h.b16 %v5457
          %v5831 = vunpack.c.l.b16 %v5458
          %v5832 = vunpack.c.h.b16 %v5458
          %v5833 = vunpack.c.l.b16 %v5459
          %v5834 = vunpack.c.h.b16 %v5459
          %v5835 = vunpack.c.l.b16 %v5460
          %v5836 = vunpack.c.h.b16 %v5460
          %v5837 = vunpack.c.l.b16 %v5461
          %v5838 = vunpack.c.h.b16 %v5461
          %v5839 = vunpack.c.l.b16 %v5462
          %v5840 = vunpack.c.h.b16 %v5462
          %v5841 = vunpack.c.l.b16 %v5463
          %v5842 = vunpack.c.h.b16 %v5463
          %v5843 = vunpack.c.l.b16 %v5464
          %v5844 = vunpack.c.h.b16 %v5464
          %v5845 = vunpack.c.l.b16 %v5465
          %v5846 = vunpack.c.h.b16 %v5465
          %v5847 = vunpack.c.l.b16 %v5466
          %v5848 = vunpack.c.h.b16 %v5466
          %v5849 = vunpack.c.l.b16 %v5467
          %v5850 = vunpack.c.h.b16 %v5467
          %v5851 = vunpack.c.l.b16 %v5468
          %v5852 = vunpack.c.h.b16 %v5468
          %v5853 = vunpack.c.l.b16 %v5469
          %v5854 = vunpack.c.h.b16 %v5469
          %v5855 = vunpack.c.l.b16 %v5470
          %v5856 = vunpack.c.h.b16 %v5470
          %v5857 = vunpack.c.l.b16 %v5471
          %v5858 = vunpack.c.h.b16 %v5471
          %v5859 = vunpack.c.l.b16 %v5472
          %v5860 = vunpack.c.h.b16 %v5472
          %v5861 = vunpack.c.l.b16 %v5473
          %v5862 = vunpack.c.h.b16 %v5473
          %v5863 = vunpack.c.l.b16 %v5474
          %v5864 = vunpack.c.h.b16 %v5474
          %v5865 = vunpack.c.l.b16 %v5475
          %v5866 = vunpack.c.h.b16 %v5475
          %v5867 = vunpack.c.l.b16 %v5476
          %v5868 = vunpack.c.h.b16 %v5476
          %v5869 = vunpack.c.l.b16 %v5477
          %v5870 = vunpack.c.h.b16 %v5477
          %v5871 = vunpack.c.l.b16 %v5478
          %v5872 = vunpack.c.h.b16 %v5478
          %v5873 = vunpack.c.l.b16 %v5479
          %v5874 = vunpack.c.h.b16 %v5479
          %v5875 = vunpack.c.l.b16 %v5480
          %v5876 = vunpack.c.h.b16 %v5480
          %v5877 = vunpack.c.l.b16 %v5481
          %v5878 = vunpack.c.h.b16 %v5481
          %v5879 = vunpack.c.l.b16 %v5482
          %v5880 = vunpack.c.h.b16 %v5482
          %v5881 = vunpack.c.l.b16 %v5483
          %v5882 = vunpack.c.h.b16 %v5483
          %v5883 = vunpack.c.l.b16 %v5484
          %v5884 = vunpack.c.h.b16 %v5484
          %v5885 = vunpack.c.l.b16 %v5485
          %v5886 = vunpack.c.h.b16 %v5485
          %v5887 = vunpack.c.l.b16 %v5486
          %v5888 = vunpack.c.h.b16 %v5486
          %v5889 = vunpack.c.l.b16 %v5487
          %v5890 = vunpack.c.h.b16 %v5487
          %v5891 = vunpack.c.l.b16 %v5488
          %v5892 = vunpack.c.h.b16 %v5488
          %v5893 = vunpack.c.l.b16 %v5489
          %v5894 = vunpack.c.h.b16 %v5489
          %v5895 = vunpack.c.l.b16 %v5490
          %v5896 = vunpack.c.h.b16 %v5490
          %v5897 = vunpack.c.l.b16 %v5491
          %v5898 = vunpack.c.h.b16 %v5491
          %v5899 = vunpack.c.l.b16 %v5492
          %v5900 = vunpack.c.h.b16 %v5492
          %v5901 = vunpack.c.l.b16 %v5493
          %v5902 = vunpack.c.h.b16 %v5493
          %v5903 = vunpack.c.l.b16 %v5494
          %v5904 = vunpack.c.h.b16 %v5494
          %v5905 = vunpack.c.l.b16 %v5495
          %v5906 = vunpack.c.h.b16 %v5495
          %v5907 = vunpack.c.l.b16 %v5496
          %v5908 = vunpack.c.h.b16 %v5496
          %v5909 = vunpack.c.l.b16 %v5497
          %v5910 = vunpack.c.h.b16 %v5497
          %v5911 = vunpack.c.l.b16 %v5498
          %v5912 = vunpack.c.h.b16 %v5498
          %v5913 = vunpack.c.l.b16 %v5499
          %v5914 = vunpack.c.h.b16 %v5499
          %v5915 = vunpack.c.l.b16 %v5500
          %v5916 = vunpack.c.h.b16 %v5500
          %v5917 = vunpack.c.l.b16 %v5501
          %v5918 = vunpack.c.h.b16 %v5501
          %v5919 = vunpack.c.l.b16 %v5502
          %v5920 = vunpack.c.h.b16 %v5502
          %v5921 = vunpack.c.l.b16 %v5503
          %v5922 = vunpack.c.h.b16 %v5503
          %v5923 = vunpack.c.l.b16 %v5504
          %v5924 = vunpack.c.h.b16 %v5504
          %v5925 = vunpack.c.l.b16 %v5505
          %v5926 = vunpack.c.h.b16 %v5505
          %v5927 = vunpack.c.l.b16 %v5506
          %v5928 = vunpack.c.h.b16 %v5506
          %v5929 = vunpack.c.l.b16 %v5507
          %v5930 = vunpack.c.h.b16 %v5507
          %v5931 = vunpack.c.l.b16 %v5508
          %v5932 = vunpack.c.h.b16 %v5508
          %v5933 = vunpack.c.l.b16 %v5509
          %v5934 = vunpack.c.h.b16 %v5509
          %v5935 = vunpack.c.l.b16 %v5510
          %v5936 = vunpack.c.h.b16 %v5510
          %v5937 = vunpack.c.l.b16 %v5511
          %v5938 = vunpack.c.h.b16 %v5511
          %v5939 = vunpack.c.l.b16 %v5512
          %v5940 = vunpack.c.h.b16 %v5512
          %v5941 = vunpack.c.l.b16 %v5513
          %v5942 = vunpack.c.h.b16 %v5513
          %v5943 = vunpack.c.l.b16 %v5514
          %v5944 = vunpack.c.h.b16 %v5514
          %v5945 = vunpack.c.l.b16 %v5515
          %v5946 = vunpack.c.h.b16 %v5515
          %v5947 = vunpack.c.l.b16 %v5516
          %v5948 = vunpack.c.h.b16 %v5516
          %v5949 = vunpack.c.l.b16 %v5517
          %v5950 = vunpack.c.h.b16 %v5517
          %v5951 = vunpack.c.l.b16 %v5518
          %v5952 = vunpack.c.h.b16 %v5518
          %v5953 = vunpack.c.l.b16 %v5519
          %v5954 = vunpack.c.h.b16 %v5519
          %v5955 = vunpack.c.l.b16 %v5520
          %v5956 = vunpack.c.h.b16 %v5520
          %v5957 = vunpack.c.l.b16 %v5521
          %v5958 = vunpack.c.h.b16 %v5521
          %v5959 = vunpack.c.l.b16 %v5522
          %v5960 = vunpack.c.h.b16 %v5522
          %v5961 = vunpack.c.l.b16 %v5523
          %v5962 = vunpack.c.h.b16 %v5523
          %v5963 = vunpack.c.l.b16 %v5524
          %v5964 = vunpack.c.h.b16 %v5524
          %v5965 = vunpack.c.l.b16 %v5525
          %v5966 = vunpack.c.h.b16 %v5525
          %v5967 = vunpack.c.l.b16 %v5526
          %v5968 = vunpack.c.h.b16 %v5526
          %v5969 = vunpack.c.l.b16 %v5527
          %v5970 = vunpack.c.h.b16 %v5527
          %v5971 = vunpack.c.l.b16 %v5528
          %v5972 = vunpack.c.h.b16 %v5528
          %v5973 = vunpack.c.l.b16 %v5529
          %v5974 = vunpack.c.h.b16 %v5529
          %v5975 = vunpack.c.l.b16 %v5530
          %v5976 = vunpack.c.h.b16 %v5530
          %v5977 = vunpack.c.l.b16 %v5531
          %v5978 = vunpack.c.h.b16 %v5531
          %v5979 = vunpack.c.l.b16 %v5532
          %v5980 = vunpack.c.h.b16 %v5532
          %v5981 = vunpack.c.l.b16 %v5533
          %v5982 = vunpack.c.h.b16 %v5533
          %v5983 = vunpack.c.l.b16 %v5534
          %v5984 = vunpack.c.h.b16 %v5534
          %v5985 = vunpack.c.l.b16 %v5535
          %v5986 = vunpack.c.h.b16 %v5535
          %v5987 = vunpack.c.l.b16 %v5536
          %v5988 = vunpack.c.h.b16 %v5536
          %v5989 = vpack.c.b16 %v5737, %v5733
          %v5990 = vpack.c.b16 %v5738, %v5734
          %v5991 = vpack.c.b16 %v5739, %v5735
          %v5992 = vpack.c.b16 %v5740, %v5736
          %v5993 = vpack.c.b16 %v5745, %v5741
          %v5994 = vpack.c.b16 %v5746, %v5742
          %v5995 = vpack.c.b16 %v5747, %v5743
          %v5996 = vpack.c.b16 %v5748, %v5744
          %v5997 = vpack.c.b16 %v5753, %v5749
          %v5998 = vpack.c.b16 %v5754, %v5750
          %v5999 = vpack.c.b16 %v5755, %v5751
          %v6000 = vpack.c.b16 %v5756, %v5752
          %v6001 = vpack.c.b16 %v5761, %v5757
          %v6002 = vpack.c.b16 %v5762, %v5758
          %v6003 = vpack.c.b16 %v5763, %v5759
          %v6004 = vpack.c.b16 %v5764, %v5760
          %v6005 = vpack.c.b16 %v5769, %v5765
          %v6006 = vpack.c.b16 %v5770, %v5766
          %v6007 = vpack.c.b16 %v5771, %v5767
          %v6008 = vpack.c.b16 %v5772, %v5768
          %v6009 = vpack.c.b16 %v5777, %v5773
          %v6010 = vpack.c.b16 %v5778, %v5774
          %v6011 = vpack.c.b16 %v5779, %v5775
          %v6012 = vpack.c.b16 %v5780, %v5776
          %v6013 = vpack.c.b16 %v5785, %v5781
          %v6014 = vpack.c.b16 %v5786, %v5782
          %v6015 = vpack.c.b16 %v5787, %v5783
          %v6016 = vpack.c.b16 %v5788, %v5784
          %v6017 = vpack.c.b16 %v5793, %v5789
          %v6018 = vpack.c.b16 %v5794, %v5790
          %v6019 = vpack.c.b16 %v5795, %v5791
          %v6020 = vpack.c.b16 %v5796, %v5792
          %v6021 = vpack.c.b16 %v5801, %v5797
          %v6022 = vpack.c.b16 %v5802, %v5798
          %v6023 = vpack.c.b16 %v5803, %v5799
          %v6024 = vpack.c.b16 %v5804, %v5800
          %v6025 = vpack.c.b16 %v5809, %v5805
          %v6026 = vpack.c.b16 %v5810, %v5806
          %v6027 = vpack.c.b16 %v5811, %v5807
          %v6028 = vpack.c.b16 %v5812, %v5808
          %v6029 = vpack.c.b16 %v5817, %v5813
          %v6030 = vpack.c.b16 %v5818, %v5814
          %v6031 = vpack.c.b16 %v5819, %v5815
          %v6032 = vpack.c.b16 %v5820, %v5816
          %v6033 = vpack.c.b16 %v5825, %v5821
          %v6034 = vpack.c.b16 %v5826, %v5822
          %v6035 = vpack.c.b16 %v5827, %v5823
          %v6036 = vpack.c.b16 %v5828, %v5824
          %v6037 = vpack.c.b16 %v5833, %v5829
          %v6038 = vpack.c.b16 %v5834, %v5830
          %v6039 = vpack.c.b16 %v5835, %v5831
          %v6040 = vpack.c.b16 %v5836, %v5832
          %v6041 = vpack.c.b16 %v5841, %v5837
          %v6042 = vpack.c.b16 %v5842, %v5838
          %v6043 = vpack.c.b16 %v5843, %v5839
          %v6044 = vpack.c.b16 %v5844, %v5840
          %v6045 = vpack.c.b16 %v5849, %v5845
          %v6046 = vpack.c.b16 %v5850, %v5846
          %v6047 = vpack.c.b16 %v5851, %v5847
          %v6048 = vpack.c.b16 %v5852, %v5848
          %v6049 = vpack.c.b16 %v5857, %v5853
          %v6050 = vpack.c.b16 %v5858, %v5854
          %v6051 = vpack.c.b16 %v5859, %v5855
          %v6052 = vpack.c.b16 %v5860, %v5856
          %v6053 = vpack.c.b16 %v5865, %v5861
          %v6054 = vpack.c.b16 %v5866, %v5862
          %v6055 = vpack.c.b16 %v5867, %v5863
          %v6056 = vpack.c.b16 %v5868, %v5864
          %v6057 = vpack.c.b16 %v5873, %v5869
          %v6058 = vpack.c.b16 %v5874, %v5870
          %v6059 = vpack.c.b16 %v5875, %v5871
          %v6060 = vpack.c.b16 %v5876, %v5872
          %v6061 = vpack.c.b16 %v5881, %v5877
          %v6062 = vpack.c.b16 %v5882, %v5878
          %v6063 = vpack.c.b16 %v5883, %v5879
          %v6064 = vpack.c.b16 %v5884, %v5880
          %v6065 = vpack.c.b16 %v5889, %v5885
          %v6066 = vpack.c.b16 %v5890, %v5886
          %v6067 = vpack.c.b16 %v5891, %v5887
          %v6068 = vpack.c.b16 %v5892, %v5888
          %v6069 = vpack.c.b16 %v5897, %v5893
          %v6070 = vpack.c.b16 %v5898, %v5894
          %v6071 = vpack.c.b16 %v5899, %v5895
          %v6072 = vpack.c.b16 %v5900, %v5896
          %v6073 = vpack.c.b16 %v5905, %v5901
          %v6074 = vpack.c.b16 %v5906, %v5902
          %v6075 = vpack.c.b16 %v5907, %v5903
          %v6076 = vpack.c.b16 %v5908, %v5904
          %v6077 = vpack.c.b16 %v5913, %v5909
          %v6078 = vpack.c.b16 %v5914, %v5910
          %v6079 = vpack.c.b16 %v5915, %v5911
          %v6080 = vpack.c.b16 %v5916, %v5912
          %v6081 = vpack.c.b16 %v5921, %v5917
          %v6082 = vpack.c.b16 %v5922, %v5918
          %v6083 = vpack.c.b16 %v5923, %v5919
          %v6084 = vpack.c.b16 %v5924, %v5920
          %v6085 = vpack.c.b16 %v5929, %v5925
          %v6086 = vpack.c.b16 %v5930, %v5926
          %v6087 = vpack.c.b16 %v5931, %v5927
          %v6088 = vpack.c.b16 %v5932, %v5928
          %v6089 = vpack.c.b16 %v5937, %v5933
          %v6090 = vpack.c.b16 %v5938, %v5934
          %v6091 = vpack.c.b16 %v5939, %v5935
          %v6092 = vpack.c.b16 %v5940, %v5936
          %v6093 = vpack.c.b16 %v5945, %v5941
          %v6094 = vpack.c.b16 %v5946, %v5942
          %v6095 = vpack.c.b16 %v5947, %v5943
          %v6096 = vpack.c.b16 %v5948, %v5944
          %v6097 = vpack.c.b16 %v5953, %v5949
          %v6098 = vpack.c.b16 %v5954, %v5950
          %v6099 = vpack.c.b16 %v5955, %v5951
          %v6100 = vpack.c.b16 %v5956, %v5952
          %v6101 = vpack.c.b16 %v5961, %v5957
          %v6102 = vpack.c.b16 %v5962, %v5958
          %v6103 = vpack.c.b16 %v5963, %v5959
          %v6104 = vpack.c.b16 %v5964, %v5960
          %v6105 = vpack.c.b16 %v5969, %v5965
          %v6106 = vpack.c.b16 %v5970, %v5966
          %v6107 = vpack.c.b16 %v5971, %v5967
          %v6108 = vpack.c.b16 %v5972, %v5968
          %v6109 = vpack.c.b16 %v5977, %v5973
          %v6110 = vpack.c.b16 %v5978, %v5974
          %v6111 = vpack.c.b16 %v5979, %v5975
          %v6112 = vpack.c.b16 %v5980, %v5976
          %v6113 = vpack.c.b16 %v5985, %v5981
          %v6114 = vpack.c.b16 %v5986, %v5982
          %v6115 = vpack.c.b16 %v5987, %v5983
          %v6116 = vpack.c.b16 %v5988, %v5984
          %6245 = vmatprep.subr.bf16.mxu0 %v6018
          %6246 = vmatpush1.bf16.msra.mxu0 %v6017
          %6247 = vmatprep.subr.bf16.mxu0 %v6014
          %6248 = vmatpush1.bf16.msra.mxu0 %v6013
          %6249 = vmatprep.subr.bf16.mxu0 %v6010
          %6250 = vmatpush1.bf16.msra.mxu0 %v6009
          %6251 = vmatprep.subr.bf16.mxu0 %v6006
          %6252 = vmatpush1.bf16.msra.mxu0 %v6005
          %6253 = vmatprep.subr.bf16.mxu0 %v6002
          %6254 = vmatpush1.bf16.msra.mxu0 %v6001
          %6255 = vmatprep.subr.bf16.mxu0 %v5998
          %6256 = vmatpush1.bf16.msra.mxu0 %v5997
          %6257 = vmatprep.subr.bf16.mxu0 %v5994
          %6258 = vmatpush1.bf16.msra.mxu0 %v5993
          %6259 = vmatprep.subr.bf16.mxu0 %v5990
          %6260 = vmatpush1.bf16.msra.mxu0 %v5989
          %6261 = vmatprep.subr.bf16.mxu0 %v6050
          %6262 = vmatpush2.bf16.msra.mxu0 %v6049
          %6263 = vmatprep.subr.bf16.mxu0 %v6046
          %6264 = vmatpush2.bf16.msra.mxu0 %v6045
          %6265 = vmatprep.subr.bf16.mxu0 %v6042
          %6266 = vmatpush2.bf16.msra.mxu0 %v6041
          %6267 = vmatprep.subr.bf16.mxu0 %v6038
          %6268 = vmatpush2.bf16.msra.mxu0 %v6037
          %6269 = vmatprep.subr.bf16.mxu0 %v6034
          %6270 = vmatpush2.bf16.msra.mxu0 %v6033
          %6271 = vmatprep.subr.bf16.mxu0 %v6030
          %6272 = vmatpush2.bf16.msra.mxu0 %v6029
          %6273 = vmatprep.subr.bf16.mxu0 %v6026
          %6274 = vmatpush2.bf16.msra.mxu0 %v6025
          %6275 = vmatprep.subr.bf16.mxu0 %v6022
          %6276 = vmatpush2.bf16.msra.mxu0 %v6021
          %6277 = vmatprep.mubr.bf16.mxu0 %v5560
          %6278 = vmatmul.mubr.bf16.gmra.mxu0 %v5548
          %v6279 = vpop.f32.mrf.mxu0
          %v6280 = vadd.f32 0.0, %v6279
          %v6281 = vpop.f32.mrf.mxu0
          %v6282 = vadd.f32 0.0, %v6281
          %v6283 = vpop.f32.mrf.mxu0
          %v6284 = vadd.f32 0.0, %v6283
          %v6285 = vpop.f32.mrf.mxu0
          %v6286 = vadd.f32 0.0, %v6285
          %6287 = vmatprep.mubr.bf16.mxu0 %v5590
          %6288 = vmatmul.mubr.bf16.gmra.mxu0 %v5587
          %v6289 = vpop.f32.mrf.mxu0
          %v6290 = vadd.f32 0.0, %v6289
          %v6291 = vpop.f32.mrf.mxu0
          %v6292 = vadd.f32 0.0, %v6291
          %v6293 = vpop.f32.mrf.mxu0
          %v6294 = vadd.f32 0.0, %v6293
          %v6295 = vpop.f32.mrf.mxu0
          %v6296 = vadd.f32 0.0, %v6295
          %6297 = vdwg.mxu0
          %6298 = vmatprep.subr.bf16.mxu0 %v6082
          %6299 = vmatpush1.bf16.msra.mxu0 %v6081
          %6300 = vmatprep.subr.bf16.mxu0 %v6078
          %6301 = vmatpush1.bf16.msra.mxu0 %v6077
          %6302 = vmatprep.subr.bf16.mxu0 %v6074
          %6303 = vmatpush1.bf16.msra.mxu0 %v6073
          %6304 = vmatprep.subr.bf16.mxu0 %v6070
          %6305 = vmatpush1.bf16.msra.mxu0 %v6069
          %6306 = vmatprep.subr.bf16.mxu0 %v6066
          %6307 = vmatpush1.bf16.msra.mxu0 %v6065
          %6308 = vmatprep.subr.bf16.mxu0 %v6062
          %6309 = vmatpush1.bf16.msra.mxu0 %v6061
          %6310 = vmatprep.subr.bf16.mxu0 %v6058
          %6311 = vmatpush1.bf16.msra.mxu0 %v6057
          %6312 = vmatprep.subr.bf16.mxu0 %v6054
          %6313 = vmatpush1.bf16.msra.mxu0 %v6053
          %6314 = vmatprep.subr.bf16.mxu0 %v6114
          %6315 = vmatpush2.bf16.msra.mxu0 %v6113
          %6316 = vmatprep.subr.bf16.mxu0 %v6110
          %6317 = vmatpush2.bf16.msra.mxu0 %v6109
          %6318 = vmatprep.subr.bf16.mxu0 %v6106
          %6319 = vmatpush2.bf16.msra.mxu0 %v6105
          %6320 = vmatprep.subr.bf16.mxu0 %v6102
          %6321 = vmatpush2.bf16.msra.mxu0 %v6101
          %6322 = vmatprep.subr.bf16.mxu0 %v6098
          %6323 = vmatpush2.bf16.msra.mxu0 %v6097
          %6324 = vmatprep.subr.bf16.mxu0 %v6094
          %6325 = vmatpush2.bf16.msra.mxu0 %v6093
          %6326 = vmatprep.subr.bf16.mxu0 %v6090
          %6327 = vmatpush2.bf16.msra.mxu0 %v6089
          %6328 = vmatprep.subr.bf16.mxu0 %v6086
          %6329 = vmatpush2.bf16.msra.mxu0 %v6085
          %6330 = vmatprep.mubr.bf16.mxu0 %v5584
          %6331 = vmatmul.mubr.bf16.gmra.mxu0 %v5572
          %v6332 = vpop.f32.mrf.mxu0
          %v6333 = vadd.f32 %v6280, %v6332
          %v6334 = vpop.f32.mrf.mxu0
          %v6335 = vadd.f32 %v6282, %v6334
          %v6336 = vpop.f32.mrf.mxu0
          %v6337 = vadd.f32 %v6284, %v6336
          %v6338 = vpop.f32.mrf.mxu0
          %v6339 = vadd.f32 %v6286, %v6338
          %6340 = vmatprep.mubr.bf16.mxu0 %v5596
          %6341 = vmatmul.mubr.bf16.gmra.mxu0 %v5593
          %v6342 = vpop.f32.mrf.mxu0
          %v6343 = vadd.f32 %v6290, %v6342
          %v6344 = vpop.f32.mrf.mxu0
          %v6345 = vadd.f32 %v6292, %v6344
          %v6346 = vpop.f32.mrf.mxu0
          %v6347 = vadd.f32 %v6294, %v6346
          %v6348 = vpop.f32.mrf.mxu0
          %v6349 = vadd.f32 %v6296, %v6348
          %6350 = vdwg.mxu0
          %6351 = vmatprep.subr.bf16.mxu0 %v6020
          %6352 = vmatpush1.bf16.msra.mxu0 %v6019
          %6353 = vmatprep.subr.bf16.mxu0 %v6016
          %6354 = vmatpush1.bf16.msra.mxu0 %v6015
          %6355 = vmatprep.subr.bf16.mxu0 %v6012
          %6356 = vmatpush1.bf16.msra.mxu0 %v6011
          %6357 = vmatprep.subr.bf16.mxu0 %v6008
          %6358 = vmatpush1.bf16.msra.mxu0 %v6007
          %6359 = vmatprep.subr.bf16.mxu0 %v6004
          %6360 = vmatpush1.bf16.msra.mxu0 %v6003
          %6361 = vmatprep.subr.bf16.mxu0 %v6000
          %6362 = vmatpush1.bf16.msra.mxu0 %v5999
          %6363 = vmatprep.subr.bf16.mxu0 %v5996
          %6364 = vmatpush1.bf16.msra.mxu0 %v5995
          %6365 = vmatprep.subr.bf16.mxu0 %v5992
          %6366 = vmatpush1.bf16.msra.mxu0 %v5991
          %6367 = vmatprep.subr.bf16.mxu0 %v6052
          %6368 = vmatpush2.bf16.msra.mxu0 %v6051
          %6369 = vmatprep.subr.bf16.mxu0 %v6048
          %6370 = vmatpush2.bf16.msra.mxu0 %v6047
          %6371 = vmatprep.subr.bf16.mxu0 %v6044
          %6372 = vmatpush2.bf16.msra.mxu0 %v6043
          %6373 = vmatprep.subr.bf16.mxu0 %v6040
          %6374 = vmatpush2.bf16.msra.mxu0 %v6039
          %6375 = vmatprep.subr.bf16.mxu0 %v6036
          %6376 = vmatpush2.bf16.msra.mxu0 %v6035
          %6377 = vmatprep.subr.bf16.mxu0 %v6032
          %6378 = vmatpush2.bf16.msra.mxu0 %v6031
          %6379 = vmatprep.subr.bf16.mxu0 %v6028
          %6380 = vmatpush2.bf16.msra.mxu0 %v6027
          %6381 = vmatprep.subr.bf16.mxu0 %v6024
          %6382 = vmatpush2.bf16.msra.mxu0 %v6023
          %6383 = vmatprep.mubr.bf16.mxu0 %v5560
          %6384 = vmatmul.mubr.bf16.gmra.mxu0 %v5548
          %v6385 = vpop.f32.mrf.mxu0
          %v6386 = vadd.f32 0.0, %v6385
          %v6387 = vpop.f32.mrf.mxu0
          %v6388 = vadd.f32 0.0, %v6387
          %v6389 = vpop.f32.mrf.mxu0
          %v6390 = vadd.f32 0.0, %v6389
          %v6391 = vpop.f32.mrf.mxu0
          %v6392 = vadd.f32 0.0, %v6391
          %6393 = vmatprep.mubr.bf16.mxu0 %v5590
          %6394 = vmatmul.mubr.bf16.gmra.mxu0 %v5587
          %v6395 = vpop.f32.mrf.mxu0
          %v6396 = vadd.f32 0.0, %v6395
          %v6397 = vpop.f32.mrf.mxu0
          %v6398 = vadd.f32 0.0, %v6397
          %v6399 = vpop.f32.mrf.mxu0
          %v6400 = vadd.f32 0.0, %v6399
          %v6401 = vpop.f32.mrf.mxu0
          %v6402 = vadd.f32 0.0, %v6401
          %6403 = vdwg.mxu0
          %6404 = vmatprep.subr.bf16.mxu0 %v6084
          %6405 = vmatpush1.bf16.msra.mxu0 %v6083
          %6406 = vmatprep.subr.bf16.mxu0 %v6080
          %6407 = vmatpush1.bf16.msra.mxu0 %v6079
          %6408 = vmatprep.subr.bf16.mxu0 %v6076
          %6409 = vmatpush1.bf16.msra.mxu0 %v6075
          %6410 = vmatprep.subr.bf16.mxu0 %v6072
          %6411 = vmatpush1.bf16.msra.mxu0 %v6071
          %6412 = vmatprep.subr.bf16.mxu0 %v6068
          %6413 = vmatpush1.bf16.msra.mxu0 %v6067
          %6414 = vmatprep.subr.bf16.mxu0 %v6064
          %6415 = vmatpush1.bf16.msra.mxu0 %v6063
          %6416 = vmatprep.subr.bf16.mxu0 %v6060
          %6417 = vmatpush1.bf16.msra.mxu0 %v6059
          %6418 = vmatprep.subr.bf16.mxu0 %v6056
          %6419 = vmatpush1.bf16.msra.mxu0 %v6055
          %6420 = vmatprep.subr.bf16.mxu0 %v6116
          %6421 = vmatpush2.bf16.msra.mxu0 %v6115
          %6422 = vmatprep.subr.bf16.mxu0 %v6112
          %6423 = vmatpush2.bf16.msra.mxu0 %v6111
          %6424 = vmatprep.subr.bf16.mxu0 %v6108
          %6425 = vmatpush2.bf16.msra.mxu0 %v6107
          %6426 = vmatprep.subr.bf16.mxu0 %v6104
          %6427 = vmatpush2.bf16.msra.mxu0 %v6103
          %6428 = vmatprep.subr.bf16.mxu0 %v6100
          %6429 = vmatpush2.bf16.msra.mxu0 %v6099
          %6430 = vmatprep.subr.bf16.mxu0 %v6096
          %6431 = vmatpush2.bf16.msra.mxu0 %v6095
          %6432 = vmatprep.subr.bf16.mxu0 %v6092
          %6433 = vmatpush2.bf16.msra.mxu0 %v6091
          %6434 = vmatprep.subr.bf16.mxu0 %v6088
          %6435 = vmatpush2.bf16.msra.mxu0 %v6087
          %6436 = vmatprep.mubr.bf16.mxu0 %v5584
          %6437 = vmatmul.mubr.bf16.gmra.mxu0 %v5572
          %v6438 = vpop.f32.mrf.mxu0
          %v6439 = vadd.f32 %v6386, %v6438
          %v6440 = vpop.f32.mrf.mxu0
          %v6441 = vadd.f32 %v6388, %v6440
          %v6442 = vpop.f32.mrf.mxu0
          %v6443 = vadd.f32 %v6390, %v6442
          %v6444 = vpop.f32.mrf.mxu0
          %v6445 = vadd.f32 %v6392, %v6444
          %6446 = vmatprep.mubr.bf16.mxu0 %v5596
          %6447 = vmatmul.mubr.bf16.gmra.mxu0 %v5593
          %v6448 = vpop.f32.mrf.mxu0
          %v6449 = vadd.f32 %v6396, %v6448
          %v6450 = vpop.f32.mrf.mxu0
          %v6451 = vadd.f32 %v6398, %v6450
          %v6452 = vpop.f32.mrf.mxu0
          %v6453 = vadd.f32 %v6400, %v6452
          %v6454 = vpop.f32.mrf.mxu0
          %v6455 = vadd.f32 %v6402, %v6454
          %6456 = vdwg.mxu0
          %v6585 = vunpack.c.l.b16 %v5280
          %v6586 = vunpack.c.h.b16 %v5280
          %v6587 = vunpack.c.l.b16 %v5281
          %v6588 = vunpack.c.h.b16 %v5281
          %v6589 = vunpack.c.l.b16 %v5282
          %v6590 = vunpack.c.h.b16 %v5282
          %v6591 = vunpack.c.l.b16 %v5283
          %v6592 = vunpack.c.h.b16 %v5283
          %v6593 = vunpack.c.l.b16 %v5284
          %v6594 = vunpack.c.h.b16 %v5284
          %v6595 = vunpack.c.l.b16 %v5285
          %v6596 = vunpack.c.h.b16 %v5285
          %v6597 = vunpack.c.l.b16 %v5286
          %v6598 = vunpack.c.h.b16 %v5286
          %v6599 = vunpack.c.l.b16 %v5287
          %v6600 = vunpack.c.h.b16 %v5287
          %v6601 = vunpack.c.l.b16 %v5288
          %v6602 = vunpack.c.h.b16 %v5288
          %v6603 = vunpack.c.l.b16 %v5289
          %v6604 = vunpack.c.h.b16 %v5289
          %v6605 = vunpack.c.l.b16 %v5290
          %v6606 = vunpack.c.h.b16 %v5290
          %v6607 = vunpack.c.l.b16 %v5291
          %v6608 = vunpack.c.h.b16 %v5291
          %v6609 = vunpack.c.l.b16 %v5292
          %v6610 = vunpack.c.h.b16 %v5292
          %v6611 = vunpack.c.l.b16 %v5293
          %v6612 = vunpack.c.h.b16 %v5293
          %v6613 = vunpack.c.l.b16 %v5294
          %v6614 = vunpack.c.h.b16 %v5294
          %v6615 = vunpack.c.l.b16 %v5295
          %v6616 = vunpack.c.h.b16 %v5295
          %v6617 = vunpack.c.l.b16 %v5296
          %v6618 = vunpack.c.h.b16 %v5296
          %v6619 = vunpack.c.l.b16 %v5297
          %v6620 = vunpack.c.h.b16 %v5297
          %v6621 = vunpack.c.l.b16 %v5298
          %v6622 = vunpack.c.h.b16 %v5298
          %v6623 = vunpack.c.l.b16 %v5299
          %v6624 = vunpack.c.h.b16 %v5299
          %v6625 = vunpack.c.l.b16 %v5300
          %v6626 = vunpack.c.h.b16 %v5300
          %v6627 = vunpack.c.l.b16 %v5301
          %v6628 = vunpack.c.h.b16 %v5301
          %v6629 = vunpack.c.l.b16 %v5302
          %v6630 = vunpack.c.h.b16 %v5302
          %v6631 = vunpack.c.l.b16 %v5303
          %v6632 = vunpack.c.h.b16 %v5303
          %v6633 = vunpack.c.l.b16 %v5304
          %v6634 = vunpack.c.h.b16 %v5304
          %v6635 = vunpack.c.l.b16 %v5305
          %v6636 = vunpack.c.h.b16 %v5305
          %v6637 = vunpack.c.l.b16 %v5306
          %v6638 = vunpack.c.h.b16 %v5306
          %v6639 = vunpack.c.l.b16 %v5307
          %v6640 = vunpack.c.h.b16 %v5307
          %v6641 = vunpack.c.l.b16 %v5308
          %v6642 = vunpack.c.h.b16 %v5308
          %v6643 = vunpack.c.l.b16 %v5309
          %v6644 = vunpack.c.h.b16 %v5309
          %v6645 = vunpack.c.l.b16 %v5310
          %v6646 = vunpack.c.h.b16 %v5310
          %v6647 = vunpack.c.l.b16 %v5311
          %v6648 = vunpack.c.h.b16 %v5311
          %v6649 = vunpack.c.l.b16 %v5312
          %v6650 = vunpack.c.h.b16 %v5312
          %v6651 = vunpack.c.l.b16 %v5313
          %v6652 = vunpack.c.h.b16 %v5313
          %v6653 = vunpack.c.l.b16 %v5314
          %v6654 = vunpack.c.h.b16 %v5314
          %v6655 = vunpack.c.l.b16 %v5315
          %v6656 = vunpack.c.h.b16 %v5315
          %v6657 = vunpack.c.l.b16 %v5316
          %v6658 = vunpack.c.h.b16 %v5316
          %v6659 = vunpack.c.l.b16 %v5317
          %v6660 = vunpack.c.h.b16 %v5317
          %v6661 = vunpack.c.l.b16 %v5318
          %v6662 = vunpack.c.h.b16 %v5318
          %v6663 = vunpack.c.l.b16 %v5319
          %v6664 = vunpack.c.h.b16 %v5319
          %v6665 = vunpack.c.l.b16 %v5320
          %v6666 = vunpack.c.h.b16 %v5320
          %v6667 = vunpack.c.l.b16 %v5321
          %v6668 = vunpack.c.h.b16 %v5321
          %v6669 = vunpack.c.l.b16 %v5322
          %v6670 = vunpack.c.h.b16 %v5322
          %v6671 = vunpack.c.l.b16 %v5323
          %v6672 = vunpack.c.h.b16 %v5323
          %v6673 = vunpack.c.l.b16 %v5324
          %v6674 = vunpack.c.h.b16 %v5324
          %v6675 = vunpack.c.l.b16 %v5325
          %v6676 = vunpack.c.h.b16 %v5325
          %v6677 = vunpack.c.l.b16 %v5326
          %v6678 = vunpack.c.h.b16 %v5326
          %v6679 = vunpack.c.l.b16 %v5327
          %v6680 = vunpack.c.h.b16 %v5327
          %v6681 = vunpack.c.l.b16 %v5328
          %v6682 = vunpack.c.h.b16 %v5328
          %v6683 = vunpack.c.l.b16 %v5329
          %v6684 = vunpack.c.h.b16 %v5329
          %v6685 = vunpack.c.l.b16 %v5330
          %v6686 = vunpack.c.h.b16 %v5330
          %v6687 = vunpack.c.l.b16 %v5331
          %v6688 = vunpack.c.h.b16 %v5331
          %v6689 = vunpack.c.l.b16 %v5332
          %v6690 = vunpack.c.h.b16 %v5332
          %v6691 = vunpack.c.l.b16 %v5333
          %v6692 = vunpack.c.h.b16 %v5333
          %v6693 = vunpack.c.l.b16 %v5334
          %v6694 = vunpack.c.h.b16 %v5334
          %v6695 = vunpack.c.l.b16 %v5335
          %v6696 = vunpack.c.h.b16 %v5335
          %v6697 = vunpack.c.l.b16 %v5336
          %v6698 = vunpack.c.h.b16 %v5336
          %v6699 = vunpack.c.l.b16 %v5337
          %v6700 = vunpack.c.h.b16 %v5337
          %v6701 = vunpack.c.l.b16 %v5338
          %v6702 = vunpack.c.h.b16 %v5338
          %v6703 = vunpack.c.l.b16 %v5339
          %v6704 = vunpack.c.h.b16 %v5339
          %v6705 = vunpack.c.l.b16 %v5340
          %v6706 = vunpack.c.h.b16 %v5340
          %v6707 = vunpack.c.l.b16 %v5341
          %v6708 = vunpack.c.h.b16 %v5341
          %v6709 = vunpack.c.l.b16 %v5342
          %v6710 = vunpack.c.h.b16 %v5342
          %v6711 = vunpack.c.l.b16 %v5343
          %v6712 = vunpack.c.h.b16 %v5343
          %v6713 = vunpack.c.l.b16 %v5344
          %v6714 = vunpack.c.h.b16 %v5344
          %v6715 = vunpack.c.l.b16 %v5345
          %v6716 = vunpack.c.h.b16 %v5345
          %v6717 = vunpack.c.l.b16 %v5346
          %v6718 = vunpack.c.h.b16 %v5346
          %v6719 = vunpack.c.l.b16 %v5347
          %v6720 = vunpack.c.h.b16 %v5347
          %v6721 = vunpack.c.l.b16 %v5348
          %v6722 = vunpack.c.h.b16 %v5348
          %v6723 = vunpack.c.l.b16 %v5349
          %v6724 = vunpack.c.h.b16 %v5349
          %v6725 = vunpack.c.l.b16 %v5350
          %v6726 = vunpack.c.h.b16 %v5350
          %v6727 = vunpack.c.l.b16 %v5351
          %v6728 = vunpack.c.h.b16 %v5351
          %v6729 = vunpack.c.l.b16 %v5352
          %v6730 = vunpack.c.h.b16 %v5352
          %v6731 = vunpack.c.l.b16 %v5353
          %v6732 = vunpack.c.h.b16 %v5353
          %v6733 = vunpack.c.l.b16 %v5354
          %v6734 = vunpack.c.h.b16 %v5354
          %v6735 = vunpack.c.l.b16 %v5355
          %v6736 = vunpack.c.h.b16 %v5355
          %v6737 = vunpack.c.l.b16 %v5356
          %v6738 = vunpack.c.h.b16 %v5356
          %v6739 = vunpack.c.l.b16 %v5357
          %v6740 = vunpack.c.h.b16 %v5357
          %v6741 = vunpack.c.l.b16 %v5358
          %v6742 = vunpack.c.h.b16 %v5358
          %v6743 = vunpack.c.l.b16 %v5359
          %v6744 = vunpack.c.h.b16 %v5359
          %v6745 = vunpack.c.l.b16 %v5360
          %v6746 = vunpack.c.h.b16 %v5360
          %v6747 = vunpack.c.l.b16 %v5361
          %v6748 = vunpack.c.h.b16 %v5361
          %v6749 = vunpack.c.l.b16 %v5362
          %v6750 = vunpack.c.h.b16 %v5362
          %v6751 = vunpack.c.l.b16 %v5363
          %v6752 = vunpack.c.h.b16 %v5363
          %v6753 = vunpack.c.l.b16 %v5364
          %v6754 = vunpack.c.h.b16 %v5364
          %v6755 = vunpack.c.l.b16 %v5365
          %v6756 = vunpack.c.h.b16 %v5365
          %v6757 = vunpack.c.l.b16 %v5366
          %v6758 = vunpack.c.h.b16 %v5366
          %v6759 = vunpack.c.l.b16 %v5367
          %v6760 = vunpack.c.h.b16 %v5367
          %v6761 = vunpack.c.l.b16 %v5368
          %v6762 = vunpack.c.h.b16 %v5368
          %v6763 = vunpack.c.l.b16 %v5369
          %v6764 = vunpack.c.h.b16 %v5369
          %v6765 = vunpack.c.l.b16 %v5370
          %v6766 = vunpack.c.h.b16 %v5370
          %v6767 = vunpack.c.l.b16 %v5371
          %v6768 = vunpack.c.h.b16 %v5371
          %v6769 = vunpack.c.l.b16 %v5372
          %v6770 = vunpack.c.h.b16 %v5372
          %v6771 = vunpack.c.l.b16 %v5373
          %v6772 = vunpack.c.h.b16 %v5373
          %v6773 = vunpack.c.l.b16 %v5374
          %v6774 = vunpack.c.h.b16 %v5374
          %v6775 = vunpack.c.l.b16 %v5375
          %v6776 = vunpack.c.h.b16 %v5375
          %v6777 = vunpack.c.l.b16 %v5376
          %v6778 = vunpack.c.h.b16 %v5376
          %v6779 = vunpack.c.l.b16 %v5377
          %v6780 = vunpack.c.h.b16 %v5377
          %v6781 = vunpack.c.l.b16 %v5378
          %v6782 = vunpack.c.h.b16 %v5378
          %v6783 = vunpack.c.l.b16 %v5379
          %v6784 = vunpack.c.h.b16 %v5379
          %v6785 = vunpack.c.l.b16 %v5380
          %v6786 = vunpack.c.h.b16 %v5380
          %v6787 = vunpack.c.l.b16 %v5381
          %v6788 = vunpack.c.h.b16 %v5381
          %v6789 = vunpack.c.l.b16 %v5382
          %v6790 = vunpack.c.h.b16 %v5382
          %v6791 = vunpack.c.l.b16 %v5383
          %v6792 = vunpack.c.h.b16 %v5383
          %v6793 = vunpack.c.l.b16 %v5384
          %v6794 = vunpack.c.h.b16 %v5384
          %v6795 = vunpack.c.l.b16 %v5385
          %v6796 = vunpack.c.h.b16 %v5385
          %v6797 = vunpack.c.l.b16 %v5386
          %v6798 = vunpack.c.h.b16 %v5386
          %v6799 = vunpack.c.l.b16 %v5387
          %v6800 = vunpack.c.h.b16 %v5387
          %v6801 = vunpack.c.l.b16 %v5388
          %v6802 = vunpack.c.h.b16 %v5388
          %v6803 = vunpack.c.l.b16 %v5389
          %v6804 = vunpack.c.h.b16 %v5389
          %v6805 = vunpack.c.l.b16 %v5390
          %v6806 = vunpack.c.h.b16 %v5390
          %v6807 = vunpack.c.l.b16 %v5391
          %v6808 = vunpack.c.h.b16 %v5391
          %v6809 = vunpack.c.l.b16 %v5392
          %v6810 = vunpack.c.h.b16 %v5392
          %v6811 = vunpack.c.l.b16 %v5393
          %v6812 = vunpack.c.h.b16 %v5393
          %v6813 = vunpack.c.l.b16 %v5394
          %v6814 = vunpack.c.h.b16 %v5394
          %v6815 = vunpack.c.l.b16 %v5395
          %v6816 = vunpack.c.h.b16 %v5395
          %v6817 = vunpack.c.l.b16 %v5396
          %v6818 = vunpack.c.h.b16 %v5396
          %v6819 = vunpack.c.l.b16 %v5397
          %v6820 = vunpack.c.h.b16 %v5397
          %v6821 = vunpack.c.l.b16 %v5398
          %v6822 = vunpack.c.h.b16 %v5398
          %v6823 = vunpack.c.l.b16 %v5399
          %v6824 = vunpack.c.h.b16 %v5399
          %v6825 = vunpack.c.l.b16 %v5400
          %v6826 = vunpack.c.h.b16 %v5400
          %v6827 = vunpack.c.l.b16 %v5401
          %v6828 = vunpack.c.h.b16 %v5401
          %v6829 = vunpack.c.l.b16 %v5402
          %v6830 = vunpack.c.h.b16 %v5402
          %v6831 = vunpack.c.l.b16 %v5403
          %v6832 = vunpack.c.h.b16 %v5403
          %v6833 = vunpack.c.l.b16 %v5404
          %v6834 = vunpack.c.h.b16 %v5404
          %v6835 = vunpack.c.l.b16 %v5405
          %v6836 = vunpack.c.h.b16 %v5405
          %v6837 = vunpack.c.l.b16 %v5406
          %v6838 = vunpack.c.h.b16 %v5406
          %v6839 = vunpack.c.l.b16 %v5407
          %v6840 = vunpack.c.h.b16 %v5407
          %v6841 = vpack.c.b16 %v6589, %v6585
          %v6842 = vpack.c.b16 %v6590, %v6586
          %v6843 = vpack.c.b16 %v6591, %v6587
          %v6844 = vpack.c.b16 %v6592, %v6588
          %v6845 = vpack.c.b16 %v6597, %v6593
          %v6846 = vpack.c.b16 %v6598, %v6594
          %v6847 = vpack.c.b16 %v6599, %v6595
          %v6848 = vpack.c.b16 %v6600, %v6596
          %v6849 = vpack.c.b16 %v6605, %v6601
          %v6850 = vpack.c.b16 %v6606, %v6602
          %v6851 = vpack.c.b16 %v6607, %v6603
          %v6852 = vpack.c.b16 %v6608, %v6604
          %v6853 = vpack.c.b16 %v6613, %v6609
          %v6854 = vpack.c.b16 %v6614, %v6610
          %v6855 = vpack.c.b16 %v6615, %v6611
          %v6856 = vpack.c.b16 %v6616, %v6612
          %v6857 = vpack.c.b16 %v6621, %v6617
          %v6858 = vpack.c.b16 %v6622, %v6618
          %v6859 = vpack.c.b16 %v6623, %v6619
          %v6860 = vpack.c.b16 %v6624, %v6620
          %v6861 = vpack.c.b16 %v6629, %v6625
          %v6862 = vpack.c.b16 %v6630, %v6626
          %v6863 = vpack.c.b16 %v6631, %v6627
          %v6864 = vpack.c.b16 %v6632, %v6628
          %v6865 = vpack.c.b16 %v6637, %v6633
          %v6866 = vpack.c.b16 %v6638, %v6634
          %v6867 = vpack.c.b16 %v6639, %v6635
          %v6868 = vpack.c.b16 %v6640, %v6636
          %v6869 = vpack.c.b16 %v6645, %v6641
          %v6870 = vpack.c.b16 %v6646, %v6642
          %v6871 = vpack.c.b16 %v6647, %v6643
          %v6872 = vpack.c.b16 %v6648, %v6644
          %v6873 = vpack.c.b16 %v6653, %v6649
          %v6874 = vpack.c.b16 %v6654, %v6650
          %v6875 = vpack.c.b16 %v6655, %v6651
          %v6876 = vpack.c.b16 %v6656, %v6652
          %v6877 = vpack.c.b16 %v6661, %v6657
          %v6878 = vpack.c.b16 %v6662, %v6658
          %v6879 = vpack.c.b16 %v6663, %v6659
          %v6880 = vpack.c.b16 %v6664, %v6660
          %v6881 = vpack.c.b16 %v6669, %v6665
          %v6882 = vpack.c.b16 %v6670, %v6666
          %v6883 = vpack.c.b16 %v6671, %v6667
          %v6884 = vpack.c.b16 %v6672, %v6668
          %v6885 = vpack.c.b16 %v6677, %v6673
          %v6886 = vpack.c.b16 %v6678, %v6674
          %v6887 = vpack.c.b16 %v6679, %v6675
          %v6888 = vpack.c.b16 %v6680, %v6676
          %v6889 = vpack.c.b16 %v6685, %v6681
          %v6890 = vpack.c.b16 %v6686, %v6682
          %v6891 = vpack.c.b16 %v6687, %v6683
          %v6892 = vpack.c.b16 %v6688, %v6684
          %v6893 = vpack.c.b16 %v6693, %v6689
          %v6894 = vpack.c.b16 %v6694, %v6690
          %v6895 = vpack.c.b16 %v6695, %v6691
          %v6896 = vpack.c.b16 %v6696, %v6692
          %v6897 = vpack.c.b16 %v6701, %v6697
          %v6898 = vpack.c.b16 %v6702, %v6698
          %v6899 = vpack.c.b16 %v6703, %v6699
          %v6900 = vpack.c.b16 %v6704, %v6700
          %v6901 = vpack.c.b16 %v6709, %v6705
          %v6902 = vpack.c.b16 %v6710, %v6706
          %v6903 = vpack.c.b16 %v6711, %v6707
          %v6904 = vpack.c.b16 %v6712, %v6708
          %v6905 = vpack.c.b16 %v6717, %v6713
          %v6906 = vpack.c.b16 %v6718, %v6714
          %v6907 = vpack.c.b16 %v6719, %v6715
          %v6908 = vpack.c.b16 %v6720, %v6716
          %v6909 = vpack.c.b16 %v6725, %v6721
          %v6910 = vpack.c.b16 %v6726, %v6722
          %v6911 = vpack.c.b16 %v6727, %v6723
          %v6912 = vpack.c.b16 %v6728, %v6724
          %v6913 = vpack.c.b16 %v6733, %v6729
          %v6914 = vpack.c.b16 %v6734, %v6730
          %v6915 = vpack.c.b16 %v6735, %v6731
          %v6916 = vpack.c.b16 %v6736, %v6732
          %v6917 = vpack.c.b16 %v6741, %v6737
          %v6918 = vpack.c.b16 %v6742, %v6738
          %v6919 = vpack.c.b16 %v6743, %v6739
          %v6920 = vpack.c.b16 %v6744, %v6740
          %v6921 = vpack.c.b16 %v6749, %v6745
          %v6922 = vpack.c.b16 %v6750, %v6746
          %v6923 = vpack.c.b16 %v6751, %v6747
          %v6924 = vpack.c.b16 %v6752, %v6748
          %v6925 = vpack.c.b16 %v6757, %v6753
          %v6926 = vpack.c.b16 %v6758, %v6754
          %v6927 = vpack.c.b16 %v6759, %v6755
          %v6928 = vpack.c.b16 %v6760, %v6756
          %v6929 = vpack.c.b16 %v6765, %v6761
          %v6930 = vpack.c.b16 %v6766, %v6762
          %v6931 = vpack.c.b16 %v6767, %v6763
          %v6932 = vpack.c.b16 %v6768, %v6764
          %v6933 = vpack.c.b16 %v6773, %v6769
          %v6934 = vpack.c.b16 %v6774, %v6770
          %v6935 = vpack.c.b16 %v6775, %v6771
          %v6936 = vpack.c.b16 %v6776, %v6772
          %v6937 = vpack.c.b16 %v6781, %v6777
          %v6938 = vpack.c.b16 %v6782, %v6778
          %v6939 = vpack.c.b16 %v6783, %v6779
          %v6940 = vpack.c.b16 %v6784, %v6780
          %v6941 = vpack.c.b16 %v6789, %v6785
          %v6942 = vpack.c.b16 %v6790, %v6786
          %v6943 = vpack.c.b16 %v6791, %v6787
          %v6944 = vpack.c.b16 %v6792, %v6788
          %v6945 = vpack.c.b16 %v6797, %v6793
          %v6946 = vpack.c.b16 %v6798, %v6794
          %v6947 = vpack.c.b16 %v6799, %v6795
          %v6948 = vpack.c.b16 %v6800, %v6796
          %v6949 = vpack.c.b16 %v6805, %v6801
          %v6950 = vpack.c.b16 %v6806, %v6802
          %v6951 = vpack.c.b16 %v6807, %v6803
          %v6952 = vpack.c.b16 %v6808, %v6804
          %v6953 = vpack.c.b16 %v6813, %v6809
          %v6954 = vpack.c.b16 %v6814, %v6810
          %v6955 = vpack.c.b16 %v6815, %v6811
          %v6956 = vpack.c.b16 %v6816, %v6812
          %v6957 = vpack.c.b16 %v6821, %v6817
          %v6958 = vpack.c.b16 %v6822, %v6818
          %v6959 = vpack.c.b16 %v6823, %v6819
          %v6960 = vpack.c.b16 %v6824, %v6820
          %v6961 = vpack.c.b16 %v6829, %v6825
          %v6962 = vpack.c.b16 %v6830, %v6826
          %v6963 = vpack.c.b16 %v6831, %v6827
          %v6964 = vpack.c.b16 %v6832, %v6828
          %v6965 = vpack.c.b16 %v6837, %v6833
          %v6966 = vpack.c.b16 %v6838, %v6834
          %v6967 = vpack.c.b16 %v6839, %v6835
          %v6968 = vpack.c.b16 %v6840, %v6836
          %7097 = vmatprep.subr.bf16.mxu0 %v6870
          %7098 = vmatpush1.bf16.msra.mxu0 %v6869
          %7099 = vmatprep.subr.bf16.mxu0 %v6866
          %7100 = vmatpush1.bf16.msra.mxu0 %v6865
          %7101 = vmatprep.subr.bf16.mxu0 %v6862
          %7102 = vmatpush1.bf16.msra.mxu0 %v6861
          %7103 = vmatprep.subr.bf16.mxu0 %v6858
          %7104 = vmatpush1.bf16.msra.mxu0 %v6857
          %7105 = vmatprep.subr.bf16.mxu0 %v6854
          %7106 = vmatpush1.bf16.msra.mxu0 %v6853
          %7107 = vmatprep.subr.bf16.mxu0 %v6850
          %7108 = vmatpush1.bf16.msra.mxu0 %v6849
          %7109 = vmatprep.subr.bf16.mxu0 %v6846
          %7110 = vmatpush1.bf16.msra.mxu0 %v6845
          %7111 = vmatprep.subr.bf16.mxu0 %v6842
          %7112 = vmatpush1.bf16.msra.mxu0 %v6841
          %7113 = vmatprep.subr.bf16.mxu0 %v6902
          %7114 = vmatpush2.bf16.msra.mxu0 %v6901
          %7115 = vmatprep.subr.bf16.mxu0 %v6898
          %7116 = vmatpush2.bf16.msra.mxu0 %v6897
          %7117 = vmatprep.subr.bf16.mxu0 %v6894
          %7118 = vmatpush2.bf16.msra.mxu0 %v6893
          %7119 = vmatprep.subr.bf16.mxu0 %v6890
          %7120 = vmatpush2.bf16.msra.mxu0 %v6889
          %7121 = vmatprep.subr.bf16.mxu0 %v6886
          %7122 = vmatpush2.bf16.msra.mxu0 %v6885
          %7123 = vmatprep.subr.bf16.mxu0 %v6882
          %7124 = vmatpush2.bf16.msra.mxu0 %v6881
          %7125 = vmatprep.subr.bf16.mxu0 %v6878
          %7126 = vmatpush2.bf16.msra.mxu0 %v6877
          %7127 = vmatprep.subr.bf16.mxu0 %v6874
          %7128 = vmatpush2.bf16.msra.mxu0 %v6873
          %7129 = vmatprep.mubr.bf16.mxu0 %v5273
          %7130 = vmatmul.mubr.bf16.gmra.mxu0 %v5272
          %v7131 = vpop.f32.mrf.mxu0
          %v7132 = vadd.f32 %v6333, %v7131
          %v7133 = vpop.f32.mrf.mxu0
          %v7134 = vadd.f32 %v6335, %v7133
          %v7135 = vpop.f32.mrf.mxu0
          %v7136 = vadd.f32 %v6337, %v7135
          %v7137 = vpop.f32.mrf.mxu0
          %v7138 = vadd.f32 %v6339, %v7137
          %7139 = vmatprep.mubr.bf16.mxu0 %v5277
          %7140 = vmatmul.mubr.bf16.gmra.mxu0 %v5276
          %v7141 = vpop.f32.mrf.mxu0
          %v7142 = vadd.f32 %v6343, %v7141
          %v7143 = vpop.f32.mrf.mxu0
          %v7144 = vadd.f32 %v6345, %v7143
          %v7145 = vpop.f32.mrf.mxu0
          %v7146 = vadd.f32 %v6347, %v7145
          %v7147 = vpop.f32.mrf.mxu0
          %v7148 = vadd.f32 %v6349, %v7147
          %7149 = vdwg.mxu0
          %7150 = vmatprep.subr.bf16.mxu0 %v6934
          %7151 = vmatpush1.bf16.msra.mxu0 %v6933
          %7152 = vmatprep.subr.bf16.mxu0 %v6930
          %7153 = vmatpush1.bf16.msra.mxu0 %v6929
          %7154 = vmatprep.subr.bf16.mxu0 %v6926
          %7155 = vmatpush1.bf16.msra.mxu0 %v6925
          %7156 = vmatprep.subr.bf16.mxu0 %v6922
          %7157 = vmatpush1.bf16.msra.mxu0 %v6921
          %7158 = vmatprep.subr.bf16.mxu0 %v6918
          %7159 = vmatpush1.bf16.msra.mxu0 %v6917
          %7160 = vmatprep.subr.bf16.mxu0 %v6914
          %7161 = vmatpush1.bf16.msra.mxu0 %v6913
          %7162 = vmatprep.subr.bf16.mxu0 %v6910
          %7163 = vmatpush1.bf16.msra.mxu0 %v6909
          %7164 = vmatprep.subr.bf16.mxu0 %v6906
          %7165 = vmatpush1.bf16.msra.mxu0 %v6905
          %7166 = vmatprep.subr.bf16.mxu0 %v6966
          %7167 = vmatpush2.bf16.msra.mxu0 %v6965
          %7168 = vmatprep.subr.bf16.mxu0 %v6962
          %7169 = vmatpush2.bf16.msra.mxu0 %v6961
          %7170 = vmatprep.subr.bf16.mxu0 %v6958
          %7171 = vmatpush2.bf16.msra.mxu0 %v6957
          %7172 = vmatprep.subr.bf16.mxu0 %v6954
          %7173 = vmatpush2.bf16.msra.mxu0 %v6953
          %7174 = vmatprep.subr.bf16.mxu0 %v6950
          %7175 = vmatpush2.bf16.msra.mxu0 %v6949
          %7176 = vmatprep.subr.bf16.mxu0 %v6946
          %7177 = vmatpush2.bf16.msra.mxu0 %v6945
          %7178 = vmatprep.subr.bf16.mxu0 %v6942
          %7179 = vmatpush2.bf16.msra.mxu0 %v6941
          %7180 = vmatprep.subr.bf16.mxu0 %v6938
          %7181 = vmatpush2.bf16.msra.mxu0 %v6937
          %7182 = vmatprep.mubr.bf16.mxu0 %v5275
          %7183 = vmatmul.mubr.bf16.gmra.mxu0 %v5274
          %v7184 = vpop.f32.mrf.mxu0
          %v7185 = vadd.f32 %v7132, %v7184
          %v7186 = vpop.f32.mrf.mxu0
          %v7187 = vadd.f32 %v7134, %v7186
          %v7188 = vpop.f32.mrf.mxu0
          %v7189 = vadd.f32 %v7136, %v7188
          %v7190 = vpop.f32.mrf.mxu0
          %v7191 = vadd.f32 %v7138, %v7190
          %7192 = vmatprep.mubr.bf16.mxu0 %v5279
          %7193 = vmatmul.mubr.bf16.gmra.mxu0 %v5278
          %v7194 = vpop.f32.mrf.mxu0
          %v7195 = vadd.f32 %v7142, %v7194
          %v7196 = vpop.f32.mrf.mxu0
          %v7197 = vadd.f32 %v7144, %v7196
          %v7198 = vpop.f32.mrf.mxu0
          %v7199 = vadd.f32 %v7146, %v7198
          %v7200 = vpop.f32.mrf.mxu0
          %v7201 = vadd.f32 %v7148, %v7200
          %7202 = vdwg.mxu0
          %7203 = vmatprep.subr.bf16.mxu0 %v6872
          %7204 = vmatpush1.bf16.msra.mxu0 %v6871
          %7205 = vmatprep.subr.bf16.mxu0 %v6868
          %7206 = vmatpush1.bf16.msra.mxu0 %v6867
          %7207 = vmatprep.subr.bf16.mxu0 %v6864
          %7208 = vmatpush1.bf16.msra.mxu0 %v6863
          %7209 = vmatprep.subr.bf16.mxu0 %v6860
          %7210 = vmatpush1.bf16.msra.mxu0 %v6859
          %7211 = vmatprep.subr.bf16.mxu0 %v6856
          %7212 = vmatpush1.bf16.msra.mxu0 %v6855
          %7213 = vmatprep.subr.bf16.mxu0 %v6852
          %7214 = vmatpush1.bf16.msra.mxu0 %v6851
          %7215 = vmatprep.subr.bf16.mxu0 %v6848
          %7216 = vmatpush1.bf16.msra.mxu0 %v6847
          %7217 = vmatprep.subr.bf16.mxu0 %v6844
          %7218 = vmatpush1.bf16.msra.mxu0 %v6843
          %7219 = vmatprep.subr.bf16.mxu0 %v6904
          %7220 = vmatpush2.bf16.msra.mxu0 %v6903
          %7221 = vmatprep.subr.bf16.mxu0 %v6900
          %7222 = vmatpush2.bf16.msra.mxu0 %v6899
          %7223 = vmatprep.subr.bf16.mxu0 %v6896
          %7224 = vmatpush2.bf16.msra.mxu0 %v6895
          %7225 = vmatprep.subr.bf16.mxu0 %v6892
          %7226 = vmatpush2.bf16.msra.mxu0 %v6891
          %7227 = vmatprep.subr.bf16.mxu0 %v6888
          %7228 = vmatpush2.bf16.msra.mxu0 %v6887
          %7229 = vmatprep.subr.bf16.mxu0 %v6884
          %7230 = vmatpush2.bf16.msra.mxu0 %v6883
          %7231 = vmatprep.subr.bf16.mxu0 %v6880
          %7232 = vmatpush2.bf16.msra.mxu0 %v6879
          %7233 = vmatprep.subr.bf16.mxu0 %v6876
          %7234 = vmatpush2.bf16.msra.mxu0 %v6875
          %7235 = vmatprep.mubr.bf16.mxu0 %v5273
          %7236 = vmatmul.mubr.bf16.gmra.mxu0 %v5272
          %v7237 = vpop.f32.mrf.mxu0
          %v7238 = vadd.f32 %v6439, %v7237
          %v7239 = vpop.f32.mrf.mxu0
          %v7240 = vadd.f32 %v6441, %v7239
          %v7241 = vpop.f32.mrf.mxu0
          %v7242 = vadd.f32 %v6443, %v7241
          %v7243 = vpop.f32.mrf.mxu0
          %v7244 = vadd.f32 %v6445, %v7243
          %7245 = vmatprep.mubr.bf16.mxu0 %v5277
          %7246 = vmatmul.mubr.bf16.gmra.mxu0 %v5276
          %v7247 = vpop.f32.mrf.mxu0
          %v7248 = vadd.f32 %v6449, %v7247
          %v7249 = vpop.f32.mrf.mxu0
          %v7250 = vadd.f32 %v6451, %v7249
          %v7251 = vpop.f32.mrf.mxu0
          %v7252 = vadd.f32 %v6453, %v7251
          %v7253 = vpop.f32.mrf.mxu0
          %v7254 = vadd.f32 %v6455, %v7253
          %7255 = vdwg.mxu0
          %7256 = vmatprep.subr.bf16.mxu0 %v6936
          %7257 = vmatpush1.bf16.msra.mxu0 %v6935
          %7258 = vmatprep.subr.bf16.mxu0 %v6932
          %7259 = vmatpush1.bf16.msra.mxu0 %v6931
          %7260 = vmatprep.subr.bf16.mxu0 %v6928
          %7261 = vmatpush1.bf16.msra.mxu0 %v6927
          %7262 = vmatprep.subr.bf16.mxu0 %v6924
          %7263 = vmatpush1.bf16.msra.mxu0 %v6923
          %7264 = vmatprep.subr.bf16.mxu0 %v6920
          %7265 = vmatpush1.bf16.msra.mxu0 %v6919
          %7266 = vmatprep.subr.bf16.mxu0 %v6916
          %7267 = vmatpush1.bf16.msra.mxu0 %v6915
          %7268 = vmatprep.subr.bf16.mxu0 %v6912
          %7269 = vmatpush1.bf16.msra.mxu0 %v6911
          %7270 = vmatprep.subr.bf16.mxu0 %v6908
          %7271 = vmatpush1.bf16.msra.mxu0 %v6907
          %7272 = vmatprep.subr.bf16.mxu0 %v6968
          %7273 = vmatpush2.bf16.msra.mxu0 %v6967
          %7274 = vmatprep.subr.bf16.mxu0 %v6964
          %7275 = vmatpush2.bf16.msra.mxu0 %v6963
          %7276 = vmatprep.subr.bf16.mxu0 %v6960
          %7277 = vmatpush2.bf16.msra.mxu0 %v6959
          %7278 = vmatprep.subr.bf16.mxu0 %v6956
          %7279 = vmatpush2.bf16.msra.mxu0 %v6955
          %7280 = vmatprep.subr.bf16.mxu0 %v6952
          %7281 = vmatpush2.bf16.msra.mxu0 %v6951
          %7282 = vmatprep.subr.bf16.mxu0 %v6948
          %7283 = vmatpush2.bf16.msra.mxu0 %v6947
          %7284 = vmatprep.subr.bf16.mxu0 %v6944
          %7285 = vmatpush2.bf16.msra.mxu0 %v6943
          %7286 = vmatprep.subr.bf16.mxu0 %v6940
          %7287 = vmatpush2.bf16.msra.mxu0 %v6939
          %7288 = vmatprep.mubr.bf16.mxu0 %v5275
          %7289 = vmatmul.mubr.bf16.gmra.mxu0 %v5274
          %v7290 = vpop.f32.mrf.mxu0
          %v7291 = vadd.f32 %v7238, %v7290
          %v7292 = vpop.f32.mrf.mxu0
          %v7293 = vadd.f32 %v7240, %v7292
          %v7294 = vpop.f32.mrf.mxu0
          %v7295 = vadd.f32 %v7242, %v7294
          %v7296 = vpop.f32.mrf.mxu0
          %v7297 = vadd.f32 %v7244, %v7296
          %7298 = vmatprep.mubr.bf16.mxu0 %v5279
          %7299 = vmatmul.mubr.bf16.gmra.mxu0 %v5278
          %v7300 = vpop.f32.mrf.mxu0
          %v7301 = vadd.f32 %v7248, %v7300
          %v7302 = vpop.f32.mrf.mxu0
          %v7303 = vadd.f32 %v7250, %v7302
          %v7304 = vpop.f32.mrf.mxu0
          %v7305 = vadd.f32 %v7252, %v7304
          %v7306 = vpop.f32.mrf.mxu0
          %v7307 = vadd.f32 %v7254, %v7306
          %7308 = vdwg.mxu0
          %v7309 = vld [vmem:[%s634] sm:$0xf]
          %v7311 = vlaneseq
          %v7312 = vshrl.u32 %v7311, 7
          %v7313 = vsub.s32 0, %v7312
          %v7314 = vrot.slane %v7309, %v7313
          %v7315 = vlaneseq
          %v7316 = vshrl.u32 %v7315, 7
          %v7317 = vsub.s32 1, %v7316
          %v7318 = vrot.slane %v7309, %v7317
          %v7319 = vlaneseq
          %v7320 = vshrl.u32 %v7319, 7
          %v7321 = vsub.s32 2, %v7320
          %v7322 = vrot.slane %v7309, %v7321
          %v7323 = vlaneseq
          %v7324 = vshrl.u32 %v7323, 7
          %v7325 = vsub.s32 3, %v7324
          %v7326 = vrot.slane %v7309, %v7325
          %v7331 = vadd.f32 %v7185, %v7314
          %v7332 = vadd.f32 %v7187, %v7318
          %v7333 = vadd.f32 %v7291, %v7322
          %v7334 = vadd.f32 %v7293, %v7326
          %v7335 = vadd.f32 %v7189, %v7314
          %v7336 = vadd.f32 %v7191, %v7318
          %v7337 = vadd.f32 %v7295, %v7322
          %v7338 = vadd.f32 %v7297, %v7326
          %v7339 = vadd.f32 %v7195, %v7314
          %v7340 = vadd.f32 %v7197, %v7318
          %v7341 = vadd.f32 %v7301, %v7322
          %v7342 = vadd.f32 %v7303, %v7326
          %v7343 = vadd.f32 %v7199, %v7314
          %v7344 = vadd.f32 %v7201, %v7318
          %v7345 = vadd.f32 %v7305, %v7322
          %v7346 = vadd.f32 %v7307, %v7326
          %v7347 = vmax.f32 %v7331, 0.0
          %v7348 = vmax.f32 %v7332, 0.0
          %v7349 = vmax.f32 %v7333, 0.0
          %v7350 = vmax.f32 %v7334, 0.0
          %v7351 = vmax.f32 %v7335, 0.0
          %v7352 = vmax.f32 %v7336, 0.0
          %v7353 = vmax.f32 %v7337, 0.0
          %v7354 = vmax.f32 %v7338, 0.0
          %v7355 = vmax.f32 %v7339, 0.0
          %v7356 = vmax.f32 %v7340, 0.0
          %v7357 = vmax.f32 %v7341, 0.0
          %v7358 = vmax.f32 %v7342, 0.0
          %v7359 = vmax.f32 %v7343, 0.0
          %v7360 = vmax.f32 %v7344, 0.0
          %v7361 = vmax.f32 %v7345, 0.0
          %v7362 = vmax.f32 %v7346, 0.0
          %v7363 = vpack.c.bf16 %v7351, %v7347
          %v7364 = vpack.c.bf16 %v7352, %v7348
          %v7365 = vpack.c.bf16 %v7353, %v7349
          %v7366 = vpack.c.bf16 %v7354, %v7350
          %v7367 = vpack.c.bf16 %v7359, %v7355
          %v7368 = vpack.c.bf16 %v7360, %v7356
          %v7369 = vpack.c.bf16 %v7361, %v7357
          %v7370 = vpack.c.bf16 %v7362, %v7358
          %v7375 = vcombine.low %v7363, %v7364
          %v7376 = vcombine.low %v7365, %v7366
          %v7378 = vunpack.c.l.s4 1966171168
          %v7379 = vunpack.c.0.s8 %v7378
          %v7380 = vlaneseq
          %v7381 = vshrl.u32 %v7380, 7
          %v7382 = vsub.s32 %v7379, %v7381
          %v7383 = vrot.slane %v7375, %v7382
          %v7385 = vunpack.c.l.s4 1966171168
          %v7386 = vunpack.c.0.s8 %v7385
          %v7387 = vlaneseq
          %v7388 = vshrl.u32 %v7387, 7
          %v7389 = vsub.s32 %v7386, %v7388
          %v7390 = vrot.slane %v7376, %v7389
          %v7391 = vcombine.low %v7383, %v7390
          %v7393 = vunpack.c.l.s4 1966171168
          %v7394 = vunpack.c.0.s8 %v7393
          %v7395 = vlaneseq
          %v7396 = vshrl.u32 %v7395, 7
          %v7397 = vsub.s32 %v7394, %v7396
          %v7398 = vrot.slane %v7391, %v7397
          %vm7400 = vcmask 1040384
          %vm7401 = vsmask.f32 256
          %vm7402 = vmand %vm7400, %vm7401
          %vm7403 = vcmask 1041409
          %vm7404 = vsmask.f32 1280
          %vm7405 = vmand %vm7403, %vm7404
          %vm7406 = vmor %vm7405, %vm7402
          %vm7407 = vcmask 1042434
          %vm7408 = vsmask.f32 2304
          %vm7409 = vmand %vm7407, %vm7408
          %vm7410 = vmor %vm7409, %vm7406
          %vm7411 = vcmask 1043459
          %vm7412 = vsmask.f32 3328
          %vm7413 = vmand %vm7411, %vm7412
          %vm7414 = vmor %vm7413, %vm7410
          %v7415 = vld [vmem:[#allocation2] sm:$0xf]
          %v7416 = vsel %vm7414, %v7398, %v7415
          %7417 = vst [vmem:[#allocation2] sm:$0xf] %v7416
          %v7419 = vshrl.u32 %v7398, 16
          %v7421 = vrot.slane %v7419, 7
          %v7422 = vrot.slane %v7421, 1
          %v7424 = vld [vmem:[#allocation2 + $0x4] sm:$0xf]
          %v7425 = vsel %vm7414, %v7422, %v7424
          %7426 = vst [vmem:[#allocation2 + $0x4] sm:$0xf] %v7425
          %v7427 = vcombine.high %v7383, %v7390
          %v7429 = vunpack.c.l.s4 1966171168
          %v7430 = vunpack.c.0.s8 %v7429
          %v7431 = vlaneseq
          %v7432 = vshrl.u32 %v7431, 7
          %v7433 = vsub.s32 %v7430, %v7432
          %v7434 = vrot.slane %v7427, %v7433
          %v7436 = vld [vmem:[#allocation2 + $0x8] sm:$0xf]
          %v7437 = vsel %vm7414, %v7434, %v7436
          %7438 = vst [vmem:[#allocation2 + $0x8] sm:$0xf] %v7437
          %v7440 = vshrl.u32 %v7434, 16
          %v7442 = vrot.slane %v7440, 7
          %v7443 = vrot.slane %v7442, 1
          %s7445 = scalar_lea.vmem [#allocation2], 12
          %v7446 = vld [vmem:[%s7445] sm:$0xf]
          %v7447 = vsel %vm7414, %v7443, %v7446
          %7448 = vst [vmem:[%s7445] sm:$0xf] %v7447
          %v7449 = vcombine.high %v7398, %v7398
          %v7451 = vld [vmem:[%s7445 + $0x4] sm:$0xf]
          %v7452 = vsel %vm7414, %v7449, %v7451
          %7453 = vst [vmem:[%s7445 + $0x4] sm:$0xf] %v7452
          %v7455 = vshrl.u32 %v7449, 16
          %v7457 = vrot.slane %v7455, 7
          %v7458 = vrot.slane %v7457, 1
          %v7460 = vld [vmem:[%s7445 + $0x8] sm:$0xf]
          %v7461 = vsel %vm7414, %v7458, %v7460
          %7462 = vst [vmem:[%s7445 + $0x8] sm:$0xf] %v7461
          %v7463 = vcombine.high %v7434, %v7434
          %s7465 = scalar_lea.vmem [#allocation2], 24
          %v7466 = vld [vmem:[%s7465] sm:$0xf]
          %v7467 = vsel %vm7414, %v7463, %v7466
          %7468 = vst [vmem:[%s7465] sm:$0xf] %v7467
          %v7470 = vshrl.u32 %v7463, 16
          %v7472 = vrot.slane %v7470, 7
          %v7473 = vrot.slane %v7472, 1
          %v7475 = vld [vmem:[%s7465 + $0x4] sm:$0xf]
          %v7476 = vsel %vm7414, %v7473, %v7475
          %7477 = vst [vmem:[%s7465 + $0x4] sm:$0xf] %v7476
          %v7478 = vcombine.high %v7363, %v7364
          %v7479 = vcombine.high %v7365, %v7366
          %v7481 = vunpack.c.l.s4 1966171168
          %v7482 = vunpack.c.0.s8 %v7481
          %v7483 = vlaneseq
          %v7484 = vshrl.u32 %v7483, 7
          %v7485 = vsub.s32 %v7482, %v7484
          %v7486 = vrot.slane %v7478, %v7485
          %v7488 = vunpack.c.l.s4 1966171168
          %v7489 = vunpack.c.0.s8 %v7488
          %v7490 = vlaneseq
          %v7491 = vshrl.u32 %v7490, 7
          %v7492 = vsub.s32 %v7489, %v7491
          %v7493 = vrot.slane %v7479, %v7492
          %v7494 = vcombine.low %v7486, %v7493
          %v7496 = vunpack.c.l.s4 1966171168
          %v7497 = vunpack.c.0.s8 %v7496
          %v7498 = vlaneseq
          %v7499 = vshrl.u32 %v7498, 7
          %v7500 = vsub.s32 %v7497, %v7499
          %v7501 = vrot.slane %v7494, %v7500
          %v7503 = vld [vmem:[%s7465 + $0x8] sm:$0xf]
          %v7504 = vsel %vm7414, %v7501, %v7503
          %7505 = vst [vmem:[%s7465 + $0x8] sm:$0xf] %v7504
          %v7510 = vcombine.low %v7367, %v7368
          %v7511 = vcombine.low %v7369, %v7370
          %v7513 = vunpack.c.l.s4 1966171168
          %v7514 = vunpack.c.0.s8 %v7513
          %v7515 = vlaneseq
          %v7516 = vshrl.u32 %v7515, 7
          %v7517 = vsub.s32 %v7514, %v7516
          %v7518 = vrot.slane %v7510, %v7517
          %v7520 = vunpack.c.l.s4 1966171168
          %v7521 = vunpack.c.0.s8 %v7520
          %v7522 = vlaneseq
          %v7523 = vshrl.u32 %v7522, 7
          %v7524 = vsub.s32 %v7521, %v7523
          %v7525 = vrot.slane %v7511, %v7524
          %v7526 = vcombine.low %v7518, %v7525
          %v7528 = vunpack.c.l.s4 1966171168
          %v7529 = vunpack.c.0.s8 %v7528
          %v7530 = vlaneseq
          %v7531 = vshrl.u32 %v7530, 7
          %v7532 = vsub.s32 %v7529, %v7531
          %v7533 = vrot.slane %v7526, %v7532
          %v7535 = vshll.u32 %v7533, 16
          %vm7538 = vsmask.f32 7938
          %vm7539 = vmand %vm7400, %vm7538
          %vm7540 = vsmask.f32 7942
          %vm7541 = vmand %vm7403, %vm7540
          %vm7542 = vmor %vm7541, %vm7539
          %vm7543 = vsmask.f32 7946
          %vm7544 = vmand %vm7407, %vm7543
          %vm7545 = vmor %vm7544, %vm7542
          %vm7546 = vsmask.f32 7950
          %vm7547 = vmand %vm7411, %vm7546
          %vm7548 = vmor %vm7547, %vm7545
          %v7549 = vld [vmem:[#allocation2] sm:$0xf]
          %v7550 = vsel %vm7548, %v7535, %v7549
          %7551 = vst [vmem:[#allocation2] sm:$0xf] %v7550
          %v7553 = vld [vmem:[#allocation2 + $0x4] sm:$0xf]
          %v7554 = vsel %vm7548, %v7533, %v7553
          %7555 = vst [vmem:[#allocation2 + $0x4] sm:$0xf] %v7554
          %v7556 = vcombine.high %v7518, %v7525
          %v7558 = vunpack.c.l.s4 1966171168
          %v7559 = vunpack.c.0.s8 %v7558
          %v7560 = vlaneseq
          %v7561 = vshrl.u32 %v7560, 7
          %v7562 = vsub.s32 %v7559, %v7561
          %v7563 = vrot.slane %v7556, %v7562
          %v7565 = vshll.u32 %v7563, 16
          %v7568 = vld [vmem:[#allocation2 + $0x8] sm:$0xf]
          %v7569 = vsel %vm7548, %v7565, %v7568
          %7570 = vst [vmem:[#allocation2 + $0x8] sm:$0xf] %v7569
          %v7572 = vld [vmem:[%s7445] sm:$0xf]
          %v7573 = vsel %vm7548, %v7563, %v7572
          %7574 = vst [vmem:[%s7445] sm:$0xf] %v7573
          %v7575 = vcombine.high %v7533, %v7533
          %v7577 = vshll.u32 %v7575, 16
          %v7580 = vld [vmem:[%s7445 + $0x4] sm:$0xf]
          %v7581 = vsel %vm7548, %v7577, %v7580
          %7582 = vst [vmem:[%s7445 + $0x4] sm:$0xf] %v7581
          %v7584 = vld [vmem:[%s7445 + $0x8] sm:$0xf]
          %v7585 = vsel %vm7548, %v7575, %v7584
          %7586 = vst [vmem:[%s7445 + $0x8] sm:$0xf] %v7585
          %v7587 = vcombine.high %v7563, %v7563
          %v7589 = vshll.u32 %v7587, 16
          %v7592 = vld [vmem:[%s7465] sm:$0xf]
          %v7593 = vsel %vm7548, %v7589, %v7592
          %7594 = vst [vmem:[%s7465] sm:$0xf] %v7593
          %v7596 = vld [vmem:[%s7465 + $0x4] sm:$0xf]
          %v7597 = vsel %vm7548, %v7587, %v7596
          %7598 = vst [vmem:[%s7465 + $0x4] sm:$0xf] %v7597
          %v7599 = vcombine.high %v7367, %v7368
          %v7600 = vcombine.high %v7369, %v7370
          %v7602 = vunpack.c.l.s4 1966171168
          %v7603 = vunpack.c.0.s8 %v7602
          %v7604 = vlaneseq
          %v7605 = vshrl.u32 %v7604, 7
          %v7606 = vsub.s32 %v7603, %v7605
          %v7607 = vrot.slane %v7599, %v7606
          %v7609 = vunpack.c.l.s4 1966171168
          %v7610 = vunpack.c.0.s8 %v7609
          %v7611 = vlaneseq
          %v7612 = vshrl.u32 %v7611, 7
          %v7613 = vsub.s32 %v7610, %v7612
          %v7614 = vrot.slane %v7600, %v7613
          %v7615 = vcombine.low %v7607, %v7614
          %v7617 = vunpack.c.l.s4 1966171168
          %v7618 = vunpack.c.0.s8 %v7617
          %v7619 = vlaneseq
          %v7620 = vshrl.u32 %v7619, 7
          %v7621 = vsub.s32 %v7618, %v7620
          %v7622 = vrot.slane %v7615, %v7621
          %v7624 = vshll.u32 %v7622, 16
          %v7627 = vld [vmem:[%s7465 + $0x8] sm:$0xf]
          %v7628 = vsel %vm7548, %v7624, %v7627
          %7629 = vst [vmem:[%s7465 + $0x8] sm:$0xf] %v7628
          %7630 = vst [vmem:[#allocation3] sm:$0xff] 0.0
        $region108: #{fwd.1} parent=63 // pred_fallthru
          _
        %v7631 = vld [vmem:[#allocation3] sm:$0xff]
        %s7632 = smul.u32 %s45, 12
        %s7633 = scalar_lea.vmem [#allocation2], %s7632
        %v7634 = vld [vmem:[%s7633] sm:$0xff]
        %v7635 = vld [vmem:[%s7633 + $0x8] sm:$0xf]
        %v7636 = vld [vmem:[%s643] sm:$0xff]
        %v7637 = vld [vmem:[%s643 + $0x8] sm:$0xff]
        %v7638 = vld [vmem:[%s643 + $0x10] sm:$0xff]
        %v7639 = vld [vmem:[%s643 + $0x18] sm:$0xff]
        %v7640 = vld [vmem:[%s643 + $0x20] sm:$0xff]
        %v7641 = vld [vmem:[%s643 + $0x28] sm:$0xff]
        %v7642 = vld [vmem:[%s643 + $0x30] sm:$0xff]
        %v7643 = vld [vmem:[%s643 + $0x38] sm:$0xff]
        %v7644 = vld [vmem:[%s643 + $0x40] sm:$0xff]
        %v7645 = vld [vmem:[%s643 + $0x48] sm:$0xff]
        %v7646 = vld [vmem:[%s643 + $0x50] sm:$0xff]
        %v7647 = vld [vmem:[%s643 + $0x58] sm:$0xff]
        %v7648 = vld [vmem:[%s643 + $0x60] sm:$0xff]
        %v7649 = vld [vmem:[%s643 + $0x68] sm:$0xff]
        %v7650 = vld [vmem:[%s643 + $0x70] sm:$0xff]
        %v7651 = vld [vmem:[%s643 + $0x78] sm:$0xff]
        %v7652 = vld [vmem:[%s643 + $0x80] sm:$0xff]
        %v7653 = vld [vmem:[%s643 + $0x88] sm:$0xff]
        %v7654 = vld [vmem:[%s643 + $0x90] sm:$0xff]
        %v7655 = vld [vmem:[%s643 + $0x98] sm:$0xff]
        %v7656 = vld [vmem:[%s643 + $0xa0] sm:$0xff]
        %v7657 = vld [vmem:[%s643 + $0xa8] sm:$0xff]
        %v7658 = vld [vmem:[%s643 + $0xb0] sm:$0xff]
        %v7659 = vld [vmem:[%s643 + $0xb8] sm:$0xff]
        %v7660 = vld [vmem:[%s643 + $0xc0] sm:$0xff]
        %v7661 = vld [vmem:[%s643 + $0xc8] sm:$0xff]
        %v7662 = vld [vmem:[%s643 + $0xd0] sm:$0xff]
        %v7663 = vld [vmem:[%s643 + $0xd8] sm:$0xff]
        %v7664 = vld [vmem:[%s643 + $0xe0] sm:$0xff]
        %v7665 = vld [vmem:[%s643 + $0xe8] sm:$0xff]
        %v7666 = vld [vmem:[%s643 + $0xf0] sm:$0xff]
        %v7667 = vld [vmem:[%s643 + $0xf8] sm:$0xff]
        %v7668 = vld [vmem:[%s643 + $0x100] sm:$0xff]
        %v7669 = vld [vmem:[%s643 + $0x108] sm:$0xff]
        %v7670 = vld [vmem:[%s643 + $0x110] sm:$0xff]
        %v7671 = vld [vmem:[%s643 + $0x118] sm:$0xff]
        %v7672 = vld [vmem:[%s643 + $0x120] sm:$0xff]
        %v7673 = vld [vmem:[%s643 + $0x128] sm:$0xff]
        %v7674 = vld [vmem:[%s643 + $0x130] sm:$0xff]
        %v7675 = vld [vmem:[%s643 + $0x138] sm:$0xff]
        %v7676 = vld [vmem:[%s643 + $0x140] sm:$0xff]
        %v7677 = vld [vmem:[%s643 + $0x148] sm:$0xff]
        %v7678 = vld [vmem:[%s643 + $0x150] sm:$0xff]
        %v7679 = vld [vmem:[%s643 + $0x158] sm:$0xff]
        %v7680 = vld [vmem:[%s643 + $0x160] sm:$0xff]
        %v7681 = vld [vmem:[%s643 + $0x168] sm:$0xff]
        %v7682 = vld [vmem:[%s643 + $0x170] sm:$0xff]
        %v7683 = vld [vmem:[%s643 + $0x178] sm:$0xff]
        %v7684 = vld [vmem:[%s643 + $0x180] sm:$0xff]
        %v7685 = vld [vmem:[%s643 + $0x188] sm:$0xff]
        %v7686 = vld [vmem:[%s643 + $0x190] sm:$0xff]
        %v7687 = vld [vmem:[%s643 + $0x198] sm:$0xff]
        %v7688 = vld [vmem:[%s643 + $0x1a0] sm:$0xff]
        %v7689 = vld [vmem:[%s643 + $0x1a8] sm:$0xff]
        %v7690 = vld [vmem:[%s643 + $0x1b0] sm:$0xff]
        %v7691 = vld [vmem:[%s643 + $0x1b8] sm:$0xff]
        %v7692 = vld [vmem:[%s643 + $0x1c0] sm:$0xff]
        %v7693 = vld [vmem:[%s643 + $0x1c8] sm:$0xff]
        %v7694 = vld [vmem:[%s643 + $0x1d0] sm:$0xff]
        %v7695 = vld [vmem:[%s643 + $0x1d8] sm:$0xff]
        %v7696 = vld [vmem:[%s643 + $0x1e0] sm:$0xff]
        %v7697 = vld [vmem:[%s643 + $0x1e8] sm:$0xff]
        %v7698 = vld [vmem:[%s643 + $0x1f0] sm:$0xff]
        %v7699 = vld [vmem:[%s643 + $0x1f8] sm:$0xff]
        %v7700 = vld [vmem:[%s643 + $0x200] sm:$0xff]
        %v7701 = vld [vmem:[%s643 + $0x208] sm:$0xff]
        %v7702 = vld [vmem:[%s643 + $0x210] sm:$0xff]
        %v7703 = vld [vmem:[%s643 + $0x218] sm:$0xff]
        %v7704 = vld [vmem:[%s643 + $0x220] sm:$0xff]
        %v7705 = vld [vmem:[%s643 + $0x228] sm:$0xff]
        %v7706 = vld [vmem:[%s643 + $0x230] sm:$0xff]
        %v7707 = vld [vmem:[%s643 + $0x238] sm:$0xff]
        %v7708 = vld [vmem:[%s643 + $0x240] sm:$0xff]
        %v7709 = vld [vmem:[%s643 + $0x248] sm:$0xff]
        %v7710 = vld [vmem:[%s643 + $0x250] sm:$0xff]
        %v7711 = vld [vmem:[%s643 + $0x258] sm:$0xff]
        %v7712 = vld [vmem:[%s643 + $0x260] sm:$0xff]
        %v7713 = vld [vmem:[%s643 + $0x268] sm:$0xff]
        %v7714 = vld [vmem:[%s643 + $0x270] sm:$0xff]
        %v7715 = vld [vmem:[%s643 + $0x278] sm:$0xff]
        %v7716 = vld [vmem:[%s643 + $0x280] sm:$0xff]
        %v7717 = vld [vmem:[%s643 + $0x288] sm:$0xff]
        %v7718 = vld [vmem:[%s643 + $0x290] sm:$0xff]
        %v7719 = vld [vmem:[%s643 + $0x298] sm:$0xff]
        %v7720 = vld [vmem:[%s643 + $0x2a0] sm:$0xff]
        %v7721 = vld [vmem:[%s643 + $0x2a8] sm:$0xff]
        %v7722 = vld [vmem:[%s643 + $0x2b0] sm:$0xff]
        %v7723 = vld [vmem:[%s643 + $0x2b8] sm:$0xff]
        %v7724 = vld [vmem:[%s643 + $0x2c0] sm:$0xff]
        %v7725 = vld [vmem:[%s643 + $0x2c8] sm:$0xff]
        %v7726 = vld [vmem:[%s643 + $0x2d0] sm:$0xff]
        %v7727 = vld [vmem:[%s643 + $0x2d8] sm:$0xff]
        %v7728 = vld [vmem:[%s643 + $0x2e0] sm:$0xff]
        %v7729 = vld [vmem:[%s643 + $0x2e8] sm:$0xff]
        %v7730 = vld [vmem:[%s643 + $0x2f0] sm:$0xff]
        %v7731 = vld [vmem:[%s643 + $0x2f8] sm:$0xff]
        %v7732 = vld [vmem:[%s643 + $0x300] sm:$0xff]
        %v7733 = vld [vmem:[%s643 + $0x308] sm:$0xff]
        %v7734 = vld [vmem:[%s643 + $0x310] sm:$0xff]
        %v7735 = vld [vmem:[%s643 + $0x318] sm:$0xff]
        %v7736 = vld [vmem:[%s643 + $0x320] sm:$0xff]
        %v7737 = vld [vmem:[%s643 + $0x328] sm:$0xff]
        %v7738 = vld [vmem:[%s643 + $0x330] sm:$0xff]
        %v7739 = vld [vmem:[%s643 + $0x338] sm:$0xff]
        %v7740 = vld [vmem:[%s643 + $0x340] sm:$0xff]
        %v7741 = vld [vmem:[%s643 + $0x348] sm:$0xff]
        %v7742 = vld [vmem:[%s643 + $0x350] sm:$0xff]
        %v7743 = vld [vmem:[%s643 + $0x358] sm:$0xff]
        %v7744 = vld [vmem:[%s643 + $0x360] sm:$0xff]
        %v7745 = vld [vmem:[%s643 + $0x368] sm:$0xff]
        %v7746 = vld [vmem:[%s643 + $0x370] sm:$0xff]
        %v7747 = vld [vmem:[%s643 + $0x378] sm:$0xff]
        %v7748 = vld [vmem:[%s643 + $0x380] sm:$0xff]
        %v7749 = vld [vmem:[%s643 + $0x388] sm:$0xff]
        %v7750 = vld [vmem:[%s643 + $0x390] sm:$0xff]
        %v7751 = vld [vmem:[%s643 + $0x398] sm:$0xff]
        %v7752 = vld [vmem:[%s643 + $0x3a0] sm:$0xff]
        %v7753 = vld [vmem:[%s643 + $0x3a8] sm:$0xff]
        %v7754 = vld [vmem:[%s643 + $0x3b0] sm:$0xff]
        %v7755 = vld [vmem:[%s643 + $0x3b8] sm:$0xff]
        %v7756 = vld [vmem:[%s643 + $0x3c0] sm:$0xff]
        %v7757 = vld [vmem:[%s643 + $0x3c8] sm:$0xff]
        %v7758 = vld [vmem:[%s643 + $0x3d0] sm:$0xff]
        %v7759 = vld [vmem:[%s643 + $0x3d8] sm:$0xff]
        %v7760 = vld [vmem:[%s643 + $0x3e0] sm:$0xff]
        %v7761 = vld [vmem:[%s643 + $0x3e8] sm:$0xff]
        %v7762 = vld [vmem:[%s643 + $0x3f0] sm:$0xff]
        %v7763 = vld [vmem:[%s643 + $0x3f8] sm:$0xff]
        %v7764 = vld [vmem:[%s643 + $0x400] sm:$0xff]
        %v7765 = vld [vmem:[%s643 + $0x408] sm:$0xff]
        %v7766 = vld [vmem:[%s643 + $0x410] sm:$0xff]
        %v7767 = vld [vmem:[%s643 + $0x418] sm:$0xff]
        %v7768 = vld [vmem:[%s643 + $0x420] sm:$0xff]
        %v7769 = vld [vmem:[%s643 + $0x428] sm:$0xff]
        %v7770 = vld [vmem:[%s643 + $0x430] sm:$0xff]
        %v7771 = vld [vmem:[%s643 + $0x438] sm:$0xff]
        %v7772 = vld [vmem:[%s643 + $0x440] sm:$0xff]
        %v7773 = vld [vmem:[%s643 + $0x448] sm:$0xff]
        %v7774 = vld [vmem:[%s643 + $0x450] sm:$0xff]
        %v7775 = vld [vmem:[%s643 + $0x458] sm:$0xff]
        %v7776 = vld [vmem:[%s643 + $0x460] sm:$0xff]
        %v7777 = vld [vmem:[%s643 + $0x468] sm:$0xff]
        %v7778 = vld [vmem:[%s643 + $0x470] sm:$0xff]
        %v7779 = vld [vmem:[%s643 + $0x478] sm:$0xff]
        %v7780 = vld [vmem:[%s643 + $0x480] sm:$0xff]
        %v7781 = vld [vmem:[%s643 + $0x488] sm:$0xff]
        %v7782 = vld [vmem:[%s643 + $0x490] sm:$0xff]
        %v7783 = vld [vmem:[%s643 + $0x498] sm:$0xff]
        %v7784 = vld [vmem:[%s643 + $0x4a0] sm:$0xff]
        %v7785 = vld [vmem:[%s643 + $0x4a8] sm:$0xff]
        %v7786 = vld [vmem:[%s643 + $0x4b0] sm:$0xff]
        %v7787 = vld [vmem:[%s643 + $0x4b8] sm:$0xff]
        %v7788 = vld [vmem:[%s643 + $0x4c0] sm:$0xff]
        %v7789 = vld [vmem:[%s643 + $0x4c8] sm:$0xff]
        %v7790 = vld [vmem:[%s643 + $0x4d0] sm:$0xff]
        %v7791 = vld [vmem:[%s643 + $0x4d8] sm:$0xff]
        %v7792 = vld [vmem:[%s643 + $0x4e0] sm:$0xff]
        %v7793 = vld [vmem:[%s643 + $0x4e8] sm:$0xff]
        %v7794 = vld [vmem:[%s643 + $0x4f0] sm:$0xff]
        %v7795 = vld [vmem:[%s643 + $0x4f8] sm:$0xff]
        %v7796 = vld [vmem:[%s643 + $0x500] sm:$0xff]
        %v7797 = vld [vmem:[%s643 + $0x508] sm:$0xff]
        %v7798 = vld [vmem:[%s643 + $0x510] sm:$0xff]
        %v7799 = vld [vmem:[%s643 + $0x518] sm:$0xff]
        %v7800 = vld [vmem:[%s643 + $0x520] sm:$0xff]
        %v7801 = vld [vmem:[%s643 + $0x528] sm:$0xff]
        %v7802 = vld [vmem:[%s643 + $0x530] sm:$0xff]
        %v7803 = vld [vmem:[%s643 + $0x538] sm:$0xff]
        %v7804 = vld [vmem:[%s643 + $0x540] sm:$0xff]
        %v7805 = vld [vmem:[%s643 + $0x548] sm:$0xff]
        %v7806 = vld [vmem:[%s643 + $0x550] sm:$0xff]
        %v7807 = vld [vmem:[%s643 + $0x558] sm:$0xff]
        %v7808 = vld [vmem:[%s643 + $0x560] sm:$0xff]
        %v7809 = vld [vmem:[%s643 + $0x568] sm:$0xff]
        %v7810 = vld [vmem:[%s643 + $0x570] sm:$0xff]
        %v7811 = vld [vmem:[%s643 + $0x578] sm:$0xff]
        %v7812 = vld [vmem:[%s643 + $0x580] sm:$0xff]
        %v7813 = vld [vmem:[%s643 + $0x588] sm:$0xff]
        %v7814 = vld [vmem:[%s643 + $0x590] sm:$0xff]
        %v7815 = vld [vmem:[%s643 + $0x598] sm:$0xff]
        %v7816 = vld [vmem:[%s643 + $0x5a0] sm:$0xff]
        %v7817 = vld [vmem:[%s643 + $0x5a8] sm:$0xff]
        %v7818 = vld [vmem:[%s643 + $0x5b0] sm:$0xff]
        %v7819 = vld [vmem:[%s643 + $0x5b8] sm:$0xff]
        %v7820 = vld [vmem:[%s643 + $0x5c0] sm:$0xff]
        %v7821 = vld [vmem:[%s643 + $0x5c8] sm:$0xff]
        %v7822 = vld [vmem:[%s643 + $0x5d0] sm:$0xff]
        %v7823 = vld [vmem:[%s643 + $0x5d8] sm:$0xff]
        %v7824 = vld [vmem:[%s643 + $0x5e0] sm:$0xff]
        %v7825 = vld [vmem:[%s643 + $0x5e8] sm:$0xff]
        %v7826 = vld [vmem:[%s643 + $0x5f0] sm:$0xff]
        %v7827 = vld [vmem:[%s643 + $0x5f8] sm:$0xff]
        %v7828 = vld [vmem:[%s643 + $0x600] sm:$0xff]
        %v7829 = vld [vmem:[%s643 + $0x608] sm:$0xff]
        %v7830 = vld [vmem:[%s643 + $0x610] sm:$0xff]
        %v7831 = vld [vmem:[%s643 + $0x618] sm:$0xff]
        %v7832 = vld [vmem:[%s643 + $0x620] sm:$0xff]
        %v7833 = vld [vmem:[%s643 + $0x628] sm:$0xff]
        %v7834 = vld [vmem:[%s643 + $0x630] sm:$0xff]
        %v7835 = vld [vmem:[%s643 + $0x638] sm:$0xff]
        %v7836 = vld [vmem:[%s643 + $0x640] sm:$0xff]
        %v7837 = vld [vmem:[%s643 + $0x648] sm:$0xff]
        %v7838 = vld [vmem:[%s643 + $0x650] sm:$0xff]
        %v7839 = vld [vmem:[%s643 + $0x658] sm:$0xff]
        %v7840 = vld [vmem:[%s643 + $0x660] sm:$0xff]
        %v7841 = vld [vmem:[%s643 + $0x668] sm:$0xff]
        %v7842 = vld [vmem:[%s643 + $0x670] sm:$0xff]
        %v7843 = vld [vmem:[%s643 + $0x678] sm:$0xff]
        %v7844 = vld [vmem:[%s643 + $0x680] sm:$0xff]
        %v7845 = vld [vmem:[%s643 + $0x688] sm:$0xff]
        %v7846 = vld [vmem:[%s643 + $0x690] sm:$0xff]
        %v7847 = vld [vmem:[%s643 + $0x698] sm:$0xff]
        %v7848 = vld [vmem:[%s643 + $0x6a0] sm:$0xff]
        %v7849 = vld [vmem:[%s643 + $0x6a8] sm:$0xff]
        %v7850 = vld [vmem:[%s643 + $0x6b0] sm:$0xff]
        %v7851 = vld [vmem:[%s643 + $0x6b8] sm:$0xff]
        %v7852 = vld [vmem:[%s643 + $0x6c0] sm:$0xff]
        %v7853 = vld [vmem:[%s643 + $0x6c8] sm:$0xff]
        %v7854 = vld [vmem:[%s643 + $0x6d0] sm:$0xff]
        %v7855 = vld [vmem:[%s643 + $0x6d8] sm:$0xff]
        %v7856 = vld [vmem:[%s643 + $0x6e0] sm:$0xff]
        %v7857 = vld [vmem:[%s643 + $0x6e8] sm:$0xff]
        %v7858 = vld [vmem:[%s643 + $0x6f0] sm:$0xff]
        %v7859 = vld [vmem:[%s643 + $0x6f8] sm:$0xff]
        %v7860 = vld [vmem:[%s643 + $0x700] sm:$0xff]
        %v7861 = vld [vmem:[%s643 + $0x708] sm:$0xff]
        %v7862 = vld [vmem:[%s643 + $0x710] sm:$0xff]
        %v7863 = vld [vmem:[%s643 + $0x718] sm:$0xff]
        %v7864 = vld [vmem:[%s643 + $0x720] sm:$0xff]
        %v7865 = vld [vmem:[%s643 + $0x728] sm:$0xff]
        %v7866 = vld [vmem:[%s643 + $0x730] sm:$0xff]
        %v7867 = vld [vmem:[%s643 + $0x738] sm:$0xff]
        %v7868 = vld [vmem:[%s643 + $0x740] sm:$0xff]
        %v7869 = vld [vmem:[%s643 + $0x748] sm:$0xff]
        %v7870 = vld [vmem:[%s643 + $0x750] sm:$0xff]
        %v7871 = vld [vmem:[%s643 + $0x758] sm:$0xff]
        %v7872 = vld [vmem:[%s643 + $0x760] sm:$0xff]
        %v7873 = vld [vmem:[%s643 + $0x768] sm:$0xff]
        %v7874 = vld [vmem:[%s643 + $0x770] sm:$0xff]
        %v7875 = vld [vmem:[%s643 + $0x778] sm:$0xff]
        %v7876 = vld [vmem:[%s643 + $0x780] sm:$0xff]
        %v7877 = vld [vmem:[%s643 + $0x788] sm:$0xff]
        %v7878 = vld [vmem:[%s643 + $0x790] sm:$0xff]
        %v7879 = vld [vmem:[%s643 + $0x798] sm:$0xff]
        %v7880 = vld [vmem:[%s643 + $0x7a0] sm:$0xff]
        %v7881 = vld [vmem:[%s643 + $0x7a8] sm:$0xff]
        %v7882 = vld [vmem:[%s643 + $0x7b0] sm:$0xff]
        %v7883 = vld [vmem:[%s643 + $0x7b8] sm:$0xff]
        %v7884 = vld [vmem:[%s643 + $0x7c0] sm:$0xff]
        %v7885 = vld [vmem:[%s643 + $0x7c8] sm:$0xff]
        %v7886 = vld [vmem:[%s643 + $0x7d0] sm:$0xff]
        %v7887 = vld [vmem:[%s643 + $0x7d8] sm:$0xff]
        %v7888 = vld [vmem:[%s643 + $0x7e0] sm:$0xff]
        %v7889 = vld [vmem:[%s643 + $0x7e8] sm:$0xff]
        %v7890 = vld [vmem:[%s643 + $0x7f0] sm:$0xff]
        %v7891 = vld [vmem:[%s643 + $0x7f8] sm:$0xff]
        %v7892 = vld [vmem:[%s643 + $0x800] sm:$0xff]
        %v7893 = vld [vmem:[%s643 + $0x808] sm:$0xff]
        %v7894 = vld [vmem:[%s643 + $0x810] sm:$0xff]
        %v7895 = vld [vmem:[%s643 + $0x818] sm:$0xff]
        %v7896 = vld [vmem:[%s643 + $0x820] sm:$0xff]
        %v7897 = vld [vmem:[%s643 + $0x828] sm:$0xff]
        %v7898 = vld [vmem:[%s643 + $0x830] sm:$0xff]
        %v7899 = vld [vmem:[%s643 + $0x838] sm:$0xff]
        %v7900 = vld [vmem:[%s643 + $0x840] sm:$0xff]
        %v7901 = vld [vmem:[%s643 + $0x848] sm:$0xff]
        %v7902 = vld [vmem:[%s643 + $0x850] sm:$0xff]
        %v7903 = vld [vmem:[%s643 + $0x858] sm:$0xff]
        %v7904 = vld [vmem:[%s643 + $0x860] sm:$0xff]
        %v7905 = vld [vmem:[%s643 + $0x868] sm:$0xff]
        %v7906 = vld [vmem:[%s643 + $0x870] sm:$0xff]
        %v7907 = vld [vmem:[%s643 + $0x878] sm:$0xff]
        %v7908 = vld [vmem:[%s643 + $0x880] sm:$0xff]
        %v7909 = vld [vmem:[%s643 + $0x888] sm:$0xff]
        %v7910 = vld [vmem:[%s643 + $0x890] sm:$0xff]
        %v7911 = vld [vmem:[%s643 + $0x898] sm:$0xff]
        %v7912 = vld [vmem:[%s643 + $0x8a0] sm:$0xff]
        %v7913 = vld [vmem:[%s643 + $0x8a8] sm:$0xff]
        %v7914 = vld [vmem:[%s643 + $0x8b0] sm:$0xff]
        %v7915 = vld [vmem:[%s643 + $0x8b8] sm:$0xff]
        %v7916 = vld [vmem:[%s643 + $0x8c0] sm:$0xff]
        %v7917 = vld [vmem:[%s643 + $0x8c8] sm:$0xff]
        %v7918 = vld [vmem:[%s643 + $0x8d0] sm:$0xff]
        %v7919 = vld [vmem:[%s643 + $0x8d8] sm:$0xff]
        %v7920 = vld [vmem:[%s643 + $0x8e0] sm:$0xff]
        %v7921 = vld [vmem:[%s643 + $0x8e8] sm:$0xff]
        %v7922 = vld [vmem:[%s643 + $0x8f0] sm:$0xff]
        %v7923 = vld [vmem:[%s643 + $0x8f8] sm:$0xff]
        %v7924 = vld [vmem:[%s643 + $0x900] sm:$0xff]
        %v7925 = vld [vmem:[%s643 + $0x908] sm:$0xff]
        %v7926 = vld [vmem:[%s643 + $0x910] sm:$0xff]
        %v7927 = vld [vmem:[%s643 + $0x918] sm:$0xff]
        %v7928 = vld [vmem:[%s643 + $0x920] sm:$0xff]
        %v7929 = vld [vmem:[%s643 + $0x928] sm:$0xff]
        %v7930 = vld [vmem:[%s643 + $0x930] sm:$0xff]
        %v7931 = vld [vmem:[%s643 + $0x938] sm:$0xff]
        %v7932 = vld [vmem:[%s643 + $0x940] sm:$0xff]
        %v7933 = vld [vmem:[%s643 + $0x948] sm:$0xff]
        %v7934 = vld [vmem:[%s643 + $0x950] sm:$0xff]
        %v7935 = vld [vmem:[%s643 + $0x958] sm:$0xff]
        %v7936 = vld [vmem:[%s643 + $0x960] sm:$0xff]
        %v7937 = vld [vmem:[%s643 + $0x968] sm:$0xff]
        %v7938 = vld [vmem:[%s643 + $0x970] sm:$0xff]
        %v7939 = vld [vmem:[%s643 + $0x978] sm:$0xff]
        %v7940 = vld [vmem:[%s643 + $0x980] sm:$0xff]
        %v7941 = vld [vmem:[%s643 + $0x988] sm:$0xff]
        %v7942 = vld [vmem:[%s643 + $0x990] sm:$0xff]
        %v7943 = vld [vmem:[%s643 + $0x998] sm:$0xff]
        %v7944 = vld [vmem:[%s643 + $0x9a0] sm:$0xff]
        %v7945 = vld [vmem:[%s643 + $0x9a8] sm:$0xff]
        %v7946 = vld [vmem:[%s643 + $0x9b0] sm:$0xff]
        %v7947 = vld [vmem:[%s643 + $0x9b8] sm:$0xff]
        %v7948 = vld [vmem:[%s643 + $0x9c0] sm:$0xff]
        %v7949 = vld [vmem:[%s643 + $0x9c8] sm:$0xff]
        %v7950 = vld [vmem:[%s643 + $0x9d0] sm:$0xff]
        %v7951 = vld [vmem:[%s643 + $0x9d8] sm:$0xff]
        %v7952 = vld [vmem:[%s643 + $0x9e0] sm:$0xff]
        %v7953 = vld [vmem:[%s643 + $0x9e8] sm:$0xff]
        %v7954 = vld [vmem:[%s643 + $0x9f0] sm:$0xff]
        %v7955 = vld [vmem:[%s643 + $0x9f8] sm:$0xff]
        %v7956 = vld [vmem:[%s643 + $0xa00] sm:$0xff]
        %v7957 = vld [vmem:[%s643 + $0xa08] sm:$0xff]
        %v7958 = vld [vmem:[%s643 + $0xa10] sm:$0xff]
        %v7959 = vld [vmem:[%s643 + $0xa18] sm:$0xff]
        %v7960 = vld [vmem:[%s643 + $0xa20] sm:$0xff]
        %v7961 = vld [vmem:[%s643 + $0xa28] sm:$0xff]
        %v7962 = vld [vmem:[%s643 + $0xa30] sm:$0xff]
        %v7963 = vld [vmem:[%s643 + $0xa38] sm:$0xff]
        %v7964 = vld [vmem:[%s643 + $0xa40] sm:$0xff]
        %v7965 = vld [vmem:[%s643 + $0xa48] sm:$0xff]
        %v7966 = vld [vmem:[%s643 + $0xa50] sm:$0xff]
        %v7967 = vld [vmem:[%s643 + $0xa58] sm:$0xff]
        %v7968 = vld [vmem:[%s643 + $0xa60] sm:$0xff]
        %v7969 = vld [vmem:[%s643 + $0xa68] sm:$0xff]
        %v7970 = vld [vmem:[%s643 + $0xa70] sm:$0xff]
        %v7971 = vld [vmem:[%s643 + $0xa78] sm:$0xff]
        %v7972 = vld [vmem:[%s643 + $0xa80] sm:$0xff]
        %v7973 = vld [vmem:[%s643 + $0xa88] sm:$0xff]
        %v7974 = vld [vmem:[%s643 + $0xa90] sm:$0xff]
        %v7975 = vld [vmem:[%s643 + $0xa98] sm:$0xff]
        %v7976 = vld [vmem:[%s643 + $0xaa0] sm:$0xff]
        %v7977 = vld [vmem:[%s643 + $0xaa8] sm:$0xff]
        %v7978 = vld [vmem:[%s643 + $0xab0] sm:$0xff]
        %v7979 = vld [vmem:[%s643 + $0xab8] sm:$0xff]
        %v7980 = vld [vmem:[%s643 + $0xac0] sm:$0xff]
        %v7981 = vld [vmem:[%s643 + $0xac8] sm:$0xff]
        %v7982 = vld [vmem:[%s643 + $0xad0] sm:$0xff]
        %v7983 = vld [vmem:[%s643 + $0xad8] sm:$0xff]
        %v7984 = vld [vmem:[%s643 + $0xae0] sm:$0xff]
        %v7985 = vld [vmem:[%s643 + $0xae8] sm:$0xff]
        %v7986 = vld [vmem:[%s643 + $0xaf0] sm:$0xff]
        %v7987 = vld [vmem:[%s643 + $0xaf8] sm:$0xff]
        %v7988 = vld [vmem:[%s643 + $0xb00] sm:$0xff]
        %v7989 = vld [vmem:[%s643 + $0xb08] sm:$0xff]
        %v7990 = vld [vmem:[%s643 + $0xb10] sm:$0xff]
        %v7991 = vld [vmem:[%s643 + $0xb18] sm:$0xff]
        %v7992 = vld [vmem:[%s643 + $0xb20] sm:$0xff]
        %v7993 = vld [vmem:[%s643 + $0xb28] sm:$0xff]
        %v7994 = vld [vmem:[%s643 + $0xb30] sm:$0xff]
        %v7995 = vld [vmem:[%s643 + $0xb38] sm:$0xff]
        %v7996 = vld [vmem:[%s643 + $0xb40] sm:$0xff]
        %v7997 = vld [vmem:[%s643 + $0xb48] sm:$0xff]
        %v7998 = vld [vmem:[%s643 + $0xb50] sm:$0xff]
        %v7999 = vld [vmem:[%s643 + $0xb58] sm:$0xff]
        %v8000 = vld [vmem:[%s643 + $0xb60] sm:$0xff]
        %v8001 = vld [vmem:[%s643 + $0xb68] sm:$0xff]
        %v8002 = vld [vmem:[%s643 + $0xb70] sm:$0xff]
        %v8003 = vld [vmem:[%s643 + $0xb78] sm:$0xff]
        %v8004 = vld [vmem:[%s643 + $0xb80] sm:$0xff]
        %v8005 = vld [vmem:[%s643 + $0xb88] sm:$0xff]
        %v8006 = vld [vmem:[%s643 + $0xb90] sm:$0xff]
        %v8007 = vld [vmem:[%s643 + $0xb98] sm:$0xff]
        %v8008 = vld [vmem:[%s643 + $0xba0] sm:$0xff]
        %v8009 = vld [vmem:[%s643 + $0xba8] sm:$0xff]
        %v8010 = vld [vmem:[%s643 + $0xbb0] sm:$0xff]
        %v8011 = vld [vmem:[%s643 + $0xbb8] sm:$0xff]
        %v8012 = vld [vmem:[%s643 + $0xbc0] sm:$0xff]
        %v8013 = vld [vmem:[%s643 + $0xbc8] sm:$0xff]
        %v8014 = vld [vmem:[%s643 + $0xbd0] sm:$0xff]
        %v8015 = vld [vmem:[%s643 + $0xbd8] sm:$0xff]
        %v8016 = vld [vmem:[%s643 + $0xbe0] sm:$0xff]
        %v8017 = vld [vmem:[%s643 + $0xbe8] sm:$0xff]
        %v8018 = vld [vmem:[%s643 + $0xbf0] sm:$0xff]
        %v8019 = vld [vmem:[%s643 + $0xbf8] sm:$0xff]
        %v8022 = vcombine.high %v7634, %v7634
        %v8024 = vunpack.c.l.s4 1966171168
        %v8025 = vunpack.c.0.s8 %v8024
        %v8026 = vlaneseq
        %v8027 = vshrl.u32 %v8026, 7
        %v8028 = vsub.s32 %v8025, %v8027
        %v8029 = vrot.slane %v7634, %v8028
        %v8031 = vunpack.c.l.s4 1966171168
        %v8032 = vunpack.c.0.s8 %v8031
        %v8033 = vlaneseq
        %v8034 = vshrl.u32 %v8033, 7
        %v8035 = vsub.s32 %v8032, %v8034
        %v8036 = vrot.slane %v8022, %v8035
        %v8037 = vcombine.high %v8029, %v8029
        %v8038 = vcombine.high %v8036, %v8036
        %v8040 = vunpack.c.l.s4 1966171168
        %v8041 = vunpack.c.0.s8 %v8040
        %v8042 = vlaneseq
        %v8043 = vshrl.u32 %v8042, 7
        %v8044 = vsub.s32 %v8041, %v8043
        %v8045 = vrot.slane %v8029, %v8044
        %v8047 = vunpack.c.l.s4 1966171168
        %v8048 = vunpack.c.0.s8 %v8047
        %v8049 = vlaneseq
        %v8050 = vshrl.u32 %v8049, 7
        %v8051 = vsub.s32 %v8048, %v8050
        %v8052 = vrot.slane %v8036, %v8051
        %v8054 = vunpack.c.l.s4 1966171168
        %v8055 = vunpack.c.0.s8 %v8054
        %v8056 = vlaneseq
        %v8057 = vshrl.u32 %v8056, 7
        %v8058 = vsub.s32 %v8055, %v8057
        %v8059 = vrot.slane %v8037, %v8058
        %v8061 = vunpack.c.l.s4 1966171168
        %v8062 = vunpack.c.0.s8 %v8061
        %v8063 = vlaneseq
        %v8064 = vshrl.u32 %v8063, 7
        %v8065 = vsub.s32 %v8062, %v8064
        %v8066 = vrot.slane %v8038, %v8065
        %v8067 = vcombine.high %v8045, %v8045
        %v8068 = vcombine.high %v8052, %v8052
        %v8069 = vcombine.high %v8059, %v8059
        %v8070 = vcombine.high %v8066, %v8066
        %v8072 = vunpack.c.l.s4 1966171168
        %v8073 = vunpack.c.0.s8 %v8072
        %v8074 = vlaneseq
        %v8075 = vshrl.u32 %v8074, 7
        %v8076 = vsub.s32 %v8073, %v8075
        %v8077 = vrot.slane %v7635, %v8076
        %v8078 = vcombine.high %v8077, %v8077
        %v8080 = vunpack.c.l.s4 1966171168
        %v8081 = vunpack.c.0.s8 %v8080
        %v8082 = vlaneseq
        %v8083 = vshrl.u32 %v8082, 7
        %v8084 = vsub.s32 %v8081, %v8083
        %v8085 = vrot.slane %v8077, %v8084
        %v8087 = vunpack.c.l.s4 1966171168
        %v8088 = vunpack.c.0.s8 %v8087
        %v8089 = vlaneseq
        %v8090 = vshrl.u32 %v8089, 7
        %v8091 = vsub.s32 %v8088, %v8090
        %v8092 = vrot.slane %v8078, %v8091
        %v8093 = vcombine.high %v8085, %v8085
        %v8094 = vcombine.high %v8092, %v8092
        %v8491 = vunpack.c.l.b16 %v7636
        %v8492 = vunpack.c.h.b16 %v7636
        %v8493 = vunpack.c.l.b16 %v7637
        %v8494 = vunpack.c.h.b16 %v7637
        %v8495 = vunpack.c.l.b16 %v7638
        %v8496 = vunpack.c.h.b16 %v7638
        %v8497 = vunpack.c.l.b16 %v7639
        %v8498 = vunpack.c.h.b16 %v7639
        %v8499 = vunpack.c.l.b16 %v7640
        %v8500 = vunpack.c.h.b16 %v7640
        %v8501 = vunpack.c.l.b16 %v7641
        %v8502 = vunpack.c.h.b16 %v7641
        %v8503 = vunpack.c.l.b16 %v7642
        %v8504 = vunpack.c.h.b16 %v7642
        %v8505 = vunpack.c.l.b16 %v7643
        %v8506 = vunpack.c.h.b16 %v7643
        %v8507 = vunpack.c.l.b16 %v7644
        %v8508 = vunpack.c.h.b16 %v7644
        %v8509 = vunpack.c.l.b16 %v7645
        %v8510 = vunpack.c.h.b16 %v7645
        %v8511 = vunpack.c.l.b16 %v7646
        %v8512 = vunpack.c.h.b16 %v7646
        %v8513 = vunpack.c.l.b16 %v7647
        %v8514 = vunpack.c.h.b16 %v7647
        %v8515 = vunpack.c.l.b16 %v7648
        %v8516 = vunpack.c.h.b16 %v7648
        %v8517 = vunpack.c.l.b16 %v7649
        %v8518 = vunpack.c.h.b16 %v7649
        %v8519 = vunpack.c.l.b16 %v7650
        %v8520 = vunpack.c.h.b16 %v7650
        %v8521 = vunpack.c.l.b16 %v7651
        %v8522 = vunpack.c.h.b16 %v7651
        %v8523 = vunpack.c.l.b16 %v7652
        %v8524 = vunpack.c.h.b16 %v7652
        %v8525 = vunpack.c.l.b16 %v7653
        %v8526 = vunpack.c.h.b16 %v7653
        %v8527 = vunpack.c.l.b16 %v7654
        %v8528 = vunpack.c.h.b16 %v7654
        %v8529 = vunpack.c.l.b16 %v7655
        %v8530 = vunpack.c.h.b16 %v7655
        %v8531 = vunpack.c.l.b16 %v7656
        %v8532 = vunpack.c.h.b16 %v7656
        %v8533 = vunpack.c.l.b16 %v7657
        %v8534 = vunpack.c.h.b16 %v7657
        %v8535 = vunpack.c.l.b16 %v7658
        %v8536 = vunpack.c.h.b16 %v7658
        %v8537 = vunpack.c.l.b16 %v7659
        %v8538 = vunpack.c.h.b16 %v7659
        %v8539 = vunpack.c.l.b16 %v7660
        %v8540 = vunpack.c.h.b16 %v7660
        %v8541 = vunpack.c.l.b16 %v7661
        %v8542 = vunpack.c.h.b16 %v7661
        %v8543 = vunpack.c.l.b16 %v7662
        %v8544 = vunpack.c.h.b16 %v7662
        %v8545 = vunpack.c.l.b16 %v7663
        %v8546 = vunpack.c.h.b16 %v7663
        %v8547 = vunpack.c.l.b16 %v7664
        %v8548 = vunpack.c.h.b16 %v7664
        %v8549 = vunpack.c.l.b16 %v7665
        %v8550 = vunpack.c.h.b16 %v7665
        %v8551 = vunpack.c.l.b16 %v7666
        %v8552 = vunpack.c.h.b16 %v7666
        %v8553 = vunpack.c.l.b16 %v7667
        %v8554 = vunpack.c.h.b16 %v7667
        %v8555 = vunpack.c.l.b16 %v7668
        %v8556 = vunpack.c.h.b16 %v7668
        %v8557 = vunpack.c.l.b16 %v7669
        %v8558 = vunpack.c.h.b16 %v7669
        %v8559 = vunpack.c.l.b16 %v7670
        %v8560 = vunpack.c.h.b16 %v7670
        %v8561 = vunpack.c.l.b16 %v7671
        %v8562 = vunpack.c.h.b16 %v7671
        %v8563 = vunpack.c.l.b16 %v7672
        %v8564 = vunpack.c.h.b16 %v7672
        %v8565 = vunpack.c.l.b16 %v7673
        %v8566 = vunpack.c.h.b16 %v7673
        %v8567 = vunpack.c.l.b16 %v7674
        %v8568 = vunpack.c.h.b16 %v7674
        %v8569 = vunpack.c.l.b16 %v7675
        %v8570 = vunpack.c.h.b16 %v7675
        %v8571 = vunpack.c.l.b16 %v7676
        %v8572 = vunpack.c.h.b16 %v7676
        %v8573 = vunpack.c.l.b16 %v7677
        %v8574 = vunpack.c.h.b16 %v7677
        %v8575 = vunpack.c.l.b16 %v7678
        %v8576 = vunpack.c.h.b16 %v7678
        %v8577 = vunpack.c.l.b16 %v7679
        %v8578 = vunpack.c.h.b16 %v7679
        %v8579 = vunpack.c.l.b16 %v7680
        %v8580 = vunpack.c.h.b16 %v7680
        %v8581 = vunpack.c.l.b16 %v7681
        %v8582 = vunpack.c.h.b16 %v7681
        %v8583 = vunpack.c.l.b16 %v7682
        %v8584 = vunpack.c.h.b16 %v7682
        %v8585 = vunpack.c.l.b16 %v7683
        %v8586 = vunpack.c.h.b16 %v7683
        %v8587 = vunpack.c.l.b16 %v7684
        %v8588 = vunpack.c.h.b16 %v7684
        %v8589 = vunpack.c.l.b16 %v7685
        %v8590 = vunpack.c.h.b16 %v7685
        %v8591 = vunpack.c.l.b16 %v7686
        %v8592 = vunpack.c.h.b16 %v7686
        %v8593 = vunpack.c.l.b16 %v7687
        %v8594 = vunpack.c.h.b16 %v7687
        %v8595 = vunpack.c.l.b16 %v7688
        %v8596 = vunpack.c.h.b16 %v7688
        %v8597 = vunpack.c.l.b16 %v7689
        %v8598 = vunpack.c.h.b16 %v7689
        %v8599 = vunpack.c.l.b16 %v7690
        %v8600 = vunpack.c.h.b16 %v7690
        %v8601 = vunpack.c.l.b16 %v7691
        %v8602 = vunpack.c.h.b16 %v7691
        %v8603 = vunpack.c.l.b16 %v7692
        %v8604 = vunpack.c.h.b16 %v7692
        %v8605 = vunpack.c.l.b16 %v7693
        %v8606 = vunpack.c.h.b16 %v7693
        %v8607 = vunpack.c.l.b16 %v7694
        %v8608 = vunpack.c.h.b16 %v7694
        %v8609 = vunpack.c.l.b16 %v7695
        %v8610 = vunpack.c.h.b16 %v7695
        %v8611 = vunpack.c.l.b16 %v7696
        %v8612 = vunpack.c.h.b16 %v7696
        %v8613 = vunpack.c.l.b16 %v7697
        %v8614 = vunpack.c.h.b16 %v7697
        %v8615 = vunpack.c.l.b16 %v7698
        %v8616 = vunpack.c.h.b16 %v7698
        %v8617 = vunpack.c.l.b16 %v7699
        %v8618 = vunpack.c.h.b16 %v7699
        %v8619 = vunpack.c.l.b16 %v7700
        %v8620 = vunpack.c.h.b16 %v7700
        %v8621 = vunpack.c.l.b16 %v7701
        %v8622 = vunpack.c.h.b16 %v7701
        %v8623 = vunpack.c.l.b16 %v7702
        %v8624 = vunpack.c.h.b16 %v7702
        %v8625 = vunpack.c.l.b16 %v7703
        %v8626 = vunpack.c.h.b16 %v7703
        %v8627 = vunpack.c.l.b16 %v7704
        %v8628 = vunpack.c.h.b16 %v7704
        %v8629 = vunpack.c.l.b16 %v7705
        %v8630 = vunpack.c.h.b16 %v7705
        %v8631 = vunpack.c.l.b16 %v7706
        %v8632 = vunpack.c.h.b16 %v7706
        %v8633 = vunpack.c.l.b16 %v7707
        %v8634 = vunpack.c.h.b16 %v7707
        %v8635 = vunpack.c.l.b16 %v7708
        %v8636 = vunpack.c.h.b16 %v7708
        %v8637 = vunpack.c.l.b16 %v7709
        %v8638 = vunpack.c.h.b16 %v7709
        %v8639 = vunpack.c.l.b16 %v7710
        %v8640 = vunpack.c.h.b16 %v7710
        %v8641 = vunpack.c.l.b16 %v7711
        %v8642 = vunpack.c.h.b16 %v7711
        %v8643 = vunpack.c.l.b16 %v7712
        %v8644 = vunpack.c.h.b16 %v7712
        %v8645 = vunpack.c.l.b16 %v7713
        %v8646 = vunpack.c.h.b16 %v7713
        %v8647 = vunpack.c.l.b16 %v7714
        %v8648 = vunpack.c.h.b16 %v7714
        %v8649 = vunpack.c.l.b16 %v7715
        %v8650 = vunpack.c.h.b16 %v7715
        %v8651 = vunpack.c.l.b16 %v7716
        %v8652 = vunpack.c.h.b16 %v7716
        %v8653 = vunpack.c.l.b16 %v7717
        %v8654 = vunpack.c.h.b16 %v7717
        %v8655 = vunpack.c.l.b16 %v7718
        %v8656 = vunpack.c.h.b16 %v7718
        %v8657 = vunpack.c.l.b16 %v7719
        %v8658 = vunpack.c.h.b16 %v7719
        %v8659 = vunpack.c.l.b16 %v7720
        %v8660 = vunpack.c.h.b16 %v7720
        %v8661 = vunpack.c.l.b16 %v7721
        %v8662 = vunpack.c.h.b16 %v7721
        %v8663 = vunpack.c.l.b16 %v7722
        %v8664 = vunpack.c.h.b16 %v7722
        %v8665 = vunpack.c.l.b16 %v7723
        %v8666 = vunpack.c.h.b16 %v7723
        %v8667 = vunpack.c.l.b16 %v7724
        %v8668 = vunpack.c.h.b16 %v7724
        %v8669 = vunpack.c.l.b16 %v7725
        %v8670 = vunpack.c.h.b16 %v7725
        %v8671 = vunpack.c.l.b16 %v7726
        %v8672 = vunpack.c.h.b16 %v7726
        %v8673 = vunpack.c.l.b16 %v7727
        %v8674 = vunpack.c.h.b16 %v7727
        %v8675 = vunpack.c.l.b16 %v7728
        %v8676 = vunpack.c.h.b16 %v7728
        %v8677 = vunpack.c.l.b16 %v7729
        %v8678 = vunpack.c.h.b16 %v7729
        %v8679 = vunpack.c.l.b16 %v7730
        %v8680 = vunpack.c.h.b16 %v7730
        %v8681 = vunpack.c.l.b16 %v7731
        %v8682 = vunpack.c.h.b16 %v7731
        %v8683 = vunpack.c.l.b16 %v7732
        %v8684 = vunpack.c.h.b16 %v7732
        %v8685 = vunpack.c.l.b16 %v7733
        %v8686 = vunpack.c.h.b16 %v7733
        %v8687 = vunpack.c.l.b16 %v7734
        %v8688 = vunpack.c.h.b16 %v7734
        %v8689 = vunpack.c.l.b16 %v7735
        %v8690 = vunpack.c.h.b16 %v7735
        %v8691 = vunpack.c.l.b16 %v7736
        %v8692 = vunpack.c.h.b16 %v7736
        %v8693 = vunpack.c.l.b16 %v7737
        %v8694 = vunpack.c.h.b16 %v7737
        %v8695 = vunpack.c.l.b16 %v7738
        %v8696 = vunpack.c.h.b16 %v7738
        %v8697 = vunpack.c.l.b16 %v7739
        %v8698 = vunpack.c.h.b16 %v7739
        %v8699 = vunpack.c.l.b16 %v7740
        %v8700 = vunpack.c.h.b16 %v7740
        %v8701 = vunpack.c.l.b16 %v7741
        %v8702 = vunpack.c.h.b16 %v7741
        %v8703 = vunpack.c.l.b16 %v7742
        %v8704 = vunpack.c.h.b16 %v7742
        %v8705 = vunpack.c.l.b16 %v7743
        %v8706 = vunpack.c.h.b16 %v7743
        %v8707 = vunpack.c.l.b16 %v7744
        %v8708 = vunpack.c.h.b16 %v7744
        %v8709 = vunpack.c.l.b16 %v7745
        %v8710 = vunpack.c.h.b16 %v7745
        %v8711 = vunpack.c.l.b16 %v7746
        %v8712 = vunpack.c.h.b16 %v7746
        %v8713 = vunpack.c.l.b16 %v7747
        %v8714 = vunpack.c.h.b16 %v7747
        %v8715 = vunpack.c.l.b16 %v7748
        %v8716 = vunpack.c.h.b16 %v7748
        %v8717 = vunpack.c.l.b16 %v7749
        %v8718 = vunpack.c.h.b16 %v7749
        %v8719 = vunpack.c.l.b16 %v7750
        %v8720 = vunpack.c.h.b16 %v7750
        %v8721 = vunpack.c.l.b16 %v7751
        %v8722 = vunpack.c.h.b16 %v7751
        %v8723 = vunpack.c.l.b16 %v7752
        %v8724 = vunpack.c.h.b16 %v7752
        %v8725 = vunpack.c.l.b16 %v7753
        %v8726 = vunpack.c.h.b16 %v7753
        %v8727 = vunpack.c.l.b16 %v7754
        %v8728 = vunpack.c.h.b16 %v7754
        %v8729 = vunpack.c.l.b16 %v7755
        %v8730 = vunpack.c.h.b16 %v7755
        %v8731 = vunpack.c.l.b16 %v7756
        %v8732 = vunpack.c.h.b16 %v7756
        %v8733 = vunpack.c.l.b16 %v7757
        %v8734 = vunpack.c.h.b16 %v7757
        %v8735 = vunpack.c.l.b16 %v7758
        %v8736 = vunpack.c.h.b16 %v7758
        %v8737 = vunpack.c.l.b16 %v7759
        %v8738 = vunpack.c.h.b16 %v7759
        %v8739 = vunpack.c.l.b16 %v7760
        %v8740 = vunpack.c.h.b16 %v7760
        %v8741 = vunpack.c.l.b16 %v7761
        %v8742 = vunpack.c.h.b16 %v7761
        %v8743 = vunpack.c.l.b16 %v7762
        %v8744 = vunpack.c.h.b16 %v7762
        %v8745 = vunpack.c.l.b16 %v7763
        %v8746 = vunpack.c.h.b16 %v7763
        %v8747 = vunpack.c.l.b16 %v7764
        %v8748 = vunpack.c.h.b16 %v7764
        %v8749 = vunpack.c.l.b16 %v7765
        %v8750 = vunpack.c.h.b16 %v7765
        %v8751 = vunpack.c.l.b16 %v7766
        %v8752 = vunpack.c.h.b16 %v7766
        %v8753 = vunpack.c.l.b16 %v7767
        %v8754 = vunpack.c.h.b16 %v7767
        %v8755 = vunpack.c.l.b16 %v7768
        %v8756 = vunpack.c.h.b16 %v7768
        %v8757 = vunpack.c.l.b16 %v7769
        %v8758 = vunpack.c.h.b16 %v7769
        %v8759 = vunpack.c.l.b16 %v7770
        %v8760 = vunpack.c.h.b16 %v7770
        %v8761 = vunpack.c.l.b16 %v7771
        %v8762 = vunpack.c.h.b16 %v7771
        %v8763 = vunpack.c.l.b16 %v7772
        %v8764 = vunpack.c.h.b16 %v7772
        %v8765 = vunpack.c.l.b16 %v7773
        %v8766 = vunpack.c.h.b16 %v7773
        %v8767 = vunpack.c.l.b16 %v7774
        %v8768 = vunpack.c.h.b16 %v7774
        %v8769 = vunpack.c.l.b16 %v7775
        %v8770 = vunpack.c.h.b16 %v7775
        %v8771 = vunpack.c.l.b16 %v7776
        %v8772 = vunpack.c.h.b16 %v7776
        %v8773 = vunpack.c.l.b16 %v7777
        %v8774 = vunpack.c.h.b16 %v7777
        %v8775 = vunpack.c.l.b16 %v7778
        %v8776 = vunpack.c.h.b16 %v7778
        %v8777 = vunpack.c.l.b16 %v7779
        %v8778 = vunpack.c.h.b16 %v7779
        %v8779 = vunpack.c.l.b16 %v7780
        %v8780 = vunpack.c.h.b16 %v7780
        %v8781 = vunpack.c.l.b16 %v7781
        %v8782 = vunpack.c.h.b16 %v7781
        %v8783 = vunpack.c.l.b16 %v7782
        %v8784 = vunpack.c.h.b16 %v7782
        %v8785 = vunpack.c.l.b16 %v7783
        %v8786 = vunpack.c.h.b16 %v7783
        %v8787 = vunpack.c.l.b16 %v7784
        %v8788 = vunpack.c.h.b16 %v7784
        %v8789 = vunpack.c.l.b16 %v7785
        %v8790 = vunpack.c.h.b16 %v7785
        %v8791 = vunpack.c.l.b16 %v7786
        %v8792 = vunpack.c.h.b16 %v7786
        %v8793 = vunpack.c.l.b16 %v7787
        %v8794 = vunpack.c.h.b16 %v7787
        %v8795 = vunpack.c.l.b16 %v7788
        %v8796 = vunpack.c.h.b16 %v7788
        %v8797 = vunpack.c.l.b16 %v7789
        %v8798 = vunpack.c.h.b16 %v7789
        %v8799 = vunpack.c.l.b16 %v7790
        %v8800 = vunpack.c.h.b16 %v7790
        %v8801 = vunpack.c.l.b16 %v7791
        %v8802 = vunpack.c.h.b16 %v7791
        %v8803 = vunpack.c.l.b16 %v7792
        %v8804 = vunpack.c.h.b16 %v7792
        %v8805 = vunpack.c.l.b16 %v7793
        %v8806 = vunpack.c.h.b16 %v7793
        %v8807 = vunpack.c.l.b16 %v7794
        %v8808 = vunpack.c.h.b16 %v7794
        %v8809 = vunpack.c.l.b16 %v7795
        %v8810 = vunpack.c.h.b16 %v7795
        %v8811 = vunpack.c.l.b16 %v7796
        %v8812 = vunpack.c.h.b16 %v7796
        %v8813 = vunpack.c.l.b16 %v7797
        %v8814 = vunpack.c.h.b16 %v7797
        %v8815 = vunpack.c.l.b16 %v7798
        %v8816 = vunpack.c.h.b16 %v7798
        %v8817 = vunpack.c.l.b16 %v7799
        %v8818 = vunpack.c.h.b16 %v7799
        %v8819 = vunpack.c.l.b16 %v7800
        %v8820 = vunpack.c.h.b16 %v7800
        %v8821 = vunpack.c.l.b16 %v7801
        %v8822 = vunpack.c.h.b16 %v7801
        %v8823 = vunpack.c.l.b16 %v7802
        %v8824 = vunpack.c.h.b16 %v7802
        %v8825 = vunpack.c.l.b16 %v7803
        %v8826 = vunpack.c.h.b16 %v7803
        %v8827 = vunpack.c.l.b16 %v7804
        %v8828 = vunpack.c.h.b16 %v7804
        %v8829 = vunpack.c.l.b16 %v7805
        %v8830 = vunpack.c.h.b16 %v7805
        %v8831 = vunpack.c.l.b16 %v7806
        %v8832 = vunpack.c.h.b16 %v7806
        %v8833 = vunpack.c.l.b16 %v7807
        %v8834 = vunpack.c.h.b16 %v7807
        %v8835 = vunpack.c.l.b16 %v7808
        %v8836 = vunpack.c.h.b16 %v7808
        %v8837 = vunpack.c.l.b16 %v7809
        %v8838 = vunpack.c.h.b16 %v7809
        %v8839 = vunpack.c.l.b16 %v7810
        %v8840 = vunpack.c.h.b16 %v7810
        %v8841 = vunpack.c.l.b16 %v7811
        %v8842 = vunpack.c.h.b16 %v7811
        %v8843 = vunpack.c.l.b16 %v7812
        %v8844 = vunpack.c.h.b16 %v7812
        %v8845 = vunpack.c.l.b16 %v7813
        %v8846 = vunpack.c.h.b16 %v7813
        %v8847 = vunpack.c.l.b16 %v7814
        %v8848 = vunpack.c.h.b16 %v7814
        %v8849 = vunpack.c.l.b16 %v7815
        %v8850 = vunpack.c.h.b16 %v7815
        %v8851 = vunpack.c.l.b16 %v7816
        %v8852 = vunpack.c.h.b16 %v7816
        %v8853 = vunpack.c.l.b16 %v7817
        %v8854 = vunpack.c.h.b16 %v7817
        %v8855 = vunpack.c.l.b16 %v7818
        %v8856 = vunpack.c.h.b16 %v7818
        %v8857 = vunpack.c.l.b16 %v7819
        %v8858 = vunpack.c.h.b16 %v7819
        %v8859 = vunpack.c.l.b16 %v7820
        %v8860 = vunpack.c.h.b16 %v7820
        %v8861 = vunpack.c.l.b16 %v7821
        %v8862 = vunpack.c.h.b16 %v7821
        %v8863 = vunpack.c.l.b16 %v7822
        %v8864 = vunpack.c.h.b16 %v7822
        %v8865 = vunpack.c.l.b16 %v7823
        %v8866 = vunpack.c.h.b16 %v7823
        %v8867 = vunpack.c.l.b16 %v7824
        %v8868 = vunpack.c.h.b16 %v7824
        %v8869 = vunpack.c.l.b16 %v7825
        %v8870 = vunpack.c.h.b16 %v7825
        %v8871 = vunpack.c.l.b16 %v7826
        %v8872 = vunpack.c.h.b16 %v7826
        %v8873 = vunpack.c.l.b16 %v7827
        %v8874 = vunpack.c.h.b16 %v7827
        %v8875 = vunpack.c.l.b16 %v7828
        %v8876 = vunpack.c.h.b16 %v7828
        %v8877 = vunpack.c.l.b16 %v7829
        %v8878 = vunpack.c.h.b16 %v7829
        %v8879 = vunpack.c.l.b16 %v7830
        %v8880 = vunpack.c.h.b16 %v7830
        %v8881 = vunpack.c.l.b16 %v7831
        %v8882 = vunpack.c.h.b16 %v7831
        %v8883 = vunpack.c.l.b16 %v7832
        %v8884 = vunpack.c.h.b16 %v7832
        %v8885 = vunpack.c.l.b16 %v7833
        %v8886 = vunpack.c.h.b16 %v7833
        %v8887 = vunpack.c.l.b16 %v7834
        %v8888 = vunpack.c.h.b16 %v7834
        %v8889 = vunpack.c.l.b16 %v7835
        %v8890 = vunpack.c.h.b16 %v7835
        %v8891 = vunpack.c.l.b16 %v7836
        %v8892 = vunpack.c.h.b16 %v7836
        %v8893 = vunpack.c.l.b16 %v7837
        %v8894 = vunpack.c.h.b16 %v7837
        %v8895 = vunpack.c.l.b16 %v7838
        %v8896 = vunpack.c.h.b16 %v7838
        %v8897 = vunpack.c.l.b16 %v7839
        %v8898 = vunpack.c.h.b16 %v7839
        %v8899 = vunpack.c.l.b16 %v7840
        %v8900 = vunpack.c.h.b16 %v7840
        %v8901 = vunpack.c.l.b16 %v7841
        %v8902 = vunpack.c.h.b16 %v7841
        %v8903 = vunpack.c.l.b16 %v7842
        %v8904 = vunpack.c.h.b16 %v7842
        %v8905 = vunpack.c.l.b16 %v7843
        %v8906 = vunpack.c.h.b16 %v7843
        %v8907 = vunpack.c.l.b16 %v7844
        %v8908 = vunpack.c.h.b16 %v7844
        %v8909 = vunpack.c.l.b16 %v7845
        %v8910 = vunpack.c.h.b16 %v7845
        %v8911 = vunpack.c.l.b16 %v7846
        %v8912 = vunpack.c.h.b16 %v7846
        %v8913 = vunpack.c.l.b16 %v7847
        %v8914 = vunpack.c.h.b16 %v7847
        %v8915 = vunpack.c.l.b16 %v7848
        %v8916 = vunpack.c.h.b16 %v7848
        %v8917 = vunpack.c.l.b16 %v7849
        %v8918 = vunpack.c.h.b16 %v7849
        %v8919 = vunpack.c.l.b16 %v7850
        %v8920 = vunpack.c.h.b16 %v7850
        %v8921 = vunpack.c.l.b16 %v7851
        %v8922 = vunpack.c.h.b16 %v7851
        %v8923 = vunpack.c.l.b16 %v7852
        %v8924 = vunpack.c.h.b16 %v7852
        %v8925 = vunpack.c.l.b16 %v7853
        %v8926 = vunpack.c.h.b16 %v7853
        %v8927 = vunpack.c.l.b16 %v7854
        %v8928 = vunpack.c.h.b16 %v7854
        %v8929 = vunpack.c.l.b16 %v7855
        %v8930 = vunpack.c.h.b16 %v7855
        %v8931 = vunpack.c.l.b16 %v7856
        %v8932 = vunpack.c.h.b16 %v7856
        %v8933 = vunpack.c.l.b16 %v7857
        %v8934 = vunpack.c.h.b16 %v7857
        %v8935 = vunpack.c.l.b16 %v7858
        %v8936 = vunpack.c.h.b16 %v7858
        %v8937 = vunpack.c.l.b16 %v7859
        %v8938 = vunpack.c.h.b16 %v7859
        %v8939 = vunpack.c.l.b16 %v7860
        %v8940 = vunpack.c.h.b16 %v7860
        %v8941 = vunpack.c.l.b16 %v7861
        %v8942 = vunpack.c.h.b16 %v7861
        %v8943 = vunpack.c.l.b16 %v7862
        %v8944 = vunpack.c.h.b16 %v7862
        %v8945 = vunpack.c.l.b16 %v7863
        %v8946 = vunpack.c.h.b16 %v7863
        %v8947 = vunpack.c.l.b16 %v7864
        %v8948 = vunpack.c.h.b16 %v7864
        %v8949 = vunpack.c.l.b16 %v7865
        %v8950 = vunpack.c.h.b16 %v7865
        %v8951 = vunpack.c.l.b16 %v7866
        %v8952 = vunpack.c.h.b16 %v7866
        %v8953 = vunpack.c.l.b16 %v7867
        %v8954 = vunpack.c.h.b16 %v7867
        %v8955 = vunpack.c.l.b16 %v7868
        %v8956 = vunpack.c.h.b16 %v7868
        %v8957 = vunpack.c.l.b16 %v7869
        %v8958 = vunpack.c.h.b16 %v7869
        %v8959 = vunpack.c.l.b16 %v7870
        %v8960 = vunpack.c.h.b16 %v7870
        %v8961 = vunpack.c.l.b16 %v7871
        %v8962 = vunpack.c.h.b16 %v7871
        %v8963 = vunpack.c.l.b16 %v7872
        %v8964 = vunpack.c.h.b16 %v7872
        %v8965 = vunpack.c.l.b16 %v7873
        %v8966 = vunpack.c.h.b16 %v7873
        %v8967 = vunpack.c.l.b16 %v7874
        %v8968 = vunpack.c.h.b16 %v7874
        %v8969 = vunpack.c.l.b16 %v7875
        %v8970 = vunpack.c.h.b16 %v7875
        %v8971 = vunpack.c.l.b16 %v7876
        %v8972 = vunpack.c.h.b16 %v7876
        %v8973 = vunpack.c.l.b16 %v7877
        %v8974 = vunpack.c.h.b16 %v7877
        %v8975 = vunpack.c.l.b16 %v7878
        %v8976 = vunpack.c.h.b16 %v7878
        %v8977 = vunpack.c.l.b16 %v7879
        %v8978 = vunpack.c.h.b16 %v7879
        %v8979 = vunpack.c.l.b16 %v7880
        %v8980 = vunpack.c.h.b16 %v7880
        %v8981 = vunpack.c.l.b16 %v7881
        %v8982 = vunpack.c.h.b16 %v7881
        %v8983 = vunpack.c.l.b16 %v7882
        %v8984 = vunpack.c.h.b16 %v7882
        %v8985 = vunpack.c.l.b16 %v7883
        %v8986 = vunpack.c.h.b16 %v7883
        %v8987 = vunpack.c.l.b16 %v7884
        %v8988 = vunpack.c.h.b16 %v7884
        %v8989 = vunpack.c.l.b16 %v7885
        %v8990 = vunpack.c.h.b16 %v7885
        %v8991 = vunpack.c.l.b16 %v7886
        %v8992 = vunpack.c.h.b16 %v7886
        %v8993 = vunpack.c.l.b16 %v7887
        %v8994 = vunpack.c.h.b16 %v7887
        %v8995 = vunpack.c.l.b16 %v7888
        %v8996 = vunpack.c.h.b16 %v7888
        %v8997 = vunpack.c.l.b16 %v7889
        %v8998 = vunpack.c.h.b16 %v7889
        %v8999 = vunpack.c.l.b16 %v7890
        %v9000 = vunpack.c.h.b16 %v7890
        %v9001 = vunpack.c.l.b16 %v7891
        %v9002 = vunpack.c.h.b16 %v7891
        %v9003 = vunpack.c.l.b16 %v7892
        %v9004 = vunpack.c.h.b16 %v7892
        %v9005 = vunpack.c.l.b16 %v7893
        %v9006 = vunpack.c.h.b16 %v7893
        %v9007 = vunpack.c.l.b16 %v7894
        %v9008 = vunpack.c.h.b16 %v7894
        %v9009 = vunpack.c.l.b16 %v7895
        %v9010 = vunpack.c.h.b16 %v7895
        %v9011 = vunpack.c.l.b16 %v7896
        %v9012 = vunpack.c.h.b16 %v7896
        %v9013 = vunpack.c.l.b16 %v7897
        %v9014 = vunpack.c.h.b16 %v7897
        %v9015 = vunpack.c.l.b16 %v7898
        %v9016 = vunpack.c.h.b16 %v7898
        %v9017 = vunpack.c.l.b16 %v7899
        %v9018 = vunpack.c.h.b16 %v7899
        %v9019 = vunpack.c.l.b16 %v7900
        %v9020 = vunpack.c.h.b16 %v7900
        %v9021 = vunpack.c.l.b16 %v7901
        %v9022 = vunpack.c.h.b16 %v7901
        %v9023 = vunpack.c.l.b16 %v7902
        %v9024 = vunpack.c.h.b16 %v7902
        %v9025 = vunpack.c.l.b16 %v7903
        %v9026 = vunpack.c.h.b16 %v7903
        %v9027 = vunpack.c.l.b16 %v7904
        %v9028 = vunpack.c.h.b16 %v7904
        %v9029 = vunpack.c.l.b16 %v7905
        %v9030 = vunpack.c.h.b16 %v7905
        %v9031 = vunpack.c.l.b16 %v7906
        %v9032 = vunpack.c.h.b16 %v7906
        %v9033 = vunpack.c.l.b16 %v7907
        %v9034 = vunpack.c.h.b16 %v7907
        %v9035 = vunpack.c.l.b16 %v7908
        %v9036 = vunpack.c.h.b16 %v7908
        %v9037 = vunpack.c.l.b16 %v7909
        %v9038 = vunpack.c.h.b16 %v7909
        %v9039 = vunpack.c.l.b16 %v7910
        %v9040 = vunpack.c.h.b16 %v7910
        %v9041 = vunpack.c.l.b16 %v7911
        %v9042 = vunpack.c.h.b16 %v7911
        %v9043 = vunpack.c.l.b16 %v7912
        %v9044 = vunpack.c.h.b16 %v7912
        %v9045 = vunpack.c.l.b16 %v7913
        %v9046 = vunpack.c.h.b16 %v7913
        %v9047 = vunpack.c.l.b16 %v7914
        %v9048 = vunpack.c.h.b16 %v7914
        %v9049 = vunpack.c.l.b16 %v7915
        %v9050 = vunpack.c.h.b16 %v7915
        %v9051 = vunpack.c.l.b16 %v7916
        %v9052 = vunpack.c.h.b16 %v7916
        %v9053 = vunpack.c.l.b16 %v7917
        %v9054 = vunpack.c.h.b16 %v7917
        %v9055 = vunpack.c.l.b16 %v7918
        %v9056 = vunpack.c.h.b16 %v7918
        %v9057 = vunpack.c.l.b16 %v7919
        %v9058 = vunpack.c.h.b16 %v7919
        %v9059 = vunpack.c.l.b16 %v7920
        %v9060 = vunpack.c.h.b16 %v7920
        %v9061 = vunpack.c.l.b16 %v7921
        %v9062 = vunpack.c.h.b16 %v7921
        %v9063 = vunpack.c.l.b16 %v7922
        %v9064 = vunpack.c.h.b16 %v7922
        %v9065 = vunpack.c.l.b16 %v7923
        %v9066 = vunpack.c.h.b16 %v7923
        %v9067 = vunpack.c.l.b16 %v7924
        %v9068 = vunpack.c.h.b16 %v7924
        %v9069 = vunpack.c.l.b16 %v7925
        %v9070 = vunpack.c.h.b16 %v7925
        %v9071 = vunpack.c.l.b16 %v7926
        %v9072 = vunpack.c.h.b16 %v7926
        %v9073 = vunpack.c.l.b16 %v7927
        %v9074 = vunpack.c.h.b16 %v7927
        %v9075 = vunpack.c.l.b16 %v7928
        %v9076 = vunpack.c.h.b16 %v7928
        %v9077 = vunpack.c.l.b16 %v7929
        %v9078 = vunpack.c.h.b16 %v7929
        %v9079 = vunpack.c.l.b16 %v7930
        %v9080 = vunpack.c.h.b16 %v7930
        %v9081 = vunpack.c.l.b16 %v7931
        %v9082 = vunpack.c.h.b16 %v7931
        %v9083 = vunpack.c.l.b16 %v7932
        %v9084 = vunpack.c.h.b16 %v7932
        %v9085 = vunpack.c.l.b16 %v7933
        %v9086 = vunpack.c.h.b16 %v7933
        %v9087 = vunpack.c.l.b16 %v7934
        %v9088 = vunpack.c.h.b16 %v7934
        %v9089 = vunpack.c.l.b16 %v7935
        %v9090 = vunpack.c.h.b16 %v7935
        %v9091 = vunpack.c.l.b16 %v7936
        %v9092 = vunpack.c.h.b16 %v7936
        %v9093 = vunpack.c.l.b16 %v7937
        %v9094 = vunpack.c.h.b16 %v7937
        %v9095 = vunpack.c.l.b16 %v7938
        %v9096 = vunpack.c.h.b16 %v7938
        %v9097 = vunpack.c.l.b16 %v7939
        %v9098 = vunpack.c.h.b16 %v7939
        %v9099 = vunpack.c.l.b16 %v7940
        %v9100 = vunpack.c.h.b16 %v7940
        %v9101 = vunpack.c.l.b16 %v7941
        %v9102 = vunpack.c.h.b16 %v7941
        %v9103 = vunpack.c.l.b16 %v7942
        %v9104 = vunpack.c.h.b16 %v7942
        %v9105 = vunpack.c.l.b16 %v7943
        %v9106 = vunpack.c.h.b16 %v7943
        %v9107 = vunpack.c.l.b16 %v7944
        %v9108 = vunpack.c.h.b16 %v7944
        %v9109 = vunpack.c.l.b16 %v7945
        %v9110 = vunpack.c.h.b16 %v7945
        %v9111 = vunpack.c.l.b16 %v7946
        %v9112 = vunpack.c.h.b16 %v7946
        %v9113 = vunpack.c.l.b16 %v7947
        %v9114 = vunpack.c.h.b16 %v7947
        %v9115 = vunpack.c.l.b16 %v7948
        %v9116 = vunpack.c.h.b16 %v7948
        %v9117 = vunpack.c.l.b16 %v7949
        %v9118 = vunpack.c.h.b16 %v7949
        %v9119 = vunpack.c.l.b16 %v7950
        %v9120 = vunpack.c.h.b16 %v7950
        %v9121 = vunpack.c.l.b16 %v7951
        %v9122 = vunpack.c.h.b16 %v7951
        %v9123 = vunpack.c.l.b16 %v7952
        %v9124 = vunpack.c.h.b16 %v7952
        %v9125 = vunpack.c.l.b16 %v7953
        %v9126 = vunpack.c.h.b16 %v7953
        %v9127 = vunpack.c.l.b16 %v7954
        %v9128 = vunpack.c.h.b16 %v7954
        %v9129 = vunpack.c.l.b16 %v7955
        %v9130 = vunpack.c.h.b16 %v7955
        %v9131 = vunpack.c.l.b16 %v7956
        %v9132 = vunpack.c.h.b16 %v7956
        %v9133 = vunpack.c.l.b16 %v7957
        %v9134 = vunpack.c.h.b16 %v7957
        %v9135 = vunpack.c.l.b16 %v7958
        %v9136 = vunpack.c.h.b16 %v7958
        %v9137 = vunpack.c.l.b16 %v7959
        %v9138 = vunpack.c.h.b16 %v7959
        %v9139 = vunpack.c.l.b16 %v7960
        %v9140 = vunpack.c.h.b16 %v7960
        %v9141 = vunpack.c.l.b16 %v7961
        %v9142 = vunpack.c.h.b16 %v7961
        %v9143 = vunpack.c.l.b16 %v7962
        %v9144 = vunpack.c.h.b16 %v7962
        %v9145 = vunpack.c.l.b16 %v7963
        %v9146 = vunpack.c.h.b16 %v7963
        %v9147 = vunpack.c.l.b16 %v7964
        %v9148 = vunpack.c.h.b16 %v7964
        %v9149 = vunpack.c.l.b16 %v7965
        %v9150 = vunpack.c.h.b16 %v7965
        %v9151 = vunpack.c.l.b16 %v7966
        %v9152 = vunpack.c.h.b16 %v7966
        %v9153 = vunpack.c.l.b16 %v7967
        %v9154 = vunpack.c.h.b16 %v7967
        %v9155 = vunpack.c.l.b16 %v7968
        %v9156 = vunpack.c.h.b16 %v7968
        %v9157 = vunpack.c.l.b16 %v7969
        %v9158 = vunpack.c.h.b16 %v7969
        %v9159 = vunpack.c.l.b16 %v7970
        %v9160 = vunpack.c.h.b16 %v7970
        %v9161 = vunpack.c.l.b16 %v7971
        %v9162 = vunpack.c.h.b16 %v7971
        %v9163 = vunpack.c.l.b16 %v7972
        %v9164 = vunpack.c.h.b16 %v7972
        %v9165 = vunpack.c.l.b16 %v7973
        %v9166 = vunpack.c.h.b16 %v7973
        %v9167 = vunpack.c.l.b16 %v7974
        %v9168 = vunpack.c.h.b16 %v7974
        %v9169 = vunpack.c.l.b16 %v7975
        %v9170 = vunpack.c.h.b16 %v7975
        %v9171 = vunpack.c.l.b16 %v7976
        %v9172 = vunpack.c.h.b16 %v7976
        %v9173 = vunpack.c.l.b16 %v7977
        %v9174 = vunpack.c.h.b16 %v7977
        %v9175 = vunpack.c.l.b16 %v7978
        %v9176 = vunpack.c.h.b16 %v7978
        %v9177 = vunpack.c.l.b16 %v7979
        %v9178 = vunpack.c.h.b16 %v7979
        %v9179 = vunpack.c.l.b16 %v7980
        %v9180 = vunpack.c.h.b16 %v7980
        %v9181 = vunpack.c.l.b16 %v7981
        %v9182 = vunpack.c.h.b16 %v7981
        %v9183 = vunpack.c.l.b16 %v7982
        %v9184 = vunpack.c.h.b16 %v7982
        %v9185 = vunpack.c.l.b16 %v7983
        %v9186 = vunpack.c.h.b16 %v7983
        %v9187 = vunpack.c.l.b16 %v7984
        %v9188 = vunpack.c.h.b16 %v7984
        %v9189 = vunpack.c.l.b16 %v7985
        %v9190 = vunpack.c.h.b16 %v7985
        %v9191 = vunpack.c.l.b16 %v7986
        %v9192 = vunpack.c.h.b16 %v7986
        %v9193 = vunpack.c.l.b16 %v7987
        %v9194 = vunpack.c.h.b16 %v7987
        %v9195 = vunpack.c.l.b16 %v7988
        %v9196 = vunpack.c.h.b16 %v7988
        %v9197 = vunpack.c.l.b16 %v7989
        %v9198 = vunpack.c.h.b16 %v7989
        %v9199 = vunpack.c.l.b16 %v7990
        %v9200 = vunpack.c.h.b16 %v7990
        %v9201 = vunpack.c.l.b16 %v7991
        %v9202 = vunpack.c.h.b16 %v7991
        %v9203 = vunpack.c.l.b16 %v7992
        %v9204 = vunpack.c.h.b16 %v7992
        %v9205 = vunpack.c.l.b16 %v7993
        %v9206 = vunpack.c.h.b16 %v7993
        %v9207 = vunpack.c.l.b16 %v7994
        %v9208 = vunpack.c.h.b16 %v7994
        %v9209 = vunpack.c.l.b16 %v7995
        %v9210 = vunpack.c.h.b16 %v7995
        %v9211 = vunpack.c.l.b16 %v7996
        %v9212 = vunpack.c.h.b16 %v7996
        %v9213 = vunpack.c.l.b16 %v7997
        %v9214 = vunpack.c.h.b16 %v7997
        %v9215 = vunpack.c.l.b16 %v7998
        %v9216 = vunpack.c.h.b16 %v7998
        %v9217 = vunpack.c.l.b16 %v7999
        %v9218 = vunpack.c.h.b16 %v7999
        %v9219 = vunpack.c.l.b16 %v8000
        %v9220 = vunpack.c.h.b16 %v8000
        %v9221 = vunpack.c.l.b16 %v8001
        %v9222 = vunpack.c.h.b16 %v8001
        %v9223 = vunpack.c.l.b16 %v8002
        %v9224 = vunpack.c.h.b16 %v8002
        %v9225 = vunpack.c.l.b16 %v8003
        %v9226 = vunpack.c.h.b16 %v8003
        %v9227 = vunpack.c.l.b16 %v8004
        %v9228 = vunpack.c.h.b16 %v8004
        %v9229 = vunpack.c.l.b16 %v8005
        %v9230 = vunpack.c.h.b16 %v8005
        %v9231 = vunpack.c.l.b16 %v8006
        %v9232 = vunpack.c.h.b16 %v8006
        %v9233 = vunpack.c.l.b16 %v8007
        %v9234 = vunpack.c.h.b16 %v8007
        %v9235 = vunpack.c.l.b16 %v8008
        %v9236 = vunpack.c.h.b16 %v8008
        %v9237 = vunpack.c.l.b16 %v8009
        %v9238 = vunpack.c.h.b16 %v8009
        %v9239 = vunpack.c.l.b16 %v8010
        %v9240 = vunpack.c.h.b16 %v8010
        %v9241 = vunpack.c.l.b16 %v8011
        %v9242 = vunpack.c.h.b16 %v8011
        %v9243 = vunpack.c.l.b16 %v8012
        %v9244 = vunpack.c.h.b16 %v8012
        %v9245 = vunpack.c.l.b16 %v8013
        %v9246 = vunpack.c.h.b16 %v8013
        %v9247 = vunpack.c.l.b16 %v8014
        %v9248 = vunpack.c.h.b16 %v8014
        %v9249 = vunpack.c.l.b16 %v8015
        %v9250 = vunpack.c.h.b16 %v8015
        %v9251 = vunpack.c.l.b16 %v8016
        %v9252 = vunpack.c.h.b16 %v8016
        %v9253 = vunpack.c.l.b16 %v8017
        %v9254 = vunpack.c.h.b16 %v8017
        %v9255 = vunpack.c.l.b16 %v8018
        %v9256 = vunpack.c.h.b16 %v8018
        %v9257 = vunpack.c.l.b16 %v8019
        %v9258 = vunpack.c.h.b16 %v8019
        %v9259 = vpack.c.b16 %v8495, %v8491
        %v9260 = vpack.c.b16 %v8496, %v8492
        %v9261 = vpack.c.b16 %v8497, %v8493
        %v9262 = vpack.c.b16 %v8498, %v8494
        %v9263 = vpack.c.b16 %v8503, %v8499
        %v9264 = vpack.c.b16 %v8504, %v8500
        %v9265 = vpack.c.b16 %v8505, %v8501
        %v9266 = vpack.c.b16 %v8506, %v8502
        %v9267 = vpack.c.b16 %v8511, %v8507
        %v9268 = vpack.c.b16 %v8512, %v8508
        %v9269 = vpack.c.b16 %v8513, %v8509
        %v9270 = vpack.c.b16 %v8514, %v8510
        %v9271 = vpack.c.b16 %v8519, %v8515
        %v9272 = vpack.c.b16 %v8520, %v8516
        %v9273 = vpack.c.b16 %v8521, %v8517
        %v9274 = vpack.c.b16 %v8522, %v8518
        %v9275 = vpack.c.b16 %v8527, %v8523
        %v9276 = vpack.c.b16 %v8528, %v8524
        %v9277 = vpack.c.b16 %v8529, %v8525
        %v9278 = vpack.c.b16 %v8530, %v8526
        %v9279 = vpack.c.b16 %v8535, %v8531
        %v9280 = vpack.c.b16 %v8536, %v8532
        %v9281 = vpack.c.b16 %v8537, %v8533
        %v9282 = vpack.c.b16 %v8538, %v8534
        %v9283 = vpack.c.b16 %v8543, %v8539
        %v9284 = vpack.c.b16 %v8544, %v8540
        %v9285 = vpack.c.b16 %v8545, %v8541
        %v9286 = vpack.c.b16 %v8546, %v8542
        %v9287 = vpack.c.b16 %v8551, %v8547
        %v9288 = vpack.c.b16 %v8552, %v8548
        %v9289 = vpack.c.b16 %v8553, %v8549
        %v9290 = vpack.c.b16 %v8554, %v8550
        %v9291 = vpack.c.b16 %v8559, %v8555
        %v9292 = vpack.c.b16 %v8560, %v8556
        %v9293 = vpack.c.b16 %v8561, %v8557
        %v9294 = vpack.c.b16 %v8562, %v8558
        %v9295 = vpack.c.b16 %v8567, %v8563
        %v9296 = vpack.c.b16 %v8568, %v8564
        %v9297 = vpack.c.b16 %v8569, %v8565
        %v9298 = vpack.c.b16 %v8570, %v8566
        %v9299 = vpack.c.b16 %v8575, %v8571
        %v9300 = vpack.c.b16 %v8576, %v8572
        %v9301 = vpack.c.b16 %v8577, %v8573
        %v9302 = vpack.c.b16 %v8578, %v8574
        %v9303 = vpack.c.b16 %v8583, %v8579
        %v9304 = vpack.c.b16 %v8584, %v8580
        %v9305 = vpack.c.b16 %v8585, %v8581
        %v9306 = vpack.c.b16 %v8586, %v8582
        %v9307 = vpack.c.b16 %v8591, %v8587
        %v9308 = vpack.c.b16 %v8592, %v8588
        %v9309 = vpack.c.b16 %v8593, %v8589
        %v9310 = vpack.c.b16 %v8594, %v8590
        %v9311 = vpack.c.b16 %v8599, %v8595
        %v9312 = vpack.c.b16 %v8600, %v8596
        %v9313 = vpack.c.b16 %v8601, %v8597
        %v9314 = vpack.c.b16 %v8602, %v8598
        %v9315 = vpack.c.b16 %v8607, %v8603
        %v9316 = vpack.c.b16 %v8608, %v8604
        %v9317 = vpack.c.b16 %v8609, %v8605
        %v9318 = vpack.c.b16 %v8610, %v8606
        %v9319 = vpack.c.b16 %v8615, %v8611
        %v9320 = vpack.c.b16 %v8616, %v8612
        %v9321 = vpack.c.b16 %v8617, %v8613
        %v9322 = vpack.c.b16 %v8618, %v8614
        %v9323 = vpack.c.b16 %v8623, %v8619
        %v9324 = vpack.c.b16 %v8624, %v8620
        %v9325 = vpack.c.b16 %v8625, %v8621
        %v9326 = vpack.c.b16 %v8626, %v8622
        %v9327 = vpack.c.b16 %v8631, %v8627
        %v9328 = vpack.c.b16 %v8632, %v8628
        %v9329 = vpack.c.b16 %v8633, %v8629
        %v9330 = vpack.c.b16 %v8634, %v8630
        %v9331 = vpack.c.b16 %v8639, %v8635
        %v9332 = vpack.c.b16 %v8640, %v8636
        %v9333 = vpack.c.b16 %v8641, %v8637
        %v9334 = vpack.c.b16 %v8642, %v8638
        %v9335 = vpack.c.b16 %v8647, %v8643
        %v9336 = vpack.c.b16 %v8648, %v8644
        %v9337 = vpack.c.b16 %v8649, %v8645
        %v9338 = vpack.c.b16 %v8650, %v8646
        %v9339 = vpack.c.b16 %v8655, %v8651
        %v9340 = vpack.c.b16 %v8656, %v8652
        %v9341 = vpack.c.b16 %v8657, %v8653
        %v9342 = vpack.c.b16 %v8658, %v8654
        %v9343 = vpack.c.b16 %v8663, %v8659
        %v9344 = vpack.c.b16 %v8664, %v8660
        %v9345 = vpack.c.b16 %v8665, %v8661
        %v9346 = vpack.c.b16 %v8666, %v8662
        %v9347 = vpack.c.b16 %v8671, %v8667
        %v9348 = vpack.c.b16 %v8672, %v8668
        %v9349 = vpack.c.b16 %v8673, %v8669
        %v9350 = vpack.c.b16 %v8674, %v8670
        %v9351 = vpack.c.b16 %v8679, %v8675
        %v9352 = vpack.c.b16 %v8680, %v8676
        %v9353 = vpack.c.b16 %v8681, %v8677
        %v9354 = vpack.c.b16 %v8682, %v8678
        %v9355 = vpack.c.b16 %v8687, %v8683
        %v9356 = vpack.c.b16 %v8688, %v8684
        %v9357 = vpack.c.b16 %v8689, %v8685
        %v9358 = vpack.c.b16 %v8690, %v8686
        %v9359 = vpack.c.b16 %v8695, %v8691
        %v9360 = vpack.c.b16 %v8696, %v8692
        %v9361 = vpack.c.b16 %v8697, %v8693
        %v9362 = vpack.c.b16 %v8698, %v8694
        %v9363 = vpack.c.b16 %v8703, %v8699
        %v9364 = vpack.c.b16 %v8704, %v8700
        %v9365 = vpack.c.b16 %v8705, %v8701
        %v9366 = vpack.c.b16 %v8706, %v8702
        %v9367 = vpack.c.b16 %v8711, %v8707
        %v9368 = vpack.c.b16 %v8712, %v8708
        %v9369 = vpack.c.b16 %v8713, %v8709
        %v9370 = vpack.c.b16 %v8714, %v8710
        %v9371 = vpack.c.b16 %v8719, %v8715
        %v9372 = vpack.c.b16 %v8720, %v8716
        %v9373 = vpack.c.b16 %v8721, %v8717
        %v9374 = vpack.c.b16 %v8722, %v8718
        %v9375 = vpack.c.b16 %v8727, %v8723
        %v9376 = vpack.c.b16 %v8728, %v8724
        %v9377 = vpack.c.b16 %v8729, %v8725
        %v9378 = vpack.c.b16 %v8730, %v8726
        %v9379 = vpack.c.b16 %v8735, %v8731
        %v9380 = vpack.c.b16 %v8736, %v8732
        %v9381 = vpack.c.b16 %v8737, %v8733
        %v9382 = vpack.c.b16 %v8738, %v8734
        %v9383 = vpack.c.b16 %v8743, %v8739
        %v9384 = vpack.c.b16 %v8744, %v8740
        %v9385 = vpack.c.b16 %v8745, %v8741
        %v9386 = vpack.c.b16 %v8746, %v8742
        %v9387 = vpack.c.b16 %v8751, %v8747
        %v9388 = vpack.c.b16 %v8752, %v8748
        %v9389 = vpack.c.b16 %v8753, %v8749
        %v9390 = vpack.c.b16 %v8754, %v8750
        %v9391 = vpack.c.b16 %v8759, %v8755
        %v9392 = vpack.c.b16 %v8760, %v8756
        %v9393 = vpack.c.b16 %v8761, %v8757
        %v9394 = vpack.c.b16 %v8762, %v8758
        %v9395 = vpack.c.b16 %v8767, %v8763
        %v9396 = vpack.c.b16 %v8768, %v8764
        %v9397 = vpack.c.b16 %v8769, %v8765
        %v9398 = vpack.c.b16 %v8770, %v8766
        %v9399 = vpack.c.b16 %v8775, %v8771
        %v9400 = vpack.c.b16 %v8776, %v8772
        %v9401 = vpack.c.b16 %v8777, %v8773
        %v9402 = vpack.c.b16 %v8778, %v8774
        %v9403 = vpack.c.b16 %v8783, %v8779
        %v9404 = vpack.c.b16 %v8784, %v8780
        %v9405 = vpack.c.b16 %v8785, %v8781
        %v9406 = vpack.c.b16 %v8786, %v8782
        %v9407 = vpack.c.b16 %v8791, %v8787
        %v9408 = vpack.c.b16 %v8792, %v8788
        %v9409 = vpack.c.b16 %v8793, %v8789
        %v9410 = vpack.c.b16 %v8794, %v8790
        %v9411 = vpack.c.b16 %v8799, %v8795
        %v9412 = vpack.c.b16 %v8800, %v8796
        %v9413 = vpack.c.b16 %v8801, %v8797
        %v9414 = vpack.c.b16 %v8802, %v8798
        %v9415 = vpack.c.b16 %v8807, %v8803
        %v9416 = vpack.c.b16 %v8808, %v8804
        %v9417 = vpack.c.b16 %v8809, %v8805
        %v9418 = vpack.c.b16 %v8810, %v8806
        %v9419 = vpack.c.b16 %v8815, %v8811
        %v9420 = vpack.c.b16 %v8816, %v8812
        %v9421 = vpack.c.b16 %v8817, %v8813
        %v9422 = vpack.c.b16 %v8818, %v8814
        %v9423 = vpack.c.b16 %v8823, %v8819
        %v9424 = vpack.c.b16 %v8824, %v8820
        %v9425 = vpack.c.b16 %v8825, %v8821
        %v9426 = vpack.c.b16 %v8826, %v8822
        %v9427 = vpack.c.b16 %v8831, %v8827
        %v9428 = vpack.c.b16 %v8832, %v8828
        %v9429 = vpack.c.b16 %v8833, %v8829
        %v9430 = vpack.c.b16 %v8834, %v8830
        %v9431 = vpack.c.b16 %v8839, %v8835
        %v9432 = vpack.c.b16 %v8840, %v8836
        %v9433 = vpack.c.b16 %v8841, %v8837
        %v9434 = vpack.c.b16 %v8842, %v8838
        %v9435 = vpack.c.b16 %v8847, %v8843
        %v9436 = vpack.c.b16 %v8848, %v8844
        %v9437 = vpack.c.b16 %v8849, %v8845
        %v9438 = vpack.c.b16 %v8850, %v8846
        %v9439 = vpack.c.b16 %v8855, %v8851
        %v9440 = vpack.c.b16 %v8856, %v8852
        %v9441 = vpack.c.b16 %v8857, %v8853
        %v9442 = vpack.c.b16 %v8858, %v8854
        %v9443 = vpack.c.b16 %v8863, %v8859
        %v9444 = vpack.c.b16 %v8864, %v8860
        %v9445 = vpack.c.b16 %v8865, %v8861
        %v9446 = vpack.c.b16 %v8866, %v8862
        %v9447 = vpack.c.b16 %v8871, %v8867
        %v9448 = vpack.c.b16 %v8872, %v8868
        %v9449 = vpack.c.b16 %v8873, %v8869
        %v9450 = vpack.c.b16 %v8874, %v8870
        %v9451 = vpack.c.b16 %v8879, %v8875
        %v9452 = vpack.c.b16 %v8880, %v8876
        %v9453 = vpack.c.b16 %v8881, %v8877
        %v9454 = vpack.c.b16 %v8882, %v8878
        %v9455 = vpack.c.b16 %v8887, %v8883
        %v9456 = vpack.c.b16 %v8888, %v8884
        %v9457 = vpack.c.b16 %v8889, %v8885
        %v9458 = vpack.c.b16 %v8890, %v8886
        %v9459 = vpack.c.b16 %v8895, %v8891
        %v9460 = vpack.c.b16 %v8896, %v8892
        %v9461 = vpack.c.b16 %v8897, %v8893
        %v9462 = vpack.c.b16 %v8898, %v8894
        %v9463 = vpack.c.b16 %v8903, %v8899
        %v9464 = vpack.c.b16 %v8904, %v8900
        %v9465 = vpack.c.b16 %v8905, %v8901
        %v9466 = vpack.c.b16 %v8906, %v8902
        %v9467 = vpack.c.b16 %v8911, %v8907
        %v9468 = vpack.c.b16 %v8912, %v8908
        %v9469 = vpack.c.b16 %v8913, %v8909
        %v9470 = vpack.c.b16 %v8914, %v8910
        %v9471 = vpack.c.b16 %v8919, %v8915
        %v9472 = vpack.c.b16 %v8920, %v8916
        %v9473 = vpack.c.b16 %v8921, %v8917
        %v9474 = vpack.c.b16 %v8922, %v8918
        %v9475 = vpack.c.b16 %v8927, %v8923
        %v9476 = vpack.c.b16 %v8928, %v8924
        %v9477 = vpack.c.b16 %v8929, %v8925
        %v9478 = vpack.c.b16 %v8930, %v8926
        %v9479 = vpack.c.b16 %v8935, %v8931
        %v9480 = vpack.c.b16 %v8936, %v8932
        %v9481 = vpack.c.b16 %v8937, %v8933
        %v9482 = vpack.c.b16 %v8938, %v8934
        %v9483 = vpack.c.b16 %v8943, %v8939
        %v9484 = vpack.c.b16 %v8944, %v8940
        %v9485 = vpack.c.b16 %v8945, %v8941
        %v9486 = vpack.c.b16 %v8946, %v8942
        %v9487 = vpack.c.b16 %v8951, %v8947
        %v9488 = vpack.c.b16 %v8952, %v8948
        %v9489 = vpack.c.b16 %v8953, %v8949
        %v9490 = vpack.c.b16 %v8954, %v8950
        %v9491 = vpack.c.b16 %v8959, %v8955
        %v9492 = vpack.c.b16 %v8960, %v8956
        %v9493 = vpack.c.b16 %v8961, %v8957
        %v9494 = vpack.c.b16 %v8962, %v8958
        %v9495 = vpack.c.b16 %v8967, %v8963
        %v9496 = vpack.c.b16 %v8968, %v8964
        %v9497 = vpack.c.b16 %v8969, %v8965
        %v9498 = vpack.c.b16 %v8970, %v8966
        %v9499 = vpack.c.b16 %v8975, %v8971
        %v9500 = vpack.c.b16 %v8976, %v8972
        %v9501 = vpack.c.b16 %v8977, %v8973
        %v9502 = vpack.c.b16 %v8978, %v8974
        %v9503 = vpack.c.b16 %v8983, %v8979
        %v9504 = vpack.c.b16 %v8984, %v8980
        %v9505 = vpack.c.b16 %v8985, %v8981
        %v9506 = vpack.c.b16 %v8986, %v8982
        %v9507 = vpack.c.b16 %v8991, %v8987
        %v9508 = vpack.c.b16 %v8992, %v8988
        %v9509 = vpack.c.b16 %v8993, %v8989
        %v9510 = vpack.c.b16 %v8994, %v8990
        %v9511 = vpack.c.b16 %v8999, %v8995
        %v9512 = vpack.c.b16 %v9000, %v8996
        %v9513 = vpack.c.b16 %v9001, %v8997
        %v9514 = vpack.c.b16 %v9002, %v8998
        %v9515 = vpack.c.b16 %v9007, %v9003
        %v9516 = vpack.c.b16 %v9008, %v9004
        %v9517 = vpack.c.b16 %v9009, %v9005
        %v9518 = vpack.c.b16 %v9010, %v9006
        %v9519 = vpack.c.b16 %v9015, %v9011
        %v9520 = vpack.c.b16 %v9016, %v9012
        %v9521 = vpack.c.b16 %v9017, %v9013
        %v9522 = vpack.c.b16 %v9018, %v9014
        %v9523 = vpack.c.b16 %v9023, %v9019
        %v9524 = vpack.c.b16 %v9024, %v9020
        %v9525 = vpack.c.b16 %v9025, %v9021
        %v9526 = vpack.c.b16 %v9026, %v9022
        %v9527 = vpack.c.b16 %v9031, %v9027
        %v9528 = vpack.c.b16 %v9032, %v9028
        %v9529 = vpack.c.b16 %v9033, %v9029
        %v9530 = vpack.c.b16 %v9034, %v9030
        %v9531 = vpack.c.b16 %v9039, %v9035
        %v9532 = vpack.c.b16 %v9040, %v9036
        %v9533 = vpack.c.b16 %v9041, %v9037
        %v9534 = vpack.c.b16 %v9042, %v9038
        %v9535 = vpack.c.b16 %v9047, %v9043
        %v9536 = vpack.c.b16 %v9048, %v9044
        %v9537 = vpack.c.b16 %v9049, %v9045
        %v9538 = vpack.c.b16 %v9050, %v9046
        %v9539 = vpack.c.b16 %v9055, %v9051
        %v9540 = vpack.c.b16 %v9056, %v9052
        %v9541 = vpack.c.b16 %v9057, %v9053
        %v9542 = vpack.c.b16 %v9058, %v9054
        %v9543 = vpack.c.b16 %v9063, %v9059
        %v9544 = vpack.c.b16 %v9064, %v9060
        %v9545 = vpack.c.b16 %v9065, %v9061
        %v9546 = vpack.c.b16 %v9066, %v9062
        %v9547 = vpack.c.b16 %v9071, %v9067
        %v9548 = vpack.c.b16 %v9072, %v9068
        %v9549 = vpack.c.b16 %v9073, %v9069
        %v9550 = vpack.c.b16 %v9074, %v9070
        %v9551 = vpack.c.b16 %v9079, %v9075
        %v9552 = vpack.c.b16 %v9080, %v9076
        %v9553 = vpack.c.b16 %v9081, %v9077
        %v9554 = vpack.c.b16 %v9082, %v9078
        %v9555 = vpack.c.b16 %v9087, %v9083
        %v9556 = vpack.c.b16 %v9088, %v9084
        %v9557 = vpack.c.b16 %v9089, %v9085
        %v9558 = vpack.c.b16 %v9090, %v9086
        %v9559 = vpack.c.b16 %v9095, %v9091
        %v9560 = vpack.c.b16 %v9096, %v9092
        %v9561 = vpack.c.b16 %v9097, %v9093
        %v9562 = vpack.c.b16 %v9098, %v9094
        %v9563 = vpack.c.b16 %v9103, %v9099
        %v9564 = vpack.c.b16 %v9104, %v9100
        %v9565 = vpack.c.b16 %v9105, %v9101
        %v9566 = vpack.c.b16 %v9106, %v9102
        %v9567 = vpack.c.b16 %v9111, %v9107
        %v9568 = vpack.c.b16 %v9112, %v9108
        %v9569 = vpack.c.b16 %v9113, %v9109
        %v9570 = vpack.c.b16 %v9114, %v9110
        %v9571 = vpack.c.b16 %v9119, %v9115
        %v9572 = vpack.c.b16 %v9120, %v9116
        %v9573 = vpack.c.b16 %v9121, %v9117
        %v9574 = vpack.c.b16 %v9122, %v9118
        %v9575 = vpack.c.b16 %v9127, %v9123
        %v9576 = vpack.c.b16 %v9128, %v9124
        %v9577 = vpack.c.b16 %v9129, %v9125
        %v9578 = vpack.c.b16 %v9130, %v9126
        %v9579 = vpack.c.b16 %v9135, %v9131
        %v9580 = vpack.c.b16 %v9136, %v9132
        %v9581 = vpack.c.b16 %v9137, %v9133
        %v9582 = vpack.c.b16 %v9138, %v9134
        %v9583 = vpack.c.b16 %v9143, %v9139
        %v9584 = vpack.c.b16 %v9144, %v9140
        %v9585 = vpack.c.b16 %v9145, %v9141
        %v9586 = vpack.c.b16 %v9146, %v9142
        %v9587 = vpack.c.b16 %v9151, %v9147
        %v9588 = vpack.c.b16 %v9152, %v9148
        %v9589 = vpack.c.b16 %v9153, %v9149
        %v9590 = vpack.c.b16 %v9154, %v9150
        %v9591 = vpack.c.b16 %v9159, %v9155
        %v9592 = vpack.c.b16 %v9160, %v9156
        %v9593 = vpack.c.b16 %v9161, %v9157
        %v9594 = vpack.c.b16 %v9162, %v9158
        %v9595 = vpack.c.b16 %v9167, %v9163
        %v9596 = vpack.c.b16 %v9168, %v9164
        %v9597 = vpack.c.b16 %v9169, %v9165
        %v9598 = vpack.c.b16 %v9170, %v9166
        %v9599 = vpack.c.b16 %v9175, %v9171
        %v9600 = vpack.c.b16 %v9176, %v9172
        %v9601 = vpack.c.b16 %v9177, %v9173
        %v9602 = vpack.c.b16 %v9178, %v9174
        %v9603 = vpack.c.b16 %v9183, %v9179
        %v9604 = vpack.c.b16 %v9184, %v9180
        %v9605 = vpack.c.b16 %v9185, %v9181
        %v9606 = vpack.c.b16 %v9186, %v9182
        %v9607 = vpack.c.b16 %v9191, %v9187
        %v9608 = vpack.c.b16 %v9192, %v9188
        %v9609 = vpack.c.b16 %v9193, %v9189
        %v9610 = vpack.c.b16 %v9194, %v9190
        %v9611 = vpack.c.b16 %v9199, %v9195
        %v9612 = vpack.c.b16 %v9200, %v9196
        %v9613 = vpack.c.b16 %v9201, %v9197
        %v9614 = vpack.c.b16 %v9202, %v9198
        %v9615 = vpack.c.b16 %v9207, %v9203
        %v9616 = vpack.c.b16 %v9208, %v9204
        %v9617 = vpack.c.b16 %v9209, %v9205
        %v9618 = vpack.c.b16 %v9210, %v9206
        %v9619 = vpack.c.b16 %v9215, %v9211
        %v9620 = vpack.c.b16 %v9216, %v9212
        %v9621 = vpack.c.b16 %v9217, %v9213
        %v9622 = vpack.c.b16 %v9218, %v9214
        %v9623 = vpack.c.b16 %v9223, %v9219
        %v9624 = vpack.c.b16 %v9224, %v9220
        %v9625 = vpack.c.b16 %v9225, %v9221
        %v9626 = vpack.c.b16 %v9226, %v9222
        %v9627 = vpack.c.b16 %v9231, %v9227
        %v9628 = vpack.c.b16 %v9232, %v9228
        %v9629 = vpack.c.b16 %v9233, %v9229
        %v9630 = vpack.c.b16 %v9234, %v9230
        %v9631 = vpack.c.b16 %v9239, %v9235
        %v9632 = vpack.c.b16 %v9240, %v9236
        %v9633 = vpack.c.b16 %v9241, %v9237
        %v9634 = vpack.c.b16 %v9242, %v9238
        %v9635 = vpack.c.b16 %v9247, %v9243
        %v9636 = vpack.c.b16 %v9248, %v9244
        %v9637 = vpack.c.b16 %v9249, %v9245
        %v9638 = vpack.c.b16 %v9250, %v9246
        %v9639 = vpack.c.b16 %v9255, %v9251
        %v9640 = vpack.c.b16 %v9256, %v9252
        %v9641 = vpack.c.b16 %v9257, %v9253
        %v9642 = vpack.c.b16 %v9258, %v9254
        %10027 = vmatprep.subr.bf16.mxu0 %v9288
        %10028 = vmatpush1.bf16.msra.mxu0 %v9287
        %10029 = vmatprep.subr.bf16.mxu0 %v9284
        %10030 = vmatpush1.bf16.msra.mxu0 %v9283
        %10031 = vmatprep.subr.bf16.mxu0 %v9280
        %10032 = vmatpush1.bf16.msra.mxu0 %v9279
        %10033 = vmatprep.subr.bf16.mxu0 %v9276
        %10034 = vmatpush1.bf16.msra.mxu0 %v9275
        %10035 = vmatprep.subr.bf16.mxu0 %v9272
        %10036 = vmatpush1.bf16.msra.mxu0 %v9271
        %10037 = vmatprep.subr.bf16.mxu0 %v9268
        %10038 = vmatpush1.bf16.msra.mxu0 %v9267
        %10039 = vmatprep.subr.bf16.mxu0 %v9264
        %10040 = vmatpush1.bf16.msra.mxu0 %v9263
        %10041 = vmatprep.subr.bf16.mxu0 %v9260
        %10042 = vmatpush1.bf16.msra.mxu0 %v9259
        %10043 = vmatprep.subr.bf16.mxu0 %v9320
        %10044 = vmatpush2.bf16.msra.mxu0 %v9319
        %10045 = vmatprep.subr.bf16.mxu0 %v9316
        %10046 = vmatpush2.bf16.msra.mxu0 %v9315
        %10047 = vmatprep.subr.bf16.mxu0 %v9312
        %10048 = vmatpush2.bf16.msra.mxu0 %v9311
        %10049 = vmatprep.subr.bf16.mxu0 %v9308
        %10050 = vmatpush2.bf16.msra.mxu0 %v9307
        %10051 = vmatprep.subr.bf16.mxu0 %v9304
        %10052 = vmatpush2.bf16.msra.mxu0 %v9303
        %10053 = vmatprep.subr.bf16.mxu0 %v9300
        %10054 = vmatpush2.bf16.msra.mxu0 %v9299
        %10055 = vmatprep.subr.bf16.mxu0 %v9296
        %10056 = vmatpush2.bf16.msra.mxu0 %v9295
        %10057 = vmatprep.subr.bf16.mxu0 %v9292
        %10058 = vmatpush2.bf16.msra.mxu0 %v9291
        %10059 = vmatprep.mubr.bf16.mxu0 %v8059
        %10060 = vmatmul.mubr.bf16.gmra.mxu0 %v8045
        %v10061 = vpop.f32.mrf.mxu0
        %v10062 = vadd.f32 0.0, %v10061
        %v10063 = vpop.f32.mrf.mxu0
        %v10064 = vadd.f32 0.0, %v10063
        %v10065 = vpop.f32.mrf.mxu0
        %v10066 = vpop.f32.mrf.mxu0
        %10067 = vdwg.mxu0
        %10068 = vmatprep.subr.bf16.mxu0 %v9352
        %10069 = vmatpush1.bf16.msra.mxu0 %v9351
        %10070 = vmatprep.subr.bf16.mxu0 %v9348
        %10071 = vmatpush1.bf16.msra.mxu0 %v9347
        %10072 = vmatprep.subr.bf16.mxu0 %v9344
        %10073 = vmatpush1.bf16.msra.mxu0 %v9343
        %10074 = vmatprep.subr.bf16.mxu0 %v9340
        %10075 = vmatpush1.bf16.msra.mxu0 %v9339
        %10076 = vmatprep.subr.bf16.mxu0 %v9336
        %10077 = vmatpush1.bf16.msra.mxu0 %v9335
        %10078 = vmatprep.subr.bf16.mxu0 %v9332
        %10079 = vmatpush1.bf16.msra.mxu0 %v9331
        %10080 = vmatprep.subr.bf16.mxu0 %v9328
        %10081 = vmatpush1.bf16.msra.mxu0 %v9327
        %10082 = vmatprep.subr.bf16.mxu0 %v9324
        %10083 = vmatpush1.bf16.msra.mxu0 %v9323
        %10084 = vmatprep.subr.bf16.mxu0 %v9384
        %10085 = vmatpush2.bf16.msra.mxu0 %v9383
        %10086 = vmatprep.subr.bf16.mxu0 %v9380
        %10087 = vmatpush2.bf16.msra.mxu0 %v9379
        %10088 = vmatprep.subr.bf16.mxu0 %v9376
        %10089 = vmatpush2.bf16.msra.mxu0 %v9375
        %10090 = vmatprep.subr.bf16.mxu0 %v9372
        %10091 = vmatpush2.bf16.msra.mxu0 %v9371
        %10092 = vmatprep.subr.bf16.mxu0 %v9368
        %10093 = vmatpush2.bf16.msra.mxu0 %v9367
        %10094 = vmatprep.subr.bf16.mxu0 %v9364
        %10095 = vmatpush2.bf16.msra.mxu0 %v9363
        %10096 = vmatprep.subr.bf16.mxu0 %v9360
        %10097 = vmatpush2.bf16.msra.mxu0 %v9359
        %10098 = vmatprep.subr.bf16.mxu0 %v9356
        %10099 = vmatpush2.bf16.msra.mxu0 %v9355
        %10100 = vmatprep.mubr.bf16.mxu0 %v8069
        %10101 = vmatmul.mubr.bf16.gmra.mxu0 %v8067
        %v10102 = vpop.f32.mrf.mxu0
        %v10103 = vadd.f32 %v10062, %v10102
        %v10104 = vpop.f32.mrf.mxu0
        %v10105 = vadd.f32 %v10064, %v10104
        %v10106 = vpop.f32.mrf.mxu0
        %v10107 = vpop.f32.mrf.mxu0
        %10108 = vdwg.mxu0
        %10109 = vmatprep.subr.bf16.mxu0 %v9416
        %10110 = vmatpush1.bf16.msra.mxu0 %v9415
        %10111 = vmatprep.subr.bf16.mxu0 %v9412
        %10112 = vmatpush1.bf16.msra.mxu0 %v9411
        %10113 = vmatprep.subr.bf16.mxu0 %v9408
        %10114 = vmatpush1.bf16.msra.mxu0 %v9407
        %10115 = vmatprep.subr.bf16.mxu0 %v9404
        %10116 = vmatpush1.bf16.msra.mxu0 %v9403
        %10117 = vmatprep.subr.bf16.mxu0 %v9400
        %10118 = vmatpush1.bf16.msra.mxu0 %v9399
        %10119 = vmatprep.subr.bf16.mxu0 %v9396
        %10120 = vmatpush1.bf16.msra.mxu0 %v9395
        %10121 = vmatprep.subr.bf16.mxu0 %v9392
        %10122 = vmatpush1.bf16.msra.mxu0 %v9391
        %10123 = vmatprep.subr.bf16.mxu0 %v9388
        %10124 = vmatpush1.bf16.msra.mxu0 %v9387
        %10125 = vmatprep.subr.bf16.mxu0 %v9448
        %10126 = vmatpush2.bf16.msra.mxu0 %v9447
        %10127 = vmatprep.subr.bf16.mxu0 %v9444
        %10128 = vmatpush2.bf16.msra.mxu0 %v9443
        %10129 = vmatprep.subr.bf16.mxu0 %v9440
        %10130 = vmatpush2.bf16.msra.mxu0 %v9439
        %10131 = vmatprep.subr.bf16.mxu0 %v9436
        %10132 = vmatpush2.bf16.msra.mxu0 %v9435
        %10133 = vmatprep.subr.bf16.mxu0 %v9432
        %10134 = vmatpush2.bf16.msra.mxu0 %v9431
        %10135 = vmatprep.subr.bf16.mxu0 %v9428
        %10136 = vmatpush2.bf16.msra.mxu0 %v9427
        %10137 = vmatprep.subr.bf16.mxu0 %v9424
        %10138 = vmatpush2.bf16.msra.mxu0 %v9423
        %10139 = vmatprep.subr.bf16.mxu0 %v9420
        %10140 = vmatpush2.bf16.msra.mxu0 %v9419
        %10141 = vmatprep.mubr.bf16.mxu0 %v8066
        %10142 = vmatmul.mubr.bf16.gmra.mxu0 %v8052
        %v10143 = vpop.f32.mrf.mxu0
        %v10144 = vadd.f32 %v10103, %v10143
        %v10145 = vpop.f32.mrf.mxu0
        %v10146 = vadd.f32 %v10105, %v10145
        %v10147 = vpop.f32.mrf.mxu0
        %v10148 = vpop.f32.mrf.mxu0
        %10149 = vdwg.mxu0
        %10150 = vmatprep.subr.bf16.mxu0 %v9480
        %10151 = vmatpush1.bf16.msra.mxu0 %v9479
        %10152 = vmatprep.subr.bf16.mxu0 %v9476
        %10153 = vmatpush1.bf16.msra.mxu0 %v9475
        %10154 = vmatprep.subr.bf16.mxu0 %v9472
        %10155 = vmatpush1.bf16.msra.mxu0 %v9471
        %10156 = vmatprep.subr.bf16.mxu0 %v9468
        %10157 = vmatpush1.bf16.msra.mxu0 %v9467
        %10158 = vmatprep.subr.bf16.mxu0 %v9464
        %10159 = vmatpush1.bf16.msra.mxu0 %v9463
        %10160 = vmatprep.subr.bf16.mxu0 %v9460
        %10161 = vmatpush1.bf16.msra.mxu0 %v9459
        %10162 = vmatprep.subr.bf16.mxu0 %v9456
        %10163 = vmatpush1.bf16.msra.mxu0 %v9455
        %10164 = vmatprep.subr.bf16.mxu0 %v9452
        %10165 = vmatpush1.bf16.msra.mxu0 %v9451
        %10166 = vmatprep.subr.bf16.mxu0 %v9512
        %10167 = vmatpush2.bf16.msra.mxu0 %v9511
        %10168 = vmatprep.subr.bf16.mxu0 %v9508
        %10169 = vmatpush2.bf16.msra.mxu0 %v9507
        %10170 = vmatprep.subr.bf16.mxu0 %v9504
        %10171 = vmatpush2.bf16.msra.mxu0 %v9503
        %10172 = vmatprep.subr.bf16.mxu0 %v9500
        %10173 = vmatpush2.bf16.msra.mxu0 %v9499
        %10174 = vmatprep.subr.bf16.mxu0 %v9496
        %10175 = vmatpush2.bf16.msra.mxu0 %v9495
        %10176 = vmatprep.subr.bf16.mxu0 %v9492
        %10177 = vmatpush2.bf16.msra.mxu0 %v9491
        %10178 = vmatprep.subr.bf16.mxu0 %v9488
        %10179 = vmatpush2.bf16.msra.mxu0 %v9487
        %10180 = vmatprep.subr.bf16.mxu0 %v9484
        %10181 = vmatpush2.bf16.msra.mxu0 %v9483
        %10182 = vmatprep.mubr.bf16.mxu0 %v8070
        %10183 = vmatmul.mubr.bf16.gmra.mxu0 %v8068
        %v10184 = vpop.f32.mrf.mxu0
        %v10185 = vadd.f32 %v10144, %v10184
        %v10186 = vpop.f32.mrf.mxu0
        %v10187 = vadd.f32 %v10146, %v10186
        %v10188 = vpop.f32.mrf.mxu0
        %v10189 = vpop.f32.mrf.mxu0
        %10190 = vdwg.mxu0
        %10191 = vmatprep.subr.bf16.mxu0 %v9544
        %10192 = vmatpush1.bf16.msra.mxu0 %v9543
        %10193 = vmatprep.subr.bf16.mxu0 %v9540
        %10194 = vmatpush1.bf16.msra.mxu0 %v9539
        %10195 = vmatprep.subr.bf16.mxu0 %v9536
        %10196 = vmatpush1.bf16.msra.mxu0 %v9535
        %10197 = vmatprep.subr.bf16.mxu0 %v9532
        %10198 = vmatpush1.bf16.msra.mxu0 %v9531
        %10199 = vmatprep.subr.bf16.mxu0 %v9528
        %10200 = vmatpush1.bf16.msra.mxu0 %v9527
        %10201 = vmatprep.subr.bf16.mxu0 %v9524
        %10202 = vmatpush1.bf16.msra.mxu0 %v9523
        %10203 = vmatprep.subr.bf16.mxu0 %v9520
        %10204 = vmatpush1.bf16.msra.mxu0 %v9519
        %10205 = vmatprep.subr.bf16.mxu0 %v9516
        %10206 = vmatpush1.bf16.msra.mxu0 %v9515
        %10207 = vmatprep.subr.bf16.mxu0 %v9576
        %10208 = vmatpush2.bf16.msra.mxu0 %v9575
        %10209 = vmatprep.subr.bf16.mxu0 %v9572
        %10210 = vmatpush2.bf16.msra.mxu0 %v9571
        %10211 = vmatprep.subr.bf16.mxu0 %v9568
        %10212 = vmatpush2.bf16.msra.mxu0 %v9567
        %10213 = vmatprep.subr.bf16.mxu0 %v9564
        %10214 = vmatpush2.bf16.msra.mxu0 %v9563
        %10215 = vmatprep.subr.bf16.mxu0 %v9560
        %10216 = vmatpush2.bf16.msra.mxu0 %v9559
        %10217 = vmatprep.subr.bf16.mxu0 %v9556
        %10218 = vmatpush2.bf16.msra.mxu0 %v9555
        %10219 = vmatprep.subr.bf16.mxu0 %v9552
        %10220 = vmatpush2.bf16.msra.mxu0 %v9551
        %10221 = vmatprep.subr.bf16.mxu0 %v9548
        %10222 = vmatpush2.bf16.msra.mxu0 %v9547
        %10223 = vmatprep.mubr.bf16.mxu0 %v8092
        %10224 = vmatmul.mubr.bf16.gmra.mxu0 %v8085
        %v10225 = vpop.f32.mrf.mxu0
        %v10226 = vadd.f32 %v10185, %v10225
        %v10227 = vpop.f32.mrf.mxu0
        %v10228 = vadd.f32 %v10187, %v10227
        %v10229 = vpop.f32.mrf.mxu0
        %v10230 = vpop.f32.mrf.mxu0
        %10231 = vdwg.mxu0
        %10232 = vmatprep.subr.bf16.mxu0 %v9608
        %10233 = vmatpush1.bf16.msra.mxu0 %v9607
        %10234 = vmatprep.subr.bf16.mxu0 %v9604
        %10235 = vmatpush1.bf16.msra.mxu0 %v9603
        %10236 = vmatprep.subr.bf16.mxu0 %v9600
        %10237 = vmatpush1.bf16.msra.mxu0 %v9599
        %10238 = vmatprep.subr.bf16.mxu0 %v9596
        %10239 = vmatpush1.bf16.msra.mxu0 %v9595
        %10240 = vmatprep.subr.bf16.mxu0 %v9592
        %10241 = vmatpush1.bf16.msra.mxu0 %v9591
        %10242 = vmatprep.subr.bf16.mxu0 %v9588
        %10243 = vmatpush1.bf16.msra.mxu0 %v9587
        %10244 = vmatprep.subr.bf16.mxu0 %v9584
        %10245 = vmatpush1.bf16.msra.mxu0 %v9583
        %10246 = vmatprep.subr.bf16.mxu0 %v9580
        %10247 = vmatpush1.bf16.msra.mxu0 %v9579
        %10248 = vmatprep.subr.bf16.mxu0 %v9640
        %10249 = vmatpush2.bf16.msra.mxu0 %v9639
        %10250 = vmatprep.subr.bf16.mxu0 %v9636
        %10251 = vmatpush2.bf16.msra.mxu0 %v9635
        %10252 = vmatprep.subr.bf16.mxu0 %v9632
        %10253 = vmatpush2.bf16.msra.mxu0 %v9631
        %10254 = vmatprep.subr.bf16.mxu0 %v9628
        %10255 = vmatpush2.bf16.msra.mxu0 %v9627
        %10256 = vmatprep.subr.bf16.mxu0 %v9624
        %10257 = vmatpush2.bf16.msra.mxu0 %v9623
        %10258 = vmatprep.subr.bf16.mxu0 %v9620
        %10259 = vmatpush2.bf16.msra.mxu0 %v9619
        %10260 = vmatprep.subr.bf16.mxu0 %v9616
        %10261 = vmatpush2.bf16.msra.mxu0 %v9615
        %10262 = vmatprep.subr.bf16.mxu0 %v9612
        %10263 = vmatpush2.bf16.msra.mxu0 %v9611
        %10264 = vmatprep.mubr.bf16.mxu0 %v8094
        %10265 = vmatmul.mubr.bf16.gmra.mxu0 %v8093
        %v10266 = vpop.f32.mrf.mxu0
        %v10267 = vadd.f32 %v10226, %v10266
        %v10268 = vpop.f32.mrf.mxu0
        %v10269 = vadd.f32 %v10228, %v10268
        %v10270 = vpop.f32.mrf.mxu0
        %v10271 = vpop.f32.mrf.mxu0
        %10272 = vdwg.mxu0
        %10273 = vmatprep.subr.bf16.mxu0 %v9290
        %10274 = vmatpush1.bf16.msra.mxu0 %v9289
        %10275 = vmatprep.subr.bf16.mxu0 %v9286
        %10276 = vmatpush1.bf16.msra.mxu0 %v9285
        %10277 = vmatprep.subr.bf16.mxu0 %v9282
        %10278 = vmatpush1.bf16.msra.mxu0 %v9281
        %10279 = vmatprep.subr.bf16.mxu0 %v9278
        %10280 = vmatpush1.bf16.msra.mxu0 %v9277
        %10281 = vmatprep.subr.bf16.mxu0 %v9274
        %10282 = vmatpush1.bf16.msra.mxu0 %v9273
        %10283 = vmatprep.subr.bf16.mxu0 %v9270
        %10284 = vmatpush1.bf16.msra.mxu0 %v9269
        %10285 = vmatprep.subr.bf16.mxu0 %v9266
        %10286 = vmatpush1.bf16.msra.mxu0 %v9265
        %10287 = vmatprep.subr.bf16.mxu0 %v9262
        %10288 = vmatpush1.bf16.msra.mxu0 %v9261
        %10289 = vmatprep.subr.bf16.mxu0 %v9322
        %10290 = vmatpush2.bf16.msra.mxu0 %v9321
        %10291 = vmatprep.subr.bf16.mxu0 %v9318
        %10292 = vmatpush2.bf16.msra.mxu0 %v9317
        %10293 = vmatprep.subr.bf16.mxu0 %v9314
        %10294 = vmatpush2.bf16.msra.mxu0 %v9313
        %10295 = vmatprep.subr.bf16.mxu0 %v9310
        %10296 = vmatpush2.bf16.msra.mxu0 %v9309
        %10297 = vmatprep.subr.bf16.mxu0 %v9306
        %10298 = vmatpush2.bf16.msra.mxu0 %v9305
        %10299 = vmatprep.subr.bf16.mxu0 %v9302
        %10300 = vmatpush2.bf16.msra.mxu0 %v9301
        %10301 = vmatprep.subr.bf16.mxu0 %v9298
        %10302 = vmatpush2.bf16.msra.mxu0 %v9297
        %10303 = vmatprep.subr.bf16.mxu0 %v9294
        %10304 = vmatpush2.bf16.msra.mxu0 %v9293
        %10305 = vmatprep.mubr.bf16.mxu0 %v8059
        %10306 = vmatmul.mubr.bf16.gmra.mxu0 %v8045
        %v10307 = vpop.f32.mrf.mxu0
        %v10308 = vadd.f32 0.0, %v10307
        %v10309 = vpop.f32.mrf.mxu0
        %v10310 = vadd.f32 0.0, %v10309
        %v10311 = vpop.f32.mrf.mxu0
        %v10312 = vpop.f32.mrf.mxu0
        %10313 = vdwg.mxu0
        %10314 = vmatprep.subr.bf16.mxu0 %v9354
        %10315 = vmatpush1.bf16.msra.mxu0 %v9353
        %10316 = vmatprep.subr.bf16.mxu0 %v9350
        %10317 = vmatpush1.bf16.msra.mxu0 %v9349
        %10318 = vmatprep.subr.bf16.mxu0 %v9346
        %10319 = vmatpush1.bf16.msra.mxu0 %v9345
        %10320 = vmatprep.subr.bf16.mxu0 %v9342
        %10321 = vmatpush1.bf16.msra.mxu0 %v9341
        %10322 = vmatprep.subr.bf16.mxu0 %v9338
        %10323 = vmatpush1.bf16.msra.mxu0 %v9337
        %10324 = vmatprep.subr.bf16.mxu0 %v9334
        %10325 = vmatpush1.bf16.msra.mxu0 %v9333
        %10326 = vmatprep.subr.bf16.mxu0 %v9330
        %10327 = vmatpush1.bf16.msra.mxu0 %v9329
        %10328 = vmatprep.subr.bf16.mxu0 %v9326
        %10329 = vmatpush1.bf16.msra.mxu0 %v9325
        %10330 = vmatprep.subr.bf16.mxu0 %v9386
        %10331 = vmatpush2.bf16.msra.mxu0 %v9385
        %10332 = vmatprep.subr.bf16.mxu0 %v9382
        %10333 = vmatpush2.bf16.msra.mxu0 %v9381
        %10334 = vmatprep.subr.bf16.mxu0 %v9378
        %10335 = vmatpush2.bf16.msra.mxu0 %v9377
        %10336 = vmatprep.subr.bf16.mxu0 %v9374
        %10337 = vmatpush2.bf16.msra.mxu0 %v9373
        %10338 = vmatprep.subr.bf16.mxu0 %v9370
        %10339 = vmatpush2.bf16.msra.mxu0 %v9369
        %10340 = vmatprep.subr.bf16.mxu0 %v9366
        %10341 = vmatpush2.bf16.msra.mxu0 %v9365
        %10342 = vmatprep.subr.bf16.mxu0 %v9362
        %10343 = vmatpush2.bf16.msra.mxu0 %v9361
        %10344 = vmatprep.subr.bf16.mxu0 %v9358
        %10345 = vmatpush2.bf16.msra.mxu0 %v9357
        %10346 = vmatprep.mubr.bf16.mxu0 %v8069
        %10347 = vmatmul.mubr.bf16.gmra.mxu0 %v8067
        %v10348 = vpop.f32.mrf.mxu0
        %v10349 = vadd.f32 %v10308, %v10348
        %v10350 = vpop.f32.mrf.mxu0
        %v10351 = vadd.f32 %v10310, %v10350
        %v10352 = vpop.f32.mrf.mxu0
        %v10353 = vpop.f32.mrf.mxu0
        %10354 = vdwg.mxu0
        %10355 = vmatprep.subr.bf16.mxu0 %v9418
        %10356 = vmatpush1.bf16.msra.mxu0 %v9417
        %10357 = vmatprep.subr.bf16.mxu0 %v9414
        %10358 = vmatpush1.bf16.msra.mxu0 %v9413
        %10359 = vmatprep.subr.bf16.mxu0 %v9410
        %10360 = vmatpush1.bf16.msra.mxu0 %v9409
        %10361 = vmatprep.subr.bf16.mxu0 %v9406
        %10362 = vmatpush1.bf16.msra.mxu0 %v9405
        %10363 = vmatprep.subr.bf16.mxu0 %v9402
        %10364 = vmatpush1.bf16.msra.mxu0 %v9401
        %10365 = vmatprep.subr.bf16.mxu0 %v9398
        %10366 = vmatpush1.bf16.msra.mxu0 %v9397
        %10367 = vmatprep.subr.bf16.mxu0 %v9394
        %10368 = vmatpush1.bf16.msra.mxu0 %v9393
        %10369 = vmatprep.subr.bf16.mxu0 %v9390
        %10370 = vmatpush1.bf16.msra.mxu0 %v9389
        %10371 = vmatprep.subr.bf16.mxu0 %v9450
        %10372 = vmatpush2.bf16.msra.mxu0 %v9449
        %10373 = vmatprep.subr.bf16.mxu0 %v9446
        %10374 = vmatpush2.bf16.msra.mxu0 %v9445
        %10375 = vmatprep.subr.bf16.mxu0 %v9442
        %10376 = vmatpush2.bf16.msra.mxu0 %v9441
        %10377 = vmatprep.subr.bf16.mxu0 %v9438
        %10378 = vmatpush2.bf16.msra.mxu0 %v9437
        %10379 = vmatprep.subr.bf16.mxu0 %v9434
        %10380 = vmatpush2.bf16.msra.mxu0 %v9433
        %10381 = vmatprep.subr.bf16.mxu0 %v9430
        %10382 = vmatpush2.bf16.msra.mxu0 %v9429
        %10383 = vmatprep.subr.bf16.mxu0 %v9426
        %10384 = vmatpush2.bf16.msra.mxu0 %v9425
        %10385 = vmatprep.subr.bf16.mxu0 %v9422
        %10386 = vmatpush2.bf16.msra.mxu0 %v9421
        %10387 = vmatprep.mubr.bf16.mxu0 %v8066
        %10388 = vmatmul.mubr.bf16.gmra.mxu0 %v8052
        %v10389 = vpop.f32.mrf.mxu0
        %v10390 = vadd.f32 %v10349, %v10389
        %v10391 = vpop.f32.mrf.mxu0
        %v10392 = vadd.f32 %v10351, %v10391
        %v10393 = vpop.f32.mrf.mxu0
        %v10394 = vpop.f32.mrf.mxu0
        %10395 = vdwg.mxu0
        %10396 = vmatprep.subr.bf16.mxu0 %v9482
        %10397 = vmatpush1.bf16.msra.mxu0 %v9481
        %10398 = vmatprep.subr.bf16.mxu0 %v9478
        %10399 = vmatpush1.bf16.msra.mxu0 %v9477
        %10400 = vmatprep.subr.bf16.mxu0 %v9474
        %10401 = vmatpush1.bf16.msra.mxu0 %v9473
        %10402 = vmatprep.subr.bf16.mxu0 %v9470
        %10403 = vmatpush1.bf16.msra.mxu0 %v9469
        %10404 = vmatprep.subr.bf16.mxu0 %v9466
        %10405 = vmatpush1.bf16.msra.mxu0 %v9465
        %10406 = vmatprep.subr.bf16.mxu0 %v9462
        %10407 = vmatpush1.bf16.msra.mxu0 %v9461
        %10408 = vmatprep.subr.bf16.mxu0 %v9458
        %10409 = vmatpush1.bf16.msra.mxu0 %v9457
        %10410 = vmatprep.subr.bf16.mxu0 %v9454
        %10411 = vmatpush1.bf16.msra.mxu0 %v9453
        %10412 = vmatprep.subr.bf16.mxu0 %v9514
        %10413 = vmatpush2.bf16.msra.mxu0 %v9513
        %10414 = vmatprep.subr.bf16.mxu0 %v9510
        %10415 = vmatpush2.bf16.msra.mxu0 %v9509
        %10416 = vmatprep.subr.bf16.mxu0 %v9506
        %10417 = vmatpush2.bf16.msra.mxu0 %v9505
        %10418 = vmatprep.subr.bf16.mxu0 %v9502
        %10419 = vmatpush2.bf16.msra.mxu0 %v9501
        %10420 = vmatprep.subr.bf16.mxu0 %v9498
        %10421 = vmatpush2.bf16.msra.mxu0 %v9497
        %10422 = vmatprep.subr.bf16.mxu0 %v9494
        %10423 = vmatpush2.bf16.msra.mxu0 %v9493
        %10424 = vmatprep.subr.bf16.mxu0 %v9490
        %10425 = vmatpush2.bf16.msra.mxu0 %v9489
        %10426 = vmatprep.subr.bf16.mxu0 %v9486
        %10427 = vmatpush2.bf16.msra.mxu0 %v9485
        %10428 = vmatprep.mubr.bf16.mxu0 %v8070
        %10429 = vmatmul.mubr.bf16.gmra.mxu0 %v8068
        %v10430 = vpop.f32.mrf.mxu0
        %v10431 = vadd.f32 %v10390, %v10430
        %v10432 = vpop.f32.mrf.mxu0
        %v10433 = vadd.f32 %v10392, %v10432
        %v10434 = vpop.f32.mrf.mxu0
        %v10435 = vpop.f32.mrf.mxu0
        %10436 = vdwg.mxu0
        %10437 = vmatprep.subr.bf16.mxu0 %v9546
        %10438 = vmatpush1.bf16.msra.mxu0 %v9545
        %10439 = vmatprep.subr.bf16.mxu0 %v9542
        %10440 = vmatpush1.bf16.msra.mxu0 %v9541
        %10441 = vmatprep.subr.bf16.mxu0 %v9538
        %10442 = vmatpush1.bf16.msra.mxu0 %v9537
        %10443 = vmatprep.subr.bf16.mxu0 %v9534
        %10444 = vmatpush1.bf16.msra.mxu0 %v9533
        %10445 = vmatprep.subr.bf16.mxu0 %v9530
        %10446 = vmatpush1.bf16.msra.mxu0 %v9529
        %10447 = vmatprep.subr.bf16.mxu0 %v9526
        %10448 = vmatpush1.bf16.msra.mxu0 %v9525
        %10449 = vmatprep.subr.bf16.mxu0 %v9522
        %10450 = vmatpush1.bf16.msra.mxu0 %v9521
        %10451 = vmatprep.subr.bf16.mxu0 %v9518
        %10452 = vmatpush1.bf16.msra.mxu0 %v9517
        %10453 = vmatprep.subr.bf16.mxu0 %v9578
        %10454 = vmatpush2.bf16.msra.mxu0 %v9577
        %10455 = vmatprep.subr.bf16.mxu0 %v9574
        %10456 = vmatpush2.bf16.msra.mxu0 %v9573
        %10457 = vmatprep.subr.bf16.mxu0 %v9570
        %10458 = vmatpush2.bf16.msra.mxu0 %v9569
        %10459 = vmatprep.subr.bf16.mxu0 %v9566
        %10460 = vmatpush2.bf16.msra.mxu0 %v9565
        %10461 = vmatprep.subr.bf16.mxu0 %v9562
        %10462 = vmatpush2.bf16.msra.mxu0 %v9561
        %10463 = vmatprep.subr.bf16.mxu0 %v9558
        %10464 = vmatpush2.bf16.msra.mxu0 %v9557
        %10465 = vmatprep.subr.bf16.mxu0 %v9554
        %10466 = vmatpush2.bf16.msra.mxu0 %v9553
        %10467 = vmatprep.subr.bf16.mxu0 %v9550
        %10468 = vmatpush2.bf16.msra.mxu0 %v9549
        %10469 = vmatprep.mubr.bf16.mxu0 %v8092
        %10470 = vmatmul.mubr.bf16.gmra.mxu0 %v8085
        %v10471 = vpop.f32.mrf.mxu0
        %v10472 = vadd.f32 %v10431, %v10471
        %v10473 = vpop.f32.mrf.mxu0
        %v10474 = vadd.f32 %v10433, %v10473
        %v10475 = vpop.f32.mrf.mxu0
        %v10476 = vpop.f32.mrf.mxu0
        %10477 = vdwg.mxu0
        %10478 = vmatprep.subr.bf16.mxu0 %v9610
        %10479 = vmatpush1.bf16.msra.mxu0 %v9609
        %10480 = vmatprep.subr.bf16.mxu0 %v9606
        %10481 = vmatpush1.bf16.msra.mxu0 %v9605
        %10482 = vmatprep.subr.bf16.mxu0 %v9602
        %10483 = vmatpush1.bf16.msra.mxu0 %v9601
        %10484 = vmatprep.subr.bf16.mxu0 %v9598
        %10485 = vmatpush1.bf16.msra.mxu0 %v9597
        %10486 = vmatprep.subr.bf16.mxu0 %v9594
        %10487 = vmatpush1.bf16.msra.mxu0 %v9593
        %10488 = vmatprep.subr.bf16.mxu0 %v9590
        %10489 = vmatpush1.bf16.msra.mxu0 %v9589
        %10490 = vmatprep.subr.bf16.mxu0 %v9586
        %10491 = vmatpush1.bf16.msra.mxu0 %v9585
        %10492 = vmatprep.subr.bf16.mxu0 %v9582
        %10493 = vmatpush1.bf16.msra.mxu0 %v9581
        %10494 = vmatprep.subr.bf16.mxu0 %v9642
        %10495 = vmatpush2.bf16.msra.mxu0 %v9641
        %10496 = vmatprep.subr.bf16.mxu0 %v9638
        %10497 = vmatpush2.bf16.msra.mxu0 %v9637
        %10498 = vmatprep.subr.bf16.mxu0 %v9634
        %10499 = vmatpush2.bf16.msra.mxu0 %v9633
        %10500 = vmatprep.subr.bf16.mxu0 %v9630
        %10501 = vmatpush2.bf16.msra.mxu0 %v9629
        %10502 = vmatprep.subr.bf16.mxu0 %v9626
        %10503 = vmatpush2.bf16.msra.mxu0 %v9625
        %10504 = vmatprep.subr.bf16.mxu0 %v9622
        %10505 = vmatpush2.bf16.msra.mxu0 %v9621
        %10506 = vmatprep.subr.bf16.mxu0 %v9618
        %10507 = vmatpush2.bf16.msra.mxu0 %v9617
        %10508 = vmatprep.subr.bf16.mxu0 %v9614
        %10509 = vmatpush2.bf16.msra.mxu0 %v9613
        %10510 = vmatprep.mubr.bf16.mxu0 %v8094
        %10511 = vmatmul.mubr.bf16.gmra.mxu0 %v8093
        %v10512 = vpop.f32.mrf.mxu0
        %v10513 = vadd.f32 %v10472, %v10512
        %v10514 = vpop.f32.mrf.mxu0
        %v10515 = vadd.f32 %v10474, %v10514
        %v10516 = vpop.f32.mrf.mxu0
        %v10517 = vpop.f32.mrf.mxu0
        %10518 = vdwg.mxu0
        %v10523 = vcombine.low %v10267, %v10269
        %v10524 = vcombine.low %v10513, %v10515
        %v10526 = vunpack.c.l.s4 1983009808
        %v10527 = vunpack.c.0.s8 %v10526
        %v10528 = vlaneseq
        %v10529 = vshrl.u32 %v10528, 7
        %v10530 = vsub.s32 %v10527, %v10529
        %v10531 = vrot.slane %v10523, %v10530
        %v10533 = vunpack.c.l.s4 1983009808
        %v10534 = vunpack.c.0.s8 %v10533
        %v10535 = vlaneseq
        %v10536 = vshrl.u32 %v10535, 7
        %v10537 = vsub.s32 %v10534, %v10536
        %v10538 = vrot.slane %v10524, %v10537
        %v10539 = vcombine.low %v10531, %v10538
        %v10541 = vadd.f32 %v7631, %v10539
        %10542 = vst [vmem:[#allocation3] sm:$0xff] %v10541
        %p10543 = scmp.eq.s32.totalorder %s45, 2
        // Predicated region
        $region109: #{fwd.1} parent=63 // pred_check
          %p10544 = pneg %p10543
        $region110: #{fwd.1} parent=63 // pred_check_branch
          %10546 = sbr.rel (%p10544) target = $region112
        $region111: #{fwd.1} parent=63 // pred_region
          %v10547 = vld [vmem:[#allocation3] sm:$0xff]
          %v10548 = vld [vmem:[%s652] sm:$0xf]
          %v10550 = vlaneseq
          %v10551 = vshrl.u32 %v10550, 7
          %v10552 = vsub.s32 0, %v10551
          %v10553 = vrot.slane %v10548, %v10552
          %v10554 = vlaneseq
          %v10555 = vshrl.u32 %v10554, 7
          %v10556 = vsub.s32 1, %v10555
          %v10557 = vrot.slane %v10548, %v10556
          %v10558 = vlaneseq
          %v10559 = vshrl.u32 %v10558, 7
          %v10560 = vsub.s32 2, %v10559
          %v10561 = vrot.slane %v10548, %v10560
          %v10562 = vlaneseq
          %v10563 = vshrl.u32 %v10562, 7
          %v10564 = vsub.s32 3, %v10563
          %v10565 = vrot.slane %v10548, %v10564
          %v10566 = vcombine.low %v10553, %v10557
          %v10567 = vcombine.low %v10561, %v10565
          %v10569 = vunpack.c.l.s4 1983009808
          %v10570 = vunpack.c.0.s8 %v10569
          %v10571 = vlaneseq
          %v10572 = vshrl.u32 %v10571, 7
          %v10573 = vsub.s32 %v10570, %v10572
          %v10574 = vrot.slane %v10566, %v10573
          %v10576 = vunpack.c.l.s4 1983009808
          %v10577 = vunpack.c.0.s8 %v10576
          %v10578 = vlaneseq
          %v10579 = vshrl.u32 %v10578, 7
          %v10580 = vsub.s32 %v10577, %v10579
          %v10581 = vrot.slane %v10567, %v10580
          %v10582 = vcombine.low %v10574, %v10581
          %v10584 = vadd.f32 %v10547, %v10582
          %v10585 = vmax.f32 %v10584, 0.0
          %v10587 = vcombine.high %v10585, %v10585
          %v10589 = vunpack.c.l.s4 1983009808
          %v10590 = vunpack.c.0.s8 %v10589
          %v10591 = vlaneseq
          %v10592 = vshrl.u32 %v10591, 7
          %v10593 = vsub.s32 %v10590, %v10592
          %v10594 = vrot.slane %v10585, %v10593
          %v10596 = vunpack.c.l.s4 1983009808
          %v10597 = vunpack.c.0.s8 %v10596
          %v10598 = vlaneseq
          %v10599 = vshrl.u32 %v10598, 7
          %v10600 = vsub.s32 %v10597, %v10599
          %v10601 = vrot.slane %v10587, %v10600
          %v10602 = vcombine.high %v10594, %v10594
          %v10603 = vcombine.high %v10601, %v10601
          %v10608 = vpack.c.bf16 %v10594, %v10594
          %v10609 = vpack.c.bf16 %v10602, %v10602
          %v10610 = vpack.c.bf16 %v10601, %v10601
          %v10611 = vpack.c.bf16 %v10603, %v10603
          %v10612 = vld [vmem:[%s661] sm:$0xf]
          %v10613 = vld [vmem:[%s661 + $0x4] sm:$0xf]
          %v10614 = vld [vmem:[%s661 + $0x8] sm:$0xf]
          %v10615 = vld [vmem:[%s661 + $0xc] sm:$0xf]
          %v10616 = vld [vmem:[%s661 + $0x10] sm:$0xf]
          %v10617 = vld [vmem:[%s661 + $0x14] sm:$0xf]
          %v10618 = vld [vmem:[%s661 + $0x18] sm:$0xf]
          %v10619 = vld [vmem:[%s661 + $0x1c] sm:$0xf]
          %v10620 = vld [vmem:[%s661 + $0x20] sm:$0xf]
          %v10621 = vld [vmem:[%s661 + $0x24] sm:$0xf]
          %v10622 = vld [vmem:[%s661 + $0x28] sm:$0xf]
          %v10623 = vld [vmem:[%s661 + $0x2c] sm:$0xf]
          %v10624 = vld [vmem:[%s661 + $0x30] sm:$0xf]
          %v10625 = vld [vmem:[%s661 + $0x34] sm:$0xf]
          %v10626 = vld [vmem:[%s661 + $0x38] sm:$0xf]
          %v10627 = vld [vmem:[%s661 + $0x3c] sm:$0xf]
          %v10628 = vld [vmem:[%s661 + $0x40] sm:$0xf]
          %v10629 = vld [vmem:[%s661 + $0x44] sm:$0xf]
          %v10630 = vld [vmem:[%s661 + $0x48] sm:$0xf]
          %v10631 = vld [vmem:[%s661 + $0x4c] sm:$0xf]
          %v10632 = vld [vmem:[%s661 + $0x50] sm:$0xf]
          %v10633 = vld [vmem:[%s661 + $0x54] sm:$0xf]
          %v10634 = vld [vmem:[%s661 + $0x58] sm:$0xf]
          %v10635 = vld [vmem:[%s661 + $0x5c] sm:$0xf]
          %v10636 = vld [vmem:[%s661 + $0x60] sm:$0xf]
          %v10637 = vld [vmem:[%s661 + $0x64] sm:$0xf]
          %v10638 = vld [vmem:[%s661 + $0x68] sm:$0xf]
          %v10639 = vld [vmem:[%s661 + $0x6c] sm:$0xf]
          %v10640 = vld [vmem:[%s661 + $0x70] sm:$0xf]
          %v10641 = vld [vmem:[%s661 + $0x74] sm:$0xf]
          %v10642 = vld [vmem:[%s661 + $0x78] sm:$0xf]
          %v10643 = vld [vmem:[%s661 + $0x7c] sm:$0xf]
          %v10644 = vld [vmem:[%s661 + $0x80] sm:$0xf]
          %v10645 = vld [vmem:[%s661 + $0x84] sm:$0xf]
          %v10646 = vld [vmem:[%s661 + $0x88] sm:$0xf]
          %v10647 = vld [vmem:[%s661 + $0x8c] sm:$0xf]
          %v10648 = vld [vmem:[%s661 + $0x90] sm:$0xf]
          %v10649 = vld [vmem:[%s661 + $0x94] sm:$0xf]
          %v10650 = vld [vmem:[%s661 + $0x98] sm:$0xf]
          %v10651 = vld [vmem:[%s661 + $0x9c] sm:$0xf]
          %v10652 = vld [vmem:[%s661 + $0xa0] sm:$0xf]
          %v10653 = vld [vmem:[%s661 + $0xa4] sm:$0xf]
          %v10654 = vld [vmem:[%s661 + $0xa8] sm:$0xf]
          %v10655 = vld [vmem:[%s661 + $0xac] sm:$0xf]
          %v10656 = vld [vmem:[%s661 + $0xb0] sm:$0xf]
          %v10657 = vld [vmem:[%s661 + $0xb4] sm:$0xf]
          %v10658 = vld [vmem:[%s661 + $0xb8] sm:$0xf]
          %v10659 = vld [vmem:[%s661 + $0xbc] sm:$0xf]
          %v10660 = vld [vmem:[%s661 + $0xc0] sm:$0xf]
          %v10661 = vld [vmem:[%s661 + $0xc4] sm:$0xf]
          %v10662 = vld [vmem:[%s661 + $0xc8] sm:$0xf]
          %v10663 = vld [vmem:[%s661 + $0xcc] sm:$0xf]
          %v10664 = vld [vmem:[%s661 + $0xd0] sm:$0xf]
          %v10665 = vld [vmem:[%s661 + $0xd4] sm:$0xf]
          %v10666 = vld [vmem:[%s661 + $0xd8] sm:$0xf]
          %v10667 = vld [vmem:[%s661 + $0xdc] sm:$0xf]
          %v10668 = vld [vmem:[%s661 + $0xe0] sm:$0xf]
          %v10669 = vld [vmem:[%s661 + $0xe4] sm:$0xf]
          %v10670 = vld [vmem:[%s661 + $0xe8] sm:$0xf]
          %v10671 = vld [vmem:[%s661 + $0xec] sm:$0xf]
          %v10672 = vld [vmem:[%s661 + $0xf0] sm:$0xf]
          %v10673 = vld [vmem:[%s661 + $0xf4] sm:$0xf]
          %v10674 = vld [vmem:[%s661 + $0xf8] sm:$0xf]
          %v10675 = vld [vmem:[%s661 + $0xfc] sm:$0xf]
          %v10676 = vld [vmem:[%s669] sm:$0x1]
          %v10678 = vlaneseq
          %v10679 = vshrl.u32 %v10678, 7
          %v10680 = vsub.s32 0, %v10679
          %v10681 = vrot.slane %v10676, %v10680
          %v10747 = vunpack.c.l.b16 %v10612
          %v10748 = vunpack.c.l.b16 %v10613
          %v10749 = vunpack.c.l.b16 %v10614
          %v10750 = vunpack.c.l.b16 %v10615
          %v10751 = vunpack.c.l.b16 %v10616
          %v10752 = vunpack.c.l.b16 %v10617
          %v10753 = vunpack.c.l.b16 %v10618
          %v10754 = vunpack.c.l.b16 %v10619
          %v10755 = vunpack.c.l.b16 %v10620
          %v10756 = vunpack.c.l.b16 %v10621
          %v10757 = vunpack.c.l.b16 %v10622
          %v10758 = vunpack.c.l.b16 %v10623
          %v10759 = vunpack.c.l.b16 %v10624
          %v10760 = vunpack.c.l.b16 %v10625
          %v10761 = vunpack.c.l.b16 %v10626
          %v10762 = vunpack.c.l.b16 %v10627
          %v10763 = vunpack.c.l.b16 %v10628
          %v10764 = vunpack.c.l.b16 %v10629
          %v10765 = vunpack.c.l.b16 %v10630
          %v10766 = vunpack.c.l.b16 %v10631
          %v10767 = vunpack.c.l.b16 %v10632
          %v10768 = vunpack.c.l.b16 %v10633
          %v10769 = vunpack.c.l.b16 %v10634
          %v10770 = vunpack.c.l.b16 %v10635
          %v10771 = vunpack.c.l.b16 %v10636
          %v10772 = vunpack.c.l.b16 %v10637
          %v10773 = vunpack.c.l.b16 %v10638
          %v10774 = vunpack.c.l.b16 %v10639
          %v10775 = vunpack.c.l.b16 %v10640
          %v10776 = vunpack.c.l.b16 %v10641
          %v10777 = vunpack.c.l.b16 %v10642
          %v10778 = vunpack.c.l.b16 %v10643
          %v10779 = vunpack.c.l.b16 %v10644
          %v10780 = vunpack.c.l.b16 %v10645
          %v10781 = vunpack.c.l.b16 %v10646
          %v10782 = vunpack.c.l.b16 %v10647
          %v10783 = vunpack.c.l.b16 %v10648
          %v10784 = vunpack.c.l.b16 %v10649
          %v10785 = vunpack.c.l.b16 %v10650
          %v10786 = vunpack.c.l.b16 %v10651
          %v10787 = vunpack.c.l.b16 %v10652
          %v10788 = vunpack.c.l.b16 %v10653
          %v10789 = vunpack.c.l.b16 %v10654
          %v10790 = vunpack.c.l.b16 %v10655
          %v10791 = vunpack.c.l.b16 %v10656
          %v10792 = vunpack.c.l.b16 %v10657
          %v10793 = vunpack.c.l.b16 %v10658
          %v10794 = vunpack.c.l.b16 %v10659
          %v10795 = vunpack.c.l.b16 %v10660
          %v10796 = vunpack.c.l.b16 %v10661
          %v10797 = vunpack.c.l.b16 %v10662
          %v10798 = vunpack.c.l.b16 %v10663
          %v10799 = vunpack.c.l.b16 %v10664
          %v10800 = vunpack.c.l.b16 %v10665
          %v10801 = vunpack.c.l.b16 %v10666
          %v10802 = vunpack.c.l.b16 %v10667
          %v10803 = vunpack.c.l.b16 %v10668
          %v10804 = vunpack.c.l.b16 %v10669
          %v10805 = vunpack.c.l.b16 %v10670
          %v10806 = vunpack.c.l.b16 %v10671
          %v10807 = vunpack.c.l.b16 %v10672
          %v10808 = vunpack.c.l.b16 %v10673
          %v10809 = vunpack.c.l.b16 %v10674
          %v10810 = vunpack.c.l.b16 %v10675
          %v10811 = vpack.c.b16 %v10748, %v10747
          %v10812 = vpack.c.b16 %v10750, %v10749
          %v10813 = vpack.c.b16 %v10752, %v10751
          %v10814 = vpack.c.b16 %v10754, %v10753
          %v10815 = vpack.c.b16 %v10756, %v10755
          %v10816 = vpack.c.b16 %v10758, %v10757
          %v10817 = vpack.c.b16 %v10760, %v10759
          %v10818 = vpack.c.b16 %v10762, %v10761
          %v10819 = vpack.c.b16 %v10764, %v10763
          %v10820 = vpack.c.b16 %v10766, %v10765
          %v10821 = vpack.c.b16 %v10768, %v10767
          %v10822 = vpack.c.b16 %v10770, %v10769
          %v10823 = vpack.c.b16 %v10772, %v10771
          %v10824 = vpack.c.b16 %v10774, %v10773
          %v10825 = vpack.c.b16 %v10776, %v10775
          %v10826 = vpack.c.b16 %v10778, %v10777
          %v10827 = vpack.c.b16 %v10780, %v10779
          %v10828 = vpack.c.b16 %v10782, %v10781
          %v10829 = vpack.c.b16 %v10784, %v10783
          %v10830 = vpack.c.b16 %v10786, %v10785
          %v10831 = vpack.c.b16 %v10788, %v10787
          %v10832 = vpack.c.b16 %v10790, %v10789
          %v10833 = vpack.c.b16 %v10792, %v10791
          %v10834 = vpack.c.b16 %v10794, %v10793
          %v10835 = vpack.c.b16 %v10796, %v10795
          %v10836 = vpack.c.b16 %v10798, %v10797
          %v10837 = vpack.c.b16 %v10800, %v10799
          %v10838 = vpack.c.b16 %v10802, %v10801
          %v10839 = vpack.c.b16 %v10804, %v10803
          %v10840 = vpack.c.b16 %v10806, %v10805
          %v10841 = vpack.c.b16 %v10808, %v10807
          %v10842 = vpack.c.b16 %v10810, %v10809
          %10875 = vmatprep.subr.bf16.mxu0 0
          %10876 = vmatpush1.bf16.msra.mxu0 %v10818
          %10877 = vmatprep.subr.bf16.mxu0 0
          %10878 = vmatpush1.bf16.msra.mxu0 %v10817
          %10879 = vmatprep.subr.bf16.mxu0 0
          %10880 = vmatpush1.bf16.msra.mxu0 %v10816
          %10881 = vmatprep.subr.bf16.mxu0 0
          %10882 = vmatpush1.bf16.msra.mxu0 %v10815
          %10883 = vmatprep.subr.bf16.mxu0 0
          %10884 = vmatpush1.bf16.msra.mxu0 %v10814
          %10885 = vmatprep.subr.bf16.mxu0 0
          %10886 = vmatpush1.bf16.msra.mxu0 %v10813
          %10887 = vmatprep.subr.bf16.mxu0 0
          %10888 = vmatpush1.bf16.msra.mxu0 %v10812
          %10889 = vmatprep.subr.bf16.mxu0 0
          %10890 = vmatpush1.bf16.msra.mxu0 %v10811
          %10891 = vmatprep.subr.bf16.mxu0 0
          %10892 = vmatpush2.bf16.msra.mxu0 %v10826
          %10893 = vmatprep.subr.bf16.mxu0 0
          %10894 = vmatpush2.bf16.msra.mxu0 %v10825
          %10895 = vmatprep.subr.bf16.mxu0 0
          %10896 = vmatpush2.bf16.msra.mxu0 %v10824
          %10897 = vmatprep.subr.bf16.mxu0 0
          %10898 = vmatpush2.bf16.msra.mxu0 %v10823
          %10899 = vmatprep.subr.bf16.mxu0 0
          %10900 = vmatpush2.bf16.msra.mxu0 %v10822
          %10901 = vmatprep.subr.bf16.mxu0 0
          %10902 = vmatpush2.bf16.msra.mxu0 %v10821
          %10903 = vmatprep.subr.bf16.mxu0 0
          %10904 = vmatpush2.bf16.msra.mxu0 %v10820
          %10905 = vmatprep.subr.bf16.mxu0 0
          %10906 = vmatpush2.bf16.msra.mxu0 %v10819
          %10907 = vmatprep.mubr.bf16.mxu0 %v10609
          %10908 = vmatmul.mubr.bf16.gmra.mxu0 %v10608
          %v10909 = vpop.f32.mrf.mxu0
          %v10910 = vadd.f32 %v10681, %v10909
          %v10911 = vpop.f32.mrf.mxu0
          %v10912 = vpop.f32.mrf.mxu0
          %v10913 = vpop.f32.mrf.mxu0
          %10914 = vdwg.mxu0
          %10915 = vmatprep.subr.bf16.mxu0 0
          %10916 = vmatpush1.bf16.msra.mxu0 %v10834
          %10917 = vmatprep.subr.bf16.mxu0 0
          %10918 = vmatpush1.bf16.msra.mxu0 %v10833
          %10919 = vmatprep.subr.bf16.mxu0 0
          %10920 = vmatpush1.bf16.msra.mxu0 %v10832
          %10921 = vmatprep.subr.bf16.mxu0 0
          %10922 = vmatpush1.bf16.msra.mxu0 %v10831
          %10923 = vmatprep.subr.bf16.mxu0 0
          %10924 = vmatpush1.bf16.msra.mxu0 %v10830
          %10925 = vmatprep.subr.bf16.mxu0 0
          %10926 = vmatpush1.bf16.msra.mxu0 %v10829
          %10927 = vmatprep.subr.bf16.mxu0 0
          %10928 = vmatpush1.bf16.msra.mxu0 %v10828
          %10929 = vmatprep.subr.bf16.mxu0 0
          %10930 = vmatpush1.bf16.msra.mxu0 %v10827
          %10931 = vmatprep.subr.bf16.mxu0 0
          %10932 = vmatpush2.bf16.msra.mxu0 %v10842
          %10933 = vmatprep.subr.bf16.mxu0 0
          %10934 = vmatpush2.bf16.msra.mxu0 %v10841
          %10935 = vmatprep.subr.bf16.mxu0 0
          %10936 = vmatpush2.bf16.msra.mxu0 %v10840
          %10937 = vmatprep.subr.bf16.mxu0 0
          %10938 = vmatpush2.bf16.msra.mxu0 %v10839
          %10939 = vmatprep.subr.bf16.mxu0 0
          %10940 = vmatpush2.bf16.msra.mxu0 %v10838
          %10941 = vmatprep.subr.bf16.mxu0 0
          %10942 = vmatpush2.bf16.msra.mxu0 %v10837
          %10943 = vmatprep.subr.bf16.mxu0 0
          %10944 = vmatpush2.bf16.msra.mxu0 %v10836
          %10945 = vmatprep.subr.bf16.mxu0 0
          %10946 = vmatpush2.bf16.msra.mxu0 %v10835
          %10947 = vmatprep.mubr.bf16.mxu0 %v10611
          %10948 = vmatmul.mubr.bf16.gmra.mxu0 %v10610
          %v10949 = vpop.f32.mrf.mxu0
          %v10950 = vadd.f32 %v10910, %v10949
          %v10951 = vpop.f32.mrf.mxu0
          %v10952 = vpop.f32.mrf.mxu0
          %v10953 = vpop.f32.mrf.mxu0
          %10954 = vdwg.mxu0
          %10955 = vst [vmem:[%s754] sm:$0x3] %v10950
        $region112: #{fwd.1} parent=63 // pred_fallthru
          _
        %p10956 = scmp.lt.s32.totalorder %s44, 1
        %s10957 = scalar_select %p10956, %s44, 1
        %s10958 = smul.addr %s10957, 2
        %s10959 = scalar_lea.vmem %s11, %s10958
        // Predicated region
        $region113: #{fwd.1} parent=63 // pred_check
          %p10960 = pneg %p353
        $region114: #{fwd.1} parent=63 // pred_check_branch
          %10962 = sbr.rel (%p10960) target = $region116
        $region115: #{fwd.1} parent=63 // pred_region
          _
        $region116: #{fwd.1} parent=63 // pred_fallthru
          _
      $region64: #{fwd.1} parent=5 // pred_fallthru
        _
      %p10963 = scmp.le.s32.totalorder 2, %s35
      // Predicated region
      $region117: #{fwd.1} parent=5 // pred_check
        %p10964 = pneg %p10963
      $region118: #{fwd.1} parent=5 // pred_check_branch
        %10966 = sbr.rel (%p10964) target = $region120
      $region119: #{fwd.1} parent=5 // pred_region
        %s10967 = ssub.s32 %s35, 2
        // Predicated region
        $region121: #{fwd.1} parent=119 // pred_check
          %p10968 = pneg %p359
        $region122: #{fwd.1} parent=119 // pred_check_branch
          %10970 = sbr.rel (%p10968) target = $region124
        $region123: #{fwd.1} parent=119 // pred_region
          %p10971 = scmp.lt.s32.totalorder %s46, 1
          %s10972 = scalar_select %p10971, %s46, 1
          %s10973 = smul.addr %s10972, 2
          %s10974 = scalar_lea.vmem %s11, %s10973
        $region124: #{fwd.1} parent=119 // pred_fallthru
          _
      $region120: #{fwd.1} parent=5 // pred_fallthru
        _
    $region6: #{fwd.1} parent=1 // loop_footer
      %s39 = sadd.s32 1, %s35
    $region7: #{fwd.1} parent=1 // loop_footer_branch
      %34 = sbr.rel target = $region3
    $region8: #{fwd.1} parent=1 // loop_exit
      _
    %10975 = vsyncpa [#allocation5], 1
    %s10976 = scalar_lea.sflag [#allocation5], 1
    %10977 = vsyncpa %s10976, 1
    %10978 = vsyncpa [#allocation7], 1
    %s10979 = scalar_lea.sflag [#allocation7], 1
    %10980 = vsyncpa %s10979, 1
    %10981 = vsyncpa [#allocation10], 1
    %s10982 = scalar_lea.sflag [#allocation10], 1
    %10983 = vsyncpa %s10982, 1
    %10984 = vsyncpa [#allocation13], 1
    %s10985 = scalar_lea.sflag [#allocation13], 1
    %10986 = vsyncpa %s10985, 1
    %10987 = vsyncpa [#allocation16], 1
    %s10988 = scalar_lea.sflag [#allocation16], 1
    %10989 = vsyncpa %s10988, 1
    %10990 = vsyncpa [#allocation19], 1
    %s10991 = scalar_lea.sflag [#allocation19], 1
    %10992 = vsyncpa %s10991, 1

</llo_original>
